<compile_context>
chip_gen: v5e
topology: v5e:2x2
jax: 0.10.0
libtpu: 0.0.40
codegen_flags: <defaults>
</compile_context>

<pallas_src>
import functools

import jax
import jax.numpy as jnp
from jax.experimental import pallas as pl
from jax.experimental.pallas import tpu as pltpu

EPS = 1e-5
LANE = 128


def _round_up_lanes(c):
    return ((c + LANE - 1) // LANE) * LANE


def residual_block_kernel(N, H, W,
                          x_ref, w1_ref, g1_ref, b1_ref,
                          w2_ref, g2_ref, b2_ref,
                          w3_ref, g3_ref, b3_ref,
                          o_ref, halo_ref):
    M = N * H * W
    inv_m = 1.0 / M
    Hp, Wp = H + 2, W + 2
    Cmid = halo_ref.shape[-1]                      # lane-padded mid channels

    def bn_scale_bias(h, gamma, beta):
        # One elementwise pass (h, h*h); fold BN into per-channel scale & bias.
        s = jnp.sum(h, axis=0, keepdims=True)
        ss = jnp.sum(h * h, axis=0, keepdims=True)
        mu = s * inv_m
        var = jnp.maximum(ss * inv_m - mu * mu, 0.0)    # biased variance
        scale = gamma * jax.lax.rsqrt(var + EPS)        # rsqrt -> EUP slot
        bias = beta - mu * scale
        return scale, bias

    # ---- conv1: 1x1, no bias -> BN1 -> ReLU   (bf16 MXU operands, f32 accum)
    h = jnp.dot(x_ref[...].astype(jnp.bfloat16), w1_ref[...],
                preferred_element_type=jnp.float32)
    sc, bi = bn_scale_bias(h, g1_ref[...], b1_ref[...])
    h = jnp.maximum(h * sc + bi, 0.0)

    # ---- stage h into a zero-halo scratch: image n, spatial row r lives at
    #      halo rows [n*Hp + 1 + r], cols [1 : 1+W]; the 1-wide border is zero.
    halo_ref[...] = jnp.zeros(halo_ref.shape, jnp.float32)
    for n in range(N):
        halo_ref[n * Hp + 1: n * Hp + 1 + H, 1: 1 + W, :] = (
            h[n * H * W:(n + 1) * H * W, :].reshape(H, W, Cmid))

    # ---- conv2: 3x3, stride 1, pad 1.  The 9 taps are plain static ref slices
    #      of the zero-halo scratch (no rolls, no boundary masks), cast to bf16
    #      and concatenated along the lane axis -> ONE MXU matmul
    #      (M, 9*Cmid) x (9*Cmid, Cmid) with f32 accumulation.
    taps = []
    for ky in range(3):
        for kx in range(3):
            per_image = [
                halo_ref[n * Hp + ky: n * Hp + ky + H, kx: kx + W, :]
                .reshape(H * W, Cmid).astype(jnp.bfloat16)
                for n in range(N)]
            taps.append(jnp.concatenate(per_image, axis=0))      # (M, Cmid) bf16
    patch = jnp.concatenate(taps, axis=-1)                       # (M, 9*Cmid) bf16
    h2 = jnp.dot(patch, w2_ref[...], preferred_element_type=jnp.float32)
    sc, bi = bn_scale_bias(h2, g2_ref[...], b2_ref[...])
    h2 = jnp.maximum(h2 * sc + bi, 0.0)

    # ---- conv3: 1x1, no bias -> BN3 (no ReLU)
    h3 = jnp.dot(h2.astype(jnp.bfloat16), w3_ref[...],
                 preferred_element_type=jnp.float32)
    sc, bi = bn_scale_bias(h3, g3_ref[...], b3_ref[...])
    h3 = h3 * sc + bi

    # ---- residual add (re-read x_ref here; don't keep it live) + final ReLU
    o_ref[...] = jnp.maximum(h3 + x_ref[...], 0.0)


def residual_block(x_nchw, params):
    """params = (w1, g1, b1, w2, g2, b2, w3, g3, b3) in matmul layout."""
    w1, g1, b1, w2, g2, b2, w3, g3, b3 = params
    N, Cin, H, W = x_nchw.shape
    Cmid = w1.shape[1]
    Cout = w3.shape[1]
    assert Cout == Cin, "no-shortcut residual block requires Cout == Cin"
    M = N * H * W

    Cin_p = _round_up_lanes(Cin)
    Cmid_p = _round_up_lanes(Cmid)
    Cout_p = _round_up_lanes(Cout)

    # NCHW -> NHWC -> (M, Cin), then lane-pad channels to 128.
    xf = jnp.transpose(x_nchw, (0, 2, 3, 1)).reshape(M, Cin).astype(jnp.float32)
    xp = jnp.pad(xf, ((0, 0), (0, Cin_p - Cin)))

    def pad2(a, r, c):
        return jnp.pad(a, ((0, r - a.shape[0]), (0, c - a.shape[1])))

    # Weights cast to bf16 in the wrapper (MXU operands); BN affine stays f32.
    w1p = pad2(w1, Cin_p, Cmid_p).astype(jnp.bfloat16)
    w3p = pad2(w3, Cmid_p, Cout_p).astype(jnp.bfloat16)
    # conv2 weights: (9, Cmid, Cmid) -> (9*Cmid_p, Cmid_p); tap k = ky*3+kx
    # occupies rows [k*Cmid_p, k*Cmid_p + Cmid) (matches the lane-concat order).
    w2p = jnp.pad(w2, ((0, 0), (0, Cmid_p - Cmid), (0, Cmid_p - Cmid)))
    w2p = w2p.reshape(9 * Cmid_p, Cmid_p).astype(jnp.bfloat16)
    g1p, b1p = pad2(g1, 1, Cmid_p), pad2(b1, 1, Cmid_p)
    g2p, b2p = pad2(g2, 1, Cmid_p), pad2(b2, 1, Cmid_p)
    g3p, b3p = pad2(g3, 1, Cout_p), pad2(b3, 1, Cout_p)

    def full(a):
        return pl.BlockSpec(a.shape, lambda i: (0, 0))

    args = (xp, w1p, g1p, b1p, w2p, g2p, b2p, w3p, g3p, b3p)
    out = pl.pallas_call(
        functools.partial(residual_block_kernel, N, H, W),
        out_shape=jax.ShapeDtypeStruct((M, Cout_p), jnp.float32),
        grid=(1,),
        in_specs=[full(a) for a in args],
        out_specs=pl.BlockSpec((M, Cout_p), lambda i: (0, 0)),
        scratch_shapes=[pltpu.VMEM((N * (H + 2), W + 2, Cmid_p), jnp.float32)],
        compiler_params=pltpu.CompilerParams(
            dimension_semantics=("arbitrary",),
            vmem_limit_bytes=64 * 1024 * 1024),
    )(*args)

    # (M, Cout_p) -> drop lane padding -> NHWC -> NCHW
    return out[:, :Cout].reshape(N, H, W, Cout).transpose(0, 3, 1, 2)


def residual_block_reference(x_nchw, params):
    """Pure-JAX f32 reference (module semantics) for a correctness check."""
    w1, g1, b1, w2, g2, b2, w3, g3, b3 = params
    x = jnp.transpose(x_nchw, (0, 2, 3, 1)).astype(jnp.float32)   # NHWC

    def bn(h, g, b):
        mu = jnp.mean(h, axis=(0, 1, 2), keepdims=True)
        var = jnp.mean((h - mu) ** 2, axis=(0, 1, 2), keepdims=True)
        return (h - mu) / jnp.sqrt(var + EPS) * g + b

    h = jnp.einsum('nhwc,cd->nhwd', x, w1)
    h = jax.nn.relu(bn(h, g1, b1))
    w2_hwio = w2.reshape(3, 3, w2.shape[1], w2.shape[2])
    h = jax.lax.conv_general_dilated(
        h, w2_hwio, window_strides=(1, 1), padding='SAME',
        dimension_numbers=('NHWC', 'HWIO', 'NHWC'))
    h = jax.nn.relu(bn(h, g2, b2))
    h = jnp.einsum('nhwc,cd->nhwd', h, w3)
    h = bn(h, g3, b3)
    out = jax.nn.relu(h + x)
    return jnp.transpose(out, (0, 3, 1, 2))


if __name__ == "__main__":
    # Small shapes consistent with the module:
    # inchanal=32 (!= 64 so conv3 out = inchanal and the residual add is valid),
    # outchanal=8 (bottleneck width), spatial 16x16, batch 2, stride=1, no shortcut.
    N, Cin, H, W = 2, 32, 16, 16
    Cmid = 8
    Cout = Cin

    key = jax.random.PRNGKey(0)
    k1, k2, k3, kx = jax.random.split(key, 4)
    # conv weights in matmul layout: (in_channels, out_channels); w2[k] is the
    # (Cmid_in, Cmid_out) slice for kernel tap k = ky*3 + kx.
    w1 = 0.1 * jax.random.normal(k1, (Cin, Cmid), jnp.float32)
    w2 = 0.1 * jax.random.normal(k2, (9, Cmid, Cmid), jnp.float32)
    w3 = 0.1 * jax.random.normal(k3, (Cmid, Cout), jnp.float32)
    # PyTorch-default BatchNorm affine init: gamma=1, beta=0.
    g1, b1 = jnp.ones((1, Cmid), jnp.float32), jnp.zeros((1, Cmid), jnp.float32)
    g2, b2 = jnp.ones((1, Cmid), jnp.float32), jnp.zeros((1, Cmid), jnp.float32)
    g3, b3 = jnp.ones((1, Cout), jnp.float32), jnp.zeros((1, Cout), jnp.float32)
    params = (w1, g1, b1, w2, g2, b2, w3, g3, b3)

    x = jax.random.normal(kx, (N, Cin, H, W), jnp.float32)

    out = jax.block_until_ready(residual_block(x, params))
    ref = jax.block_until_ready(residual_block_reference(x, params))

    assert out.shape == (N, Cout, H, W), out.shape
    # Kernel uses bf16 MXU operands (f32 accumulation); ~1e-2 abs drift vs the
    # pure-f32 reference is expected after three conv+BN stages.
    max_err = float(jnp.max(jnp.abs(out - ref)))
    assert max_err < 1e-1, f"kernel/reference mismatch, max abs err = {max_err}"

    print("KERNEL_OK")
</pallas_src>

<mosaic_0001>
module attributes {stable_mosaic.version = 11 : i64} {
  func.func @residual_block_kernel(%arg0: i32, %arg1: memref<512x128xf32, #tpu.memory_space<vmem>>, %arg2: memref<128x128xbf16, #tpu.memory_space<vmem>>, %arg3: memref<1x128xf32, #tpu.memory_space<vmem>>, %arg4: memref<1x128xf32, #tpu.memory_space<vmem>>, %arg5: memref<1152x128xbf16, #tpu.memory_space<vmem>>, %arg6: memref<1x128xf32, #tpu.memory_space<vmem>>, %arg7: memref<1x128xf32, #tpu.memory_space<vmem>>, %arg8: memref<128x128xbf16, #tpu.memory_space<vmem>>, %arg9: memref<1x128xf32, #tpu.memory_space<vmem>>, %arg10: memref<1x128xf32, #tpu.memory_space<vmem>>, %arg11: memref<512x128xf32, #tpu.memory_space<vmem>>, %arg12: memref<36x18x128xf32, #tpu.memory_space<vmem>>) attributes {dimension_semantics = [#tpu.dimension_semantics<arbitrary>], iteration_bounds = array<i64: 1>, scalar_prefetch = 0 : i64, scratch_operands = 1 : i64, tpu.core_type = #tpu.core_type<tc>, window_params = [{pipeline_mode = #tpu.pipeline_mode<synchronous>, transform_indices = @transform_0, window_bounds = array<i64: 512, 128>}, {pipeline_mode = #tpu.pipeline_mode<synchronous>, transform_indices = @transform_1, window_bounds = array<i64: 128, 128>}, {pipeline_mode = #tpu.pipeline_mode<synchronous>, transform_indices = @transform_2, window_bounds = array<i64: 1, 128>}, {pipeline_mode = #tpu.pipeline_mode<synchronous>, transform_indices = @transform_3, window_bounds = array<i64: 1, 128>}, {pipeline_mode = #tpu.pipeline_mode<synchronous>, transform_indices = @transform_4, window_bounds = array<i64: 1152, 128>}, {pipeline_mode = #tpu.pipeline_mode<synchronous>, transform_indices = @transform_5, window_bounds = array<i64: 1, 128>}, {pipeline_mode = #tpu.pipeline_mode<synchronous>, transform_indices = @transform_6, window_bounds = array<i64: 1, 128>}, {pipeline_mode = #tpu.pipeline_mode<synchronous>, transform_indices = @transform_7, window_bounds = array<i64: 128, 128>}, {pipeline_mode = #tpu.pipeline_mode<synchronous>, transform_indices = @transform_8, window_bounds = array<i64: 1, 128>}, {pipeline_mode = #tpu.pipeline_mode<synchronous>, transform_indices = @transform_9, window_bounds = array<i64: 1, 128>}, {pipeline_mode = #tpu.pipeline_mode<synchronous>, transform_indices = @transform_10, window_bounds = array<i64: 512, 128>}]} {
    %c0 = arith.constant 0 : index
    %c0_0 = arith.constant 0 : index
    %0 = vector.load %arg1[%c0, %c0_0] : memref<512x128xf32, #tpu.memory_space<vmem>>, vector<512x128xf32>
    %1 = arith.truncf %0 : vector<512x128xf32> to vector<512x128xbf16>
    %c0_1 = arith.constant 0 : index
    %c0_2 = arith.constant 0 : index
    %2 = vector.load %arg2[%c0_1, %c0_2] : memref<128x128xbf16, #tpu.memory_space<vmem>>, vector<128x128xbf16>
    %cst = arith.constant dense<0.000000e+00> : vector<512x128xf32>
    %3 = tpu.matmul %1, %2, %cst {dimension_numbers = #tpu.dot_dimension_numbers<[1], [0], [0], [1], [0, 0, 1, 1], [], []>} : vector<512x128xbf16>, vector<128x128xbf16>, vector<512x128xf32> -> vector<512x128xf32>
    %c0_3 = arith.constant 0 : index
    %c0_4 = arith.constant 0 : index
    %4 = vector.load %arg3[%c0_3, %c0_4] : memref<1x128xf32, #tpu.memory_space<vmem>>, vector<1x128xf32>
    %c0_5 = arith.constant 0 : index
    %c0_6 = arith.constant 0 : index
    %5 = vector.load %arg4[%c0_5, %c0_6] : memref<1x128xf32, #tpu.memory_space<vmem>>, vector<1x128xf32>
    %cst_7 = arith.constant dense<0.000000e+00> : vector<128xf32>
    %6 = vector.multi_reduction <add>, %3, %cst_7 [0] : vector<512x128xf32> to vector<128xf32>
    %7 = vector.shape_cast %6 : vector<128xf32> to vector<1x128xf32>
    %8 = arith.mulf %3, %3 : vector<512x128xf32>
    %cst_8 = arith.constant dense<0.000000e+00> : vector<128xf32>
    %9 = vector.multi_reduction <add>, %8, %cst_8 [0] : vector<512x128xf32> to vector<128xf32>
    %10 = vector.shape_cast %9 : vector<128xf32> to vector<1x128xf32>
    %cst_9 = arith.constant 0.001953125 : f32
    %11 = vector.broadcast %cst_9 : f32 to vector<1x128xf32>
    %12 = arith.mulf %7, %11 : vector<1x128xf32>
    %cst_10 = arith.constant 0.001953125 : f32
    %13 = vector.broadcast %cst_10 : f32 to vector<1x128xf32>
    %14 = arith.mulf %10, %13 : vector<1x128xf32>
    %15 = arith.mulf %12, %12 : vector<1x128xf32>
    %16 = arith.subf %14, %15 : vector<1x128xf32>
    %cst_11 = arith.constant 0.000000e+00 : f32
    %17 = vector.broadcast %cst_11 : f32 to vector<1x128xf32>
    %18 = arith.maximumf %16, %17 : vector<1x128xf32>
    %cst_12 = arith.constant 9.99999974E-6 : f32
    %19 = vector.broadcast %cst_12 : f32 to vector<1x128xf32>
    %20 = arith.addf %18, %19 : vector<1x128xf32>
    %21 = math.rsqrt %20 : vector<1x128xf32>
    %22 = arith.mulf %4, %21 : vector<1x128xf32>
    %23 = arith.mulf %12, %22 : vector<1x128xf32>
    %24 = arith.subf %5, %23 : vector<1x128xf32>
    %25 = vector.broadcast %22 : vector<1x128xf32> to vector<512x128xf32>
    %26 = arith.mulf %3, %25 : vector<512x128xf32>
    %27 = vector.broadcast %24 : vector<1x128xf32> to vector<512x128xf32>
    %28 = arith.addf %26, %27 : vector<512x128xf32>
    %cst_13 = arith.constant 0.000000e+00 : f32
    %29 = vector.broadcast %cst_13 : f32 to vector<512x128xf32>
    %30 = arith.maximumf %28, %29 : vector<512x128xf32>
    %cst_14 = arith.constant 0.000000e+00 : f32
    %31 = vector.broadcast %cst_14 : f32 to vector<36x18x128xf32>
    %c0_15 = arith.constant 0 : index
    %c0_16 = arith.constant 0 : index
    %c0_17 = arith.constant 0 : index
    %32 = vector.load %arg12[%c0_15, %c0_16, %c0_17] : memref<36x18x128xf32, #tpu.memory_space<vmem>>, vector<36x18x128xf32>
    tpu.vector_store %arg12[%c0_15, %c0_16, %c0_17], %31 {strides = array<i32>} : memref<36x18x128xf32, #tpu.memory_space<vmem>>, vector<36x18x128xf32>,
    %33 = vector.extract_strided_slice %30 {offsets = [0, 0], sizes = [256, 128], strides = [1, 1]} : vector<512x128xf32> to vector<256x128xf32>
    %34 = vector.shape_cast %33 : vector<256x128xf32> to vector<16x16x128xf32>
    %c1 = arith.constant 1 : index
    %c1_18 = arith.constant 1 : index
    %c0_19 = arith.constant 0 : index
    %35 = vector.load %arg12[%c1, %c1_18, %c0_19] : memref<36x18x128xf32, #tpu.memory_space<vmem>>, vector<16x16x128xf32>
    tpu.vector_store %arg12[%c1, %c1_18, %c0_19], %34 {strides = array<i32>} : memref<36x18x128xf32, #tpu.memory_space<vmem>>, vector<16x16x128xf32>,
    %36 = vector.extract_strided_slice %30 {offsets = [256, 0], sizes = [256, 128], strides = [1, 1]} : vector<512x128xf32> to vector<256x128xf32>
    %37 = vector.shape_cast %36 : vector<256x128xf32> to vector<16x16x128xf32>
    %c19 = arith.constant 19 : index
    %c1_20 = arith.constant 1 : index
    %c0_21 = arith.constant 0 : index
    %38 = vector.load %arg12[%c19, %c1_20, %c0_21] : memref<36x18x128xf32, #tpu.memory_space<vmem>>, vector<16x16x128xf32>
    tpu.vector_store %arg12[%c19, %c1_20, %c0_21], %37 {strides = array<i32>} : memref<36x18x128xf32, #tpu.memory_space<vmem>>, vector<16x16x128xf32>,
    %c0_22 = arith.constant 0 : index
    %c0_23 = arith.constant 0 : index
    %c0_24 = arith.constant 0 : index
    %39 = vector.load %arg12[%c0_22, %c0_23, %c0_24] : memref<36x18x128xf32, #tpu.memory_space<vmem>>, vector<16x16x128xf32>
    %40 = vector.shape_cast %39 : vector<16x16x128xf32> to vector<256x128xf32>
    %41 = arith.truncf %40 : vector<256x128xf32> to vector<256x128xbf16>
    %c18 = arith.constant 18 : index
    %c0_25 = arith.constant 0 : index
    %c0_26 = arith.constant 0 : index
    %42 = vector.load %arg12[%c18, %c0_25, %c0_26] : memref<36x18x128xf32, #tpu.memory_space<vmem>>, vector<16x16x128xf32>
    %43 = vector.shape_cast %42 : vector<16x16x128xf32> to vector<256x128xf32>
    %44 = arith.truncf %43 : vector<256x128xf32> to vector<256x128xbf16>
    %45 = tpu.concatenate %41, %44 in 0 : vector<256x128xbf16>, vector<256x128xbf16> -> vector<512x128xbf16>
    %c0_27 = arith.constant 0 : index
    %c1_28 = arith.constant 1 : index
    %c0_29 = arith.constant 0 : index
    %46 = vector.load %arg12[%c0_27, %c1_28, %c0_29] : memref<36x18x128xf32, #tpu.memory_space<vmem>>, vector<16x16x128xf32>
    %47 = vector.shape_cast %46 : vector<16x16x128xf32> to vector<256x128xf32>
    %48 = arith.truncf %47 : vector<256x128xf32> to vector<256x128xbf16>
    %c18_30 = arith.constant 18 : index
    %c1_31 = arith.constant 1 : index
    %c0_32 = arith.constant 0 : index
    %49 = vector.load %arg12[%c18_30, %c1_31, %c0_32] : memref<36x18x128xf32, #tpu.memory_space<vmem>>, vector<16x16x128xf32>
    %50 = vector.shape_cast %49 : vector<16x16x128xf32> to vector<256x128xf32>
    %51 = arith.truncf %50 : vector<256x128xf32> to vector<256x128xbf16>
    %52 = tpu.concatenate %48, %51 in 0 : vector<256x128xbf16>, vector<256x128xbf16> -> vector<512x128xbf16>
    %c0_33 = arith.constant 0 : index
    %c2 = arith.constant 2 : index
    %c0_34 = arith.constant 0 : index
    %53 = vector.load %arg12[%c0_33, %c2, %c0_34] : memref<36x18x128xf32, #tpu.memory_space<vmem>>, vector<16x16x128xf32>
    %54 = vector.shape_cast %53 : vector<16x16x128xf32> to vector<256x128xf32>
    %55 = arith.truncf %54 : vector<256x128xf32> to vector<256x128xbf16>
    %c18_35 = arith.constant 18 : index
    %c2_36 = arith.constant 2 : index
    %c0_37 = arith.constant 0 : index
    %56 = vector.load %arg12[%c18_35, %c2_36, %c0_37] : memref<36x18x128xf32, #tpu.memory_space<vmem>>, vector<16x16x128xf32>
    %57 = vector.shape_cast %56 : vector<16x16x128xf32> to vector<256x128xf32>
    %58 = arith.truncf %57 : vector<256x128xf32> to vector<256x128xbf16>
    %59 = tpu.concatenate %55, %58 in 0 : vector<256x128xbf16>, vector<256x128xbf16> -> vector<512x128xbf16>
    %c1_38 = arith.constant 1 : index
    %c0_39 = arith.constant 0 : index
    %c0_40 = arith.constant 0 : index
    %60 = vector.load %arg12[%c1_38, %c0_39, %c0_40] : memref<36x18x128xf32, #tpu.memory_space<vmem>>, vector<16x16x128xf32>
    %61 = vector.shape_cast %60 : vector<16x16x128xf32> to vector<256x128xf32>
    %62 = arith.truncf %61 : vector<256x128xf32> to vector<256x128xbf16>
    %c19_41 = arith.constant 19 : index
    %c0_42 = arith.constant 0 : index
    %c0_43 = arith.constant 0 : index
    %63 = vector.load %arg12[%c19_41, %c0_42, %c0_43] : memref<36x18x128xf32, #tpu.memory_space<vmem>>, vector<16x16x128xf32>
    %64 = vector.shape_cast %63 : vector<16x16x128xf32> to vector<256x128xf32>
    %65 = arith.truncf %64 : vector<256x128xf32> to vector<256x128xbf16>
    %66 = tpu.concatenate %62, %65 in 0 : vector<256x128xbf16>, vector<256x128xbf16> -> vector<512x128xbf16>
    %c1_44 = arith.constant 1 : index
    %c1_45 = arith.constant 1 : index
    %c0_46 = arith.constant 0 : index
    %67 = vector.load %arg12[%c1_44, %c1_45, %c0_46] : memref<36x18x128xf32, #tpu.memory_space<vmem>>, vector<16x16x128xf32>
    %68 = vector.shape_cast %67 : vector<16x16x128xf32> to vector<256x128xf32>
    %69 = arith.truncf %68 : vector<256x128xf32> to vector<256x128xbf16>
    %c19_47 = arith.constant 19 : index
    %c1_48 = arith.constant 1 : index
    %c0_49 = arith.constant 0 : index
    %70 = vector.load %arg12[%c19_47, %c1_48, %c0_49] : memref<36x18x128xf32, #tpu.memory_space<vmem>>, vector<16x16x128xf32>
    %71 = vector.shape_cast %70 : vector<16x16x128xf32> to vector<256x128xf32>
    %72 = arith.truncf %71 : vector<256x128xf32> to vector<256x128xbf16>
    %73 = tpu.concatenate %69, %72 in 0 : vector<256x128xbf16>, vector<256x128xbf16> -> vector<512x128xbf16>
    %c1_50 = arith.constant 1 : index
    %c2_51 = arith.constant 2 : index
    %c0_52 = arith.constant 0 : index
    %74 = vector.load %arg12[%c1_50, %c2_51, %c0_52] : memref<36x18x128xf32, #tpu.memory_space<vmem>>, vector<16x16x128xf32>
    %75 = vector.shape_cast %74 : vector<16x16x128xf32> to vector<256x128xf32>
    %76 = arith.truncf %75 : vector<256x128xf32> to vector<256x128xbf16>
    %c19_53 = arith.constant 19 : index
    %c2_54 = arith.constant 2 : index
    %c0_55 = arith.constant 0 : index
    %77 = vector.load %arg12[%c19_53, %c2_54, %c0_55] : memref<36x18x128xf32, #tpu.memory_space<vmem>>, vector<16x16x128xf32>
    %78 = vector.shape_cast %77 : vector<16x16x128xf32> to vector<256x128xf32>
    %79 = arith.truncf %78 : vector<256x128xf32> to vector<256x128xbf16>
    %80 = tpu.concatenate %76, %79 in 0 : vector<256x128xbf16>, vector<256x128xbf16> -> vector<512x128xbf16>
    %c2_56 = arith.constant 2 : index
    %c0_57 = arith.constant 0 : index
    %c0_58 = arith.constant 0 : index
    %81 = vector.load %arg12[%c2_56, %c0_57, %c0_58] : memref<36x18x128xf32, #tpu.memory_space<vmem>>, vector<16x16x128xf32>
    %82 = vector.shape_cast %81 : vector<16x16x128xf32> to vector<256x128xf32>
    %83 = arith.truncf %82 : vector<256x128xf32> to vector<256x128xbf16>
    %c20 = arith.constant 20 : index
    %c0_59 = arith.constant 0 : index
    %c0_60 = arith.constant 0 : index
    %84 = vector.load %arg12[%c20, %c0_59, %c0_60] : memref<36x18x128xf32, #tpu.memory_space<vmem>>, vector<16x16x128xf32>
    %85 = vector.shape_cast %84 : vector<16x16x128xf32> to vector<256x128xf32>
    %86 = arith.truncf %85 : vector<256x128xf32> to vector<256x128xbf16>
    %87 = tpu.concatenate %83, %86 in 0 : vector<256x128xbf16>, vector<256x128xbf16> -> vector<512x128xbf16>
    %c2_61 = arith.constant 2 : index
    %c1_62 = arith.constant 1 : index
    %c0_63 = arith.constant 0 : index
    %88 = vector.load %arg12[%c2_61, %c1_62, %c0_63] : memref<36x18x128xf32, #tpu.memory_space<vmem>>, vector<16x16x128xf32>
    %89 = vector.shape_cast %88 : vector<16x16x128xf32> to vector<256x128xf32>
    %90 = arith.truncf %89 : vector<256x128xf32> to vector<256x128xbf16>
    %c20_64 = arith.constant 20 : index
    %c1_65 = arith.constant 1 : index
    %c0_66 = arith.constant 0 : index
    %91 = vector.load %arg12[%c20_64, %c1_65, %c0_66] : memref<36x18x128xf32, #tpu.memory_space<vmem>>, vector<16x16x128xf32>
    %92 = vector.shape_cast %91 : vector<16x16x128xf32> to vector<256x128xf32>
    %93 = arith.truncf %92 : vector<256x128xf32> to vector<256x128xbf16>
    %94 = tpu.concatenate %90, %93 in 0 : vector<256x128xbf16>, vector<256x128xbf16> -> vector<512x128xbf16>
    %c2_67 = arith.constant 2 : index
    %c2_68 = arith.constant 2 : index
    %c0_69 = arith.constant 0 : index
    %95 = vector.load %arg12[%c2_67, %c2_68, %c0_69] : memref<36x18x128xf32, #tpu.memory_space<vmem>>, vector<16x16x128xf32>
    %96 = vector.shape_cast %95 : vector<16x16x128xf32> to vector<256x128xf32>
    %97 = arith.truncf %96 : vector<256x128xf32> to vector<256x128xbf16>
    %c20_70 = arith.constant 20 : index
    %c2_71 = arith.constant 2 : index
    %c0_72 = arith.constant 0 : index
    %98 = vector.load %arg12[%c20_70, %c2_71, %c0_72] : memref<36x18x128xf32, #tpu.memory_space<vmem>>, vector<16x16x128xf32>
    %99 = vector.shape_cast %98 : vector<16x16x128xf32> to vector<256x128xf32>
    %100 = arith.truncf %99 : vector<256x128xf32> to vector<256x128xbf16>
    %101 = tpu.concatenate %97, %100 in 0 : vector<256x128xbf16>, vector<256x128xbf16> -> vector<512x128xbf16>
    %102 = tpu.concatenate %45, %52, %59, %66, %73, %80, %87, %94, %101 in 1 : vector<512x128xbf16>, vector<512x128xbf16>, vector<512x128xbf16>, vector<512x128xbf16>, vector<512x128xbf16>, vector<512x128xbf16>, vector<512x128xbf16>, vector<512x128xbf16>, vector<512x128xbf16> -> vector<512x1152xbf16>
    %c0_73 = arith.constant 0 : index
    %c0_74 = arith.constant 0 : index
    %103 = vector.load %arg5[%c0_73, %c0_74] : memref<1152x128xbf16, #tpu.memory_space<vmem>>, vector<1152x128xbf16>
    %cst_75 = arith.constant dense<0.000000e+00> : vector<512x128xf32>
    %104 = tpu.matmul %102, %103, %cst_75 {dimension_numbers = #tpu.dot_dimension_numbers<[1], [0], [0], [1], [0, 0, 1, 1], [], []>} : vector<512x1152xbf16>, vector<1152x128xbf16>, vector<512x128xf32> -> vector<512x128xf32>
    %c0_76 = arith.constant 0 : index
    %c0_77 = arith.constant 0 : index
    %105 = vector.load %arg6[%c0_76, %c0_77] : memref<1x128xf32, #tpu.memory_space<vmem>>, vector<1x128xf32>
    %c0_78 = arith.constant 0 : index
    %c0_79 = arith.constant 0 : index
    %106 = vector.load %arg7[%c0_78, %c0_79] : memref<1x128xf32, #tpu.memory_space<vmem>>, vector<1x128xf32>
    %cst_80 = arith.constant dense<0.000000e+00> : vector<128xf32>
    %107 = vector.multi_reduction <add>, %104, %cst_80 [0] : vector<512x128xf32> to vector<128xf32>
    %108 = vector.shape_cast %107 : vector<128xf32> to vector<1x128xf32>
    %109 = arith.mulf %104, %104 : vector<512x128xf32>
    %cst_81 = arith.constant dense<0.000000e+00> : vector<128xf32>
    %110 = vector.multi_reduction <add>, %109, %cst_81 [0] : vector<512x128xf32> to vector<128xf32>
    %111 = vector.shape_cast %110 : vector<128xf32> to vector<1x128xf32>
    %cst_82 = arith.constant 0.001953125 : f32
    %112 = vector.broadcast %cst_82 : f32 to vector<1x128xf32>
    %113 = arith.mulf %108, %112 : vector<1x128xf32>
    %cst_83 = arith.constant 0.001953125 : f32
    %114 = vector.broadcast %cst_83 : f32 to vector<1x128xf32>
    %115 = arith.mulf %111, %114 : vector<1x128xf32>
    %116 = arith.mulf %113, %113 : vector<1x128xf32>
    %117 = arith.subf %115, %116 : vector<1x128xf32>
    %cst_84 = arith.constant 0.000000e+00 : f32
    %118 = vector.broadcast %cst_84 : f32 to vector<1x128xf32>
    %119 = arith.maximumf %117, %118 : vector<1x128xf32>
    %cst_85 = arith.constant 9.99999974E-6 : f32
    %120 = vector.broadcast %cst_85 : f32 to vector<1x128xf32>
    %121 = arith.addf %119, %120 : vector<1x128xf32>
    %122 = math.rsqrt %121 : vector<1x128xf32>
    %123 = arith.mulf %105, %122 : vector<1x128xf32>
    %124 = arith.mulf %113, %123 : vector<1x128xf32>
    %125 = arith.subf %106, %124 : vector<1x128xf32>
    %126 = vector.broadcast %123 : vector<1x128xf32> to vector<512x128xf32>
    %127 = arith.mulf %104, %126 : vector<512x128xf32>
    %128 = vector.broadcast %125 : vector<1x128xf32> to vector<512x128xf32>
    %129 = arith.addf %127, %128 : vector<512x128xf32>
    %cst_86 = arith.constant 0.000000e+00 : f32
    %130 = vector.broadcast %cst_86 : f32 to vector<512x128xf32>
    %131 = arith.maximumf %129, %130 : vector<512x128xf32>
    %132 = arith.truncf %131 : vector<512x128xf32> to vector<512x128xbf16>
    %c0_87 = arith.constant 0 : index
    %c0_88 = arith.constant 0 : index
    %133 = vector.load %arg8[%c0_87, %c0_88] : memref<128x128xbf16, #tpu.memory_space<vmem>>, vector<128x128xbf16>
    %cst_89 = arith.constant dense<0.000000e+00> : vector<512x128xf32>
    %134 = tpu.matmul %132, %133, %cst_89 {dimension_numbers = #tpu.dot_dimension_numbers<[1], [0], [0], [1], [0, 0, 1, 1], [], []>} : vector<512x128xbf16>, vector<128x128xbf16>, vector<512x128xf32> -> vector<512x128xf32>
    %c0_90 = arith.constant 0 : index
    %c0_91 = arith.constant 0 : index
    %135 = vector.load %arg9[%c0_90, %c0_91] : memref<1x128xf32, #tpu.memory_space<vmem>>, vector<1x128xf32>
    %c0_92 = arith.constant 0 : index
    %c0_93 = arith.constant 0 : index
    %136 = vector.load %arg10[%c0_92, %c0_93] : memref<1x128xf32, #tpu.memory_space<vmem>>, vector<1x128xf32>
    %cst_94 = arith.constant dense<0.000000e+00> : vector<128xf32>
    %137 = vector.multi_reduction <add>, %134, %cst_94 [0] : vector<512x128xf32> to vector<128xf32>
    %138 = vector.shape_cast %137 : vector<128xf32> to vector<1x128xf32>
    %139 = arith.mulf %134, %134 : vector<512x128xf32>
    %cst_95 = arith.constant dense<0.000000e+00> : vector<128xf32>
    %140 = vector.multi_reduction <add>, %139, %cst_95 [0] : vector<512x128xf32> to vector<128xf32>
    %141 = vector.shape_cast %140 : vector<128xf32> to vector<1x128xf32>
    %cst_96 = arith.constant 0.001953125 : f32
    %142 = vector.broadcast %cst_96 : f32 to vector<1x128xf32>
    %143 = arith.mulf %138, %142 : vector<1x128xf32>
    %cst_97 = arith.constant 0.001953125 : f32
    %144 = vector.broadcast %cst_97 : f32 to vector<1x128xf32>
    %145 = arith.mulf %141, %144 : vector<1x128xf32>
    %146 = arith.mulf %143, %143 : vector<1x128xf32>
    %147 = arith.subf %145, %146 : vector<1x128xf32>
    %cst_98 = arith.constant 0.000000e+00 : f32
    %148 = vector.broadcast %cst_98 : f32 to vector<1x128xf32>
    %149 = arith.maximumf %147, %148 : vector<1x128xf32>
    %cst_99 = arith.constant 9.99999974E-6 : f32
    %150 = vector.broadcast %cst_99 : f32 to vector<1x128xf32>
    %151 = arith.addf %149, %150 : vector<1x128xf32>
    %152 = math.rsqrt %151 : vector<1x128xf32>
    %153 = arith.mulf %135, %152 : vector<1x128xf32>
    %154 = arith.mulf %143, %153 : vector<1x128xf32>
    %155 = arith.subf %136, %154 : vector<1x128xf32>
    %156 = vector.broadcast %153 : vector<1x128xf32> to vector<512x128xf32>
    %157 = arith.mulf %134, %156 : vector<512x128xf32>
    %158 = vector.broadcast %155 : vector<1x128xf32> to vector<512x128xf32>
    %159 = arith.addf %157, %158 : vector<512x128xf32>
    %c0_100 = arith.constant 0 : index
    %c0_101 = arith.constant 0 : index
    %160 = vector.load %arg1[%c0_100, %c0_101] : memref<512x128xf32, #tpu.memory_space<vmem>>, vector<512x128xf32>
    %161 = arith.addf %159, %160 : vector<512x128xf32>
    %cst_102 = arith.constant 0.000000e+00 : f32
    %162 = vector.broadcast %cst_102 : f32 to vector<512x128xf32>
    %163 = arith.maximumf %161, %162 : vector<512x128xf32>
    %c0_103 = arith.constant 0 : index
    %c0_104 = arith.constant 0 : index
    %164 = vector.load %arg11[%c0_103, %c0_104] : memref<512x128xf32, #tpu.memory_space<vmem>>, vector<512x128xf32>
    tpu.vector_store %arg11[%c0_103, %c0_104], %163 {strides = array<i32>} : memref<512x128xf32, #tpu.memory_space<vmem>>, vector<512x128xf32>,
    return
  }
  func.func @transform_0(%arg0: i32) -> (i32, i32) {
    %c0_i32 = arith.constant 0 : i32
    %c0_i32_0 = arith.constant 0 : i32
    %c0_i32_1 = arith.constant 0 : i32
    return %c0_i32, %c0_i32_0 : i32, i32
  }
  func.func @transform_1(%arg0: i32) -> (i32, i32) {
    %c0_i32 = arith.constant 0 : i32
    %c0_i32_0 = arith.constant 0 : i32
    %c0_i32_1 = arith.constant 0 : i32
    return %c0_i32, %c0_i32_0 : i32, i32
  }
  func.func @transform_2(%arg0: i32) -> (i32, i32) {
    %c0_i32 = arith.constant 0 : i32
    %c0_i32_0 = arith.constant 0 : i32
    %c0_i32_1 = arith.constant 0 : i32
    return %c0_i32, %c0_i32_0 : i32, i32
  }
  func.func @transform_3(%arg0: i32) -> (i32, i32) {
    %c0_i32 = arith.constant 0 : i32
    %c0_i32_0 = arith.constant 0 : i32
    %c0_i32_1 = arith.constant 0 : i32
    return %c0_i32, %c0_i32_0 : i32, i32
  }
  func.func @transform_4(%arg0: i32) -> (i32, i32) {
    %c0_i32 = arith.constant 0 : i32
    %c0_i32_0 = arith.constant 0 : i32
    %c0_i32_1 = arith.constant 0 : i32
    return %c0_i32, %c0_i32_0 : i32, i32
  }
  func.func @transform_5(%arg0: i32) -> (i32, i32) {
    %c0_i32 = arith.constant 0 : i32
    %c0_i32_0 = arith.constant 0 : i32
    %c0_i32_1 = arith.constant 0 : i32
    return %c0_i32, %c0_i32_0 : i32, i32
  }
  func.func @transform_6(%arg0: i32) -> (i32, i32) {
    %c0_i32 = arith.constant 0 : i32
    %c0_i32_0 = arith.constant 0 : i32
    %c0_i32_1 = arith.constant 0 : i32
    return %c0_i32, %c0_i32_0 : i32, i32
  }
  func.func @transform_7(%arg0: i32) -> (i32, i32) {
    %c0_i32 = arith.constant 0 : i32
    %c0_i32_0 = arith.constant 0 : i32
    %c0_i32_1 = arith.constant 0 : i32
    return %c0_i32, %c0_i32_0 : i32, i32
  }
  func.func @transform_8(%arg0: i32) -> (i32, i32) {
    %c0_i32 = arith.constant 0 : i32
    %c0_i32_0 = arith.constant 0 : i32
    %c0_i32_1 = arith.constant 0 : i32
    return %c0_i32, %c0_i32_0 : i32, i32
  }
  func.func @transform_9(%arg0: i32) -> (i32, i32) {
    %c0_i32 = arith.constant 0 : i32
    %c0_i32_0 = arith.constant 0 : i32
    %c0_i32_1 = arith.constant 0 : i32
    return %c0_i32, %c0_i32_0 : i32, i32
  }
  func.func @transform_10(%arg0: i32) -> (i32, i32) {
    %c0_i32 = arith.constant 0 : i32
    %c0_i32_0 = arith.constant 0 : i32
    %c0_i32_1 = arith.constant 0 : i32
    return %c0_i32, %c0_i32_0 : i32, i32
  }
}

</mosaic_0001>

<llo_original>
// kernel: tpu_custom_call.1
$region0: #{tpu_custom_call.1}
  #allocation0 [shape = 'u32[]', space=smem, size = 0x4, offset = 0x4, fixed_abs, tag = 'smem constant byte address 0x4 - core index']
  #allocation1 [shape = 'u32[72,128]{1,0:T(1,128)}', space=vmem, size = 0x9000, scoped, tag = 'internal scratch']
  #allocation2 [shape = 'f32[36,18,128]{2,1,0:T(8,128)}', space=vmem, size = 0x6c000, scoped, tag = 'scratch operand']
  %s0 = inlined_call_operand.hbm [shape: f32[512,128], index: 0, kind: input, shape index: {}]
  %s1 = inlined_call_operand.hbm [shape: bf16[128,128], index: 1, kind: input, shape index: {}]
  %s2 = inlined_call_operand.vmem [shape: f32[1,128], index: 2, kind: input, shape index: {}]
  %s3 = inlined_call_operand.vmem [shape: f32[1,128], index: 3, kind: input, shape index: {}]
  %s4 = inlined_call_operand.hbm [shape: bf16[1152,128], index: 4, kind: input, shape index: {}]
  %s5 = inlined_call_operand.vmem [shape: f32[1,128], index: 5, kind: input, shape index: {}]
  %s6 = inlined_call_operand.vmem [shape: f32[1,128], index: 6, kind: input, shape index: {}]
  %s7 = inlined_call_operand.hbm [shape: bf16[128,128], index: 7, kind: input, shape index: {}]
  %s8 = inlined_call_operand.vmem [shape: f32[1,128], index: 8, kind: input, shape index: {}]
  %s9 = inlined_call_operand.vmem [shape: f32[1,128], index: 9, kind: input, shape index: {}]
  %s10 = inlined_call_operand.hbm [shape: f32[512,128], index: 10, kind: output, shape index: {}]
  %s11 = sld [smem:[#allocation0]]
  $region66: #{tpu_custom_call.1} parent=0
    _
  %s13 = ssub.s32 1, %s11
  %s14 = scalar_select 0, %s13, %s11
  $region1: #{tpu_custom_call.1} parent=0
    #allocation3 [shape = 'u8[262144]{0}', space=vmem, size = 0x40000, scoped, tag = 'input window, operand 0, single buffered']
    #allocation4 [shape = 's32[1]{0}', space=sflag, size = 0x4, scoped, tag = 'scoped memory for tpu_custom_call.1']
    #allocation5 [shape = 's32[1]{0}', space=sflag, size = 0x4, scoped, tag = 'scoped memory for tpu_custom_call.1']
    #allocation6 [shape = 'u8[32768]{0}', space=vmem, size = 0x8000, scoped, tag = 'input window, operand 1, single buffered']
    #allocation7 [shape = 's32[1]{0}', space=sflag, size = 0x4, scoped, tag = 'scoped memory for tpu_custom_call.1']
    #allocation8 [shape = 'u8[294912]{0}', space=vmem, size = 0x48000, scoped, tag = 'input window, operand 4, single buffered']
    #allocation9 [shape = 'u8[32768]{0}', space=vmem, size = 0x8000, scoped, tag = 'input window, operand 7, single buffered']
    #allocation10 [shape = 's32[1]{0}', space=sflag, size = 0x4, scoped, tag = 'scoped memory for tpu_custom_call.1']
    #allocation11 [shape = 'u8[262144]{0}', space=vmem, size = 0x40000, scoped, tag = 'output window, operand 0, single buffered']
    %15 = vsyncpa [#allocation4], 0
    %16 = vsyncpa [#allocation7], 0
    %17 = vsyncpa [#allocation10], 0
    %18 = vsyncpa [#allocation5], 0
    // Predicated region
    $region2: #{tpu_custom_call.1} parent=1 // pred_check
      _
    $region3: #{tpu_custom_call.1} parent=1 // pred_check_branch
      %20 = sbr.rel (0) target = $region5
    $region4: #{tpu_custom_call.1} parent=1 // pred_region
      %22 = vsyncadd [#allocation4], 0
      %s23 = sshll.u32 %s0, 4
      %s24 = int_to_ptr.hbm [resolvable:$true] %s23
      %s25 = sshll.u32 [#allocation3], 4
      %s26 = int_to_ptr.vmem [resolvable:$true] %s25
      %31 = dma.hbm_to_vmem [thread:$0]  %s24, 8192, %s26, [#allocation4], 128, 128, 8
    $region5: #{tpu_custom_call.1} parent=1 // pred_fallthru
      _
    // Predicated region
    $region6: #{tpu_custom_call.1} parent=1 // pred_check
      _
    $region7: #{tpu_custom_call.1} parent=1 // pred_check_branch
      %33 = sbr.rel (0) target = $region9
    $region8: #{tpu_custom_call.1} parent=1 // pred_region
      %35 = vsyncadd [#allocation7], 0
      %s36 = sshll.u32 %s1, 4
      %s37 = int_to_ptr.hbm [resolvable:$true] %s36
      %s38 = sshll.u32 [#allocation6], 4
      %s39 = int_to_ptr.vmem [resolvable:$true] %s38
      %44 = dma.hbm_to_vmem [thread:$0]  %s37, 1024, %s39, [#allocation7], 64, 64, 4
    $region9: #{tpu_custom_call.1} parent=1 // pred_fallthru
      _
    // Predicated region
    $region10: #{tpu_custom_call.1} parent=1 // pred_check
      _
    $region11: #{tpu_custom_call.1} parent=1 // pred_check_branch
      %46 = sbr.rel (0) target = $region13
    $region12: #{tpu_custom_call.1} parent=1 // pred_region
      _
    $region13: #{tpu_custom_call.1} parent=1 // pred_fallthru
      _
    // Predicated region
    $region14: #{tpu_custom_call.1} parent=1 // pred_check
      _
    $region15: #{tpu_custom_call.1} parent=1 // pred_check_branch
      %48 = sbr.rel (0) target = $region17
    $region16: #{tpu_custom_call.1} parent=1 // pred_region
      _
    $region17: #{tpu_custom_call.1} parent=1 // pred_fallthru
      _
    // Predicated region
    $region18: #{tpu_custom_call.1} parent=1 // pred_check
      _
    $region19: #{tpu_custom_call.1} parent=1 // pred_check_branch
      %50 = sbr.rel (0) target = $region21
    $region20: #{tpu_custom_call.1} parent=1 // pred_region
      %52 = vsyncadd [#allocation7], 0
      %s53 = sshll.u32 %s4, 4
      %s54 = int_to_ptr.hbm [resolvable:$true] %s53
      %s55 = sshll.u32 [#allocation8], 4
      %s56 = int_to_ptr.vmem [resolvable:$true] %s55
      %61 = dma.hbm_to_vmem [thread:$0]  %s54, 9216, %s56, [#allocation7], 64, 64, 4
    $region21: #{tpu_custom_call.1} parent=1 // pred_fallthru
      _
    // Predicated region
    $region22: #{tpu_custom_call.1} parent=1 // pred_check
      _
    $region23: #{tpu_custom_call.1} parent=1 // pred_check_branch
      %63 = sbr.rel (0) target = $region25
    $region24: #{tpu_custom_call.1} parent=1 // pred_region
      _
    $region25: #{tpu_custom_call.1} parent=1 // pred_fallthru
      _
    // Predicated region
    $region26: #{tpu_custom_call.1} parent=1 // pred_check
      _
    $region27: #{tpu_custom_call.1} parent=1 // pred_check_branch
      %65 = sbr.rel (0) target = $region29
    $region28: #{tpu_custom_call.1} parent=1 // pred_region
      _
    $region29: #{tpu_custom_call.1} parent=1 // pred_fallthru
      _
    // Predicated region
    $region30: #{tpu_custom_call.1} parent=1 // pred_check
      _
    $region31: #{tpu_custom_call.1} parent=1 // pred_check_branch
      %67 = sbr.rel (0) target = $region33
    $region32: #{tpu_custom_call.1} parent=1 // pred_region
      %69 = vsyncadd [#allocation10], 0
      %s70 = sshll.u32 %s7, 4
      %s71 = int_to_ptr.hbm [resolvable:$true] %s70
      %s72 = sshll.u32 [#allocation9], 4
      %s73 = int_to_ptr.vmem [resolvable:$true] %s72
      %78 = dma.hbm_to_vmem [thread:$0]  %s71, 1024, %s73, [#allocation10], 64, 64, 4
    $region33: #{tpu_custom_call.1} parent=1 // pred_fallthru
      _
    // Predicated region
    $region34: #{tpu_custom_call.1} parent=1 // pred_check
      _
    $region35: #{tpu_custom_call.1} parent=1 // pred_check_branch
      %80 = sbr.rel (0) target = $region37
    $region36: #{tpu_custom_call.1} parent=1 // pred_region
      _
    $region37: #{tpu_custom_call.1} parent=1 // pred_fallthru
      _
    // Predicated region
    $region38: #{tpu_custom_call.1} parent=1 // pred_check
      _
    $region39: #{tpu_custom_call.1} parent=1 // pred_check_branch
      %82 = sbr.rel (0) target = $region41
    $region40: #{tpu_custom_call.1} parent=1 // pred_region
      _
    $region41: #{tpu_custom_call.1} parent=1 // pred_fallthru
      _
    // Predicated region
    $region42: #{tpu_custom_call.1} parent=1 // pred_check
      _
    $region43: #{tpu_custom_call.1} parent=1 // pred_check_branch
      %84 = sbr.rel (0) target = $region45
    $region44: #{tpu_custom_call.1} parent=1 // pred_region
      %86 = dma.done [#allocation4], 8192
    $region45: #{tpu_custom_call.1} parent=1 // pred_fallthru
      _
    // Predicated region
    $region46: #{tpu_custom_call.1} parent=1 // pred_check
      _
    $region47: #{tpu_custom_call.1} parent=1 // pred_check_branch
      %88 = sbr.rel (0) target = $region49
    $region48: #{tpu_custom_call.1} parent=1 // pred_region
      %90 = dma.done [#allocation7], 1024
    $region49: #{tpu_custom_call.1} parent=1 // pred_fallthru
      _
    // Predicated region
    $region50: #{tpu_custom_call.1} parent=1 // pred_check
      _
    $region51: #{tpu_custom_call.1} parent=1 // pred_check_branch
      %92 = sbr.rel (0) target = $region53
    $region52: #{tpu_custom_call.1} parent=1 // pred_region
      %94 = dma.done [#allocation7], 9216
    $region53: #{tpu_custom_call.1} parent=1 // pred_fallthru
      _
    // Predicated region
    $region54: #{tpu_custom_call.1} parent=1 // pred_check
      _
    $region55: #{tpu_custom_call.1} parent=1 // pred_check_branch
      %96 = sbr.rel (0) target = $region57
    $region56: #{tpu_custom_call.1} parent=1 // pred_region
      %98 = dma.done [#allocation10], 1024
    $region57: #{tpu_custom_call.1} parent=1 // pred_fallthru
      _
    %v99 = vld [vmem:[#allocation3] sm:$0xff]
    %v100 = vld [vmem:[#allocation3 + $0x8] sm:$0xff]
    %v101 = vld [vmem:[#allocation3 + $0x10] sm:$0xff]
    %v102 = vld [vmem:[#allocation3 + $0x18] sm:$0xff]
    %v103 = vld [vmem:[#allocation3 + $0x20] sm:$0xff]
    %v104 = vld [vmem:[#allocation3 + $0x28] sm:$0xff]
    %v105 = vld [vmem:[#allocation3 + $0x30] sm:$0xff]
    %v106 = vld [vmem:[#allocation3 + $0x38] sm:$0xff]
    %v107 = vld [vmem:[#allocation3 + $0x40] sm:$0xff]
    %v108 = vld [vmem:[#allocation3 + $0x48] sm:$0xff]
    %v109 = vld [vmem:[#allocation3 + $0x50] sm:$0xff]
    %v110 = vld [vmem:[#allocation3 + $0x58] sm:$0xff]
    %v111 = vld [vmem:[#allocation3 + $0x60] sm:$0xff]
    %v112 = vld [vmem:[#allocation3 + $0x68] sm:$0xff]
    %v113 = vld [vmem:[#allocation3 + $0x70] sm:$0xff]
    %v114 = vld [vmem:[#allocation3 + $0x78] sm:$0xff]
    %v115 = vld [vmem:[#allocation3 + $0x80] sm:$0xff]
    %v116 = vld [vmem:[#allocation3 + $0x88] sm:$0xff]
    %v117 = vld [vmem:[#allocation3 + $0x90] sm:$0xff]
    %v118 = vld [vmem:[#allocation3 + $0x98] sm:$0xff]
    %v119 = vld [vmem:[#allocation3 + $0xa0] sm:$0xff]
    %v120 = vld [vmem:[#allocation3 + $0xa8] sm:$0xff]
    %v121 = vld [vmem:[#allocation3 + $0xb0] sm:$0xff]
    %v122 = vld [vmem:[#allocation3 + $0xb8] sm:$0xff]
    %v123 = vld [vmem:[#allocation3 + $0xc0] sm:$0xff]
    %v124 = vld [vmem:[#allocation3 + $0xc8] sm:$0xff]
    %v125 = vld [vmem:[#allocation3 + $0xd0] sm:$0xff]
    %v126 = vld [vmem:[#allocation3 + $0xd8] sm:$0xff]
    %v127 = vld [vmem:[#allocation3 + $0xe0] sm:$0xff]
    %v128 = vld [vmem:[#allocation3 + $0xe8] sm:$0xff]
    %v129 = vld [vmem:[#allocation3 + $0xf0] sm:$0xff]
    %v130 = vld [vmem:[#allocation3 + $0xf8] sm:$0xff]
    %v131 = vld [vmem:[#allocation3 + $0x100] sm:$0xff]
    %v132 = vld [vmem:[#allocation3 + $0x108] sm:$0xff]
    %v133 = vld [vmem:[#allocation3 + $0x110] sm:$0xff]
    %v134 = vld [vmem:[#allocation3 + $0x118] sm:$0xff]
    %v135 = vld [vmem:[#allocation3 + $0x120] sm:$0xff]
    %v136 = vld [vmem:[#allocation3 + $0x128] sm:$0xff]
    %v137 = vld [vmem:[#allocation3 + $0x130] sm:$0xff]
    %v138 = vld [vmem:[#allocation3 + $0x138] sm:$0xff]
    %v139 = vld [vmem:[#allocation3 + $0x140] sm:$0xff]
    %v140 = vld [vmem:[#allocation3 + $0x148] sm:$0xff]
    %v141 = vld [vmem:[#allocation3 + $0x150] sm:$0xff]
    %v142 = vld [vmem:[#allocation3 + $0x158] sm:$0xff]
    %v143 = vld [vmem:[#allocation3 + $0x160] sm:$0xff]
    %v144 = vld [vmem:[#allocation3 + $0x168] sm:$0xff]
    %v145 = vld [vmem:[#allocation3 + $0x170] sm:$0xff]
    %v146 = vld [vmem:[#allocation3 + $0x178] sm:$0xff]
    %v147 = vld [vmem:[#allocation3 + $0x180] sm:$0xff]
    %v148 = vld [vmem:[#allocation3 + $0x188] sm:$0xff]
    %v149 = vld [vmem:[#allocation3 + $0x190] sm:$0xff]
    %v150 = vld [vmem:[#allocation3 + $0x198] sm:$0xff]
    %v151 = vld [vmem:[#allocation3 + $0x1a0] sm:$0xff]
    %v152 = vld [vmem:[#allocation3 + $0x1a8] sm:$0xff]
    %v153 = vld [vmem:[#allocation3 + $0x1b0] sm:$0xff]
    %v154 = vld [vmem:[#allocation3 + $0x1b8] sm:$0xff]
    %v155 = vld [vmem:[#allocation3 + $0x1c0] sm:$0xff]
    %v156 = vld [vmem:[#allocation3 + $0x1c8] sm:$0xff]
    %v157 = vld [vmem:[#allocation3 + $0x1d0] sm:$0xff]
    %v158 = vld [vmem:[#allocation3 + $0x1d8] sm:$0xff]
    %v159 = vld [vmem:[#allocation3 + $0x1e0] sm:$0xff]
    %v160 = vld [vmem:[#allocation3 + $0x1e8] sm:$0xff]
    %v161 = vld [vmem:[#allocation3 + $0x1f0] sm:$0xff]
    %v162 = vld [vmem:[#allocation3 + $0x1f8] sm:$0xff]
    %v163 = vpack.c.bf16 %v100, %v99
    %v164 = vpack.c.bf16 %v102, %v101
    %v165 = vpack.c.bf16 %v104, %v103
    %v166 = vpack.c.bf16 %v106, %v105
    %v167 = vpack.c.bf16 %v108, %v107
    %v168 = vpack.c.bf16 %v110, %v109
    %v169 = vpack.c.bf16 %v112, %v111
    %v170 = vpack.c.bf16 %v114, %v113
    %v171 = vpack.c.bf16 %v116, %v115
    %v172 = vpack.c.bf16 %v118, %v117
    %v173 = vpack.c.bf16 %v120, %v119
    %v174 = vpack.c.bf16 %v122, %v121
    %v175 = vpack.c.bf16 %v124, %v123
    %v176 = vpack.c.bf16 %v126, %v125
    %v177 = vpack.c.bf16 %v128, %v127
    %v178 = vpack.c.bf16 %v130, %v129
    %v179 = vpack.c.bf16 %v132, %v131
    %v180 = vpack.c.bf16 %v134, %v133
    %v181 = vpack.c.bf16 %v136, %v135
    %v182 = vpack.c.bf16 %v138, %v137
    %v183 = vpack.c.bf16 %v140, %v139
    %v184 = vpack.c.bf16 %v142, %v141
    %v185 = vpack.c.bf16 %v144, %v143
    %v186 = vpack.c.bf16 %v146, %v145
    %v187 = vpack.c.bf16 %v148, %v147
    %v188 = vpack.c.bf16 %v150, %v149
    %v189 = vpack.c.bf16 %v152, %v151
    %v190 = vpack.c.bf16 %v154, %v153
    %v191 = vpack.c.bf16 %v156, %v155
    %v192 = vpack.c.bf16 %v158, %v157
    %v193 = vpack.c.bf16 %v160, %v159
    %v194 = vpack.c.bf16 %v162, %v161
    %v195 = vld [vmem:[#allocation6] sm:$0xf]
    %v196 = vld [vmem:[#allocation6 + $0x4] sm:$0xf]
    %v197 = vld [vmem:[#allocation6 + $0x8] sm:$0xf]
    %v198 = vld [vmem:[#allocation6 + $0xc] sm:$0xf]
    %v199 = vld [vmem:[#allocation6 + $0x10] sm:$0xf]
    %v200 = vld [vmem:[#allocation6 + $0x14] sm:$0xf]
    %v201 = vld [vmem:[#allocation6 + $0x18] sm:$0xf]
    %v202 = vld [vmem:[#allocation6 + $0x1c] sm:$0xf]
    %v203 = vld [vmem:[#allocation6 + $0x20] sm:$0xf]
    %v204 = vld [vmem:[#allocation6 + $0x24] sm:$0xf]
    %v205 = vld [vmem:[#allocation6 + $0x28] sm:$0xf]
    %v206 = vld [vmem:[#allocation6 + $0x2c] sm:$0xf]
    %v207 = vld [vmem:[#allocation6 + $0x30] sm:$0xf]
    %v208 = vld [vmem:[#allocation6 + $0x34] sm:$0xf]
    %v209 = vld [vmem:[#allocation6 + $0x38] sm:$0xf]
    %v210 = vld [vmem:[#allocation6 + $0x3c] sm:$0xf]
    %v227 = vunpack.c.l.b16 %v195
    %v228 = vunpack.c.l.b16 %v196
    %v229 = vunpack.c.l.b16 %v197
    %v230 = vunpack.c.l.b16 %v198
    %v231 = vunpack.c.l.b16 %v199
    %v232 = vunpack.c.l.b16 %v200
    %v233 = vunpack.c.l.b16 %v201
    %v234 = vunpack.c.l.b16 %v202
    %v235 = vunpack.c.l.b16 %v203
    %v236 = vunpack.c.l.b16 %v204
    %v237 = vunpack.c.l.b16 %v205
    %v238 = vunpack.c.l.b16 %v206
    %v239 = vunpack.c.l.b16 %v207
    %v240 = vunpack.c.l.b16 %v208
    %v241 = vunpack.c.l.b16 %v209
    %v242 = vunpack.c.l.b16 %v210
    %v243 = vpack.c.b16 %v228, %v227
    %v244 = vpack.c.b16 %v230, %v229
    %v245 = vpack.c.b16 %v232, %v231
    %v246 = vpack.c.b16 %v234, %v233
    %v247 = vpack.c.b16 %v236, %v235
    %v248 = vpack.c.b16 %v238, %v237
    %v249 = vpack.c.b16 %v240, %v239
    %v250 = vpack.c.b16 %v242, %v241
    %259 = vmatpush.bf16.msra.mxu0 %v250
    %260 = vmatpush.bf16.msra.mxu0 %v249
    %261 = vmatpush.bf16.msra.mxu0 %v248
    %262 = vmatpush.bf16.msra.mxu0 %v247
    %263 = vmatpush.bf16.msra.mxu0 %v246
    %264 = vmatpush.bf16.msra.mxu0 %v245
    %265 = vmatpush.bf16.msra.mxu0 %v244
    %266 = vmatpush.bf16.msra.mxu0 %v243
    %267 = vmatmul.bf16.gmra.mxu0 %v163
    %v268 = vpop.f32.mrf.mxu0
    %v269 = vadd.f32 0.0, %v268
    %v270 = vpop.f32.mrf.mxu0
    %v271 = vadd.f32 0.0, %v270
    %272 = vmatmul.bf16.gmra.mxu0 %v164
    %v273 = vpop.f32.mrf.mxu0
    %v274 = vadd.f32 0.0, %v273
    %v275 = vpop.f32.mrf.mxu0
    %v276 = vadd.f32 0.0, %v275
    %277 = vmatmul.bf16.gmra.mxu0 %v165
    %v278 = vpop.f32.mrf.mxu0
    %v279 = vadd.f32 0.0, %v278
    %v280 = vpop.f32.mrf.mxu0
    %v281 = vadd.f32 0.0, %v280
    %282 = vmatmul.bf16.gmra.mxu0 %v166
    %v283 = vpop.f32.mrf.mxu0
    %v284 = vadd.f32 0.0, %v283
    %v285 = vpop.f32.mrf.mxu0
    %v286 = vadd.f32 0.0, %v285
    %287 = vmatmul.bf16.gmra.mxu0 %v167
    %v288 = vpop.f32.mrf.mxu0
    %v289 = vadd.f32 0.0, %v288
    %v290 = vpop.f32.mrf.mxu0
    %v291 = vadd.f32 0.0, %v290
    %292 = vmatmul.bf16.gmra.mxu0 %v168
    %v293 = vpop.f32.mrf.mxu0
    %v294 = vadd.f32 0.0, %v293
    %v295 = vpop.f32.mrf.mxu0
    %v296 = vadd.f32 0.0, %v295
    %297 = vmatmul.bf16.gmra.mxu0 %v169
    %v298 = vpop.f32.mrf.mxu0
    %v299 = vadd.f32 0.0, %v298
    %v300 = vpop.f32.mrf.mxu0
    %v301 = vadd.f32 0.0, %v300
    %302 = vmatmul.bf16.gmra.mxu0 %v170
    %v303 = vpop.f32.mrf.mxu0
    %v304 = vadd.f32 0.0, %v303
    %v305 = vpop.f32.mrf.mxu0
    %v306 = vadd.f32 0.0, %v305
    %307 = vmatmul.bf16.gmra.mxu0 %v171
    %v308 = vpop.f32.mrf.mxu0
    %v309 = vadd.f32 0.0, %v308
    %v310 = vpop.f32.mrf.mxu0
    %v311 = vadd.f32 0.0, %v310
    %312 = vmatmul.bf16.gmra.mxu0 %v172
    %v313 = vpop.f32.mrf.mxu0
    %v314 = vadd.f32 0.0, %v313
    %v315 = vpop.f32.mrf.mxu0
    %v316 = vadd.f32 0.0, %v315
    %317 = vmatmul.bf16.gmra.mxu0 %v173
    %v318 = vpop.f32.mrf.mxu0
    %v319 = vadd.f32 0.0, %v318
    %v320 = vpop.f32.mrf.mxu0
    %v321 = vadd.f32 0.0, %v320
    %322 = vmatmul.bf16.gmra.mxu0 %v174
    %v323 = vpop.f32.mrf.mxu0
    %v324 = vadd.f32 0.0, %v323
    %v325 = vpop.f32.mrf.mxu0
    %v326 = vadd.f32 0.0, %v325
    %327 = vmatmul.bf16.gmra.mxu0 %v175
    %v328 = vpop.f32.mrf.mxu0
    %v329 = vadd.f32 0.0, %v328
    %v330 = vpop.f32.mrf.mxu0
    %v331 = vadd.f32 0.0, %v330
    %332 = vmatmul.bf16.gmra.mxu0 %v176
    %v333 = vpop.f32.mrf.mxu0
    %v334 = vadd.f32 0.0, %v333
    %v335 = vpop.f32.mrf.mxu0
    %v336 = vadd.f32 0.0, %v335
    %337 = vmatmul.bf16.gmra.mxu0 %v177
    %v338 = vpop.f32.mrf.mxu0
    %v339 = vadd.f32 0.0, %v338
    %v340 = vpop.f32.mrf.mxu0
    %v341 = vadd.f32 0.0, %v340
    %342 = vmatmul.bf16.gmra.mxu0 %v178
    %v343 = vpop.f32.mrf.mxu0
    %v344 = vadd.f32 0.0, %v343
    %v345 = vpop.f32.mrf.mxu0
    %v346 = vadd.f32 0.0, %v345
    %347 = vmatmul.bf16.gmra.mxu0 %v179
    %v348 = vpop.f32.mrf.mxu0
    %v349 = vadd.f32 0.0, %v348
    %v350 = vpop.f32.mrf.mxu0
    %v351 = vadd.f32 0.0, %v350
    %352 = vmatmul.bf16.gmra.mxu0 %v180
    %v353 = vpop.f32.mrf.mxu0
    %v354 = vadd.f32 0.0, %v353
    %v355 = vpop.f32.mrf.mxu0
    %v356 = vadd.f32 0.0, %v355
    %357 = vmatmul.bf16.gmra.mxu0 %v181
    %v358 = vpop.f32.mrf.mxu0
    %v359 = vadd.f32 0.0, %v358
    %v360 = vpop.f32.mrf.mxu0
    %v361 = vadd.f32 0.0, %v360
    %362 = vmatmul.bf16.gmra.mxu0 %v182
    %v363 = vpop.f32.mrf.mxu0
    %v364 = vadd.f32 0.0, %v363
    %v365 = vpop.f32.mrf.mxu0
    %v366 = vadd.f32 0.0, %v365
    %367 = vmatmul.bf16.gmra.mxu0 %v183
    %v368 = vpop.f32.mrf.mxu0
    %v369 = vadd.f32 0.0, %v368
    %v370 = vpop.f32.mrf.mxu0
    %v371 = vadd.f32 0.0, %v370
    %372 = vmatmul.bf16.gmra.mxu0 %v184
    %v373 = vpop.f32.mrf.mxu0
    %v374 = vadd.f32 0.0, %v373
    %v375 = vpop.f32.mrf.mxu0
    %v376 = vadd.f32 0.0, %v375
    %377 = vmatmul.bf16.gmra.mxu0 %v185
    %v378 = vpop.f32.mrf.mxu0
    %v379 = vadd.f32 0.0, %v378
    %v380 = vpop.f32.mrf.mxu0
    %v381 = vadd.f32 0.0, %v380
    %382 = vmatmul.bf16.gmra.mxu0 %v186
    %v383 = vpop.f32.mrf.mxu0
    %v384 = vadd.f32 0.0, %v383
    %v385 = vpop.f32.mrf.mxu0
    %v386 = vadd.f32 0.0, %v385
    %387 = vmatmul.bf16.gmra.mxu0 %v187
    %v388 = vpop.f32.mrf.mxu0
    %v389 = vadd.f32 0.0, %v388
    %v390 = vpop.f32.mrf.mxu0
    %v391 = vadd.f32 0.0, %v390
    %392 = vmatmul.bf16.gmra.mxu0 %v188
    %v393 = vpop.f32.mrf.mxu0
    %v394 = vadd.f32 0.0, %v393
    %v395 = vpop.f32.mrf.mxu0
    %v396 = vadd.f32 0.0, %v395
    %397 = vmatmul.bf16.gmra.mxu0 %v189
    %v398 = vpop.f32.mrf.mxu0
    %v399 = vadd.f32 0.0, %v398
    %v400 = vpop.f32.mrf.mxu0
    %v401 = vadd.f32 0.0, %v400
    %402 = vmatmul.bf16.gmra.mxu0 %v190
    %v403 = vpop.f32.mrf.mxu0
    %v404 = vadd.f32 0.0, %v403
    %v405 = vpop.f32.mrf.mxu0
    %v406 = vadd.f32 0.0, %v405
    %407 = vmatmul.bf16.gmra.mxu0 %v191
    %v408 = vpop.f32.mrf.mxu0
    %v409 = vadd.f32 0.0, %v408
    %v410 = vpop.f32.mrf.mxu0
    %v411 = vadd.f32 0.0, %v410
    %412 = vmatmul.bf16.gmra.mxu0 %v192
    %v413 = vpop.f32.mrf.mxu0
    %v414 = vadd.f32 0.0, %v413
    %v415 = vpop.f32.mrf.mxu0
    %v416 = vadd.f32 0.0, %v415
    %417 = vmatmul.bf16.gmra.mxu0 %v193
    %v418 = vpop.f32.mrf.mxu0
    %v419 = vadd.f32 0.0, %v418
    %v420 = vpop.f32.mrf.mxu0
    %v421 = vadd.f32 0.0, %v420
    %422 = vmatmul.bf16.gmra.mxu0 %v194
    %v423 = vpop.f32.mrf.mxu0
    %v424 = vadd.f32 0.0, %v423
    %v425 = vpop.f32.mrf.mxu0
    %v426 = vadd.f32 0.0, %v425
    %427 = vdwg.mxu0
    %v428 = vld [vmem:[%s2] sm:$0x1]
    %v429 = vld [vmem:[%s3] sm:$0x1]
    %v430 = vadd.f32 %v269, %v271
    %v431 = vadd.f32 %v430, %v274
    %v432 = vadd.f32 %v431, %v276
    %v433 = vadd.f32 %v432, %v279
    %v434 = vadd.f32 %v433, %v281
    %v435 = vadd.f32 %v434, %v284
    %v436 = vadd.f32 %v435, %v286
    %v437 = vadd.f32 %v436, %v289
    %v438 = vadd.f32 %v437, %v291
    %v439 = vadd.f32 %v438, %v294
    %v440 = vadd.f32 %v439, %v296
    %v441 = vadd.f32 %v440, %v299
    %v442 = vadd.f32 %v441, %v301
    %v443 = vadd.f32 %v442, %v304
    %v444 = vadd.f32 %v443, %v306
    %v445 = vadd.f32 %v444, %v309
    %v446 = vadd.f32 %v445, %v311
    %v447 = vadd.f32 %v446, %v314
    %v448 = vadd.f32 %v447, %v316
    %v449 = vadd.f32 %v448, %v319
    %v450 = vadd.f32 %v449, %v321
    %v451 = vadd.f32 %v450, %v324
    %v452 = vadd.f32 %v451, %v326
    %v453 = vadd.f32 %v452, %v329
    %v454 = vadd.f32 %v453, %v331
    %v455 = vadd.f32 %v454, %v334
    %v456 = vadd.f32 %v455, %v336
    %v457 = vadd.f32 %v456, %v339
    %v458 = vadd.f32 %v457, %v341
    %v459 = vadd.f32 %v458, %v344
    %v460 = vadd.f32 %v459, %v346
    %v461 = vadd.f32 %v460, %v349
    %v462 = vadd.f32 %v461, %v351
    %v463 = vadd.f32 %v462, %v354
    %v464 = vadd.f32 %v463, %v356
    %v465 = vadd.f32 %v464, %v359
    %v466 = vadd.f32 %v465, %v361
    %v467 = vadd.f32 %v466, %v364
    %v468 = vadd.f32 %v467, %v366
    %v469 = vadd.f32 %v468, %v369
    %v470 = vadd.f32 %v469, %v371
    %v471 = vadd.f32 %v470, %v374
    %v472 = vadd.f32 %v471, %v376
    %v473 = vadd.f32 %v472, %v379
    %v474 = vadd.f32 %v473, %v381
    %v475 = vadd.f32 %v474, %v384
    %v476 = vadd.f32 %v475, %v386
    %v477 = vadd.f32 %v476, %v389
    %v478 = vadd.f32 %v477, %v391
    %v479 = vadd.f32 %v478, %v394
    %v480 = vadd.f32 %v479, %v396
    %v481 = vadd.f32 %v480, %v399
    %v482 = vadd.f32 %v481, %v401
    %v483 = vadd.f32 %v482, %v404
    %v484 = vadd.f32 %v483, %v406
    %v485 = vadd.f32 %v484, %v409
    %v486 = vadd.f32 %v485, %v411
    %v487 = vadd.f32 %v486, %v414
    %v488 = vadd.f32 %v487, %v416
    %v489 = vadd.f32 %v488, %v419
    %v490 = vadd.f32 %v489, %v421
    %v491 = vadd.f32 %v490, %v424
    %v492 = vadd.f32 %v491, %v426
    %v493 = vrot.slane %v492, 4
    %v494 = vadd.f32 %v492, %v493
    %v495 = vrot.slane %v494, 2
    %v496 = vadd.f32 %v494, %v495
    %v497 = vrot.slane %v496, 1
    %v498 = vadd.f32 %v496, %v497
    %v499 = vmul.f32 %v269, %v269
    %v500 = vmul.f32 %v271, %v271
    %v501 = vmul.f32 %v274, %v274
    %v502 = vmul.f32 %v276, %v276
    %v503 = vmul.f32 %v279, %v279
    %v504 = vmul.f32 %v281, %v281
    %v505 = vmul.f32 %v284, %v284
    %v506 = vmul.f32 %v286, %v286
    %v507 = vmul.f32 %v289, %v289
    %v508 = vmul.f32 %v291, %v291
    %v509 = vmul.f32 %v294, %v294
    %v510 = vmul.f32 %v296, %v296
    %v511 = vmul.f32 %v299, %v299
    %v512 = vmul.f32 %v301, %v301
    %v513 = vmul.f32 %v304, %v304
    %v514 = vmul.f32 %v306, %v306
    %v515 = vmul.f32 %v309, %v309
    %v516 = vmul.f32 %v311, %v311
    %v517 = vmul.f32 %v314, %v314
    %v518 = vmul.f32 %v316, %v316
    %v519 = vmul.f32 %v319, %v319
    %v520 = vmul.f32 %v321, %v321
    %v521 = vmul.f32 %v324, %v324
    %v522 = vmul.f32 %v326, %v326
    %v523 = vmul.f32 %v329, %v329
    %v524 = vmul.f32 %v331, %v331
    %v525 = vmul.f32 %v334, %v334
    %v526 = vmul.f32 %v336, %v336
    %v527 = vmul.f32 %v339, %v339
    %v528 = vmul.f32 %v341, %v341
    %v529 = vmul.f32 %v344, %v344
    %v530 = vmul.f32 %v346, %v346
    %v531 = vmul.f32 %v349, %v349
    %v532 = vmul.f32 %v351, %v351
    %v533 = vmul.f32 %v354, %v354
    %v534 = vmul.f32 %v356, %v356
    %v535 = vmul.f32 %v359, %v359
    %v536 = vmul.f32 %v361, %v361
    %v537 = vmul.f32 %v364, %v364
    %v538 = vmul.f32 %v366, %v366
    %v539 = vmul.f32 %v369, %v369
    %v540 = vmul.f32 %v371, %v371
    %v541 = vmul.f32 %v374, %v374
    %v542 = vmul.f32 %v376, %v376
    %v543 = vmul.f32 %v379, %v379
    %v544 = vmul.f32 %v381, %v381
    %v545 = vmul.f32 %v384, %v384
    %v546 = vmul.f32 %v386, %v386
    %v547 = vmul.f32 %v389, %v389
    %v548 = vmul.f32 %v391, %v391
    %v549 = vmul.f32 %v394, %v394
    %v550 = vmul.f32 %v396, %v396
    %v551 = vmul.f32 %v399, %v399
    %v552 = vmul.f32 %v401, %v401
    %v553 = vmul.f32 %v404, %v404
    %v554 = vmul.f32 %v406, %v406
    %v555 = vmul.f32 %v409, %v409
    %v556 = vmul.f32 %v411, %v411
    %v557 = vmul.f32 %v414, %v414
    %v558 = vmul.f32 %v416, %v416
    %v559 = vmul.f32 %v419, %v419
    %v560 = vmul.f32 %v421, %v421
    %v561 = vmul.f32 %v424, %v424
    %v562 = vmul.f32 %v426, %v426
    %v563 = vadd.f32 %v499, %v500
    %v564 = vadd.f32 %v563, %v501
    %v565 = vadd.f32 %v564, %v502
    %v566 = vadd.f32 %v565, %v503
    %v567 = vadd.f32 %v566, %v504
    %v568 = vadd.f32 %v567, %v505
    %v569 = vadd.f32 %v568, %v506
    %v570 = vadd.f32 %v569, %v507
    %v571 = vadd.f32 %v570, %v508
    %v572 = vadd.f32 %v571, %v509
    %v573 = vadd.f32 %v572, %v510
    %v574 = vadd.f32 %v573, %v511
    %v575 = vadd.f32 %v574, %v512
    %v576 = vadd.f32 %v575, %v513
    %v577 = vadd.f32 %v576, %v514
    %v578 = vadd.f32 %v577, %v515
    %v579 = vadd.f32 %v578, %v516
    %v580 = vadd.f32 %v579, %v517
    %v581 = vadd.f32 %v580, %v518
    %v582 = vadd.f32 %v581, %v519
    %v583 = vadd.f32 %v582, %v520
    %v584 = vadd.f32 %v583, %v521
    %v585 = vadd.f32 %v584, %v522
    %v586 = vadd.f32 %v585, %v523
    %v587 = vadd.f32 %v586, %v524
    %v588 = vadd.f32 %v587, %v525
    %v589 = vadd.f32 %v588, %v526
    %v590 = vadd.f32 %v589, %v527
    %v591 = vadd.f32 %v590, %v528
    %v592 = vadd.f32 %v591, %v529
    %v593 = vadd.f32 %v592, %v530
    %v594 = vadd.f32 %v593, %v531
    %v595 = vadd.f32 %v594, %v532
    %v596 = vadd.f32 %v595, %v533
    %v597 = vadd.f32 %v596, %v534
    %v598 = vadd.f32 %v597, %v535
    %v599 = vadd.f32 %v598, %v536
    %v600 = vadd.f32 %v599, %v537
    %v601 = vadd.f32 %v600, %v538
    %v602 = vadd.f32 %v601, %v539
    %v603 = vadd.f32 %v602, %v540
    %v604 = vadd.f32 %v603, %v541
    %v605 = vadd.f32 %v604, %v542
    %v606 = vadd.f32 %v605, %v543
    %v607 = vadd.f32 %v606, %v544
    %v608 = vadd.f32 %v607, %v545
    %v609 = vadd.f32 %v608, %v546
    %v610 = vadd.f32 %v609, %v547
    %v611 = vadd.f32 %v610, %v548
    %v612 = vadd.f32 %v611, %v549
    %v613 = vadd.f32 %v612, %v550
    %v614 = vadd.f32 %v613, %v551
    %v615 = vadd.f32 %v614, %v552
    %v616 = vadd.f32 %v615, %v553
    %v617 = vadd.f32 %v616, %v554
    %v618 = vadd.f32 %v617, %v555
    %v619 = vadd.f32 %v618, %v556
    %v620 = vadd.f32 %v619, %v557
    %v621 = vadd.f32 %v620, %v558
    %v622 = vadd.f32 %v621, %v559
    %v623 = vadd.f32 %v622, %v560
    %v624 = vadd.f32 %v623, %v561
    %v625 = vadd.f32 %v624, %v562
    %v626 = vrot.slane %v625, 4
    %v627 = vadd.f32 %v625, %v626
    %v628 = vrot.slane %v627, 2
    %v629 = vadd.f32 %v627, %v628
    %v630 = vrot.slane %v629, 1
    %v631 = vadd.f32 %v629, %v630
    %v632 = vmul.f32 %v498, 0.001953125
    %v633 = vmul.f32 %v631, 0.001953125
    %v634 = vmul.f32 %v632, %v632
    %v635 = vsub.f32 %v633, %v634
    %v636 = vmax.f32 %v635, 0.0
    %v637 = vadd.f32 %v636, 1e-05
    %v638 = vrsqrt.pop %v637
    %v639 = vmul.f32 %v638, %v637
    %v640 = vmul.f32 %v639, %v638
    %v641 = vmul.f32 0.5, %v640
    %v642 = vsub.f32 1.5, %v641
    %v643 = vmul.f32 %v638, %v642
    %vm644 = vweird.f32 %v637
    %vm645 = vweird.f32 %v638
    %vm646 = vmor %vm644, %vm645
    %v647 = vsel %vm646, %v638, %v643
    %v648 = vmul.f32 %v428, %v647
    %v649 = vmul.f32 %v632, %v648
    %v650 = vsub.f32 %v429, %v649
    %v652 = vperm.slane %v648, 0
    %v654 = vmul.f32 %v269, %v652
    %v655 = vmul.f32 %v271, %v652
    %v656 = vmul.f32 %v274, %v652
    %v657 = vmul.f32 %v276, %v652
    %v658 = vmul.f32 %v279, %v652
    %v659 = vmul.f32 %v281, %v652
    %v660 = vmul.f32 %v284, %v652
    %v661 = vmul.f32 %v286, %v652
    %v662 = vmul.f32 %v289, %v652
    %v663 = vmul.f32 %v291, %v652
    %v664 = vmul.f32 %v294, %v652
    %v665 = vmul.f32 %v296, %v652
    %v666 = vmul.f32 %v299, %v652
    %v667 = vmul.f32 %v301, %v652
    %v668 = vmul.f32 %v304, %v652
    %v669 = vmul.f32 %v306, %v652
    %v670 = vmul.f32 %v309, %v652
    %v671 = vmul.f32 %v311, %v652
    %v672 = vmul.f32 %v314, %v652
    %v673 = vmul.f32 %v316, %v652
    %v674 = vmul.f32 %v319, %v652
    %v675 = vmul.f32 %v321, %v652
    %v676 = vmul.f32 %v324, %v652
    %v677 = vmul.f32 %v326, %v652
    %v678 = vmul.f32 %v329, %v652
    %v679 = vmul.f32 %v331, %v652
    %v680 = vmul.f32 %v334, %v652
    %v681 = vmul.f32 %v336, %v652
    %v682 = vmul.f32 %v339, %v652
    %v683 = vmul.f32 %v341, %v652
    %v684 = vmul.f32 %v344, %v652
    %v685 = vmul.f32 %v346, %v652
    %v686 = vmul.f32 %v349, %v652
    %v687 = vmul.f32 %v351, %v652
    %v688 = vmul.f32 %v354, %v652
    %v689 = vmul.f32 %v356, %v652
    %v690 = vmul.f32 %v359, %v652
    %v691 = vmul.f32 %v361, %v652
    %v692 = vmul.f32 %v364, %v652
    %v693 = vmul.f32 %v366, %v652
    %v694 = vmul.f32 %v369, %v652
    %v695 = vmul.f32 %v371, %v652
    %v696 = vmul.f32 %v374, %v652
    %v697 = vmul.f32 %v376, %v652
    %v698 = vmul.f32 %v379, %v652
    %v699 = vmul.f32 %v381, %v652
    %v700 = vmul.f32 %v384, %v652
    %v701 = vmul.f32 %v386, %v652
    %v702 = vmul.f32 %v389, %v652
    %v703 = vmul.f32 %v391, %v652
    %v704 = vmul.f32 %v394, %v652
    %v705 = vmul.f32 %v396, %v652
    %v706 = vmul.f32 %v399, %v652
    %v707 = vmul.f32 %v401, %v652
    %v708 = vmul.f32 %v404, %v652
    %v709 = vmul.f32 %v406, %v652
    %v710 = vmul.f32 %v409, %v652
    %v711 = vmul.f32 %v411, %v652
    %v712 = vmul.f32 %v414, %v652
    %v713 = vmul.f32 %v416, %v652
    %v714 = vmul.f32 %v419, %v652
    %v715 = vmul.f32 %v421, %v652
    %v716 = vmul.f32 %v424, %v652
    %v717 = vmul.f32 %v426, %v652
    %v719 = vperm.slane %v650, 0
    %v721 = vadd.f32 %v654, %v719
    %v722 = vadd.f32 %v655, %v719
    %v723 = vadd.f32 %v656, %v719
    %v724 = vadd.f32 %v657, %v719
    %v725 = vadd.f32 %v658, %v719
    %v726 = vadd.f32 %v659, %v719
    %v727 = vadd.f32 %v660, %v719
    %v728 = vadd.f32 %v661, %v719
    %v729 = vadd.f32 %v662, %v719
    %v730 = vadd.f32 %v663, %v719
    %v731 = vadd.f32 %v664, %v719
    %v732 = vadd.f32 %v665, %v719
    %v733 = vadd.f32 %v666, %v719
    %v734 = vadd.f32 %v667, %v719
    %v735 = vadd.f32 %v668, %v719
    %v736 = vadd.f32 %v669, %v719
    %v737 = vadd.f32 %v670, %v719
    %v738 = vadd.f32 %v671, %v719
    %v739 = vadd.f32 %v672, %v719
    %v740 = vadd.f32 %v673, %v719
    %v741 = vadd.f32 %v674, %v719
    %v742 = vadd.f32 %v675, %v719
    %v743 = vadd.f32 %v676, %v719
    %v744 = vadd.f32 %v677, %v719
    %v745 = vadd.f32 %v678, %v719
    %v746 = vadd.f32 %v679, %v719
    %v747 = vadd.f32 %v680, %v719
    %v748 = vadd.f32 %v681, %v719
    %v749 = vadd.f32 %v682, %v719
    %v750 = vadd.f32 %v683, %v719
    %v751 = vadd.f32 %v684, %v719
    %v752 = vadd.f32 %v685, %v719
    %v753 = vadd.f32 %v686, %v719
    %v754 = vadd.f32 %v687, %v719
    %v755 = vadd.f32 %v688, %v719
    %v756 = vadd.f32 %v689, %v719
    %v757 = vadd.f32 %v690, %v719
    %v758 = vadd.f32 %v691, %v719
    %v759 = vadd.f32 %v692, %v719
    %v760 = vadd.f32 %v693, %v719
    %v761 = vadd.f32 %v694, %v719
    %v762 = vadd.f32 %v695, %v719
    %v763 = vadd.f32 %v696, %v719
    %v764 = vadd.f32 %v697, %v719
    %v765 = vadd.f32 %v698, %v719
    %v766 = vadd.f32 %v699, %v719
    %v767 = vadd.f32 %v700, %v719
    %v768 = vadd.f32 %v701, %v719
    %v769 = vadd.f32 %v702, %v719
    %v770 = vadd.f32 %v703, %v719
    %v771 = vadd.f32 %v704, %v719
    %v772 = vadd.f32 %v705, %v719
    %v773 = vadd.f32 %v706, %v719
    %v774 = vadd.f32 %v707, %v719
    %v775 = vadd.f32 %v708, %v719
    %v776 = vadd.f32 %v709, %v719
    %v777 = vadd.f32 %v710, %v719
    %v778 = vadd.f32 %v711, %v719
    %v779 = vadd.f32 %v712, %v719
    %v780 = vadd.f32 %v713, %v719
    %v781 = vadd.f32 %v714, %v719
    %v782 = vadd.f32 %v715, %v719
    %v783 = vadd.f32 %v716, %v719
    %v784 = vadd.f32 %v717, %v719
    %v785 = vmax.f32 %v721, 0.0
    %v786 = vmax.f32 %v722, 0.0
    %v787 = vmax.f32 %v723, 0.0
    %v788 = vmax.f32 %v724, 0.0
    %v789 = vmax.f32 %v725, 0.0
    %v790 = vmax.f32 %v726, 0.0
    %v791 = vmax.f32 %v727, 0.0
    %v792 = vmax.f32 %v728, 0.0
    %v793 = vmax.f32 %v729, 0.0
    %v794 = vmax.f32 %v730, 0.0
    %v795 = vmax.f32 %v731, 0.0
    %v796 = vmax.f32 %v732, 0.0
    %v797 = vmax.f32 %v733, 0.0
    %v798 = vmax.f32 %v734, 0.0
    %v799 = vmax.f32 %v735, 0.0
    %v800 = vmax.f32 %v736, 0.0
    %v801 = vmax.f32 %v737, 0.0
    %v802 = vmax.f32 %v738, 0.0
    %v803 = vmax.f32 %v739, 0.0
    %v804 = vmax.f32 %v740, 0.0
    %v805 = vmax.f32 %v741, 0.0
    %v806 = vmax.f32 %v742, 0.0
    %v807 = vmax.f32 %v743, 0.0
    %v808 = vmax.f32 %v744, 0.0
    %v809 = vmax.f32 %v745, 0.0
    %v810 = vmax.f32 %v746, 0.0
    %v811 = vmax.f32 %v747, 0.0
    %v812 = vmax.f32 %v748, 0.0
    %v813 = vmax.f32 %v749, 0.0
    %v814 = vmax.f32 %v750, 0.0
    %v815 = vmax.f32 %v751, 0.0
    %v816 = vmax.f32 %v752, 0.0
    %v817 = vmax.f32 %v753, 0.0
    %v818 = vmax.f32 %v754, 0.0
    %v819 = vmax.f32 %v755, 0.0
    %v820 = vmax.f32 %v756, 0.0
    %v821 = vmax.f32 %v757, 0.0
    %v822 = vmax.f32 %v758, 0.0
    %v823 = vmax.f32 %v759, 0.0
    %v824 = vmax.f32 %v760, 0.0
    %v825 = vmax.f32 %v761, 0.0
    %v826 = vmax.f32 %v762, 0.0
    %v827 = vmax.f32 %v763, 0.0
    %v828 = vmax.f32 %v764, 0.0
    %v829 = vmax.f32 %v765, 0.0
    %v830 = vmax.f32 %v766, 0.0
    %v831 = vmax.f32 %v767, 0.0
    %v832 = vmax.f32 %v768, 0.0
    %v833 = vmax.f32 %v769, 0.0
    %v834 = vmax.f32 %v770, 0.0
    %v835 = vmax.f32 %v771, 0.0
    %v836 = vmax.f32 %v772, 0.0
    %v837 = vmax.f32 %v773, 0.0
    %v838 = vmax.f32 %v774, 0.0
    %v839 = vmax.f32 %v775, 0.0
    %v840 = vmax.f32 %v776, 0.0
    %v841 = vmax.f32 %v777, 0.0
    %v842 = vmax.f32 %v778, 0.0
    %v843 = vmax.f32 %v779, 0.0
    %v844 = vmax.f32 %v780, 0.0
    %v845 = vmax.f32 %v781, 0.0
    %v846 = vmax.f32 %v782, 0.0
    %v847 = vmax.f32 %v783, 0.0
    %v848 = vmax.f32 %v784, 0.0
    %849 = vst [vmem:[#allocation2] sm:$0xff] 0.0
    %850 = vst [vmem:[#allocation2 + $0x8] sm:$0xff] 0.0
    %851 = vst [vmem:[#allocation2 + $0x10] sm:$0x3] 0.0
    %852 = vst [vmem:[#allocation2 + $0x18] sm:$0xff] 0.0
    %853 = vst [vmem:[#allocation2 + $0x20] sm:$0xff] 0.0
    %854 = vst [vmem:[#allocation2 + $0x28] sm:$0x3] 0.0
    %855 = vst [vmem:[#allocation2 + $0x30] sm:$0xff] 0.0
    %856 = vst [vmem:[#allocation2 + $0x38] sm:$0xff] 0.0
    %857 = vst [vmem:[#allocation2 + $0x40] sm:$0x3] 0.0
    %858 = vst [vmem:[#allocation2 + $0x48] sm:$0xff] 0.0
    %859 = vst [vmem:[#allocation2 + $0x50] sm:$0xff] 0.0
    %860 = vst [vmem:[#allocation2 + $0x58] sm:$0x3] 0.0
    %861 = vst [vmem:[#allocation2 + $0x60] sm:$0xff] 0.0
    %862 = vst [vmem:[#allocation2 + $0x68] sm:$0xff] 0.0
    %863 = vst [vmem:[#allocation2 + $0x70] sm:$0x3] 0.0
    %864 = vst [vmem:[#allocation2 + $0x78] sm:$0xff] 0.0
    %865 = vst [vmem:[#allocation2 + $0x80] sm:$0xff] 0.0
    %866 = vst [vmem:[#allocation2 + $0x88] sm:$0x3] 0.0
    %867 = vst [vmem:[#allocation2 + $0x90] sm:$0xff] 0.0
    %868 = vst [vmem:[#allocation2 + $0x98] sm:$0xff] 0.0
    %869 = vst [vmem:[#allocation2 + $0xa0] sm:$0x3] 0.0
    %870 = vst [vmem:[#allocation2 + $0xa8] sm:$0xff] 0.0
    %871 = vst [vmem:[#allocation2 + $0xb0] sm:$0xff] 0.0
    %872 = vst [vmem:[#allocation2 + $0xb8] sm:$0x3] 0.0
    %873 = vst [vmem:[#allocation2 + $0xc0] sm:$0xff] 0.0
    %874 = vst [vmem:[#allocation2 + $0xc8] sm:$0xff] 0.0
    %875 = vst [vmem:[#allocation2 + $0xd0] sm:$0x3] 0.0
    %876 = vst [vmem:[#allocation2 + $0xd8] sm:$0xff] 0.0
    %877 = vst [vmem:[#allocation2 + $0xe0] sm:$0xff] 0.0
    %878 = vst [vmem:[#allocation2 + $0xe8] sm:$0x3] 0.0
    %879 = vst [vmem:[#allocation2 + $0xf0] sm:$0xff] 0.0
    %880 = vst [vmem:[#allocation2 + $0xf8] sm:$0xff] 0.0
    %881 = vst [vmem:[#allocation2 + $0x100] sm:$0x3] 0.0
    %882 = vst [vmem:[#allocation2 + $0x108] sm:$0xff] 0.0
    %883 = vst [vmem:[#allocation2 + $0x110] sm:$0xff] 0.0
    %884 = vst [vmem:[#allocation2 + $0x118] sm:$0x3] 0.0
    %885 = vst [vmem:[#allocation2 + $0x120] sm:$0xff] 0.0
    %886 = vst [vmem:[#allocation2 + $0x128] sm:$0xff] 0.0
    %887 = vst [vmem:[#allocation2 + $0x130] sm:$0x3] 0.0
    %888 = vst [vmem:[#allocation2 + $0x138] sm:$0xff] 0.0
    %889 = vst [vmem:[#allocation2 + $0x140] sm:$0xff] 0.0
    %890 = vst [vmem:[#allocation2 + $0x148] sm:$0x3] 0.0
    %891 = vst [vmem:[#allocation2 + $0x150] sm:$0xff] 0.0
    %892 = vst [vmem:[#allocation2 + $0x158] sm:$0xff] 0.0
    %893 = vst [vmem:[#allocation2 + $0x160] sm:$0x3] 0.0
    %894 = vst [vmem:[#allocation2 + $0x168] sm:$0xff] 0.0
    %895 = vst [vmem:[#allocation2 + $0x170] sm:$0xff] 0.0
    %896 = vst [vmem:[#allocation2 + $0x178] sm:$0x3] 0.0
    %897 = vst [vmem:[#allocation2 + $0x180] sm:$0xff] 0.0
    %898 = vst [vmem:[#allocation2 + $0x188] sm:$0xff] 0.0
    %899 = vst [vmem:[#allocation2 + $0x190] sm:$0x3] 0.0
    %900 = vst [vmem:[#allocation2 + $0x198] sm:$0xff] 0.0
    %901 = vst [vmem:[#allocation2 + $0x1a0] sm:$0xff] 0.0
    %902 = vst [vmem:[#allocation2 + $0x1a8] sm:$0x3] 0.0
    %903 = vst [vmem:[#allocation2 + $0x1b0] sm:$0xff] 0.0
    %904 = vst [vmem:[#allocation2 + $0x1b8] sm:$0xff] 0.0
    %905 = vst [vmem:[#allocation2 + $0x1c0] sm:$0x3] 0.0
    %906 = vst [vmem:[#allocation2 + $0x1c8] sm:$0xff] 0.0
    %907 = vst [vmem:[#allocation2 + $0x1d0] sm:$0xff] 0.0
    %908 = vst [vmem:[#allocation2 + $0x1d8] sm:$0x3] 0.0
    %909 = vst [vmem:[#allocation2 + $0x1e0] sm:$0xff] 0.0
    %910 = vst [vmem:[#allocation2 + $0x1e8] sm:$0xff] 0.0
    %911 = vst [vmem:[#allocation2 + $0x1f0] sm:$0x3] 0.0
    %912 = vst [vmem:[#allocation2 + $0x1f8] sm:$0xff] 0.0
    %913 = vst [vmem:[#allocation2 + $0x200] sm:$0xff] 0.0
    %914 = vst [vmem:[#allocation2 + $0x208] sm:$0x3] 0.0
    %915 = vst [vmem:[#allocation2 + $0x210] sm:$0xff] 0.0
    %916 = vst [vmem:[#allocation2 + $0x218] sm:$0xff] 0.0
    %917 = vst [vmem:[#allocation2 + $0x220] sm:$0x3] 0.0
    %918 = vst [vmem:[#allocation2 + $0x228] sm:$0xff] 0.0
    %919 = vst [vmem:[#allocation2 + $0x230] sm:$0xff] 0.0
    %920 = vst [vmem:[#allocation2 + $0x238] sm:$0x3] 0.0
    %921 = vst [vmem:[#allocation2 + $0x240] sm:$0xff] 0.0
    %922 = vst [vmem:[#allocation2 + $0x248] sm:$0xff] 0.0
    %923 = vst [vmem:[#allocation2 + $0x250] sm:$0x3] 0.0
    %924 = vst [vmem:[#allocation2 + $0x258] sm:$0xff] 0.0
    %925 = vst [vmem:[#allocation2 + $0x260] sm:$0xff] 0.0
    %926 = vst [vmem:[#allocation2 + $0x268] sm:$0x3] 0.0
    %927 = vst [vmem:[#allocation2 + $0x270] sm:$0xff] 0.0
    %928 = vst [vmem:[#allocation2 + $0x278] sm:$0xff] 0.0
    %929 = vst [vmem:[#allocation2 + $0x280] sm:$0x3] 0.0
    %930 = vst [vmem:[#allocation2 + $0x288] sm:$0xff] 0.0
    %931 = vst [vmem:[#allocation2 + $0x290] sm:$0xff] 0.0
    %932 = vst [vmem:[#allocation2 + $0x298] sm:$0x3] 0.0
    %933 = vst [vmem:[#allocation2 + $0x2a0] sm:$0xff] 0.0
    %934 = vst [vmem:[#allocation2 + $0x2a8] sm:$0xff] 0.0
    %935 = vst [vmem:[#allocation2 + $0x2b0] sm:$0x3] 0.0
    %936 = vst [vmem:[#allocation2 + $0x2b8] sm:$0xff] 0.0
    %937 = vst [vmem:[#allocation2 + $0x2c0] sm:$0xff] 0.0
    %938 = vst [vmem:[#allocation2 + $0x2c8] sm:$0x3] 0.0
    %939 = vst [vmem:[#allocation2 + $0x2d0] sm:$0xff] 0.0
    %940 = vst [vmem:[#allocation2 + $0x2d8] sm:$0xff] 0.0
    %941 = vst [vmem:[#allocation2 + $0x2e0] sm:$0x3] 0.0
    %942 = vst [vmem:[#allocation2 + $0x2e8] sm:$0xff] 0.0
    %943 = vst [vmem:[#allocation2 + $0x2f0] sm:$0xff] 0.0
    %944 = vst [vmem:[#allocation2 + $0x2f8] sm:$0x3] 0.0
    %945 = vst [vmem:[#allocation2 + $0x300] sm:$0xff] 0.0
    %946 = vst [vmem:[#allocation2 + $0x308] sm:$0xff] 0.0
    %947 = vst [vmem:[#allocation2 + $0x310] sm:$0x3] 0.0
    %948 = vst [vmem:[#allocation2 + $0x318] sm:$0xff] 0.0
    %949 = vst [vmem:[#allocation2 + $0x320] sm:$0xff] 0.0
    %950 = vst [vmem:[#allocation2 + $0x328] sm:$0x3] 0.0
    %951 = vst [vmem:[#allocation2 + $0x330] sm:$0xff] 0.0
    %952 = vst [vmem:[#allocation2 + $0x338] sm:$0xff] 0.0
    %953 = vst [vmem:[#allocation2 + $0x340] sm:$0x3] 0.0
    %954 = vst [vmem:[#allocation2 + $0x348] sm:$0xff] 0.0
    %955 = vst [vmem:[#allocation2 + $0x350] sm:$0xff] 0.0
    %956 = vst [vmem:[#allocation2 + $0x358] sm:$0x3] 0.0
    %s957 = scalar_lea.vmem [#allocation2], 24
    %958 = vst [vmem:[%s957 + $0x1] sm:$0xff] %v785
    %959 = vst [vmem:[%s957 + $0x9] sm:$0xff] %v786
    %960 = vst [vmem:[%s957 + $0x19] sm:$0xff] %v787
    %961 = vst [vmem:[%s957 + $0x21] sm:$0xff] %v788
    %962 = vst [vmem:[%s957 + $0x31] sm:$0xff] %v789
    %963 = vst [vmem:[%s957 + $0x39] sm:$0xff] %v790
    %964 = vst [vmem:[%s957 + $0x49] sm:$0xff] %v791
    %965 = vst [vmem:[%s957 + $0x51] sm:$0xff] %v792
    %966 = vst [vmem:[%s957 + $0x61] sm:$0xff] %v793
    %967 = vst [vmem:[%s957 + $0x69] sm:$0xff] %v794
    %968 = vst [vmem:[%s957 + $0x79] sm:$0xff] %v795
    %969 = vst [vmem:[%s957 + $0x81] sm:$0xff] %v796
    %970 = vst [vmem:[%s957 + $0x91] sm:$0xff] %v797
    %971 = vst [vmem:[%s957 + $0x99] sm:$0xff] %v798
    %972 = vst [vmem:[%s957 + $0xa9] sm:$0xff] %v799
    %973 = vst [vmem:[%s957 + $0xb1] sm:$0xff] %v800
    %974 = vst [vmem:[%s957 + $0xc1] sm:$0xff] %v801
    %975 = vst [vmem:[%s957 + $0xc9] sm:$0xff] %v802
    %976 = vst [vmem:[%s957 + $0xd9] sm:$0xff] %v803
    %977 = vst [vmem:[%s957 + $0xe1] sm:$0xff] %v804
    %978 = vst [vmem:[%s957 + $0xf1] sm:$0xff] %v805
    %979 = vst [vmem:[%s957 + $0xf9] sm:$0xff] %v806
    %980 = vst [vmem:[%s957 + $0x109] sm:$0xff] %v807
    %981 = vst [vmem:[%s957 + $0x111] sm:$0xff] %v808
    %982 = vst [vmem:[%s957 + $0x121] sm:$0xff] %v809
    %983 = vst [vmem:[%s957 + $0x129] sm:$0xff] %v810
    %984 = vst [vmem:[%s957 + $0x139] sm:$0xff] %v811
    %985 = vst [vmem:[%s957 + $0x141] sm:$0xff] %v812
    %986 = vst [vmem:[%s957 + $0x151] sm:$0xff] %v813
    %987 = vst [vmem:[%s957 + $0x159] sm:$0xff] %v814
    %988 = vst [vmem:[%s957 + $0x169] sm:$0xff] %v815
    %989 = vst [vmem:[%s957 + $0x171] sm:$0xff] %v816
    %s990 = scalar_lea.vmem [#allocation2], 456
    %991 = vst [vmem:[%s990 + $0x1] sm:$0xff] %v817
    %992 = vst [vmem:[%s990 + $0x9] sm:$0xff] %v818
    %993 = vst [vmem:[%s990 + $0x19] sm:$0xff] %v819
    %994 = vst [vmem:[%s990 + $0x21] sm:$0xff] %v820
    %995 = vst [vmem:[%s990 + $0x31] sm:$0xff] %v821
    %996 = vst [vmem:[%s990 + $0x39] sm:$0xff] %v822
    %997 = vst [vmem:[%s990 + $0x49] sm:$0xff] %v823
    %998 = vst [vmem:[%s990 + $0x51] sm:$0xff] %v824
    %999 = vst [vmem:[%s990 + $0x61] sm:$0xff] %v825
    %1000 = vst [vmem:[%s990 + $0x69] sm:$0xff] %v826
    %1001 = vst [vmem:[%s990 + $0x79] sm:$0xff] %v827
    %1002 = vst [vmem:[%s990 + $0x81] sm:$0xff] %v828
    %1003 = vst [vmem:[%s990 + $0x91] sm:$0xff] %v829
    %1004 = vst [vmem:[%s990 + $0x99] sm:$0xff] %v830
    %1005 = vst [vmem:[%s990 + $0xa9] sm:$0xff] %v831
    %1006 = vst [vmem:[%s990 + $0xb1] sm:$0xff] %v832
    %1007 = vst [vmem:[%s990 + $0xc1] sm:$0xff] %v833
    %1008 = vst [vmem:[%s990 + $0xc9] sm:$0xff] %v834
    %1009 = vst [vmem:[%s990 + $0xd9] sm:$0xff] %v835
    %1010 = vst [vmem:[%s990 + $0xe1] sm:$0xff] %v836
    %1011 = vst [vmem:[%s990 + $0xf1] sm:$0xff] %v837
    %1012 = vst [vmem:[%s990 + $0xf9] sm:$0xff] %v838
    %1013 = vst [vmem:[%s990 + $0x109] sm:$0xff] %v839
    %1014 = vst [vmem:[%s990 + $0x111] sm:$0xff] %v840
    %1015 = vst [vmem:[%s990 + $0x121] sm:$0xff] %v841
    %1016 = vst [vmem:[%s990 + $0x129] sm:$0xff] %v842
    %1017 = vst [vmem:[%s990 + $0x139] sm:$0xff] %v843
    %1018 = vst [vmem:[%s990 + $0x141] sm:$0xff] %v844
    %1019 = vst [vmem:[%s990 + $0x151] sm:$0xff] %v845
    %1020 = vst [vmem:[%s990 + $0x159] sm:$0xff] %v846
    %1021 = vst [vmem:[%s990 + $0x169] sm:$0xff] %v847
    %1022 = vst [vmem:[%s990 + $0x171] sm:$0xff] %v848
    %v1023 = vld [vmem:[#allocation2] sm:$0xff]
    %v1024 = vld [vmem:[#allocation2 + $0x8] sm:$0xff]
    %v1025 = vld [vmem:[#allocation2 + $0x18] sm:$0xff]
    %v1026 = vld [vmem:[#allocation2 + $0x20] sm:$0xff]
    %v1027 = vld [vmem:[#allocation2 + $0x30] sm:$0xff]
    %v1028 = vld [vmem:[#allocation2 + $0x38] sm:$0xff]
    %v1029 = vld [vmem:[#allocation2 + $0x48] sm:$0xff]
    %v1030 = vld [vmem:[#allocation2 + $0x50] sm:$0xff]
    %v1031 = vld [vmem:[#allocation2 + $0x60] sm:$0xff]
    %v1032 = vld [vmem:[#allocation2 + $0x68] sm:$0xff]
    %v1033 = vld [vmem:[#allocation2 + $0x78] sm:$0xff]
    %v1034 = vld [vmem:[#allocation2 + $0x80] sm:$0xff]
    %v1035 = vld [vmem:[#allocation2 + $0x90] sm:$0xff]
    %v1036 = vld [vmem:[#allocation2 + $0x98] sm:$0xff]
    %v1037 = vld [vmem:[#allocation2 + $0xa8] sm:$0xff]
    %v1038 = vld [vmem:[#allocation2 + $0xb0] sm:$0xff]
    %v1039 = vld [vmem:[#allocation2 + $0xc0] sm:$0xff]
    %v1040 = vld [vmem:[#allocation2 + $0xc8] sm:$0xff]
    %v1041 = vld [vmem:[#allocation2 + $0xd8] sm:$0xff]
    %v1042 = vld [vmem:[#allocation2 + $0xe0] sm:$0xff]
    %v1043 = vld [vmem:[#allocation2 + $0xf0] sm:$0xff]
    %v1044 = vld [vmem:[#allocation2 + $0xf8] sm:$0xff]
    %v1045 = vld [vmem:[#allocation2 + $0x108] sm:$0xff]
    %v1046 = vld [vmem:[#allocation2 + $0x110] sm:$0xff]
    %v1047 = vld [vmem:[#allocation2 + $0x120] sm:$0xff]
    %v1048 = vld [vmem:[#allocation2 + $0x128] sm:$0xff]
    %v1049 = vld [vmem:[#allocation2 + $0x138] sm:$0xff]
    %v1050 = vld [vmem:[#allocation2 + $0x140] sm:$0xff]
    %v1051 = vld [vmem:[#allocation2 + $0x150] sm:$0xff]
    %v1052 = vld [vmem:[#allocation2 + $0x158] sm:$0xff]
    %v1053 = vld [vmem:[#allocation2 + $0x168] sm:$0xff]
    %v1054 = vld [vmem:[#allocation2 + $0x170] sm:$0xff]
    %v1055 = vpack.c.bf16 %v1023, %v1023
    %v1056 = vpack.c.bf16 %v1024, %v1024
    %v1057 = vpack.c.bf16 %v1025, %v1025
    %v1058 = vpack.c.bf16 %v1026, %v1026
    %v1059 = vpack.c.bf16 %v1027, %v1027
    %v1060 = vpack.c.bf16 %v1028, %v1028
    %v1061 = vpack.c.bf16 %v1029, %v1029
    %v1062 = vpack.c.bf16 %v1030, %v1030
    %v1063 = vpack.c.bf16 %v1031, %v1031
    %v1064 = vpack.c.bf16 %v1032, %v1032
    %v1065 = vpack.c.bf16 %v1033, %v1033
    %v1066 = vpack.c.bf16 %v1034, %v1034
    %v1067 = vpack.c.bf16 %v1035, %v1035
    %v1068 = vpack.c.bf16 %v1036, %v1036
    %v1069 = vpack.c.bf16 %v1037, %v1037
    %v1070 = vpack.c.bf16 %v1038, %v1038
    %v1071 = vpack.c.bf16 %v1039, %v1039
    %v1072 = vpack.c.bf16 %v1040, %v1040
    %v1073 = vpack.c.bf16 %v1041, %v1041
    %v1074 = vpack.c.bf16 %v1042, %v1042
    %v1075 = vpack.c.bf16 %v1043, %v1043
    %v1076 = vpack.c.bf16 %v1044, %v1044
    %v1077 = vpack.c.bf16 %v1045, %v1045
    %v1078 = vpack.c.bf16 %v1046, %v1046
    %v1079 = vpack.c.bf16 %v1047, %v1047
    %v1080 = vpack.c.bf16 %v1048, %v1048
    %v1081 = vpack.c.bf16 %v1049, %v1049
    %v1082 = vpack.c.bf16 %v1050, %v1050
    %v1083 = vpack.c.bf16 %v1051, %v1051
    %v1084 = vpack.c.bf16 %v1052, %v1052
    %v1085 = vpack.c.bf16 %v1053, %v1053
    %v1086 = vpack.c.bf16 %v1054, %v1054
    %s1087 = scalar_lea.vmem [#allocation2], 432
    %v1088 = vld [vmem:[%s1087] sm:$0xff]
    %v1089 = vld [vmem:[%s1087 + $0x8] sm:$0xff]
    %v1090 = vld [vmem:[%s1087 + $0x18] sm:$0xff]
    %v1091 = vld [vmem:[%s1087 + $0x20] sm:$0xff]
    %v1092 = vld [vmem:[%s1087 + $0x30] sm:$0xff]
    %v1093 = vld [vmem:[%s1087 + $0x38] sm:$0xff]
    %v1094 = vld [vmem:[%s1087 + $0x48] sm:$0xff]
    %v1095 = vld [vmem:[%s1087 + $0x50] sm:$0xff]
    %v1096 = vld [vmem:[%s1087 + $0x60] sm:$0xff]
    %v1097 = vld [vmem:[%s1087 + $0x68] sm:$0xff]
    %v1098 = vld [vmem:[%s1087 + $0x78] sm:$0xff]
    %v1099 = vld [vmem:[%s1087 + $0x80] sm:$0xff]
    %v1100 = vld [vmem:[%s1087 + $0x90] sm:$0xff]
    %v1101 = vld [vmem:[%s1087 + $0x98] sm:$0xff]
    %v1102 = vld [vmem:[%s1087 + $0xa8] sm:$0xff]
    %v1103 = vld [vmem:[%s1087 + $0xb0] sm:$0xff]
    %v1104 = vld [vmem:[%s1087 + $0xc0] sm:$0xff]
    %v1105 = vld [vmem:[%s1087 + $0xc8] sm:$0xff]
    %v1106 = vld [vmem:[%s1087 + $0xd8] sm:$0xff]
    %v1107 = vld [vmem:[%s1087 + $0xe0] sm:$0xff]
    %v1108 = vld [vmem:[%s1087 + $0xf0] sm:$0xff]
    %v1109 = vld [vmem:[%s1087 + $0xf8] sm:$0xff]
    %v1110 = vld [vmem:[%s1087 + $0x108] sm:$0xff]
    %v1111 = vld [vmem:[%s1087 + $0x110] sm:$0xff]
    %v1112 = vld [vmem:[%s1087 + $0x120] sm:$0xff]
    %v1113 = vld [vmem:[%s1087 + $0x128] sm:$0xff]
    %v1114 = vld [vmem:[%s1087 + $0x138] sm:$0xff]
    %v1115 = vld [vmem:[%s1087 + $0x140] sm:$0xff]
    %v1116 = vld [vmem:[%s1087 + $0x150] sm:$0xff]
    %v1117 = vld [vmem:[%s1087 + $0x158] sm:$0xff]
    %v1118 = vld [vmem:[%s1087 + $0x168] sm:$0xff]
    %v1119 = vld [vmem:[%s1087 + $0x170] sm:$0xff]
    %v1120 = vpack.c.bf16 %v1088, %v1088
    %v1121 = vpack.c.bf16 %v1089, %v1089
    %v1122 = vpack.c.bf16 %v1090, %v1090
    %v1123 = vpack.c.bf16 %v1091, %v1091
    %v1124 = vpack.c.bf16 %v1092, %v1092
    %v1125 = vpack.c.bf16 %v1093, %v1093
    %v1126 = vpack.c.bf16 %v1094, %v1094
    %v1127 = vpack.c.bf16 %v1095, %v1095
    %v1128 = vpack.c.bf16 %v1096, %v1096
    %v1129 = vpack.c.bf16 %v1097, %v1097
    %v1130 = vpack.c.bf16 %v1098, %v1098
    %v1131 = vpack.c.bf16 %v1099, %v1099
    %v1132 = vpack.c.bf16 %v1100, %v1100
    %v1133 = vpack.c.bf16 %v1101, %v1101
    %v1134 = vpack.c.bf16 %v1102, %v1102
    %v1135 = vpack.c.bf16 %v1103, %v1103
    %v1136 = vpack.c.bf16 %v1104, %v1104
    %v1137 = vpack.c.bf16 %v1105, %v1105
    %v1138 = vpack.c.bf16 %v1106, %v1106
    %v1139 = vpack.c.bf16 %v1107, %v1107
    %v1140 = vpack.c.bf16 %v1108, %v1108
    %v1141 = vpack.c.bf16 %v1109, %v1109
    %v1142 = vpack.c.bf16 %v1110, %v1110
    %v1143 = vpack.c.bf16 %v1111, %v1111
    %v1144 = vpack.c.bf16 %v1112, %v1112
    %v1145 = vpack.c.bf16 %v1113, %v1113
    %v1146 = vpack.c.bf16 %v1114, %v1114
    %v1147 = vpack.c.bf16 %v1115, %v1115
    %v1148 = vpack.c.bf16 %v1116, %v1116
    %v1149 = vpack.c.bf16 %v1117, %v1117
    %v1150 = vpack.c.bf16 %v1118, %v1118
    %v1151 = vpack.c.bf16 %v1119, %v1119
    %v1184 = vunpack.c.l.b16 %v1055
    %v1185 = vunpack.c.l.b16 %v1056
    %v1186 = vunpack.c.l.b16 %v1057
    %v1187 = vunpack.c.l.b16 %v1058
    %v1188 = vunpack.c.l.b16 %v1059
    %v1189 = vunpack.c.l.b16 %v1060
    %v1190 = vunpack.c.l.b16 %v1061
    %v1191 = vunpack.c.l.b16 %v1062
    %v1192 = vunpack.c.l.b16 %v1063
    %v1193 = vunpack.c.l.b16 %v1064
    %v1194 = vunpack.c.l.b16 %v1065
    %v1195 = vunpack.c.l.b16 %v1066
    %v1196 = vunpack.c.l.b16 %v1067
    %v1197 = vunpack.c.l.b16 %v1068
    %v1198 = vunpack.c.l.b16 %v1069
    %v1199 = vunpack.c.l.b16 %v1070
    %v1200 = vunpack.c.l.b16 %v1071
    %v1201 = vunpack.c.l.b16 %v1072
    %v1202 = vunpack.c.l.b16 %v1073
    %v1203 = vunpack.c.l.b16 %v1074
    %v1204 = vunpack.c.l.b16 %v1075
    %v1205 = vunpack.c.l.b16 %v1076
    %v1206 = vunpack.c.l.b16 %v1077
    %v1207 = vunpack.c.l.b16 %v1078
    %v1208 = vunpack.c.l.b16 %v1079
    %v1209 = vunpack.c.l.b16 %v1080
    %v1210 = vunpack.c.l.b16 %v1081
    %v1211 = vunpack.c.l.b16 %v1082
    %v1212 = vunpack.c.l.b16 %v1083
    %v1213 = vunpack.c.l.b16 %v1084
    %v1214 = vunpack.c.l.b16 %v1085
    %v1215 = vunpack.c.l.b16 %v1086
    %v1216 = vpack.c.b16 %v1185, %v1184
    %v1217 = vpack.c.b16 %v1187, %v1186
    %v1218 = vpack.c.b16 %v1189, %v1188
    %v1219 = vpack.c.b16 %v1191, %v1190
    %v1220 = vpack.c.b16 %v1193, %v1192
    %v1221 = vpack.c.b16 %v1195, %v1194
    %v1222 = vpack.c.b16 %v1197, %v1196
    %v1223 = vpack.c.b16 %v1199, %v1198
    %v1224 = vpack.c.b16 %v1201, %v1200
    %v1225 = vpack.c.b16 %v1203, %v1202
    %v1226 = vpack.c.b16 %v1205, %v1204
    %v1227 = vpack.c.b16 %v1207, %v1206
    %v1228 = vpack.c.b16 %v1209, %v1208
    %v1229 = vpack.c.b16 %v1211, %v1210
    %v1230 = vpack.c.b16 %v1213, %v1212
    %v1231 = vpack.c.b16 %v1215, %v1214
    %v1280 = vunpack.c.l.b16 %v1120
    %v1281 = vunpack.c.l.b16 %v1121
    %v1282 = vunpack.c.l.b16 %v1122
    %v1283 = vunpack.c.l.b16 %v1123
    %v1284 = vunpack.c.l.b16 %v1124
    %v1285 = vunpack.c.l.b16 %v1125
    %v1286 = vunpack.c.l.b16 %v1126
    %v1287 = vunpack.c.l.b16 %v1127
    %v1288 = vunpack.c.l.b16 %v1128
    %v1289 = vunpack.c.l.b16 %v1129
    %v1290 = vunpack.c.l.b16 %v1130
    %v1291 = vunpack.c.l.b16 %v1131
    %v1292 = vunpack.c.l.b16 %v1132
    %v1293 = vunpack.c.l.b16 %v1133
    %v1294 = vunpack.c.l.b16 %v1134
    %v1295 = vunpack.c.l.b16 %v1135
    %v1296 = vunpack.c.l.b16 %v1136
    %v1297 = vunpack.c.l.b16 %v1137
    %v1298 = vunpack.c.l.b16 %v1138
    %v1299 = vunpack.c.l.b16 %v1139
    %v1300 = vunpack.c.l.b16 %v1140
    %v1301 = vunpack.c.l.b16 %v1141
    %v1302 = vunpack.c.l.b16 %v1142
    %v1303 = vunpack.c.l.b16 %v1143
    %v1304 = vunpack.c.l.b16 %v1144
    %v1305 = vunpack.c.l.b16 %v1145
    %v1306 = vunpack.c.l.b16 %v1146
    %v1307 = vunpack.c.l.b16 %v1147
    %v1308 = vunpack.c.l.b16 %v1148
    %v1309 = vunpack.c.l.b16 %v1149
    %v1310 = vunpack.c.l.b16 %v1150
    %v1311 = vunpack.c.l.b16 %v1151
    %v1312 = vpack.c.b16 %v1281, %v1280
    %v1313 = vpack.c.b16 %v1283, %v1282
    %v1314 = vpack.c.b16 %v1285, %v1284
    %v1315 = vpack.c.b16 %v1287, %v1286
    %v1316 = vpack.c.b16 %v1289, %v1288
    %v1317 = vpack.c.b16 %v1291, %v1290
    %v1318 = vpack.c.b16 %v1293, %v1292
    %v1319 = vpack.c.b16 %v1295, %v1294
    %v1320 = vpack.c.b16 %v1297, %v1296
    %v1321 = vpack.c.b16 %v1299, %v1298
    %v1322 = vpack.c.b16 %v1301, %v1300
    %v1323 = vpack.c.b16 %v1303, %v1302
    %v1324 = vpack.c.b16 %v1305, %v1304
    %v1325 = vpack.c.b16 %v1307, %v1306
    %v1326 = vpack.c.b16 %v1309, %v1308
    %v1327 = vpack.c.b16 %v1311, %v1310
    %v1344 = vld [vmem:[#allocation2 + $0x1] sm:$0xff]
    %v1345 = vld [vmem:[#allocation2 + $0x9] sm:$0xff]
    %v1346 = vld [vmem:[#allocation2 + $0x19] sm:$0xff]
    %v1347 = vld [vmem:[#allocation2 + $0x21] sm:$0xff]
    %v1348 = vld [vmem:[#allocation2 + $0x31] sm:$0xff]
    %v1349 = vld [vmem:[#allocation2 + $0x39] sm:$0xff]
    %v1350 = vld [vmem:[#allocation2 + $0x49] sm:$0xff]
    %v1351 = vld [vmem:[#allocation2 + $0x51] sm:$0xff]
    %v1352 = vld [vmem:[#allocation2 + $0x61] sm:$0xff]
    %v1353 = vld [vmem:[#allocation2 + $0x69] sm:$0xff]
    %v1354 = vld [vmem:[#allocation2 + $0x79] sm:$0xff]
    %v1355 = vld [vmem:[#allocation2 + $0x81] sm:$0xff]
    %v1356 = vld [vmem:[#allocation2 + $0x91] sm:$0xff]
    %v1357 = vld [vmem:[#allocation2 + $0x99] sm:$0xff]
    %v1358 = vld [vmem:[#allocation2 + $0xa9] sm:$0xff]
    %v1359 = vld [vmem:[#allocation2 + $0xb1] sm:$0xff]
    %v1360 = vld [vmem:[#allocation2 + $0xc1] sm:$0xff]
    %v1361 = vld [vmem:[#allocation2 + $0xc9] sm:$0xff]
    %v1362 = vld [vmem:[#allocation2 + $0xd9] sm:$0xff]
    %v1363 = vld [vmem:[#allocation2 + $0xe1] sm:$0xff]
    %v1364 = vld [vmem:[#allocation2 + $0xf1] sm:$0xff]
    %v1365 = vld [vmem:[#allocation2 + $0xf9] sm:$0xff]
    %v1366 = vld [vmem:[#allocation2 + $0x109] sm:$0xff]
    %v1367 = vld [vmem:[#allocation2 + $0x111] sm:$0xff]
    %v1368 = vld [vmem:[#allocation2 + $0x121] sm:$0xff]
    %v1369 = vld [vmem:[#allocation2 + $0x129] sm:$0xff]
    %v1370 = vld [vmem:[#allocation2 + $0x139] sm:$0xff]
    %v1371 = vld [vmem:[#allocation2 + $0x141] sm:$0xff]
    %v1372 = vld [vmem:[#allocation2 + $0x151] sm:$0xff]
    %v1373 = vld [vmem:[#allocation2 + $0x159] sm:$0xff]
    %v1374 = vld [vmem:[#allocation2 + $0x169] sm:$0xff]
    %v1375 = vld [vmem:[#allocation2 + $0x171] sm:$0xff]
    %v1376 = vpack.c.bf16 %v1344, %v1344
    %v1377 = vpack.c.bf16 %v1345, %v1345
    %v1378 = vpack.c.bf16 %v1346, %v1346
    %v1379 = vpack.c.bf16 %v1347, %v1347
    %v1380 = vpack.c.bf16 %v1348, %v1348
    %v1381 = vpack.c.bf16 %v1349, %v1349
    %v1382 = vpack.c.bf16 %v1350, %v1350
    %v1383 = vpack.c.bf16 %v1351, %v1351
    %v1384 = vpack.c.bf16 %v1352, %v1352
    %v1385 = vpack.c.bf16 %v1353, %v1353
    %v1386 = vpack.c.bf16 %v1354, %v1354
    %v1387 = vpack.c.bf16 %v1355, %v1355
    %v1388 = vpack.c.bf16 %v1356, %v1356
    %v1389 = vpack.c.bf16 %v1357, %v1357
    %v1390 = vpack.c.bf16 %v1358, %v1358
    %v1391 = vpack.c.bf16 %v1359, %v1359
    %v1392 = vpack.c.bf16 %v1360, %v1360
    %v1393 = vpack.c.bf16 %v1361, %v1361
    %v1394 = vpack.c.bf16 %v1362, %v1362
    %v1395 = vpack.c.bf16 %v1363, %v1363
    %v1396 = vpack.c.bf16 %v1364, %v1364
    %v1397 = vpack.c.bf16 %v1365, %v1365
    %v1398 = vpack.c.bf16 %v1366, %v1366
    %v1399 = vpack.c.bf16 %v1367, %v1367
    %v1400 = vpack.c.bf16 %v1368, %v1368
    %v1401 = vpack.c.bf16 %v1369, %v1369
    %v1402 = vpack.c.bf16 %v1370, %v1370
    %v1403 = vpack.c.bf16 %v1371, %v1371
    %v1404 = vpack.c.bf16 %v1372, %v1372
    %v1405 = vpack.c.bf16 %v1373, %v1373
    %v1406 = vpack.c.bf16 %v1374, %v1374
    %v1407 = vpack.c.bf16 %v1375, %v1375
    %v1408 = vld [vmem:[%s1087 + $0x1] sm:$0xff]
    %v1409 = vld [vmem:[%s1087 + $0x9] sm:$0xff]
    %v1410 = vld [vmem:[%s1087 + $0x19] sm:$0xff]
    %v1411 = vld [vmem:[%s1087 + $0x21] sm:$0xff]
    %v1412 = vld [vmem:[%s1087 + $0x31] sm:$0xff]
    %v1413 = vld [vmem:[%s1087 + $0x39] sm:$0xff]
    %v1414 = vld [vmem:[%s1087 + $0x49] sm:$0xff]
    %v1415 = vld [vmem:[%s1087 + $0x51] sm:$0xff]
    %v1416 = vld [vmem:[%s1087 + $0x61] sm:$0xff]
    %v1417 = vld [vmem:[%s1087 + $0x69] sm:$0xff]
    %v1418 = vld [vmem:[%s1087 + $0x79] sm:$0xff]
    %v1419 = vld [vmem:[%s1087 + $0x81] sm:$0xff]
    %v1420 = vld [vmem:[%s1087 + $0x91] sm:$0xff]
    %v1421 = vld [vmem:[%s1087 + $0x99] sm:$0xff]
    %v1422 = vld [vmem:[%s1087 + $0xa9] sm:$0xff]
    %v1423 = vld [vmem:[%s1087 + $0xb1] sm:$0xff]
    %v1424 = vld [vmem:[%s1087 + $0xc1] sm:$0xff]
    %v1425 = vld [vmem:[%s1087 + $0xc9] sm:$0xff]
    %v1426 = vld [vmem:[%s1087 + $0xd9] sm:$0xff]
    %v1427 = vld [vmem:[%s1087 + $0xe1] sm:$0xff]
    %v1428 = vld [vmem:[%s1087 + $0xf1] sm:$0xff]
    %v1429 = vld [vmem:[%s1087 + $0xf9] sm:$0xff]
    %v1430 = vld [vmem:[%s1087 + $0x109] sm:$0xff]
    %v1431 = vld [vmem:[%s1087 + $0x111] sm:$0xff]
    %v1432 = vld [vmem:[%s1087 + $0x121] sm:$0xff]
    %v1433 = vld [vmem:[%s1087 + $0x129] sm:$0xff]
    %v1434 = vld [vmem:[%s1087 + $0x139] sm:$0xff]
    %v1435 = vld [vmem:[%s1087 + $0x141] sm:$0xff]
    %v1436 = vld [vmem:[%s1087 + $0x151] sm:$0xff]
    %v1437 = vld [vmem:[%s1087 + $0x159] sm:$0xff]
    %v1438 = vld [vmem:[%s1087 + $0x169] sm:$0xff]
    %v1439 = vld [vmem:[%s1087 + $0x171] sm:$0xff]
    %v1440 = vpack.c.bf16 %v1408, %v1408
    %v1441 = vpack.c.bf16 %v1409, %v1409
    %v1442 = vpack.c.bf16 %v1410, %v1410
    %v1443 = vpack.c.bf16 %v1411, %v1411
    %v1444 = vpack.c.bf16 %v1412, %v1412
    %v1445 = vpack.c.bf16 %v1413, %v1413
    %v1446 = vpack.c.bf16 %v1414, %v1414
    %v1447 = vpack.c.bf16 %v1415, %v1415
    %v1448 = vpack.c.bf16 %v1416, %v1416
    %v1449 = vpack.c.bf16 %v1417, %v1417
    %v1450 = vpack.c.bf16 %v1418, %v1418
    %v1451 = vpack.c.bf16 %v1419, %v1419
    %v1452 = vpack.c.bf16 %v1420, %v1420
    %v1453 = vpack.c.bf16 %v1421, %v1421
    %v1454 = vpack.c.bf16 %v1422, %v1422
    %v1455 = vpack.c.bf16 %v1423, %v1423
    %v1456 = vpack.c.bf16 %v1424, %v1424
    %v1457 = vpack.c.bf16 %v1425, %v1425
    %v1458 = vpack.c.bf16 %v1426, %v1426
    %v1459 = vpack.c.bf16 %v1427, %v1427
    %v1460 = vpack.c.bf16 %v1428, %v1428
    %v1461 = vpack.c.bf16 %v1429, %v1429
    %v1462 = vpack.c.bf16 %v1430, %v1430
    %v1463 = vpack.c.bf16 %v1431, %v1431
    %v1464 = vpack.c.bf16 %v1432, %v1432
    %v1465 = vpack.c.bf16 %v1433, %v1433
    %v1466 = vpack.c.bf16 %v1434, %v1434
    %v1467 = vpack.c.bf16 %v1435, %v1435
    %v1468 = vpack.c.bf16 %v1436, %v1436
    %v1469 = vpack.c.bf16 %v1437, %v1437
    %v1470 = vpack.c.bf16 %v1438, %v1438
    %v1471 = vpack.c.bf16 %v1439, %v1439
    %v1504 = vunpack.c.l.b16 %v1376
    %v1505 = vunpack.c.l.b16 %v1377
    %v1506 = vunpack.c.l.b16 %v1378
    %v1507 = vunpack.c.l.b16 %v1379
    %v1508 = vunpack.c.l.b16 %v1380
    %v1509 = vunpack.c.l.b16 %v1381
    %v1510 = vunpack.c.l.b16 %v1382
    %v1511 = vunpack.c.l.b16 %v1383
    %v1512 = vunpack.c.l.b16 %v1384
    %v1513 = vunpack.c.l.b16 %v1385
    %v1514 = vunpack.c.l.b16 %v1386
    %v1515 = vunpack.c.l.b16 %v1387
    %v1516 = vunpack.c.l.b16 %v1388
    %v1517 = vunpack.c.l.b16 %v1389
    %v1518 = vunpack.c.l.b16 %v1390
    %v1519 = vunpack.c.l.b16 %v1391
    %v1520 = vunpack.c.l.b16 %v1392
    %v1521 = vunpack.c.l.b16 %v1393
    %v1522 = vunpack.c.l.b16 %v1394
    %v1523 = vunpack.c.l.b16 %v1395
    %v1524 = vunpack.c.l.b16 %v1396
    %v1525 = vunpack.c.l.b16 %v1397
    %v1526 = vunpack.c.l.b16 %v1398
    %v1527 = vunpack.c.l.b16 %v1399
    %v1528 = vunpack.c.l.b16 %v1400
    %v1529 = vunpack.c.l.b16 %v1401
    %v1530 = vunpack.c.l.b16 %v1402
    %v1531 = vunpack.c.l.b16 %v1403
    %v1532 = vunpack.c.l.b16 %v1404
    %v1533 = vunpack.c.l.b16 %v1405
    %v1534 = vunpack.c.l.b16 %v1406
    %v1535 = vunpack.c.l.b16 %v1407
    %v1536 = vpack.c.b16 %v1505, %v1504
    %v1537 = vpack.c.b16 %v1507, %v1506
    %v1538 = vpack.c.b16 %v1509, %v1508
    %v1539 = vpack.c.b16 %v1511, %v1510
    %v1540 = vpack.c.b16 %v1513, %v1512
    %v1541 = vpack.c.b16 %v1515, %v1514
    %v1542 = vpack.c.b16 %v1517, %v1516
    %v1543 = vpack.c.b16 %v1519, %v1518
    %v1544 = vpack.c.b16 %v1521, %v1520
    %v1545 = vpack.c.b16 %v1523, %v1522
    %v1546 = vpack.c.b16 %v1525, %v1524
    %v1547 = vpack.c.b16 %v1527, %v1526
    %v1548 = vpack.c.b16 %v1529, %v1528
    %v1549 = vpack.c.b16 %v1531, %v1530
    %v1550 = vpack.c.b16 %v1533, %v1532
    %v1551 = vpack.c.b16 %v1535, %v1534
    %v1600 = vunpack.c.l.b16 %v1440
    %v1601 = vunpack.c.l.b16 %v1441
    %v1602 = vunpack.c.l.b16 %v1442
    %v1603 = vunpack.c.l.b16 %v1443
    %v1604 = vunpack.c.l.b16 %v1444
    %v1605 = vunpack.c.l.b16 %v1445
    %v1606 = vunpack.c.l.b16 %v1446
    %v1607 = vunpack.c.l.b16 %v1447
    %v1608 = vunpack.c.l.b16 %v1448
    %v1609 = vunpack.c.l.b16 %v1449
    %v1610 = vunpack.c.l.b16 %v1450
    %v1611 = vunpack.c.l.b16 %v1451
    %v1612 = vunpack.c.l.b16 %v1452
    %v1613 = vunpack.c.l.b16 %v1453
    %v1614 = vunpack.c.l.b16 %v1454
    %v1615 = vunpack.c.l.b16 %v1455
    %v1616 = vunpack.c.l.b16 %v1456
    %v1617 = vunpack.c.l.b16 %v1457
    %v1618 = vunpack.c.l.b16 %v1458
    %v1619 = vunpack.c.l.b16 %v1459
    %v1620 = vunpack.c.l.b16 %v1460
    %v1621 = vunpack.c.l.b16 %v1461
    %v1622 = vunpack.c.l.b16 %v1462
    %v1623 = vunpack.c.l.b16 %v1463
    %v1624 = vunpack.c.l.b16 %v1464
    %v1625 = vunpack.c.l.b16 %v1465
    %v1626 = vunpack.c.l.b16 %v1466
    %v1627 = vunpack.c.l.b16 %v1467
    %v1628 = vunpack.c.l.b16 %v1468
    %v1629 = vunpack.c.l.b16 %v1469
    %v1630 = vunpack.c.l.b16 %v1470
    %v1631 = vunpack.c.l.b16 %v1471
    %v1632 = vpack.c.b16 %v1601, %v1600
    %v1633 = vpack.c.b16 %v1603, %v1602
    %v1634 = vpack.c.b16 %v1605, %v1604
    %v1635 = vpack.c.b16 %v1607, %v1606
    %v1636 = vpack.c.b16 %v1609, %v1608
    %v1637 = vpack.c.b16 %v1611, %v1610
    %v1638 = vpack.c.b16 %v1613, %v1612
    %v1639 = vpack.c.b16 %v1615, %v1614
    %v1640 = vpack.c.b16 %v1617, %v1616
    %v1641 = vpack.c.b16 %v1619, %v1618
    %v1642 = vpack.c.b16 %v1621, %v1620
    %v1643 = vpack.c.b16 %v1623, %v1622
    %v1644 = vpack.c.b16 %v1625, %v1624
    %v1645 = vpack.c.b16 %v1627, %v1626
    %v1646 = vpack.c.b16 %v1629, %v1628
    %v1647 = vpack.c.b16 %v1631, %v1630
    %v1664 = vld [vmem:[#allocation2 + $0x2] sm:$0xff]
    %v1665 = vld [vmem:[#allocation2 + $0xa] sm:$0xff]
    %v1666 = vld [vmem:[#allocation2 + $0x1a] sm:$0xff]
    %v1667 = vld [vmem:[#allocation2 + $0x22] sm:$0xff]
    %v1668 = vld [vmem:[#allocation2 + $0x32] sm:$0xff]
    %v1669 = vld [vmem:[#allocation2 + $0x3a] sm:$0xff]
    %v1670 = vld [vmem:[#allocation2 + $0x4a] sm:$0xff]
    %v1671 = vld [vmem:[#allocation2 + $0x52] sm:$0xff]
    %v1672 = vld [vmem:[#allocation2 + $0x62] sm:$0xff]
    %v1673 = vld [vmem:[#allocation2 + $0x6a] sm:$0xff]
    %v1674 = vld [vmem:[#allocation2 + $0x7a] sm:$0xff]
    %v1675 = vld [vmem:[#allocation2 + $0x82] sm:$0xff]
    %v1676 = vld [vmem:[#allocation2 + $0x92] sm:$0xff]
    %v1677 = vld [vmem:[#allocation2 + $0x9a] sm:$0xff]
    %v1678 = vld [vmem:[#allocation2 + $0xaa] sm:$0xff]
    %v1679 = vld [vmem:[#allocation2 + $0xb2] sm:$0xff]
    %v1680 = vld [vmem:[#allocation2 + $0xc2] sm:$0xff]
    %v1681 = vld [vmem:[#allocation2 + $0xca] sm:$0xff]
    %v1682 = vld [vmem:[#allocation2 + $0xda] sm:$0xff]
    %v1683 = vld [vmem:[#allocation2 + $0xe2] sm:$0xff]
    %v1684 = vld [vmem:[#allocation2 + $0xf2] sm:$0xff]
    %v1685 = vld [vmem:[#allocation2 + $0xfa] sm:$0xff]
    %v1686 = vld [vmem:[#allocation2 + $0x10a] sm:$0xff]
    %v1687 = vld [vmem:[#allocation2 + $0x112] sm:$0xff]
    %v1688 = vld [vmem:[#allocation2 + $0x122] sm:$0xff]
    %v1689 = vld [vmem:[#allocation2 + $0x12a] sm:$0xff]
    %v1690 = vld [vmem:[#allocation2 + $0x13a] sm:$0xff]
    %v1691 = vld [vmem:[#allocation2 + $0x142] sm:$0xff]
    %v1692 = vld [vmem:[#allocation2 + $0x152] sm:$0xff]
    %v1693 = vld [vmem:[#allocation2 + $0x15a] sm:$0xff]
    %v1694 = vld [vmem:[#allocation2 + $0x16a] sm:$0xff]
    %v1695 = vld [vmem:[#allocation2 + $0x172] sm:$0xff]
    %v1696 = vpack.c.bf16 %v1664, %v1664
    %v1697 = vpack.c.bf16 %v1665, %v1665
    %v1698 = vpack.c.bf16 %v1666, %v1666
    %v1699 = vpack.c.bf16 %v1667, %v1667
    %v1700 = vpack.c.bf16 %v1668, %v1668
    %v1701 = vpack.c.bf16 %v1669, %v1669
    %v1702 = vpack.c.bf16 %v1670, %v1670
    %v1703 = vpack.c.bf16 %v1671, %v1671
    %v1704 = vpack.c.bf16 %v1672, %v1672
    %v1705 = vpack.c.bf16 %v1673, %v1673
    %v1706 = vpack.c.bf16 %v1674, %v1674
    %v1707 = vpack.c.bf16 %v1675, %v1675
    %v1708 = vpack.c.bf16 %v1676, %v1676
    %v1709 = vpack.c.bf16 %v1677, %v1677
    %v1710 = vpack.c.bf16 %v1678, %v1678
    %v1711 = vpack.c.bf16 %v1679, %v1679
    %v1712 = vpack.c.bf16 %v1680, %v1680
    %v1713 = vpack.c.bf16 %v1681, %v1681
    %v1714 = vpack.c.bf16 %v1682, %v1682
    %v1715 = vpack.c.bf16 %v1683, %v1683
    %v1716 = vpack.c.bf16 %v1684, %v1684
    %v1717 = vpack.c.bf16 %v1685, %v1685
    %v1718 = vpack.c.bf16 %v1686, %v1686
    %v1719 = vpack.c.bf16 %v1687, %v1687
    %v1720 = vpack.c.bf16 %v1688, %v1688
    %v1721 = vpack.c.bf16 %v1689, %v1689
    %v1722 = vpack.c.bf16 %v1690, %v1690
    %v1723 = vpack.c.bf16 %v1691, %v1691
    %v1724 = vpack.c.bf16 %v1692, %v1692
    %v1725 = vpack.c.bf16 %v1693, %v1693
    %v1726 = vpack.c.bf16 %v1694, %v1694
    %v1727 = vpack.c.bf16 %v1695, %v1695
    %v1728 = vld [vmem:[%s1087 + $0x2] sm:$0xff]
    %v1729 = vld [vmem:[%s1087 + $0xa] sm:$0xff]
    %v1730 = vld [vmem:[%s1087 + $0x1a] sm:$0xff]
    %v1731 = vld [vmem:[%s1087 + $0x22] sm:$0xff]
    %v1732 = vld [vmem:[%s1087 + $0x32] sm:$0xff]
    %v1733 = vld [vmem:[%s1087 + $0x3a] sm:$0xff]
    %v1734 = vld [vmem:[%s1087 + $0x4a] sm:$0xff]
    %v1735 = vld [vmem:[%s1087 + $0x52] sm:$0xff]
    %v1736 = vld [vmem:[%s1087 + $0x62] sm:$0xff]
    %v1737 = vld [vmem:[%s1087 + $0x6a] sm:$0xff]
    %v1738 = vld [vmem:[%s1087 + $0x7a] sm:$0xff]
    %v1739 = vld [vmem:[%s1087 + $0x82] sm:$0xff]
    %v1740 = vld [vmem:[%s1087 + $0x92] sm:$0xff]
    %v1741 = vld [vmem:[%s1087 + $0x9a] sm:$0xff]
    %v1742 = vld [vmem:[%s1087 + $0xaa] sm:$0xff]
    %v1743 = vld [vmem:[%s1087 + $0xb2] sm:$0xff]
    %v1744 = vld [vmem:[%s1087 + $0xc2] sm:$0xff]
    %v1745 = vld [vmem:[%s1087 + $0xca] sm:$0xff]
    %v1746 = vld [vmem:[%s1087 + $0xda] sm:$0xff]
    %v1747 = vld [vmem:[%s1087 + $0xe2] sm:$0xff]
    %v1748 = vld [vmem:[%s1087 + $0xf2] sm:$0xff]
    %v1749 = vld [vmem:[%s1087 + $0xfa] sm:$0xff]
    %v1750 = vld [vmem:[%s1087 + $0x10a] sm:$0xff]
    %v1751 = vld [vmem:[%s1087 + $0x112] sm:$0xff]
    %v1752 = vld [vmem:[%s1087 + $0x122] sm:$0xff]
    %v1753 = vld [vmem:[%s1087 + $0x12a] sm:$0xff]
    %v1754 = vld [vmem:[%s1087 + $0x13a] sm:$0xff]
    %v1755 = vld [vmem:[%s1087 + $0x142] sm:$0xff]
    %v1756 = vld [vmem:[%s1087 + $0x152] sm:$0xff]
    %v1757 = vld [vmem:[%s1087 + $0x15a] sm:$0xff]
    %v1758 = vld [vmem:[%s1087 + $0x16a] sm:$0xff]
    %v1759 = vld [vmem:[%s1087 + $0x172] sm:$0xff]
    %v1760 = vpack.c.bf16 %v1728, %v1728
    %v1761 = vpack.c.bf16 %v1729, %v1729
    %v1762 = vpack.c.bf16 %v1730, %v1730
    %v1763 = vpack.c.bf16 %v1731, %v1731
    %v1764 = vpack.c.bf16 %v1732, %v1732
    %v1765 = vpack.c.bf16 %v1733, %v1733
    %v1766 = vpack.c.bf16 %v1734, %v1734
    %v1767 = vpack.c.bf16 %v1735, %v1735
    %v1768 = vpack.c.bf16 %v1736, %v1736
    %v1769 = vpack.c.bf16 %v1737, %v1737
    %v1770 = vpack.c.bf16 %v1738, %v1738
    %v1771 = vpack.c.bf16 %v1739, %v1739
    %v1772 = vpack.c.bf16 %v1740, %v1740
    %v1773 = vpack.c.bf16 %v1741, %v1741
    %v1774 = vpack.c.bf16 %v1742, %v1742
    %v1775 = vpack.c.bf16 %v1743, %v1743
    %v1776 = vpack.c.bf16 %v1744, %v1744
    %v1777 = vpack.c.bf16 %v1745, %v1745
    %v1778 = vpack.c.bf16 %v1746, %v1746
    %v1779 = vpack.c.bf16 %v1747, %v1747
    %v1780 = vpack.c.bf16 %v1748, %v1748
    %v1781 = vpack.c.bf16 %v1749, %v1749
    %v1782 = vpack.c.bf16 %v1750, %v1750
    %v1783 = vpack.c.bf16 %v1751, %v1751
    %v1784 = vpack.c.bf16 %v1752, %v1752
    %v1785 = vpack.c.bf16 %v1753, %v1753
    %v1786 = vpack.c.bf16 %v1754, %v1754
    %v1787 = vpack.c.bf16 %v1755, %v1755
    %v1788 = vpack.c.bf16 %v1756, %v1756
    %v1789 = vpack.c.bf16 %v1757, %v1757
    %v1790 = vpack.c.bf16 %v1758, %v1758
    %v1791 = vpack.c.bf16 %v1759, %v1759
    %v1824 = vunpack.c.l.b16 %v1696
    %v1825 = vunpack.c.l.b16 %v1697
    %v1826 = vunpack.c.l.b16 %v1698
    %v1827 = vunpack.c.l.b16 %v1699
    %v1828 = vunpack.c.l.b16 %v1700
    %v1829 = vunpack.c.l.b16 %v1701
    %v1830 = vunpack.c.l.b16 %v1702
    %v1831 = vunpack.c.l.b16 %v1703
    %v1832 = vunpack.c.l.b16 %v1704
    %v1833 = vunpack.c.l.b16 %v1705
    %v1834 = vunpack.c.l.b16 %v1706
    %v1835 = vunpack.c.l.b16 %v1707
    %v1836 = vunpack.c.l.b16 %v1708
    %v1837 = vunpack.c.l.b16 %v1709
    %v1838 = vunpack.c.l.b16 %v1710
    %v1839 = vunpack.c.l.b16 %v1711
    %v1840 = vunpack.c.l.b16 %v1712
    %v1841 = vunpack.c.l.b16 %v1713
    %v1842 = vunpack.c.l.b16 %v1714
    %v1843 = vunpack.c.l.b16 %v1715
    %v1844 = vunpack.c.l.b16 %v1716
    %v1845 = vunpack.c.l.b16 %v1717
    %v1846 = vunpack.c.l.b16 %v1718
    %v1847 = vunpack.c.l.b16 %v1719
    %v1848 = vunpack.c.l.b16 %v1720
    %v1849 = vunpack.c.l.b16 %v1721
    %v1850 = vunpack.c.l.b16 %v1722
    %v1851 = vunpack.c.l.b16 %v1723
    %v1852 = vunpack.c.l.b16 %v1724
    %v1853 = vunpack.c.l.b16 %v1725
    %v1854 = vunpack.c.l.b16 %v1726
    %v1855 = vunpack.c.l.b16 %v1727
    %v1856 = vpack.c.b16 %v1825, %v1824
    %v1857 = vpack.c.b16 %v1827, %v1826
    %v1858 = vpack.c.b16 %v1829, %v1828
    %v1859 = vpack.c.b16 %v1831, %v1830
    %v1860 = vpack.c.b16 %v1833, %v1832
    %v1861 = vpack.c.b16 %v1835, %v1834
    %v1862 = vpack.c.b16 %v1837, %v1836
    %v1863 = vpack.c.b16 %v1839, %v1838
    %v1864 = vpack.c.b16 %v1841, %v1840
    %v1865 = vpack.c.b16 %v1843, %v1842
    %v1866 = vpack.c.b16 %v1845, %v1844
    %v1867 = vpack.c.b16 %v1847, %v1846
    %v1868 = vpack.c.b16 %v1849, %v1848
    %v1869 = vpack.c.b16 %v1851, %v1850
    %v1870 = vpack.c.b16 %v1853, %v1852
    %v1871 = vpack.c.b16 %v1855, %v1854
    %v1920 = vunpack.c.l.b16 %v1760
    %v1921 = vunpack.c.l.b16 %v1761
    %v1922 = vunpack.c.l.b16 %v1762
    %v1923 = vunpack.c.l.b16 %v1763
    %v1924 = vunpack.c.l.b16 %v1764
    %v1925 = vunpack.c.l.b16 %v1765
    %v1926 = vunpack.c.l.b16 %v1766
    %v1927 = vunpack.c.l.b16 %v1767
    %v1928 = vunpack.c.l.b16 %v1768
    %v1929 = vunpack.c.l.b16 %v1769
    %v1930 = vunpack.c.l.b16 %v1770
    %v1931 = vunpack.c.l.b16 %v1771
    %v1932 = vunpack.c.l.b16 %v1772
    %v1933 = vunpack.c.l.b16 %v1773
    %v1934 = vunpack.c.l.b16 %v1774
    %v1935 = vunpack.c.l.b16 %v1775
    %v1936 = vunpack.c.l.b16 %v1776
    %v1937 = vunpack.c.l.b16 %v1777
    %v1938 = vunpack.c.l.b16 %v1778
    %v1939 = vunpack.c.l.b16 %v1779
    %v1940 = vunpack.c.l.b16 %v1780
    %v1941 = vunpack.c.l.b16 %v1781
    %v1942 = vunpack.c.l.b16 %v1782
    %v1943 = vunpack.c.l.b16 %v1783
    %v1944 = vunpack.c.l.b16 %v1784
    %v1945 = vunpack.c.l.b16 %v1785
    %v1946 = vunpack.c.l.b16 %v1786
    %v1947 = vunpack.c.l.b16 %v1787
    %v1948 = vunpack.c.l.b16 %v1788
    %v1949 = vunpack.c.l.b16 %v1789
    %v1950 = vunpack.c.l.b16 %v1790
    %v1951 = vunpack.c.l.b16 %v1791
    %v1952 = vpack.c.b16 %v1921, %v1920
    %v1953 = vpack.c.b16 %v1923, %v1922
    %v1954 = vpack.c.b16 %v1925, %v1924
    %v1955 = vpack.c.b16 %v1927, %v1926
    %v1956 = vpack.c.b16 %v1929, %v1928
    %v1957 = vpack.c.b16 %v1931, %v1930
    %v1958 = vpack.c.b16 %v1933, %v1932
    %v1959 = vpack.c.b16 %v1935, %v1934
    %v1960 = vpack.c.b16 %v1937, %v1936
    %v1961 = vpack.c.b16 %v1939, %v1938
    %v1962 = vpack.c.b16 %v1941, %v1940
    %v1963 = vpack.c.b16 %v1943, %v1942
    %v1964 = vpack.c.b16 %v1945, %v1944
    %v1965 = vpack.c.b16 %v1947, %v1946
    %v1966 = vpack.c.b16 %v1949, %v1948
    %v1967 = vpack.c.b16 %v1951, %v1950
    %v1984 = vld [vmem:[%s957] sm:$0xff]
    %v1985 = vld [vmem:[%s957 + $0x8] sm:$0xff]
    %v1986 = vld [vmem:[%s957 + $0x18] sm:$0xff]
    %v1987 = vld [vmem:[%s957 + $0x20] sm:$0xff]
    %v1988 = vld [vmem:[%s957 + $0x30] sm:$0xff]
    %v1989 = vld [vmem:[%s957 + $0x38] sm:$0xff]
    %v1990 = vld [vmem:[%s957 + $0x48] sm:$0xff]
    %v1991 = vld [vmem:[%s957 + $0x50] sm:$0xff]
    %v1992 = vld [vmem:[%s957 + $0x60] sm:$0xff]
    %v1993 = vld [vmem:[%s957 + $0x68] sm:$0xff]
    %v1994 = vld [vmem:[%s957 + $0x78] sm:$0xff]
    %v1995 = vld [vmem:[%s957 + $0x80] sm:$0xff]
    %v1996 = vld [vmem:[%s957 + $0x90] sm:$0xff]
    %v1997 = vld [vmem:[%s957 + $0x98] sm:$0xff]
    %v1998 = vld [vmem:[%s957 + $0xa8] sm:$0xff]
    %v1999 = vld [vmem:[%s957 + $0xb0] sm:$0xff]
    %v2000 = vld [vmem:[%s957 + $0xc0] sm:$0xff]
    %v2001 = vld [vmem:[%s957 + $0xc8] sm:$0xff]
    %v2002 = vld [vmem:[%s957 + $0xd8] sm:$0xff]
    %v2003 = vld [vmem:[%s957 + $0xe0] sm:$0xff]
    %v2004 = vld [vmem:[%s957 + $0xf0] sm:$0xff]
    %v2005 = vld [vmem:[%s957 + $0xf8] sm:$0xff]
    %v2006 = vld [vmem:[%s957 + $0x108] sm:$0xff]
    %v2007 = vld [vmem:[%s957 + $0x110] sm:$0xff]
    %v2008 = vld [vmem:[%s957 + $0x120] sm:$0xff]
    %v2009 = vld [vmem:[%s957 + $0x128] sm:$0xff]
    %v2010 = vld [vmem:[%s957 + $0x138] sm:$0xff]
    %v2011 = vld [vmem:[%s957 + $0x140] sm:$0xff]
    %v2012 = vld [vmem:[%s957 + $0x150] sm:$0xff]
    %v2013 = vld [vmem:[%s957 + $0x158] sm:$0xff]
    %v2014 = vld [vmem:[%s957 + $0x168] sm:$0xff]
    %v2015 = vld [vmem:[%s957 + $0x170] sm:$0xff]
    %v2016 = vpack.c.bf16 %v1984, %v1984
    %v2017 = vpack.c.bf16 %v1985, %v1985
    %v2018 = vpack.c.bf16 %v1986, %v1986
    %v2019 = vpack.c.bf16 %v1987, %v1987
    %v2020 = vpack.c.bf16 %v1988, %v1988
    %v2021 = vpack.c.bf16 %v1989, %v1989
    %v2022 = vpack.c.bf16 %v1990, %v1990
    %v2023 = vpack.c.bf16 %v1991, %v1991
    %v2024 = vpack.c.bf16 %v1992, %v1992
    %v2025 = vpack.c.bf16 %v1993, %v1993
    %v2026 = vpack.c.bf16 %v1994, %v1994
    %v2027 = vpack.c.bf16 %v1995, %v1995
    %v2028 = vpack.c.bf16 %v1996, %v1996
    %v2029 = vpack.c.bf16 %v1997, %v1997
    %v2030 = vpack.c.bf16 %v1998, %v1998
    %v2031 = vpack.c.bf16 %v1999, %v1999
    %v2032 = vpack.c.bf16 %v2000, %v2000
    %v2033 = vpack.c.bf16 %v2001, %v2001
    %v2034 = vpack.c.bf16 %v2002, %v2002
    %v2035 = vpack.c.bf16 %v2003, %v2003
    %v2036 = vpack.c.bf16 %v2004, %v2004
    %v2037 = vpack.c.bf16 %v2005, %v2005
    %v2038 = vpack.c.bf16 %v2006, %v2006
    %v2039 = vpack.c.bf16 %v2007, %v2007
    %v2040 = vpack.c.bf16 %v2008, %v2008
    %v2041 = vpack.c.bf16 %v2009, %v2009
    %v2042 = vpack.c.bf16 %v2010, %v2010
    %v2043 = vpack.c.bf16 %v2011, %v2011
    %v2044 = vpack.c.bf16 %v2012, %v2012
    %v2045 = vpack.c.bf16 %v2013, %v2013
    %v2046 = vpack.c.bf16 %v2014, %v2014
    %v2047 = vpack.c.bf16 %v2015, %v2015
    %v2048 = vld [vmem:[%s990] sm:$0xff]
    %v2049 = vld [vmem:[%s990 + $0x8] sm:$0xff]
    %v2050 = vld [vmem:[%s990 + $0x18] sm:$0xff]
    %v2051 = vld [vmem:[%s990 + $0x20] sm:$0xff]
    %v2052 = vld [vmem:[%s990 + $0x30] sm:$0xff]
    %v2053 = vld [vmem:[%s990 + $0x38] sm:$0xff]
    %v2054 = vld [vmem:[%s990 + $0x48] sm:$0xff]
    %v2055 = vld [vmem:[%s990 + $0x50] sm:$0xff]
    %v2056 = vld [vmem:[%s990 + $0x60] sm:$0xff]
    %v2057 = vld [vmem:[%s990 + $0x68] sm:$0xff]
    %v2058 = vld [vmem:[%s990 + $0x78] sm:$0xff]
    %v2059 = vld [vmem:[%s990 + $0x80] sm:$0xff]
    %v2060 = vld [vmem:[%s990 + $0x90] sm:$0xff]
    %v2061 = vld [vmem:[%s990 + $0x98] sm:$0xff]
    %v2062 = vld [vmem:[%s990 + $0xa8] sm:$0xff]
    %v2063 = vld [vmem:[%s990 + $0xb0] sm:$0xff]
    %v2064 = vld [vmem:[%s990 + $0xc0] sm:$0xff]
    %v2065 = vld [vmem:[%s990 + $0xc8] sm:$0xff]
    %v2066 = vld [vmem:[%s990 + $0xd8] sm:$0xff]
    %v2067 = vld [vmem:[%s990 + $0xe0] sm:$0xff]
    %v2068 = vld [vmem:[%s990 + $0xf0] sm:$0xff]
    %v2069 = vld [vmem:[%s990 + $0xf8] sm:$0xff]
    %v2070 = vld [vmem:[%s990 + $0x108] sm:$0xff]
    %v2071 = vld [vmem:[%s990 + $0x110] sm:$0xff]
    %v2072 = vld [vmem:[%s990 + $0x120] sm:$0xff]
    %v2073 = vld [vmem:[%s990 + $0x128] sm:$0xff]
    %v2074 = vld [vmem:[%s990 + $0x138] sm:$0xff]
    %v2075 = vld [vmem:[%s990 + $0x140] sm:$0xff]
    %v2076 = vld [vmem:[%s990 + $0x150] sm:$0xff]
    %v2077 = vld [vmem:[%s990 + $0x158] sm:$0xff]
    %v2078 = vld [vmem:[%s990 + $0x168] sm:$0xff]
    %v2079 = vld [vmem:[%s990 + $0x170] sm:$0xff]
    %v2080 = vpack.c.bf16 %v2048, %v2048
    %v2081 = vpack.c.bf16 %v2049, %v2049
    %v2082 = vpack.c.bf16 %v2050, %v2050
    %v2083 = vpack.c.bf16 %v2051, %v2051
    %v2084 = vpack.c.bf16 %v2052, %v2052
    %v2085 = vpack.c.bf16 %v2053, %v2053
    %v2086 = vpack.c.bf16 %v2054, %v2054
    %v2087 = vpack.c.bf16 %v2055, %v2055
    %v2088 = vpack.c.bf16 %v2056, %v2056
    %v2089 = vpack.c.bf16 %v2057, %v2057
    %v2090 = vpack.c.bf16 %v2058, %v2058
    %v2091 = vpack.c.bf16 %v2059, %v2059
    %v2092 = vpack.c.bf16 %v2060, %v2060
    %v2093 = vpack.c.bf16 %v2061, %v2061
    %v2094 = vpack.c.bf16 %v2062, %v2062
    %v2095 = vpack.c.bf16 %v2063, %v2063
    %v2096 = vpack.c.bf16 %v2064, %v2064
    %v2097 = vpack.c.bf16 %v2065, %v2065
    %v2098 = vpack.c.bf16 %v2066, %v2066
    %v2099 = vpack.c.bf16 %v2067, %v2067
    %v2100 = vpack.c.bf16 %v2068, %v2068
    %v2101 = vpack.c.bf16 %v2069, %v2069
    %v2102 = vpack.c.bf16 %v2070, %v2070
    %v2103 = vpack.c.bf16 %v2071, %v2071
    %v2104 = vpack.c.bf16 %v2072, %v2072
    %v2105 = vpack.c.bf16 %v2073, %v2073
    %v2106 = vpack.c.bf16 %v2074, %v2074
    %v2107 = vpack.c.bf16 %v2075, %v2075
    %v2108 = vpack.c.bf16 %v2076, %v2076
    %v2109 = vpack.c.bf16 %v2077, %v2077
    %v2110 = vpack.c.bf16 %v2078, %v2078
    %v2111 = vpack.c.bf16 %v2079, %v2079
    %v2144 = vunpack.c.l.b16 %v2016
    %v2145 = vunpack.c.l.b16 %v2017
    %v2146 = vunpack.c.l.b16 %v2018
    %v2147 = vunpack.c.l.b16 %v2019
    %v2148 = vunpack.c.l.b16 %v2020
    %v2149 = vunpack.c.l.b16 %v2021
    %v2150 = vunpack.c.l.b16 %v2022
    %v2151 = vunpack.c.l.b16 %v2023
    %v2152 = vunpack.c.l.b16 %v2024
    %v2153 = vunpack.c.l.b16 %v2025
    %v2154 = vunpack.c.l.b16 %v2026
    %v2155 = vunpack.c.l.b16 %v2027
    %v2156 = vunpack.c.l.b16 %v2028
    %v2157 = vunpack.c.l.b16 %v2029
    %v2158 = vunpack.c.l.b16 %v2030
    %v2159 = vunpack.c.l.b16 %v2031
    %v2160 = vunpack.c.l.b16 %v2032
    %v2161 = vunpack.c.l.b16 %v2033
    %v2162 = vunpack.c.l.b16 %v2034
    %v2163 = vunpack.c.l.b16 %v2035
    %v2164 = vunpack.c.l.b16 %v2036
    %v2165 = vunpack.c.l.b16 %v2037
    %v2166 = vunpack.c.l.b16 %v2038
    %v2167 = vunpack.c.l.b16 %v2039
    %v2168 = vunpack.c.l.b16 %v2040
    %v2169 = vunpack.c.l.b16 %v2041
    %v2170 = vunpack.c.l.b16 %v2042
    %v2171 = vunpack.c.l.b16 %v2043
    %v2172 = vunpack.c.l.b16 %v2044
    %v2173 = vunpack.c.l.b16 %v2045
    %v2174 = vunpack.c.l.b16 %v2046
    %v2175 = vunpack.c.l.b16 %v2047
    %v2176 = vpack.c.b16 %v2145, %v2144
    %v2177 = vpack.c.b16 %v2147, %v2146
    %v2178 = vpack.c.b16 %v2149, %v2148
    %v2179 = vpack.c.b16 %v2151, %v2150
    %v2180 = vpack.c.b16 %v2153, %v2152
    %v2181 = vpack.c.b16 %v2155, %v2154
    %v2182 = vpack.c.b16 %v2157, %v2156
    %v2183 = vpack.c.b16 %v2159, %v2158
    %v2184 = vpack.c.b16 %v2161, %v2160
    %v2185 = vpack.c.b16 %v2163, %v2162
    %v2186 = vpack.c.b16 %v2165, %v2164
    %v2187 = vpack.c.b16 %v2167, %v2166
    %v2188 = vpack.c.b16 %v2169, %v2168
    %v2189 = vpack.c.b16 %v2171, %v2170
    %v2190 = vpack.c.b16 %v2173, %v2172
    %v2191 = vpack.c.b16 %v2175, %v2174
    %v2240 = vunpack.c.l.b16 %v2080
    %v2241 = vunpack.c.l.b16 %v2081
    %v2242 = vunpack.c.l.b16 %v2082
    %v2243 = vunpack.c.l.b16 %v2083
    %v2244 = vunpack.c.l.b16 %v2084
    %v2245 = vunpack.c.l.b16 %v2085
    %v2246 = vunpack.c.l.b16 %v2086
    %v2247 = vunpack.c.l.b16 %v2087
    %v2248 = vunpack.c.l.b16 %v2088
    %v2249 = vunpack.c.l.b16 %v2089
    %v2250 = vunpack.c.l.b16 %v2090
    %v2251 = vunpack.c.l.b16 %v2091
    %v2252 = vunpack.c.l.b16 %v2092
    %v2253 = vunpack.c.l.b16 %v2093
    %v2254 = vunpack.c.l.b16 %v2094
    %v2255 = vunpack.c.l.b16 %v2095
    %v2256 = vunpack.c.l.b16 %v2096
    %v2257 = vunpack.c.l.b16 %v2097
    %v2258 = vunpack.c.l.b16 %v2098
    %v2259 = vunpack.c.l.b16 %v2099
    %v2260 = vunpack.c.l.b16 %v2100
    %v2261 = vunpack.c.l.b16 %v2101
    %v2262 = vunpack.c.l.b16 %v2102
    %v2263 = vunpack.c.l.b16 %v2103
    %v2264 = vunpack.c.l.b16 %v2104
    %v2265 = vunpack.c.l.b16 %v2105
    %v2266 = vunpack.c.l.b16 %v2106
    %v2267 = vunpack.c.l.b16 %v2107
    %v2268 = vunpack.c.l.b16 %v2108
    %v2269 = vunpack.c.l.b16 %v2109
    %v2270 = vunpack.c.l.b16 %v2110
    %v2271 = vunpack.c.l.b16 %v2111
    %v2272 = vpack.c.b16 %v2241, %v2240
    %v2273 = vpack.c.b16 %v2243, %v2242
    %v2274 = vpack.c.b16 %v2245, %v2244
    %v2275 = vpack.c.b16 %v2247, %v2246
    %v2276 = vpack.c.b16 %v2249, %v2248
    %v2277 = vpack.c.b16 %v2251, %v2250
    %v2278 = vpack.c.b16 %v2253, %v2252
    %v2279 = vpack.c.b16 %v2255, %v2254
    %v2280 = vpack.c.b16 %v2257, %v2256
    %v2281 = vpack.c.b16 %v2259, %v2258
    %v2282 = vpack.c.b16 %v2261, %v2260
    %v2283 = vpack.c.b16 %v2263, %v2262
    %v2284 = vpack.c.b16 %v2265, %v2264
    %v2285 = vpack.c.b16 %v2267, %v2266
    %v2286 = vpack.c.b16 %v2269, %v2268
    %v2287 = vpack.c.b16 %v2271, %v2270
    %v2304 = vld [vmem:[%s957 + $0x1] sm:$0xff]
    %v2305 = vld [vmem:[%s957 + $0x9] sm:$0xff]
    %v2306 = vld [vmem:[%s957 + $0x19] sm:$0xff]
    %v2307 = vld [vmem:[%s957 + $0x21] sm:$0xff]
    %v2308 = vld [vmem:[%s957 + $0x31] sm:$0xff]
    %v2309 = vld [vmem:[%s957 + $0x39] sm:$0xff]
    %v2310 = vld [vmem:[%s957 + $0x49] sm:$0xff]
    %v2311 = vld [vmem:[%s957 + $0x51] sm:$0xff]
    %v2312 = vld [vmem:[%s957 + $0x61] sm:$0xff]
    %v2313 = vld [vmem:[%s957 + $0x69] sm:$0xff]
    %v2314 = vld [vmem:[%s957 + $0x79] sm:$0xff]
    %v2315 = vld [vmem:[%s957 + $0x81] sm:$0xff]
    %v2316 = vld [vmem:[%s957 + $0x91] sm:$0xff]
    %v2317 = vld [vmem:[%s957 + $0x99] sm:$0xff]
    %v2318 = vld [vmem:[%s957 + $0xa9] sm:$0xff]
    %v2319 = vld [vmem:[%s957 + $0xb1] sm:$0xff]
    %v2320 = vld [vmem:[%s957 + $0xc1] sm:$0xff]
    %v2321 = vld [vmem:[%s957 + $0xc9] sm:$0xff]
    %v2322 = vld [vmem:[%s957 + $0xd9] sm:$0xff]
    %v2323 = vld [vmem:[%s957 + $0xe1] sm:$0xff]
    %v2324 = vld [vmem:[%s957 + $0xf1] sm:$0xff]
    %v2325 = vld [vmem:[%s957 + $0xf9] sm:$0xff]
    %v2326 = vld [vmem:[%s957 + $0x109] sm:$0xff]
    %v2327 = vld [vmem:[%s957 + $0x111] sm:$0xff]
    %v2328 = vld [vmem:[%s957 + $0x121] sm:$0xff]
    %v2329 = vld [vmem:[%s957 + $0x129] sm:$0xff]
    %v2330 = vld [vmem:[%s957 + $0x139] sm:$0xff]
    %v2331 = vld [vmem:[%s957 + $0x141] sm:$0xff]
    %v2332 = vld [vmem:[%s957 + $0x151] sm:$0xff]
    %v2333 = vld [vmem:[%s957 + $0x159] sm:$0xff]
    %v2334 = vld [vmem:[%s957 + $0x169] sm:$0xff]
    %v2335 = vld [vmem:[%s957 + $0x171] sm:$0xff]
    %v2336 = vpack.c.bf16 %v2304, %v2304
    %v2337 = vpack.c.bf16 %v2305, %v2305
    %v2338 = vpack.c.bf16 %v2306, %v2306
    %v2339 = vpack.c.bf16 %v2307, %v2307
    %v2340 = vpack.c.bf16 %v2308, %v2308
    %v2341 = vpack.c.bf16 %v2309, %v2309
    %v2342 = vpack.c.bf16 %v2310, %v2310
    %v2343 = vpack.c.bf16 %v2311, %v2311
    %v2344 = vpack.c.bf16 %v2312, %v2312
    %v2345 = vpack.c.bf16 %v2313, %v2313
    %v2346 = vpack.c.bf16 %v2314, %v2314
    %v2347 = vpack.c.bf16 %v2315, %v2315
    %v2348 = vpack.c.bf16 %v2316, %v2316
    %v2349 = vpack.c.bf16 %v2317, %v2317
    %v2350 = vpack.c.bf16 %v2318, %v2318
    %v2351 = vpack.c.bf16 %v2319, %v2319
    %v2352 = vpack.c.bf16 %v2320, %v2320
    %v2353 = vpack.c.bf16 %v2321, %v2321
    %v2354 = vpack.c.bf16 %v2322, %v2322
    %v2355 = vpack.c.bf16 %v2323, %v2323
    %v2356 = vpack.c.bf16 %v2324, %v2324
    %v2357 = vpack.c.bf16 %v2325, %v2325
    %v2358 = vpack.c.bf16 %v2326, %v2326
    %v2359 = vpack.c.bf16 %v2327, %v2327
    %v2360 = vpack.c.bf16 %v2328, %v2328
    %v2361 = vpack.c.bf16 %v2329, %v2329
    %v2362 = vpack.c.bf16 %v2330, %v2330
    %v2363 = vpack.c.bf16 %v2331, %v2331
    %v2364 = vpack.c.bf16 %v2332, %v2332
    %v2365 = vpack.c.bf16 %v2333, %v2333
    %v2366 = vpack.c.bf16 %v2334, %v2334
    %v2367 = vpack.c.bf16 %v2335, %v2335
    %v2368 = vld [vmem:[%s990 + $0x1] sm:$0xff]
    %v2369 = vld [vmem:[%s990 + $0x9] sm:$0xff]
    %v2370 = vld [vmem:[%s990 + $0x19] sm:$0xff]
    %v2371 = vld [vmem:[%s990 + $0x21] sm:$0xff]
    %v2372 = vld [vmem:[%s990 + $0x31] sm:$0xff]
    %v2373 = vld [vmem:[%s990 + $0x39] sm:$0xff]
    %v2374 = vld [vmem:[%s990 + $0x49] sm:$0xff]
    %v2375 = vld [vmem:[%s990 + $0x51] sm:$0xff]
    %v2376 = vld [vmem:[%s990 + $0x61] sm:$0xff]
    %v2377 = vld [vmem:[%s990 + $0x69] sm:$0xff]
    %v2378 = vld [vmem:[%s990 + $0x79] sm:$0xff]
    %v2379 = vld [vmem:[%s990 + $0x81] sm:$0xff]
    %v2380 = vld [vmem:[%s990 + $0x91] sm:$0xff]
    %v2381 = vld [vmem:[%s990 + $0x99] sm:$0xff]
    %v2382 = vld [vmem:[%s990 + $0xa9] sm:$0xff]
    %v2383 = vld [vmem:[%s990 + $0xb1] sm:$0xff]
    %v2384 = vld [vmem:[%s990 + $0xc1] sm:$0xff]
    %v2385 = vld [vmem:[%s990 + $0xc9] sm:$0xff]
    %v2386 = vld [vmem:[%s990 + $0xd9] sm:$0xff]
    %v2387 = vld [vmem:[%s990 + $0xe1] sm:$0xff]
    %v2388 = vld [vmem:[%s990 + $0xf1] sm:$0xff]
    %v2389 = vld [vmem:[%s990 + $0xf9] sm:$0xff]
    %v2390 = vld [vmem:[%s990 + $0x109] sm:$0xff]
    %v2391 = vld [vmem:[%s990 + $0x111] sm:$0xff]
    %v2392 = vld [vmem:[%s990 + $0x121] sm:$0xff]
    %v2393 = vld [vmem:[%s990 + $0x129] sm:$0xff]
    %v2394 = vld [vmem:[%s990 + $0x139] sm:$0xff]
    %v2395 = vld [vmem:[%s990 + $0x141] sm:$0xff]
    %v2396 = vld [vmem:[%s990 + $0x151] sm:$0xff]
    %v2397 = vld [vmem:[%s990 + $0x159] sm:$0xff]
    %v2398 = vld [vmem:[%s990 + $0x169] sm:$0xff]
    %v2399 = vld [vmem:[%s990 + $0x171] sm:$0xff]
    %v2400 = vpack.c.bf16 %v2368, %v2368
    %v2401 = vpack.c.bf16 %v2369, %v2369
    %v2402 = vpack.c.bf16 %v2370, %v2370
    %v2403 = vpack.c.bf16 %v2371, %v2371
    %v2404 = vpack.c.bf16 %v2372, %v2372
    %v2405 = vpack.c.bf16 %v2373, %v2373
    %v2406 = vpack.c.bf16 %v2374, %v2374
    %v2407 = vpack.c.bf16 %v2375, %v2375
    %v2408 = vpack.c.bf16 %v2376, %v2376
    %v2409 = vpack.c.bf16 %v2377, %v2377
    %v2410 = vpack.c.bf16 %v2378, %v2378
    %v2411 = vpack.c.bf16 %v2379, %v2379
    %v2412 = vpack.c.bf16 %v2380, %v2380
    %v2413 = vpack.c.bf16 %v2381, %v2381
    %v2414 = vpack.c.bf16 %v2382, %v2382
    %v2415 = vpack.c.bf16 %v2383, %v2383
    %v2416 = vpack.c.bf16 %v2384, %v2384
    %v2417 = vpack.c.bf16 %v2385, %v2385
    %v2418 = vpack.c.bf16 %v2386, %v2386
    %v2419 = vpack.c.bf16 %v2387, %v2387
    %v2420 = vpack.c.bf16 %v2388, %v2388
    %v2421 = vpack.c.bf16 %v2389, %v2389
    %v2422 = vpack.c.bf16 %v2390, %v2390
    %v2423 = vpack.c.bf16 %v2391, %v2391
    %v2424 = vpack.c.bf16 %v2392, %v2392
    %v2425 = vpack.c.bf16 %v2393, %v2393
    %v2426 = vpack.c.bf16 %v2394, %v2394
    %v2427 = vpack.c.bf16 %v2395, %v2395
    %v2428 = vpack.c.bf16 %v2396, %v2396
    %v2429 = vpack.c.bf16 %v2397, %v2397
    %v2430 = vpack.c.bf16 %v2398, %v2398
    %v2431 = vpack.c.bf16 %v2399, %v2399
    %v2464 = vunpack.c.l.b16 %v2336
    %v2465 = vunpack.c.l.b16 %v2337
    %v2466 = vunpack.c.l.b16 %v2338
    %v2467 = vunpack.c.l.b16 %v2339
    %v2468 = vunpack.c.l.b16 %v2340
    %v2469 = vunpack.c.l.b16 %v2341
    %v2470 = vunpack.c.l.b16 %v2342
    %v2471 = vunpack.c.l.b16 %v2343
    %v2472 = vunpack.c.l.b16 %v2344
    %v2473 = vunpack.c.l.b16 %v2345
    %v2474 = vunpack.c.l.b16 %v2346
    %v2475 = vunpack.c.l.b16 %v2347
    %v2476 = vunpack.c.l.b16 %v2348
    %v2477 = vunpack.c.l.b16 %v2349
    %v2478 = vunpack.c.l.b16 %v2350
    %v2479 = vunpack.c.l.b16 %v2351
    %v2480 = vunpack.c.l.b16 %v2352
    %v2481 = vunpack.c.l.b16 %v2353
    %v2482 = vunpack.c.l.b16 %v2354
    %v2483 = vunpack.c.l.b16 %v2355
    %v2484 = vunpack.c.l.b16 %v2356
    %v2485 = vunpack.c.l.b16 %v2357
    %v2486 = vunpack.c.l.b16 %v2358
    %v2487 = vunpack.c.l.b16 %v2359
    %v2488 = vunpack.c.l.b16 %v2360
    %v2489 = vunpack.c.l.b16 %v2361
    %v2490 = vunpack.c.l.b16 %v2362
    %v2491 = vunpack.c.l.b16 %v2363
    %v2492 = vunpack.c.l.b16 %v2364
    %v2493 = vunpack.c.l.b16 %v2365
    %v2494 = vunpack.c.l.b16 %v2366
    %v2495 = vunpack.c.l.b16 %v2367
    %v2496 = vpack.c.b16 %v2465, %v2464
    %v2497 = vpack.c.b16 %v2467, %v2466
    %v2498 = vpack.c.b16 %v2469, %v2468
    %v2499 = vpack.c.b16 %v2471, %v2470
    %v2500 = vpack.c.b16 %v2473, %v2472
    %v2501 = vpack.c.b16 %v2475, %v2474
    %v2502 = vpack.c.b16 %v2477, %v2476
    %v2503 = vpack.c.b16 %v2479, %v2478
    %v2504 = vpack.c.b16 %v2481, %v2480
    %v2505 = vpack.c.b16 %v2483, %v2482
    %v2506 = vpack.c.b16 %v2485, %v2484
    %v2507 = vpack.c.b16 %v2487, %v2486
    %v2508 = vpack.c.b16 %v2489, %v2488
    %v2509 = vpack.c.b16 %v2491, %v2490
    %v2510 = vpack.c.b16 %v2493, %v2492
    %v2511 = vpack.c.b16 %v2495, %v2494
    %v2560 = vunpack.c.l.b16 %v2400
    %v2561 = vunpack.c.l.b16 %v2401
    %v2562 = vunpack.c.l.b16 %v2402
    %v2563 = vunpack.c.l.b16 %v2403
    %v2564 = vunpack.c.l.b16 %v2404
    %v2565 = vunpack.c.l.b16 %v2405
    %v2566 = vunpack.c.l.b16 %v2406
    %v2567 = vunpack.c.l.b16 %v2407
    %v2568 = vunpack.c.l.b16 %v2408
    %v2569 = vunpack.c.l.b16 %v2409
    %v2570 = vunpack.c.l.b16 %v2410
    %v2571 = vunpack.c.l.b16 %v2411
    %v2572 = vunpack.c.l.b16 %v2412
    %v2573 = vunpack.c.l.b16 %v2413
    %v2574 = vunpack.c.l.b16 %v2414
    %v2575 = vunpack.c.l.b16 %v2415
    %v2576 = vunpack.c.l.b16 %v2416
    %v2577 = vunpack.c.l.b16 %v2417
    %v2578 = vunpack.c.l.b16 %v2418
    %v2579 = vunpack.c.l.b16 %v2419
    %v2580 = vunpack.c.l.b16 %v2420
    %v2581 = vunpack.c.l.b16 %v2421
    %v2582 = vunpack.c.l.b16 %v2422
    %v2583 = vunpack.c.l.b16 %v2423
    %v2584 = vunpack.c.l.b16 %v2424
    %v2585 = vunpack.c.l.b16 %v2425
    %v2586 = vunpack.c.l.b16 %v2426
    %v2587 = vunpack.c.l.b16 %v2427
    %v2588 = vunpack.c.l.b16 %v2428
    %v2589 = vunpack.c.l.b16 %v2429
    %v2590 = vunpack.c.l.b16 %v2430
    %v2591 = vunpack.c.l.b16 %v2431
    %v2592 = vpack.c.b16 %v2561, %v2560
    %v2593 = vpack.c.b16 %v2563, %v2562
    %v2594 = vpack.c.b16 %v2565, %v2564
    %v2595 = vpack.c.b16 %v2567, %v2566
    %v2596 = vpack.c.b16 %v2569, %v2568
    %v2597 = vpack.c.b16 %v2571, %v2570
    %v2598 = vpack.c.b16 %v2573, %v2572
    %v2599 = vpack.c.b16 %v2575, %v2574
    %v2600 = vpack.c.b16 %v2577, %v2576
    %v2601 = vpack.c.b16 %v2579, %v2578
    %v2602 = vpack.c.b16 %v2581, %v2580
    %v2603 = vpack.c.b16 %v2583, %v2582
    %v2604 = vpack.c.b16 %v2585, %v2584
    %v2605 = vpack.c.b16 %v2587, %v2586
    %v2606 = vpack.c.b16 %v2589, %v2588
    %v2607 = vpack.c.b16 %v2591, %v2590
    %v2624 = vld [vmem:[%s957 + $0x2] sm:$0xff]
    %v2625 = vld [vmem:[%s957 + $0xa] sm:$0xff]
    %v2626 = vld [vmem:[%s957 + $0x1a] sm:$0xff]
    %v2627 = vld [vmem:[%s957 + $0x22] sm:$0xff]
    %v2628 = vld [vmem:[%s957 + $0x32] sm:$0xff]
    %v2629 = vld [vmem:[%s957 + $0x3a] sm:$0xff]
    %v2630 = vld [vmem:[%s957 + $0x4a] sm:$0xff]
    %v2631 = vld [vmem:[%s957 + $0x52] sm:$0xff]
    %v2632 = vld [vmem:[%s957 + $0x62] sm:$0xff]
    %v2633 = vld [vmem:[%s957 + $0x6a] sm:$0xff]
    %v2634 = vld [vmem:[%s957 + $0x7a] sm:$0xff]
    %v2635 = vld [vmem:[%s957 + $0x82] sm:$0xff]
    %v2636 = vld [vmem:[%s957 + $0x92] sm:$0xff]
    %v2637 = vld [vmem:[%s957 + $0x9a] sm:$0xff]
    %v2638 = vld [vmem:[%s957 + $0xaa] sm:$0xff]
    %v2639 = vld [vmem:[%s957 + $0xb2] sm:$0xff]
    %v2640 = vld [vmem:[%s957 + $0xc2] sm:$0xff]
    %v2641 = vld [vmem:[%s957 + $0xca] sm:$0xff]
    %v2642 = vld [vmem:[%s957 + $0xda] sm:$0xff]
    %v2643 = vld [vmem:[%s957 + $0xe2] sm:$0xff]
    %v2644 = vld [vmem:[%s957 + $0xf2] sm:$0xff]
    %v2645 = vld [vmem:[%s957 + $0xfa] sm:$0xff]
    %v2646 = vld [vmem:[%s957 + $0x10a] sm:$0xff]
    %v2647 = vld [vmem:[%s957 + $0x112] sm:$0xff]
    %v2648 = vld [vmem:[%s957 + $0x122] sm:$0xff]
    %v2649 = vld [vmem:[%s957 + $0x12a] sm:$0xff]
    %v2650 = vld [vmem:[%s957 + $0x13a] sm:$0xff]
    %v2651 = vld [vmem:[%s957 + $0x142] sm:$0xff]
    %v2652 = vld [vmem:[%s957 + $0x152] sm:$0xff]
    %v2653 = vld [vmem:[%s957 + $0x15a] sm:$0xff]
    %v2654 = vld [vmem:[%s957 + $0x16a] sm:$0xff]
    %v2655 = vld [vmem:[%s957 + $0x172] sm:$0xff]
    %v2656 = vpack.c.bf16 %v2624, %v2624
    %v2657 = vpack.c.bf16 %v2625, %v2625
    %v2658 = vpack.c.bf16 %v2626, %v2626
    %v2659 = vpack.c.bf16 %v2627, %v2627
    %v2660 = vpack.c.bf16 %v2628, %v2628
    %v2661 = vpack.c.bf16 %v2629, %v2629
    %v2662 = vpack.c.bf16 %v2630, %v2630
    %v2663 = vpack.c.bf16 %v2631, %v2631
    %v2664 = vpack.c.bf16 %v2632, %v2632
    %v2665 = vpack.c.bf16 %v2633, %v2633
    %v2666 = vpack.c.bf16 %v2634, %v2634
    %v2667 = vpack.c.bf16 %v2635, %v2635
    %v2668 = vpack.c.bf16 %v2636, %v2636
    %v2669 = vpack.c.bf16 %v2637, %v2637
    %v2670 = vpack.c.bf16 %v2638, %v2638
    %v2671 = vpack.c.bf16 %v2639, %v2639
    %v2672 = vpack.c.bf16 %v2640, %v2640
    %v2673 = vpack.c.bf16 %v2641, %v2641
    %v2674 = vpack.c.bf16 %v2642, %v2642
    %v2675 = vpack.c.bf16 %v2643, %v2643
    %v2676 = vpack.c.bf16 %v2644, %v2644
    %v2677 = vpack.c.bf16 %v2645, %v2645
    %v2678 = vpack.c.bf16 %v2646, %v2646
    %v2679 = vpack.c.bf16 %v2647, %v2647
    %v2680 = vpack.c.bf16 %v2648, %v2648
    %v2681 = vpack.c.bf16 %v2649, %v2649
    %v2682 = vpack.c.bf16 %v2650, %v2650
    %v2683 = vpack.c.bf16 %v2651, %v2651
    %v2684 = vpack.c.bf16 %v2652, %v2652
    %v2685 = vpack.c.bf16 %v2653, %v2653
    %v2686 = vpack.c.bf16 %v2654, %v2654
    %v2687 = vpack.c.bf16 %v2655, %v2655
    %v2688 = vld [vmem:[%s990 + $0x2] sm:$0xff]
    %v2689 = vld [vmem:[%s990 + $0xa] sm:$0xff]
    %v2690 = vld [vmem:[%s990 + $0x1a] sm:$0xff]
    %v2691 = vld [vmem:[%s990 + $0x22] sm:$0xff]
    %v2692 = vld [vmem:[%s990 + $0x32] sm:$0xff]
    %v2693 = vld [vmem:[%s990 + $0x3a] sm:$0xff]
    %v2694 = vld [vmem:[%s990 + $0x4a] sm:$0xff]
    %v2695 = vld [vmem:[%s990 + $0x52] sm:$0xff]
    %v2696 = vld [vmem:[%s990 + $0x62] sm:$0xff]
    %v2697 = vld [vmem:[%s990 + $0x6a] sm:$0xff]
    %v2698 = vld [vmem:[%s990 + $0x7a] sm:$0xff]
    %v2699 = vld [vmem:[%s990 + $0x82] sm:$0xff]
    %v2700 = vld [vmem:[%s990 + $0x92] sm:$0xff]
    %v2701 = vld [vmem:[%s990 + $0x9a] sm:$0xff]
    %v2702 = vld [vmem:[%s990 + $0xaa] sm:$0xff]
    %v2703 = vld [vmem:[%s990 + $0xb2] sm:$0xff]
    %v2704 = vld [vmem:[%s990 + $0xc2] sm:$0xff]
    %v2705 = vld [vmem:[%s990 + $0xca] sm:$0xff]
    %v2706 = vld [vmem:[%s990 + $0xda] sm:$0xff]
    %v2707 = vld [vmem:[%s990 + $0xe2] sm:$0xff]
    %v2708 = vld [vmem:[%s990 + $0xf2] sm:$0xff]
    %v2709 = vld [vmem:[%s990 + $0xfa] sm:$0xff]
    %v2710 = vld [vmem:[%s990 + $0x10a] sm:$0xff]
    %v2711 = vld [vmem:[%s990 + $0x112] sm:$0xff]
    %v2712 = vld [vmem:[%s990 + $0x122] sm:$0xff]
    %v2713 = vld [vmem:[%s990 + $0x12a] sm:$0xff]
    %v2714 = vld [vmem:[%s990 + $0x13a] sm:$0xff]
    %v2715 = vld [vmem:[%s990 + $0x142] sm:$0xff]
    %v2716 = vld [vmem:[%s990 + $0x152] sm:$0xff]
    %v2717 = vld [vmem:[%s990 + $0x15a] sm:$0xff]
    %v2718 = vld [vmem:[%s990 + $0x16a] sm:$0xff]
    %v2719 = vld [vmem:[%s990 + $0x172] sm:$0xff]
    %v2720 = vpack.c.bf16 %v2688, %v2688
    %v2721 = vpack.c.bf16 %v2689, %v2689
    %v2722 = vpack.c.bf16 %v2690, %v2690
    %v2723 = vpack.c.bf16 %v2691, %v2691
    %v2724 = vpack.c.bf16 %v2692, %v2692
    %v2725 = vpack.c.bf16 %v2693, %v2693
    %v2726 = vpack.c.bf16 %v2694, %v2694
    %v2727 = vpack.c.bf16 %v2695, %v2695
    %v2728 = vpack.c.bf16 %v2696, %v2696
    %v2729 = vpack.c.bf16 %v2697, %v2697
    %v2730 = vpack.c.bf16 %v2698, %v2698
    %v2731 = vpack.c.bf16 %v2699, %v2699
    %v2732 = vpack.c.bf16 %v2700, %v2700
    %v2733 = vpack.c.bf16 %v2701, %v2701
    %v2734 = vpack.c.bf16 %v2702, %v2702
    %v2735 = vpack.c.bf16 %v2703, %v2703
    %v2736 = vpack.c.bf16 %v2704, %v2704
    %v2737 = vpack.c.bf16 %v2705, %v2705
    %v2738 = vpack.c.bf16 %v2706, %v2706
    %v2739 = vpack.c.bf16 %v2707, %v2707
    %v2740 = vpack.c.bf16 %v2708, %v2708
    %v2741 = vpack.c.bf16 %v2709, %v2709
    %v2742 = vpack.c.bf16 %v2710, %v2710
    %v2743 = vpack.c.bf16 %v2711, %v2711
    %v2744 = vpack.c.bf16 %v2712, %v2712
    %v2745 = vpack.c.bf16 %v2713, %v2713
    %v2746 = vpack.c.bf16 %v2714, %v2714
    %v2747 = vpack.c.bf16 %v2715, %v2715
    %v2748 = vpack.c.bf16 %v2716, %v2716
    %v2749 = vpack.c.bf16 %v2717, %v2717
    %v2750 = vpack.c.bf16 %v2718, %v2718
    %v2751 = vpack.c.bf16 %v2719, %v2719
    %v2784 = vunpack.c.l.b16 %v2656
    %v2785 = vunpack.c.l.b16 %v2657
    %v2786 = vunpack.c.l.b16 %v2658
    %v2787 = vunpack.c.l.b16 %v2659
    %v2788 = vunpack.c.l.b16 %v2660
    %v2789 = vunpack.c.l.b16 %v2661
    %v2790 = vunpack.c.l.b16 %v2662
    %v2791 = vunpack.c.l.b16 %v2663
    %v2792 = vunpack.c.l.b16 %v2664
    %v2793 = vunpack.c.l.b16 %v2665
    %v2794 = vunpack.c.l.b16 %v2666
    %v2795 = vunpack.c.l.b16 %v2667
    %v2796 = vunpack.c.l.b16 %v2668
    %v2797 = vunpack.c.l.b16 %v2669
    %v2798 = vunpack.c.l.b16 %v2670
    %v2799 = vunpack.c.l.b16 %v2671
    %v2800 = vunpack.c.l.b16 %v2672
    %v2801 = vunpack.c.l.b16 %v2673
    %v2802 = vunpack.c.l.b16 %v2674
    %v2803 = vunpack.c.l.b16 %v2675
    %v2804 = vunpack.c.l.b16 %v2676
    %v2805 = vunpack.c.l.b16 %v2677
    %v2806 = vunpack.c.l.b16 %v2678
    %v2807 = vunpack.c.l.b16 %v2679
    %v2808 = vunpack.c.l.b16 %v2680
    %v2809 = vunpack.c.l.b16 %v2681
    %v2810 = vunpack.c.l.b16 %v2682
    %v2811 = vunpack.c.l.b16 %v2683
    %v2812 = vunpack.c.l.b16 %v2684
    %v2813 = vunpack.c.l.b16 %v2685
    %v2814 = vunpack.c.l.b16 %v2686
    %v2815 = vunpack.c.l.b16 %v2687
    %v2816 = vpack.c.b16 %v2785, %v2784
    %v2817 = vpack.c.b16 %v2787, %v2786
    %v2818 = vpack.c.b16 %v2789, %v2788
    %v2819 = vpack.c.b16 %v2791, %v2790
    %v2820 = vpack.c.b16 %v2793, %v2792
    %v2821 = vpack.c.b16 %v2795, %v2794
    %v2822 = vpack.c.b16 %v2797, %v2796
    %v2823 = vpack.c.b16 %v2799, %v2798
    %v2824 = vpack.c.b16 %v2801, %v2800
    %v2825 = vpack.c.b16 %v2803, %v2802
    %v2826 = vpack.c.b16 %v2805, %v2804
    %v2827 = vpack.c.b16 %v2807, %v2806
    %v2828 = vpack.c.b16 %v2809, %v2808
    %v2829 = vpack.c.b16 %v2811, %v2810
    %v2830 = vpack.c.b16 %v2813, %v2812
    %v2831 = vpack.c.b16 %v2815, %v2814
    %v2880 = vunpack.c.l.b16 %v2720
    %v2881 = vunpack.c.l.b16 %v2721
    %v2882 = vunpack.c.l.b16 %v2722
    %v2883 = vunpack.c.l.b16 %v2723
    %v2884 = vunpack.c.l.b16 %v2724
    %v2885 = vunpack.c.l.b16 %v2725
    %v2886 = vunpack.c.l.b16 %v2726
    %v2887 = vunpack.c.l.b16 %v2727
    %v2888 = vunpack.c.l.b16 %v2728
    %v2889 = vunpack.c.l.b16 %v2729
    %v2890 = vunpack.c.l.b16 %v2730
    %v2891 = vunpack.c.l.b16 %v2731
    %v2892 = vunpack.c.l.b16 %v2732
    %v2893 = vunpack.c.l.b16 %v2733
    %v2894 = vunpack.c.l.b16 %v2734
    %v2895 = vunpack.c.l.b16 %v2735
    %v2896 = vunpack.c.l.b16 %v2736
    %v2897 = vunpack.c.l.b16 %v2737
    %v2898 = vunpack.c.l.b16 %v2738
    %v2899 = vunpack.c.l.b16 %v2739
    %v2900 = vunpack.c.l.b16 %v2740
    %v2901 = vunpack.c.l.b16 %v2741
    %v2902 = vunpack.c.l.b16 %v2742
    %v2903 = vunpack.c.l.b16 %v2743
    %v2904 = vunpack.c.l.b16 %v2744
    %v2905 = vunpack.c.l.b16 %v2745
    %v2906 = vunpack.c.l.b16 %v2746
    %v2907 = vunpack.c.l.b16 %v2747
    %v2908 = vunpack.c.l.b16 %v2748
    %v2909 = vunpack.c.l.b16 %v2749
    %v2910 = vunpack.c.l.b16 %v2750
    %v2911 = vunpack.c.l.b16 %v2751
    %v2912 = vpack.c.b16 %v2881, %v2880
    %v2913 = vpack.c.b16 %v2883, %v2882
    %v2914 = vpack.c.b16 %v2885, %v2884
    %v2915 = vpack.c.b16 %v2887, %v2886
    %v2916 = vpack.c.b16 %v2889, %v2888
    %v2917 = vpack.c.b16 %v2891, %v2890
    %v2918 = vpack.c.b16 %v2893, %v2892
    %v2919 = vpack.c.b16 %v2895, %v2894
    %v2920 = vpack.c.b16 %v2897, %v2896
    %v2921 = vpack.c.b16 %v2899, %v2898
    %v2922 = vpack.c.b16 %v2901, %v2900
    %v2923 = vpack.c.b16 %v2903, %v2902
    %v2924 = vpack.c.b16 %v2905, %v2904
    %v2925 = vpack.c.b16 %v2907, %v2906
    %v2926 = vpack.c.b16 %v2909, %v2908
    %v2927 = vpack.c.b16 %v2911, %v2910
    %s2944 = scalar_lea.vmem [#allocation2], 48
    %v2945 = vld [vmem:[%s2944] sm:$0xff]
    %v2946 = vld [vmem:[%s2944 + $0x8] sm:$0xff]
    %v2947 = vld [vmem:[%s2944 + $0x18] sm:$0xff]
    %v2948 = vld [vmem:[%s2944 + $0x20] sm:$0xff]
    %v2949 = vld [vmem:[%s2944 + $0x30] sm:$0xff]
    %v2950 = vld [vmem:[%s2944 + $0x38] sm:$0xff]
    %v2951 = vld [vmem:[%s2944 + $0x48] sm:$0xff]
    %v2952 = vld [vmem:[%s2944 + $0x50] sm:$0xff]
    %v2953 = vld [vmem:[%s2944 + $0x60] sm:$0xff]
    %v2954 = vld [vmem:[%s2944 + $0x68] sm:$0xff]
    %v2955 = vld [vmem:[%s2944 + $0x78] sm:$0xff]
    %v2956 = vld [vmem:[%s2944 + $0x80] sm:$0xff]
    %v2957 = vld [vmem:[%s2944 + $0x90] sm:$0xff]
    %v2958 = vld [vmem:[%s2944 + $0x98] sm:$0xff]
    %v2959 = vld [vmem:[%s2944 + $0xa8] sm:$0xff]
    %v2960 = vld [vmem:[%s2944 + $0xb0] sm:$0xff]
    %v2961 = vld [vmem:[%s2944 + $0xc0] sm:$0xff]
    %v2962 = vld [vmem:[%s2944 + $0xc8] sm:$0xff]
    %v2963 = vld [vmem:[%s2944 + $0xd8] sm:$0xff]
    %v2964 = vld [vmem:[%s2944 + $0xe0] sm:$0xff]
    %v2965 = vld [vmem:[%s2944 + $0xf0] sm:$0xff]
    %v2966 = vld [vmem:[%s2944 + $0xf8] sm:$0xff]
    %v2967 = vld [vmem:[%s2944 + $0x108] sm:$0xff]
    %v2968 = vld [vmem:[%s2944 + $0x110] sm:$0xff]
    %v2969 = vld [vmem:[%s2944 + $0x120] sm:$0xff]
    %v2970 = vld [vmem:[%s2944 + $0x128] sm:$0xff]
    %v2971 = vld [vmem:[%s2944 + $0x138] sm:$0xff]
    %v2972 = vld [vmem:[%s2944 + $0x140] sm:$0xff]
    %v2973 = vld [vmem:[%s2944 + $0x150] sm:$0xff]
    %v2974 = vld [vmem:[%s2944 + $0x158] sm:$0xff]
    %v2975 = vld [vmem:[%s2944 + $0x168] sm:$0xff]
    %v2976 = vld [vmem:[%s2944 + $0x170] sm:$0xff]
    %v2977 = vpack.c.bf16 %v2945, %v2945
    %v2978 = vpack.c.bf16 %v2946, %v2946
    %v2979 = vpack.c.bf16 %v2947, %v2947
    %v2980 = vpack.c.bf16 %v2948, %v2948
    %v2981 = vpack.c.bf16 %v2949, %v2949
    %v2982 = vpack.c.bf16 %v2950, %v2950
    %v2983 = vpack.c.bf16 %v2951, %v2951
    %v2984 = vpack.c.bf16 %v2952, %v2952
    %v2985 = vpack.c.bf16 %v2953, %v2953
    %v2986 = vpack.c.bf16 %v2954, %v2954
    %v2987 = vpack.c.bf16 %v2955, %v2955
    %v2988 = vpack.c.bf16 %v2956, %v2956
    %v2989 = vpack.c.bf16 %v2957, %v2957
    %v2990 = vpack.c.bf16 %v2958, %v2958
    %v2991 = vpack.c.bf16 %v2959, %v2959
    %v2992 = vpack.c.bf16 %v2960, %v2960
    %v2993 = vpack.c.bf16 %v2961, %v2961
    %v2994 = vpack.c.bf16 %v2962, %v2962
    %v2995 = vpack.c.bf16 %v2963, %v2963
    %v2996 = vpack.c.bf16 %v2964, %v2964
    %v2997 = vpack.c.bf16 %v2965, %v2965
    %v2998 = vpack.c.bf16 %v2966, %v2966
    %v2999 = vpack.c.bf16 %v2967, %v2967
    %v3000 = vpack.c.bf16 %v2968, %v2968
    %v3001 = vpack.c.bf16 %v2969, %v2969
    %v3002 = vpack.c.bf16 %v2970, %v2970
    %v3003 = vpack.c.bf16 %v2971, %v2971
    %v3004 = vpack.c.bf16 %v2972, %v2972
    %v3005 = vpack.c.bf16 %v2973, %v2973
    %v3006 = vpack.c.bf16 %v2974, %v2974
    %v3007 = vpack.c.bf16 %v2975, %v2975
    %v3008 = vpack.c.bf16 %v2976, %v2976
    %s3009 = scalar_lea.vmem [#allocation2], 480
    %v3010 = vld [vmem:[%s3009] sm:$0xff]
    %v3011 = vld [vmem:[%s3009 + $0x8] sm:$0xff]
    %v3012 = vld [vmem:[%s3009 + $0x18] sm:$0xff]
    %v3013 = vld [vmem:[%s3009 + $0x20] sm:$0xff]
    %v3014 = vld [vmem:[%s3009 + $0x30] sm:$0xff]
    %v3015 = vld [vmem:[%s3009 + $0x38] sm:$0xff]
    %v3016 = vld [vmem:[%s3009 + $0x48] sm:$0xff]
    %v3017 = vld [vmem:[%s3009 + $0x50] sm:$0xff]
    %v3018 = vld [vmem:[%s3009 + $0x60] sm:$0xff]
    %v3019 = vld [vmem:[%s3009 + $0x68] sm:$0xff]
    %v3020 = vld [vmem:[%s3009 + $0x78] sm:$0xff]
    %v3021 = vld [vmem:[%s3009 + $0x80] sm:$0xff]
    %v3022 = vld [vmem:[%s3009 + $0x90] sm:$0xff]
    %v3023 = vld [vmem:[%s3009 + $0x98] sm:$0xff]
    %v3024 = vld [vmem:[%s3009 + $0xa8] sm:$0xff]
    %v3025 = vld [vmem:[%s3009 + $0xb0] sm:$0xff]
    %v3026 = vld [vmem:[%s3009 + $0xc0] sm:$0xff]
    %v3027 = vld [vmem:[%s3009 + $0xc8] sm:$0xff]
    %v3028 = vld [vmem:[%s3009 + $0xd8] sm:$0xff]
    %v3029 = vld [vmem:[%s3009 + $0xe0] sm:$0xff]
    %v3030 = vld [vmem:[%s3009 + $0xf0] sm:$0xff]
    %v3031 = vld [vmem:[%s3009 + $0xf8] sm:$0xff]
    %v3032 = vld [vmem:[%s3009 + $0x108] sm:$0xff]
    %v3033 = vld [vmem:[%s3009 + $0x110] sm:$0xff]
    %v3034 = vld [vmem:[%s3009 + $0x120] sm:$0xff]
    %v3035 = vld [vmem:[%s3009 + $0x128] sm:$0xff]
    %v3036 = vld [vmem:[%s3009 + $0x138] sm:$0xff]
    %v3037 = vld [vmem:[%s3009 + $0x140] sm:$0xff]
    %v3038 = vld [vmem:[%s3009 + $0x150] sm:$0xff]
    %v3039 = vld [vmem:[%s3009 + $0x158] sm:$0xff]
    %v3040 = vld [vmem:[%s3009 + $0x168] sm:$0xff]
    %v3041 = vld [vmem:[%s3009 + $0x170] sm:$0xff]
    %v3042 = vpack.c.bf16 %v3010, %v3010
    %v3043 = vpack.c.bf16 %v3011, %v3011
    %v3044 = vpack.c.bf16 %v3012, %v3012
    %v3045 = vpack.c.bf16 %v3013, %v3013
    %v3046 = vpack.c.bf16 %v3014, %v3014
    %v3047 = vpack.c.bf16 %v3015, %v3015
    %v3048 = vpack.c.bf16 %v3016, %v3016
    %v3049 = vpack.c.bf16 %v3017, %v3017
    %v3050 = vpack.c.bf16 %v3018, %v3018
    %v3051 = vpack.c.bf16 %v3019, %v3019
    %v3052 = vpack.c.bf16 %v3020, %v3020
    %v3053 = vpack.c.bf16 %v3021, %v3021
    %v3054 = vpack.c.bf16 %v3022, %v3022
    %v3055 = vpack.c.bf16 %v3023, %v3023
    %v3056 = vpack.c.bf16 %v3024, %v3024
    %v3057 = vpack.c.bf16 %v3025, %v3025
    %v3058 = vpack.c.bf16 %v3026, %v3026
    %v3059 = vpack.c.bf16 %v3027, %v3027
    %v3060 = vpack.c.bf16 %v3028, %v3028
    %v3061 = vpack.c.bf16 %v3029, %v3029
    %v3062 = vpack.c.bf16 %v3030, %v3030
    %v3063 = vpack.c.bf16 %v3031, %v3031
    %v3064 = vpack.c.bf16 %v3032, %v3032
    %v3065 = vpack.c.bf16 %v3033, %v3033
    %v3066 = vpack.c.bf16 %v3034, %v3034
    %v3067 = vpack.c.bf16 %v3035, %v3035
    %v3068 = vpack.c.bf16 %v3036, %v3036
    %v3069 = vpack.c.bf16 %v3037, %v3037
    %v3070 = vpack.c.bf16 %v3038, %v3038
    %v3071 = vpack.c.bf16 %v3039, %v3039
    %v3072 = vpack.c.bf16 %v3040, %v3040
    %v3073 = vpack.c.bf16 %v3041, %v3041
    %v3106 = vunpack.c.l.b16 %v2977
    %v3107 = vunpack.c.l.b16 %v2978
    %v3108 = vunpack.c.l.b16 %v2979
    %v3109 = vunpack.c.l.b16 %v2980
    %v3110 = vunpack.c.l.b16 %v2981
    %v3111 = vunpack.c.l.b16 %v2982
    %v3112 = vunpack.c.l.b16 %v2983
    %v3113 = vunpack.c.l.b16 %v2984
    %v3114 = vunpack.c.l.b16 %v2985
    %v3115 = vunpack.c.l.b16 %v2986
    %v3116 = vunpack.c.l.b16 %v2987
    %v3117 = vunpack.c.l.b16 %v2988
    %v3118 = vunpack.c.l.b16 %v2989
    %v3119 = vunpack.c.l.b16 %v2990
    %v3120 = vunpack.c.l.b16 %v2991
    %v3121 = vunpack.c.l.b16 %v2992
    %v3122 = vunpack.c.l.b16 %v2993
    %v3123 = vunpack.c.l.b16 %v2994
    %v3124 = vunpack.c.l.b16 %v2995
    %v3125 = vunpack.c.l.b16 %v2996
    %v3126 = vunpack.c.l.b16 %v2997
    %v3127 = vunpack.c.l.b16 %v2998
    %v3128 = vunpack.c.l.b16 %v2999
    %v3129 = vunpack.c.l.b16 %v3000
    %v3130 = vunpack.c.l.b16 %v3001
    %v3131 = vunpack.c.l.b16 %v3002
    %v3132 = vunpack.c.l.b16 %v3003
    %v3133 = vunpack.c.l.b16 %v3004
    %v3134 = vunpack.c.l.b16 %v3005
    %v3135 = vunpack.c.l.b16 %v3006
    %v3136 = vunpack.c.l.b16 %v3007
    %v3137 = vunpack.c.l.b16 %v3008
    %v3138 = vpack.c.b16 %v3107, %v3106
    %v3139 = vpack.c.b16 %v3109, %v3108
    %v3140 = vpack.c.b16 %v3111, %v3110
    %v3141 = vpack.c.b16 %v3113, %v3112
    %v3142 = vpack.c.b16 %v3115, %v3114
    %v3143 = vpack.c.b16 %v3117, %v3116
    %v3144 = vpack.c.b16 %v3119, %v3118
    %v3145 = vpack.c.b16 %v3121, %v3120
    %v3146 = vpack.c.b16 %v3123, %v3122
    %v3147 = vpack.c.b16 %v3125, %v3124
    %v3148 = vpack.c.b16 %v3127, %v3126
    %v3149 = vpack.c.b16 %v3129, %v3128
    %v3150 = vpack.c.b16 %v3131, %v3130
    %v3151 = vpack.c.b16 %v3133, %v3132
    %v3152 = vpack.c.b16 %v3135, %v3134
    %v3153 = vpack.c.b16 %v3137, %v3136
    %v3202 = vunpack.c.l.b16 %v3042
    %v3203 = vunpack.c.l.b16 %v3043
    %v3204 = vunpack.c.l.b16 %v3044
    %v3205 = vunpack.c.l.b16 %v3045
    %v3206 = vunpack.c.l.b16 %v3046
    %v3207 = vunpack.c.l.b16 %v3047
    %v3208 = vunpack.c.l.b16 %v3048
    %v3209 = vunpack.c.l.b16 %v3049
    %v3210 = vunpack.c.l.b16 %v3050
    %v3211 = vunpack.c.l.b16 %v3051
    %v3212 = vunpack.c.l.b16 %v3052
    %v3213 = vunpack.c.l.b16 %v3053
    %v3214 = vunpack.c.l.b16 %v3054
    %v3215 = vunpack.c.l.b16 %v3055
    %v3216 = vunpack.c.l.b16 %v3056
    %v3217 = vunpack.c.l.b16 %v3057
    %v3218 = vunpack.c.l.b16 %v3058
    %v3219 = vunpack.c.l.b16 %v3059
    %v3220 = vunpack.c.l.b16 %v3060
    %v3221 = vunpack.c.l.b16 %v3061
    %v3222 = vunpack.c.l.b16 %v3062
    %v3223 = vunpack.c.l.b16 %v3063
    %v3224 = vunpack.c.l.b16 %v3064
    %v3225 = vunpack.c.l.b16 %v3065
    %v3226 = vunpack.c.l.b16 %v3066
    %v3227 = vunpack.c.l.b16 %v3067
    %v3228 = vunpack.c.l.b16 %v3068
    %v3229 = vunpack.c.l.b16 %v3069
    %v3230 = vunpack.c.l.b16 %v3070
    %v3231 = vunpack.c.l.b16 %v3071
    %v3232 = vunpack.c.l.b16 %v3072
    %v3233 = vunpack.c.l.b16 %v3073
    %v3234 = vpack.c.b16 %v3203, %v3202
    %v3235 = vpack.c.b16 %v3205, %v3204
    %v3236 = vpack.c.b16 %v3207, %v3206
    %v3237 = vpack.c.b16 %v3209, %v3208
    %v3238 = vpack.c.b16 %v3211, %v3210
    %v3239 = vpack.c.b16 %v3213, %v3212
    %v3240 = vpack.c.b16 %v3215, %v3214
    %v3241 = vpack.c.b16 %v3217, %v3216
    %v3242 = vpack.c.b16 %v3219, %v3218
    %v3243 = vpack.c.b16 %v3221, %v3220
    %v3244 = vpack.c.b16 %v3223, %v3222
    %v3245 = vpack.c.b16 %v3225, %v3224
    %v3246 = vpack.c.b16 %v3227, %v3226
    %v3247 = vpack.c.b16 %v3229, %v3228
    %v3248 = vpack.c.b16 %v3231, %v3230
    %v3249 = vpack.c.b16 %v3233, %v3232
    %v3266 = vld [vmem:[%s2944 + $0x1] sm:$0xff]
    %v3267 = vld [vmem:[%s2944 + $0x9] sm:$0xff]
    %v3268 = vld [vmem:[%s2944 + $0x19] sm:$0xff]
    %v3269 = vld [vmem:[%s2944 + $0x21] sm:$0xff]
    %v3270 = vld [vmem:[%s2944 + $0x31] sm:$0xff]
    %v3271 = vld [vmem:[%s2944 + $0x39] sm:$0xff]
    %v3272 = vld [vmem:[%s2944 + $0x49] sm:$0xff]
    %v3273 = vld [vmem:[%s2944 + $0x51] sm:$0xff]
    %v3274 = vld [vmem:[%s2944 + $0x61] sm:$0xff]
    %v3275 = vld [vmem:[%s2944 + $0x69] sm:$0xff]
    %v3276 = vld [vmem:[%s2944 + $0x79] sm:$0xff]
    %v3277 = vld [vmem:[%s2944 + $0x81] sm:$0xff]
    %v3278 = vld [vmem:[%s2944 + $0x91] sm:$0xff]
    %v3279 = vld [vmem:[%s2944 + $0x99] sm:$0xff]
    %v3280 = vld [vmem:[%s2944 + $0xa9] sm:$0xff]
    %v3281 = vld [vmem:[%s2944 + $0xb1] sm:$0xff]
    %v3282 = vld [vmem:[%s2944 + $0xc1] sm:$0xff]
    %v3283 = vld [vmem:[%s2944 + $0xc9] sm:$0xff]
    %v3284 = vld [vmem:[%s2944 + $0xd9] sm:$0xff]
    %v3285 = vld [vmem:[%s2944 + $0xe1] sm:$0xff]
    %v3286 = vld [vmem:[%s2944 + $0xf1] sm:$0xff]
    %v3287 = vld [vmem:[%s2944 + $0xf9] sm:$0xff]
    %v3288 = vld [vmem:[%s2944 + $0x109] sm:$0xff]
    %v3289 = vld [vmem:[%s2944 + $0x111] sm:$0xff]
    %v3290 = vld [vmem:[%s2944 + $0x121] sm:$0xff]
    %v3291 = vld [vmem:[%s2944 + $0x129] sm:$0xff]
    %v3292 = vld [vmem:[%s2944 + $0x139] sm:$0xff]
    %v3293 = vld [vmem:[%s2944 + $0x141] sm:$0xff]
    %v3294 = vld [vmem:[%s2944 + $0x151] sm:$0xff]
    %v3295 = vld [vmem:[%s2944 + $0x159] sm:$0xff]
    %v3296 = vld [vmem:[%s2944 + $0x169] sm:$0xff]
    %v3297 = vld [vmem:[%s2944 + $0x171] sm:$0xff]
    %v3298 = vpack.c.bf16 %v3266, %v3266
    %v3299 = vpack.c.bf16 %v3267, %v3267
    %v3300 = vpack.c.bf16 %v3268, %v3268
    %v3301 = vpack.c.bf16 %v3269, %v3269
    %v3302 = vpack.c.bf16 %v3270, %v3270
    %v3303 = vpack.c.bf16 %v3271, %v3271
    %v3304 = vpack.c.bf16 %v3272, %v3272
    %v3305 = vpack.c.bf16 %v3273, %v3273
    %v3306 = vpack.c.bf16 %v3274, %v3274
    %v3307 = vpack.c.bf16 %v3275, %v3275
    %v3308 = vpack.c.bf16 %v3276, %v3276
    %v3309 = vpack.c.bf16 %v3277, %v3277
    %v3310 = vpack.c.bf16 %v3278, %v3278
    %v3311 = vpack.c.bf16 %v3279, %v3279
    %v3312 = vpack.c.bf16 %v3280, %v3280
    %v3313 = vpack.c.bf16 %v3281, %v3281
    %v3314 = vpack.c.bf16 %v3282, %v3282
    %v3315 = vpack.c.bf16 %v3283, %v3283
    %v3316 = vpack.c.bf16 %v3284, %v3284
    %v3317 = vpack.c.bf16 %v3285, %v3285
    %v3318 = vpack.c.bf16 %v3286, %v3286
    %v3319 = vpack.c.bf16 %v3287, %v3287
    %v3320 = vpack.c.bf16 %v3288, %v3288
    %v3321 = vpack.c.bf16 %v3289, %v3289
    %v3322 = vpack.c.bf16 %v3290, %v3290
    %v3323 = vpack.c.bf16 %v3291, %v3291
    %v3324 = vpack.c.bf16 %v3292, %v3292
    %v3325 = vpack.c.bf16 %v3293, %v3293
    %v3326 = vpack.c.bf16 %v3294, %v3294
    %v3327 = vpack.c.bf16 %v3295, %v3295
    %v3328 = vpack.c.bf16 %v3296, %v3296
    %v3329 = vpack.c.bf16 %v3297, %v3297
    %v3330 = vld [vmem:[%s3009 + $0x1] sm:$0xff]
    %v3331 = vld [vmem:[%s3009 + $0x9] sm:$0xff]
    %v3332 = vld [vmem:[%s3009 + $0x19] sm:$0xff]
    %v3333 = vld [vmem:[%s3009 + $0x21] sm:$0xff]
    %v3334 = vld [vmem:[%s3009 + $0x31] sm:$0xff]
    %v3335 = vld [vmem:[%s3009 + $0x39] sm:$0xff]
    %v3336 = vld [vmem:[%s3009 + $0x49] sm:$0xff]
    %v3337 = vld [vmem:[%s3009 + $0x51] sm:$0xff]
    %v3338 = vld [vmem:[%s3009 + $0x61] sm:$0xff]
    %v3339 = vld [vmem:[%s3009 + $0x69] sm:$0xff]
    %v3340 = vld [vmem:[%s3009 + $0x79] sm:$0xff]
    %v3341 = vld [vmem:[%s3009 + $0x81] sm:$0xff]
    %v3342 = vld [vmem:[%s3009 + $0x91] sm:$0xff]
    %v3343 = vld [vmem:[%s3009 + $0x99] sm:$0xff]
    %v3344 = vld [vmem:[%s3009 + $0xa9] sm:$0xff]
    %v3345 = vld [vmem:[%s3009 + $0xb1] sm:$0xff]
    %v3346 = vld [vmem:[%s3009 + $0xc1] sm:$0xff]
    %v3347 = vld [vmem:[%s3009 + $0xc9] sm:$0xff]
    %v3348 = vld [vmem:[%s3009 + $0xd9] sm:$0xff]
    %v3349 = vld [vmem:[%s3009 + $0xe1] sm:$0xff]
    %v3350 = vld [vmem:[%s3009 + $0xf1] sm:$0xff]
    %v3351 = vld [vmem:[%s3009 + $0xf9] sm:$0xff]
    %v3352 = vld [vmem:[%s3009 + $0x109] sm:$0xff]
    %v3353 = vld [vmem:[%s3009 + $0x111] sm:$0xff]
    %v3354 = vld [vmem:[%s3009 + $0x121] sm:$0xff]
    %v3355 = vld [vmem:[%s3009 + $0x129] sm:$0xff]
    %v3356 = vld [vmem:[%s3009 + $0x139] sm:$0xff]
    %v3357 = vld [vmem:[%s3009 + $0x141] sm:$0xff]
    %v3358 = vld [vmem:[%s3009 + $0x151] sm:$0xff]
    %v3359 = vld [vmem:[%s3009 + $0x159] sm:$0xff]
    %v3360 = vld [vmem:[%s3009 + $0x169] sm:$0xff]
    %v3361 = vld [vmem:[%s3009 + $0x171] sm:$0xff]
    %v3362 = vpack.c.bf16 %v3330, %v3330
    %v3363 = vpack.c.bf16 %v3331, %v3331
    %v3364 = vpack.c.bf16 %v3332, %v3332
    %v3365 = vpack.c.bf16 %v3333, %v3333
    %v3366 = vpack.c.bf16 %v3334, %v3334
    %v3367 = vpack.c.bf16 %v3335, %v3335
    %v3368 = vpack.c.bf16 %v3336, %v3336
    %v3369 = vpack.c.bf16 %v3337, %v3337
    %v3370 = vpack.c.bf16 %v3338, %v3338
    %v3371 = vpack.c.bf16 %v3339, %v3339
    %v3372 = vpack.c.bf16 %v3340, %v3340
    %v3373 = vpack.c.bf16 %v3341, %v3341
    %v3374 = vpack.c.bf16 %v3342, %v3342
    %v3375 = vpack.c.bf16 %v3343, %v3343
    %v3376 = vpack.c.bf16 %v3344, %v3344
    %v3377 = vpack.c.bf16 %v3345, %v3345
    %v3378 = vpack.c.bf16 %v3346, %v3346
    %v3379 = vpack.c.bf16 %v3347, %v3347
    %v3380 = vpack.c.bf16 %v3348, %v3348
    %v3381 = vpack.c.bf16 %v3349, %v3349
    %v3382 = vpack.c.bf16 %v3350, %v3350
    %v3383 = vpack.c.bf16 %v3351, %v3351
    %v3384 = vpack.c.bf16 %v3352, %v3352
    %v3385 = vpack.c.bf16 %v3353, %v3353
    %v3386 = vpack.c.bf16 %v3354, %v3354
    %v3387 = vpack.c.bf16 %v3355, %v3355
    %v3388 = vpack.c.bf16 %v3356, %v3356
    %v3389 = vpack.c.bf16 %v3357, %v3357
    %v3390 = vpack.c.bf16 %v3358, %v3358
    %v3391 = vpack.c.bf16 %v3359, %v3359
    %v3392 = vpack.c.bf16 %v3360, %v3360
    %v3393 = vpack.c.bf16 %v3361, %v3361
    %v3426 = vunpack.c.l.b16 %v3298
    %v3427 = vunpack.c.l.b16 %v3299
    %v3428 = vunpack.c.l.b16 %v3300
    %v3429 = vunpack.c.l.b16 %v3301
    %v3430 = vunpack.c.l.b16 %v3302
    %v3431 = vunpack.c.l.b16 %v3303
    %v3432 = vunpack.c.l.b16 %v3304
    %v3433 = vunpack.c.l.b16 %v3305
    %v3434 = vunpack.c.l.b16 %v3306
    %v3435 = vunpack.c.l.b16 %v3307
    %v3436 = vunpack.c.l.b16 %v3308
    %v3437 = vunpack.c.l.b16 %v3309
    %v3438 = vunpack.c.l.b16 %v3310
    %v3439 = vunpack.c.l.b16 %v3311
    %v3440 = vunpack.c.l.b16 %v3312
    %v3441 = vunpack.c.l.b16 %v3313
    %v3442 = vunpack.c.l.b16 %v3314
    %v3443 = vunpack.c.l.b16 %v3315
    %v3444 = vunpack.c.l.b16 %v3316
    %v3445 = vunpack.c.l.b16 %v3317
    %v3446 = vunpack.c.l.b16 %v3318
    %v3447 = vunpack.c.l.b16 %v3319
    %v3448 = vunpack.c.l.b16 %v3320
    %v3449 = vunpack.c.l.b16 %v3321
    %v3450 = vunpack.c.l.b16 %v3322
    %v3451 = vunpack.c.l.b16 %v3323
    %v3452 = vunpack.c.l.b16 %v3324
    %v3453 = vunpack.c.l.b16 %v3325
    %v3454 = vunpack.c.l.b16 %v3326
    %v3455 = vunpack.c.l.b16 %v3327
    %v3456 = vunpack.c.l.b16 %v3328
    %v3457 = vunpack.c.l.b16 %v3329
    %v3458 = vpack.c.b16 %v3427, %v3426
    %v3459 = vpack.c.b16 %v3429, %v3428
    %v3460 = vpack.c.b16 %v3431, %v3430
    %v3461 = vpack.c.b16 %v3433, %v3432
    %v3462 = vpack.c.b16 %v3435, %v3434
    %v3463 = vpack.c.b16 %v3437, %v3436
    %v3464 = vpack.c.b16 %v3439, %v3438
    %v3465 = vpack.c.b16 %v3441, %v3440
    %v3466 = vpack.c.b16 %v3443, %v3442
    %v3467 = vpack.c.b16 %v3445, %v3444
    %v3468 = vpack.c.b16 %v3447, %v3446
    %v3469 = vpack.c.b16 %v3449, %v3448
    %v3470 = vpack.c.b16 %v3451, %v3450
    %v3471 = vpack.c.b16 %v3453, %v3452
    %v3472 = vpack.c.b16 %v3455, %v3454
    %v3473 = vpack.c.b16 %v3457, %v3456
    %v3522 = vunpack.c.l.b16 %v3362
    %v3523 = vunpack.c.l.b16 %v3363
    %v3524 = vunpack.c.l.b16 %v3364
    %v3525 = vunpack.c.l.b16 %v3365
    %v3526 = vunpack.c.l.b16 %v3366
    %v3527 = vunpack.c.l.b16 %v3367
    %v3528 = vunpack.c.l.b16 %v3368
    %v3529 = vunpack.c.l.b16 %v3369
    %v3530 = vunpack.c.l.b16 %v3370
    %v3531 = vunpack.c.l.b16 %v3371
    %v3532 = vunpack.c.l.b16 %v3372
    %v3533 = vunpack.c.l.b16 %v3373
    %v3534 = vunpack.c.l.b16 %v3374
    %v3535 = vunpack.c.l.b16 %v3375
    %v3536 = vunpack.c.l.b16 %v3376
    %v3537 = vunpack.c.l.b16 %v3377
    %v3538 = vunpack.c.l.b16 %v3378
    %v3539 = vunpack.c.l.b16 %v3379
    %v3540 = vunpack.c.l.b16 %v3380
    %v3541 = vunpack.c.l.b16 %v3381
    %v3542 = vunpack.c.l.b16 %v3382
    %v3543 = vunpack.c.l.b16 %v3383
    %v3544 = vunpack.c.l.b16 %v3384
    %v3545 = vunpack.c.l.b16 %v3385
    %v3546 = vunpack.c.l.b16 %v3386
    %v3547 = vunpack.c.l.b16 %v3387
    %v3548 = vunpack.c.l.b16 %v3388
    %v3549 = vunpack.c.l.b16 %v3389
    %v3550 = vunpack.c.l.b16 %v3390
    %v3551 = vunpack.c.l.b16 %v3391
    %v3552 = vunpack.c.l.b16 %v3392
    %v3553 = vunpack.c.l.b16 %v3393
    %v3554 = vpack.c.b16 %v3523, %v3522
    %v3555 = vpack.c.b16 %v3525, %v3524
    %v3556 = vpack.c.b16 %v3527, %v3526
    %v3557 = vpack.c.b16 %v3529, %v3528
    %v3558 = vpack.c.b16 %v3531, %v3530
    %v3559 = vpack.c.b16 %v3533, %v3532
    %v3560 = vpack.c.b16 %v3535, %v3534
    %v3561 = vpack.c.b16 %v3537, %v3536
    %v3562 = vpack.c.b16 %v3539, %v3538
    %v3563 = vpack.c.b16 %v3541, %v3540
    %v3564 = vpack.c.b16 %v3543, %v3542
    %v3565 = vpack.c.b16 %v3545, %v3544
    %v3566 = vpack.c.b16 %v3547, %v3546
    %v3567 = vpack.c.b16 %v3549, %v3548
    %v3568 = vpack.c.b16 %v3551, %v3550
    %v3569 = vpack.c.b16 %v3553, %v3552
    %v3586 = vld [vmem:[%s2944 + $0x2] sm:$0xff]
    %v3587 = vld [vmem:[%s2944 + $0xa] sm:$0xff]
    %v3588 = vld [vmem:[%s2944 + $0x1a] sm:$0xff]
    %v3589 = vld [vmem:[%s2944 + $0x22] sm:$0xff]
    %v3590 = vld [vmem:[%s2944 + $0x32] sm:$0xff]
    %v3591 = vld [vmem:[%s2944 + $0x3a] sm:$0xff]
    %v3592 = vld [vmem:[%s2944 + $0x4a] sm:$0xff]
    %v3593 = vld [vmem:[%s2944 + $0x52] sm:$0xff]
    %v3594 = vld [vmem:[%s2944 + $0x62] sm:$0xff]
    %v3595 = vld [vmem:[%s2944 + $0x6a] sm:$0xff]
    %v3596 = vld [vmem:[%s2944 + $0x7a] sm:$0xff]
    %v3597 = vld [vmem:[%s2944 + $0x82] sm:$0xff]
    %v3598 = vld [vmem:[%s2944 + $0x92] sm:$0xff]
    %v3599 = vld [vmem:[%s2944 + $0x9a] sm:$0xff]
    %v3600 = vld [vmem:[%s2944 + $0xaa] sm:$0xff]
    %v3601 = vld [vmem:[%s2944 + $0xb2] sm:$0xff]
    %v3602 = vld [vmem:[%s2944 + $0xc2] sm:$0xff]
    %v3603 = vld [vmem:[%s2944 + $0xca] sm:$0xff]
    %v3604 = vld [vmem:[%s2944 + $0xda] sm:$0xff]
    %v3605 = vld [vmem:[%s2944 + $0xe2] sm:$0xff]
    %v3606 = vld [vmem:[%s2944 + $0xf2] sm:$0xff]
    %v3607 = vld [vmem:[%s2944 + $0xfa] sm:$0xff]
    %v3608 = vld [vmem:[%s2944 + $0x10a] sm:$0xff]
    %v3609 = vld [vmem:[%s2944 + $0x112] sm:$0xff]
    %v3610 = vld [vmem:[%s2944 + $0x122] sm:$0xff]
    %v3611 = vld [vmem:[%s2944 + $0x12a] sm:$0xff]
    %v3612 = vld [vmem:[%s2944 + $0x13a] sm:$0xff]
    %v3613 = vld [vmem:[%s2944 + $0x142] sm:$0xff]
    %v3614 = vld [vmem:[%s2944 + $0x152] sm:$0xff]
    %v3615 = vld [vmem:[%s2944 + $0x15a] sm:$0xff]
    %v3616 = vld [vmem:[%s2944 + $0x16a] sm:$0xff]
    %v3617 = vld [vmem:[%s2944 + $0x172] sm:$0xff]
    %v3618 = vpack.c.bf16 %v3586, %v3586
    %v3619 = vpack.c.bf16 %v3587, %v3587
    %v3620 = vpack.c.bf16 %v3588, %v3588
    %v3621 = vpack.c.bf16 %v3589, %v3589
    %v3622 = vpack.c.bf16 %v3590, %v3590
    %v3623 = vpack.c.bf16 %v3591, %v3591
    %v3624 = vpack.c.bf16 %v3592, %v3592
    %v3625 = vpack.c.bf16 %v3593, %v3593
    %v3626 = vpack.c.bf16 %v3594, %v3594
    %v3627 = vpack.c.bf16 %v3595, %v3595
    %v3628 = vpack.c.bf16 %v3596, %v3596
    %v3629 = vpack.c.bf16 %v3597, %v3597
    %v3630 = vpack.c.bf16 %v3598, %v3598
    %v3631 = vpack.c.bf16 %v3599, %v3599
    %v3632 = vpack.c.bf16 %v3600, %v3600
    %v3633 = vpack.c.bf16 %v3601, %v3601
    %v3634 = vpack.c.bf16 %v3602, %v3602
    %v3635 = vpack.c.bf16 %v3603, %v3603
    %v3636 = vpack.c.bf16 %v3604, %v3604
    %v3637 = vpack.c.bf16 %v3605, %v3605
    %v3638 = vpack.c.bf16 %v3606, %v3606
    %v3639 = vpack.c.bf16 %v3607, %v3607
    %v3640 = vpack.c.bf16 %v3608, %v3608
    %v3641 = vpack.c.bf16 %v3609, %v3609
    %v3642 = vpack.c.bf16 %v3610, %v3610
    %v3643 = vpack.c.bf16 %v3611, %v3611
    %v3644 = vpack.c.bf16 %v3612, %v3612
    %v3645 = vpack.c.bf16 %v3613, %v3613
    %v3646 = vpack.c.bf16 %v3614, %v3614
    %v3647 = vpack.c.bf16 %v3615, %v3615
    %v3648 = vpack.c.bf16 %v3616, %v3616
    %v3649 = vpack.c.bf16 %v3617, %v3617
    %v3650 = vld [vmem:[%s3009 + $0x2] sm:$0xff]
    %v3651 = vld [vmem:[%s3009 + $0xa] sm:$0xff]
    %v3652 = vld [vmem:[%s3009 + $0x1a] sm:$0xff]
    %v3653 = vld [vmem:[%s3009 + $0x22] sm:$0xff]
    %v3654 = vld [vmem:[%s3009 + $0x32] sm:$0xff]
    %v3655 = vld [vmem:[%s3009 + $0x3a] sm:$0xff]
    %v3656 = vld [vmem:[%s3009 + $0x4a] sm:$0xff]
    %v3657 = vld [vmem:[%s3009 + $0x52] sm:$0xff]
    %v3658 = vld [vmem:[%s3009 + $0x62] sm:$0xff]
    %v3659 = vld [vmem:[%s3009 + $0x6a] sm:$0xff]
    %v3660 = vld [vmem:[%s3009 + $0x7a] sm:$0xff]
    %v3661 = vld [vmem:[%s3009 + $0x82] sm:$0xff]
    %v3662 = vld [vmem:[%s3009 + $0x92] sm:$0xff]
    %v3663 = vld [vmem:[%s3009 + $0x9a] sm:$0xff]
    %v3664 = vld [vmem:[%s3009 + $0xaa] sm:$0xff]
    %v3665 = vld [vmem:[%s3009 + $0xb2] sm:$0xff]
    %v3666 = vld [vmem:[%s3009 + $0xc2] sm:$0xff]
    %v3667 = vld [vmem:[%s3009 + $0xca] sm:$0xff]
    %v3668 = vld [vmem:[%s3009 + $0xda] sm:$0xff]
    %v3669 = vld [vmem:[%s3009 + $0xe2] sm:$0xff]
    %v3670 = vld [vmem:[%s3009 + $0xf2] sm:$0xff]
    %v3671 = vld [vmem:[%s3009 + $0xfa] sm:$0xff]
    %v3672 = vld [vmem:[%s3009 + $0x10a] sm:$0xff]
    %v3673 = vld [vmem:[%s3009 + $0x112] sm:$0xff]
    %v3674 = vld [vmem:[%s3009 + $0x122] sm:$0xff]
    %v3675 = vld [vmem:[%s3009 + $0x12a] sm:$0xff]
    %v3676 = vld [vmem:[%s3009 + $0x13a] sm:$0xff]
    %v3677 = vld [vmem:[%s3009 + $0x142] sm:$0xff]
    %v3678 = vld [vmem:[%s3009 + $0x152] sm:$0xff]
    %v3679 = vld [vmem:[%s3009 + $0x15a] sm:$0xff]
    %v3680 = vld [vmem:[%s3009 + $0x16a] sm:$0xff]
    %v3681 = vld [vmem:[%s3009 + $0x172] sm:$0xff]
    %v3682 = vpack.c.bf16 %v3650, %v3650
    %v3683 = vpack.c.bf16 %v3651, %v3651
    %v3684 = vpack.c.bf16 %v3652, %v3652
    %v3685 = vpack.c.bf16 %v3653, %v3653
    %v3686 = vpack.c.bf16 %v3654, %v3654
    %v3687 = vpack.c.bf16 %v3655, %v3655
    %v3688 = vpack.c.bf16 %v3656, %v3656
    %v3689 = vpack.c.bf16 %v3657, %v3657
    %v3690 = vpack.c.bf16 %v3658, %v3658
    %v3691 = vpack.c.bf16 %v3659, %v3659
    %v3692 = vpack.c.bf16 %v3660, %v3660
    %v3693 = vpack.c.bf16 %v3661, %v3661
    %v3694 = vpack.c.bf16 %v3662, %v3662
    %v3695 = vpack.c.bf16 %v3663, %v3663
    %v3696 = vpack.c.bf16 %v3664, %v3664
    %v3697 = vpack.c.bf16 %v3665, %v3665
    %v3698 = vpack.c.bf16 %v3666, %v3666
    %v3699 = vpack.c.bf16 %v3667, %v3667
    %v3700 = vpack.c.bf16 %v3668, %v3668
    %v3701 = vpack.c.bf16 %v3669, %v3669
    %v3702 = vpack.c.bf16 %v3670, %v3670
    %v3703 = vpack.c.bf16 %v3671, %v3671
    %v3704 = vpack.c.bf16 %v3672, %v3672
    %v3705 = vpack.c.bf16 %v3673, %v3673
    %v3706 = vpack.c.bf16 %v3674, %v3674
    %v3707 = vpack.c.bf16 %v3675, %v3675
    %v3708 = vpack.c.bf16 %v3676, %v3676
    %v3709 = vpack.c.bf16 %v3677, %v3677
    %v3710 = vpack.c.bf16 %v3678, %v3678
    %v3711 = vpack.c.bf16 %v3679, %v3679
    %v3712 = vpack.c.bf16 %v3680, %v3680
    %v3713 = vpack.c.bf16 %v3681, %v3681
    %v3746 = vunpack.c.l.b16 %v3618
    %v3747 = vunpack.c.l.b16 %v3619
    %v3748 = vunpack.c.l.b16 %v3620
    %v3749 = vunpack.c.l.b16 %v3621
    %v3750 = vunpack.c.l.b16 %v3622
    %v3751 = vunpack.c.l.b16 %v3623
    %v3752 = vunpack.c.l.b16 %v3624
    %v3753 = vunpack.c.l.b16 %v3625
    %v3754 = vunpack.c.l.b16 %v3626
    %v3755 = vunpack.c.l.b16 %v3627
    %v3756 = vunpack.c.l.b16 %v3628
    %v3757 = vunpack.c.l.b16 %v3629
    %v3758 = vunpack.c.l.b16 %v3630
    %v3759 = vunpack.c.l.b16 %v3631
    %v3760 = vunpack.c.l.b16 %v3632
    %v3761 = vunpack.c.l.b16 %v3633
    %v3762 = vunpack.c.l.b16 %v3634
    %v3763 = vunpack.c.l.b16 %v3635
    %v3764 = vunpack.c.l.b16 %v3636
    %v3765 = vunpack.c.l.b16 %v3637
    %v3766 = vunpack.c.l.b16 %v3638
    %v3767 = vunpack.c.l.b16 %v3639
    %v3768 = vunpack.c.l.b16 %v3640
    %v3769 = vunpack.c.l.b16 %v3641
    %v3770 = vunpack.c.l.b16 %v3642
    %v3771 = vunpack.c.l.b16 %v3643
    %v3772 = vunpack.c.l.b16 %v3644
    %v3773 = vunpack.c.l.b16 %v3645
    %v3774 = vunpack.c.l.b16 %v3646
    %v3775 = vunpack.c.l.b16 %v3647
    %v3776 = vunpack.c.l.b16 %v3648
    %v3777 = vunpack.c.l.b16 %v3649
    %v3778 = vpack.c.b16 %v3747, %v3746
    %v3779 = vpack.c.b16 %v3749, %v3748
    %v3780 = vpack.c.b16 %v3751, %v3750
    %v3781 = vpack.c.b16 %v3753, %v3752
    %v3782 = vpack.c.b16 %v3755, %v3754
    %v3783 = vpack.c.b16 %v3757, %v3756
    %v3784 = vpack.c.b16 %v3759, %v3758
    %v3785 = vpack.c.b16 %v3761, %v3760
    %v3786 = vpack.c.b16 %v3763, %v3762
    %v3787 = vpack.c.b16 %v3765, %v3764
    %v3788 = vpack.c.b16 %v3767, %v3766
    %v3789 = vpack.c.b16 %v3769, %v3768
    %v3790 = vpack.c.b16 %v3771, %v3770
    %v3791 = vpack.c.b16 %v3773, %v3772
    %v3792 = vpack.c.b16 %v3775, %v3774
    %v3793 = vpack.c.b16 %v3777, %v3776
    %v3842 = vunpack.c.l.b16 %v3682
    %v3843 = vunpack.c.l.b16 %v3683
    %v3844 = vunpack.c.l.b16 %v3684
    %v3845 = vunpack.c.l.b16 %v3685
    %v3846 = vunpack.c.l.b16 %v3686
    %v3847 = vunpack.c.l.b16 %v3687
    %v3848 = vunpack.c.l.b16 %v3688
    %v3849 = vunpack.c.l.b16 %v3689
    %v3850 = vunpack.c.l.b16 %v3690
    %v3851 = vunpack.c.l.b16 %v3691
    %v3852 = vunpack.c.l.b16 %v3692
    %v3853 = vunpack.c.l.b16 %v3693
    %v3854 = vunpack.c.l.b16 %v3694
    %v3855 = vunpack.c.l.b16 %v3695
    %v3856 = vunpack.c.l.b16 %v3696
    %v3857 = vunpack.c.l.b16 %v3697
    %v3858 = vunpack.c.l.b16 %v3698
    %v3859 = vunpack.c.l.b16 %v3699
    %v3860 = vunpack.c.l.b16 %v3700
    %v3861 = vunpack.c.l.b16 %v3701
    %v3862 = vunpack.c.l.b16 %v3702
    %v3863 = vunpack.c.l.b16 %v3703
    %v3864 = vunpack.c.l.b16 %v3704
    %v3865 = vunpack.c.l.b16 %v3705
    %v3866 = vunpack.c.l.b16 %v3706
    %v3867 = vunpack.c.l.b16 %v3707
    %v3868 = vunpack.c.l.b16 %v3708
    %v3869 = vunpack.c.l.b16 %v3709
    %v3870 = vunpack.c.l.b16 %v3710
    %v3871 = vunpack.c.l.b16 %v3711
    %v3872 = vunpack.c.l.b16 %v3712
    %v3873 = vunpack.c.l.b16 %v3713
    %v3874 = vpack.c.b16 %v3843, %v3842
    %v3875 = vpack.c.b16 %v3845, %v3844
    %v3876 = vpack.c.b16 %v3847, %v3846
    %v3877 = vpack.c.b16 %v3849, %v3848
    %v3878 = vpack.c.b16 %v3851, %v3850
    %v3879 = vpack.c.b16 %v3853, %v3852
    %v3880 = vpack.c.b16 %v3855, %v3854
    %v3881 = vpack.c.b16 %v3857, %v3856
    %v3882 = vpack.c.b16 %v3859, %v3858
    %v3883 = vpack.c.b16 %v3861, %v3860
    %v3884 = vpack.c.b16 %v3863, %v3862
    %v3885 = vpack.c.b16 %v3865, %v3864
    %v3886 = vpack.c.b16 %v3867, %v3866
    %v3887 = vpack.c.b16 %v3869, %v3868
    %v3888 = vpack.c.b16 %v3871, %v3870
    %v3889 = vpack.c.b16 %v3873, %v3872
    %v3906 = vld [vmem:[#allocation8] sm:$0xf]
    %v3907 = vld [vmem:[#allocation8 + $0x4] sm:$0xf]
    %v3908 = vld [vmem:[#allocation8 + $0x8] sm:$0xf]
    %v3909 = vld [vmem:[#allocation8 + $0xc] sm:$0xf]
    %v3910 = vld [vmem:[#allocation8 + $0x10] sm:$0xf]
    %v3911 = vld [vmem:[#allocation8 + $0x14] sm:$0xf]
    %v3912 = vld [vmem:[#allocation8 + $0x18] sm:$0xf]
    %v3913 = vld [vmem:[#allocation8 + $0x1c] sm:$0xf]
    %v3914 = vld [vmem:[#allocation8 + $0x20] sm:$0xf]
    %v3915 = vld [vmem:[#allocation8 + $0x24] sm:$0xf]
    %v3916 = vld [vmem:[#allocation8 + $0x28] sm:$0xf]
    %v3917 = vld [vmem:[#allocation8 + $0x2c] sm:$0xf]
    %v3918 = vld [vmem:[#allocation8 + $0x30] sm:$0xf]
    %v3919 = vld [vmem:[#allocation8 + $0x34] sm:$0xf]
    %v3920 = vld [vmem:[#allocation8 + $0x38] sm:$0xf]
    %v3921 = vld [vmem:[#allocation8 + $0x3c] sm:$0xf]
    %v3922 = vld [vmem:[#allocation8 + $0x40] sm:$0xf]
    %v3923 = vld [vmem:[#allocation8 + $0x44] sm:$0xf]
    %v3924 = vld [vmem:[#allocation8 + $0x48] sm:$0xf]
    %v3925 = vld [vmem:[#allocation8 + $0x4c] sm:$0xf]
    %v3926 = vld [vmem:[#allocation8 + $0x50] sm:$0xf]
    %v3927 = vld [vmem:[#allocation8 + $0x54] sm:$0xf]
    %v3928 = vld [vmem:[#allocation8 + $0x58] sm:$0xf]
    %v3929 = vld [vmem:[#allocation8 + $0x5c] sm:$0xf]
    %v3930 = vld [vmem:[#allocation8 + $0x60] sm:$0xf]
    %v3931 = vld [vmem:[#allocation8 + $0x64] sm:$0xf]
    %v3932 = vld [vmem:[#allocation8 + $0x68] sm:$0xf]
    %v3933 = vld [vmem:[#allocation8 + $0x6c] sm:$0xf]
    %v3934 = vld [vmem:[#allocation8 + $0x70] sm:$0xf]
    %v3935 = vld [vmem:[#allocation8 + $0x74] sm:$0xf]
    %v3936 = vld [vmem:[#allocation8 + $0x78] sm:$0xf]
    %v3937 = vld [vmem:[#allocation8 + $0x7c] sm:$0xf]
    %v3938 = vld [vmem:[#allocation8 + $0x80] sm:$0xf]
    %v3939 = vld [vmem:[#allocation8 + $0x84] sm:$0xf]
    %v3940 = vld [vmem:[#allocation8 + $0x88] sm:$0xf]
    %v3941 = vld [vmem:[#allocation8 + $0x8c] sm:$0xf]
    %v3942 = vld [vmem:[#allocation8 + $0x90] sm:$0xf]
    %v3943 = vld [vmem:[#allocation8 + $0x94] sm:$0xf]
    %v3944 = vld [vmem:[#allocation8 + $0x98] sm:$0xf]
    %v3945 = vld [vmem:[#allocation8 + $0x9c] sm:$0xf]
    %v3946 = vld [vmem:[#allocation8 + $0xa0] sm:$0xf]
    %v3947 = vld [vmem:[#allocation8 + $0xa4] sm:$0xf]
    %v3948 = vld [vmem:[#allocation8 + $0xa8] sm:$0xf]
    %v3949 = vld [vmem:[#allocation8 + $0xac] sm:$0xf]
    %v3950 = vld [vmem:[#allocation8 + $0xb0] sm:$0xf]
    %v3951 = vld [vmem:[#allocation8 + $0xb4] sm:$0xf]
    %v3952 = vld [vmem:[#allocation8 + $0xb8] sm:$0xf]
    %v3953 = vld [vmem:[#allocation8 + $0xbc] sm:$0xf]
    %v3954 = vld [vmem:[#allocation8 + $0xc0] sm:$0xf]
    %v3955 = vld [vmem:[#allocation8 + $0xc4] sm:$0xf]
    %v3956 = vld [vmem:[#allocation8 + $0xc8] sm:$0xf]
    %v3957 = vld [vmem:[#allocation8 + $0xcc] sm:$0xf]
    %v3958 = vld [vmem:[#allocation8 + $0xd0] sm:$0xf]
    %v3959 = vld [vmem:[#allocation8 + $0xd4] sm:$0xf]
    %v3960 = vld [vmem:[#allocation8 + $0xd8] sm:$0xf]
    %v3961 = vld [vmem:[#allocation8 + $0xdc] sm:$0xf]
    %v3962 = vld [vmem:[#allocation8 + $0xe0] sm:$0xf]
    %v3963 = vld [vmem:[#allocation8 + $0xe4] sm:$0xf]
    %v3964 = vld [vmem:[#allocation8 + $0xe8] sm:$0xf]
    %v3965 = vld [vmem:[#allocation8 + $0xec] sm:$0xf]
    %v3966 = vld [vmem:[#allocation8 + $0xf0] sm:$0xf]
    %v3967 = vld [vmem:[#allocation8 + $0xf4] sm:$0xf]
    %v3968 = vld [vmem:[#allocation8 + $0xf8] sm:$0xf]
    %v3969 = vld [vmem:[#allocation8 + $0xfc] sm:$0xf]
    %v3970 = vld [vmem:[#allocation8 + $0x100] sm:$0xf]
    %v3971 = vld [vmem:[#allocation8 + $0x104] sm:$0xf]
    %v3972 = vld [vmem:[#allocation8 + $0x108] sm:$0xf]
    %v3973 = vld [vmem:[#allocation8 + $0x10c] sm:$0xf]
    %v3974 = vld [vmem:[#allocation8 + $0x110] sm:$0xf]
    %v3975 = vld [vmem:[#allocation8 + $0x114] sm:$0xf]
    %v3976 = vld [vmem:[#allocation8 + $0x118] sm:$0xf]
    %v3977 = vld [vmem:[#allocation8 + $0x11c] sm:$0xf]
    %v3978 = vld [vmem:[#allocation8 + $0x120] sm:$0xf]
    %v3979 = vld [vmem:[#allocation8 + $0x124] sm:$0xf]
    %v3980 = vld [vmem:[#allocation8 + $0x128] sm:$0xf]
    %v3981 = vld [vmem:[#allocation8 + $0x12c] sm:$0xf]
    %v3982 = vld [vmem:[#allocation8 + $0x130] sm:$0xf]
    %v3983 = vld [vmem:[#allocation8 + $0x134] sm:$0xf]
    %v3984 = vld [vmem:[#allocation8 + $0x138] sm:$0xf]
    %v3985 = vld [vmem:[#allocation8 + $0x13c] sm:$0xf]
    %v3986 = vld [vmem:[#allocation8 + $0x140] sm:$0xf]
    %v3987 = vld [vmem:[#allocation8 + $0x144] sm:$0xf]
    %v3988 = vld [vmem:[#allocation8 + $0x148] sm:$0xf]
    %v3989 = vld [vmem:[#allocation8 + $0x14c] sm:$0xf]
    %v3990 = vld [vmem:[#allocation8 + $0x150] sm:$0xf]
    %v3991 = vld [vmem:[#allocation8 + $0x154] sm:$0xf]
    %v3992 = vld [vmem:[#allocation8 + $0x158] sm:$0xf]
    %v3993 = vld [vmem:[#allocation8 + $0x15c] sm:$0xf]
    %v3994 = vld [vmem:[#allocation8 + $0x160] sm:$0xf]
    %v3995 = vld [vmem:[#allocation8 + $0x164] sm:$0xf]
    %v3996 = vld [vmem:[#allocation8 + $0x168] sm:$0xf]
    %v3997 = vld [vmem:[#allocation8 + $0x16c] sm:$0xf]
    %v3998 = vld [vmem:[#allocation8 + $0x170] sm:$0xf]
    %v3999 = vld [vmem:[#allocation8 + $0x174] sm:$0xf]
    %v4000 = vld [vmem:[#allocation8 + $0x178] sm:$0xf]
    %v4001 = vld [vmem:[#allocation8 + $0x17c] sm:$0xf]
    %v4002 = vld [vmem:[#allocation8 + $0x180] sm:$0xf]
    %v4003 = vld [vmem:[#allocation8 + $0x184] sm:$0xf]
    %v4004 = vld [vmem:[#allocation8 + $0x188] sm:$0xf]
    %v4005 = vld [vmem:[#allocation8 + $0x18c] sm:$0xf]
    %v4006 = vld [vmem:[#allocation8 + $0x190] sm:$0xf]
    %v4007 = vld [vmem:[#allocation8 + $0x194] sm:$0xf]
    %v4008 = vld [vmem:[#allocation8 + $0x198] sm:$0xf]
    %v4009 = vld [vmem:[#allocation8 + $0x19c] sm:$0xf]
    %v4010 = vld [vmem:[#allocation8 + $0x1a0] sm:$0xf]
    %v4011 = vld [vmem:[#allocation8 + $0x1a4] sm:$0xf]
    %v4012 = vld [vmem:[#allocation8 + $0x1a8] sm:$0xf]
    %v4013 = vld [vmem:[#allocation8 + $0x1ac] sm:$0xf]
    %v4014 = vld [vmem:[#allocation8 + $0x1b0] sm:$0xf]
    %v4015 = vld [vmem:[#allocation8 + $0x1b4] sm:$0xf]
    %v4016 = vld [vmem:[#allocation8 + $0x1b8] sm:$0xf]
    %v4017 = vld [vmem:[#allocation8 + $0x1bc] sm:$0xf]
    %v4018 = vld [vmem:[#allocation8 + $0x1c0] sm:$0xf]
    %v4019 = vld [vmem:[#allocation8 + $0x1c4] sm:$0xf]
    %v4020 = vld [vmem:[#allocation8 + $0x1c8] sm:$0xf]
    %v4021 = vld [vmem:[#allocation8 + $0x1cc] sm:$0xf]
    %v4022 = vld [vmem:[#allocation8 + $0x1d0] sm:$0xf]
    %v4023 = vld [vmem:[#allocation8 + $0x1d4] sm:$0xf]
    %v4024 = vld [vmem:[#allocation8 + $0x1d8] sm:$0xf]
    %v4025 = vld [vmem:[#allocation8 + $0x1dc] sm:$0xf]
    %v4026 = vld [vmem:[#allocation8 + $0x1e0] sm:$0xf]
    %v4027 = vld [vmem:[#allocation8 + $0x1e4] sm:$0xf]
    %v4028 = vld [vmem:[#allocation8 + $0x1e8] sm:$0xf]
    %v4029 = vld [vmem:[#allocation8 + $0x1ec] sm:$0xf]
    %v4030 = vld [vmem:[#allocation8 + $0x1f0] sm:$0xf]
    %v4031 = vld [vmem:[#allocation8 + $0x1f4] sm:$0xf]
    %v4032 = vld [vmem:[#allocation8 + $0x1f8] sm:$0xf]
    %v4033 = vld [vmem:[#allocation8 + $0x1fc] sm:$0xf]
    %v4034 = vld [vmem:[#allocation8 + $0x200] sm:$0xf]
    %v4035 = vld [vmem:[#allocation8 + $0x204] sm:$0xf]
    %v4036 = vld [vmem:[#allocation8 + $0x208] sm:$0xf]
    %v4037 = vld [vmem:[#allocation8 + $0x20c] sm:$0xf]
    %v4038 = vld [vmem:[#allocation8 + $0x210] sm:$0xf]
    %v4039 = vld [vmem:[#allocation8 + $0x214] sm:$0xf]
    %v4040 = vld [vmem:[#allocation8 + $0x218] sm:$0xf]
    %v4041 = vld [vmem:[#allocation8 + $0x21c] sm:$0xf]
    %v4042 = vld [vmem:[#allocation8 + $0x220] sm:$0xf]
    %v4043 = vld [vmem:[#allocation8 + $0x224] sm:$0xf]
    %v4044 = vld [vmem:[#allocation8 + $0x228] sm:$0xf]
    %v4045 = vld [vmem:[#allocation8 + $0x22c] sm:$0xf]
    %v4046 = vld [vmem:[#allocation8 + $0x230] sm:$0xf]
    %v4047 = vld [vmem:[#allocation8 + $0x234] sm:$0xf]
    %v4048 = vld [vmem:[#allocation8 + $0x238] sm:$0xf]
    %v4049 = vld [vmem:[#allocation8 + $0x23c] sm:$0xf]
    %v4194 = vunpack.c.l.b16 %v3906
    %v4195 = vunpack.c.l.b16 %v3907
    %v4196 = vunpack.c.l.b16 %v3908
    %v4197 = vunpack.c.l.b16 %v3909
    %v4198 = vunpack.c.l.b16 %v3910
    %v4199 = vunpack.c.l.b16 %v3911
    %v4200 = vunpack.c.l.b16 %v3912
    %v4201 = vunpack.c.l.b16 %v3913
    %v4202 = vunpack.c.l.b16 %v3914
    %v4203 = vunpack.c.l.b16 %v3915
    %v4204 = vunpack.c.l.b16 %v3916
    %v4205 = vunpack.c.l.b16 %v3917
    %v4206 = vunpack.c.l.b16 %v3918
    %v4207 = vunpack.c.l.b16 %v3919
    %v4208 = vunpack.c.l.b16 %v3920
    %v4209 = vunpack.c.l.b16 %v3921
    %v4210 = vunpack.c.l.b16 %v3922
    %v4211 = vunpack.c.l.b16 %v3923
    %v4212 = vunpack.c.l.b16 %v3924
    %v4213 = vunpack.c.l.b16 %v3925
    %v4214 = vunpack.c.l.b16 %v3926
    %v4215 = vunpack.c.l.b16 %v3927
    %v4216 = vunpack.c.l.b16 %v3928
    %v4217 = vunpack.c.l.b16 %v3929
    %v4218 = vunpack.c.l.b16 %v3930
    %v4219 = vunpack.c.l.b16 %v3931
    %v4220 = vunpack.c.l.b16 %v3932
    %v4221 = vunpack.c.l.b16 %v3933
    %v4222 = vunpack.c.l.b16 %v3934
    %v4223 = vunpack.c.l.b16 %v3935
    %v4224 = vunpack.c.l.b16 %v3936
    %v4225 = vunpack.c.l.b16 %v3937
    %v4226 = vunpack.c.l.b16 %v3938
    %v4227 = vunpack.c.l.b16 %v3939
    %v4228 = vunpack.c.l.b16 %v3940
    %v4229 = vunpack.c.l.b16 %v3941
    %v4230 = vunpack.c.l.b16 %v3942
    %v4231 = vunpack.c.l.b16 %v3943
    %v4232 = vunpack.c.l.b16 %v3944
    %v4233 = vunpack.c.l.b16 %v3945
    %v4234 = vunpack.c.l.b16 %v3946
    %v4235 = vunpack.c.l.b16 %v3947
    %v4236 = vunpack.c.l.b16 %v3948
    %v4237 = vunpack.c.l.b16 %v3949
    %v4238 = vunpack.c.l.b16 %v3950
    %v4239 = vunpack.c.l.b16 %v3951
    %v4240 = vunpack.c.l.b16 %v3952
    %v4241 = vunpack.c.l.b16 %v3953
    %v4242 = vunpack.c.l.b16 %v3954
    %v4243 = vunpack.c.l.b16 %v3955
    %v4244 = vunpack.c.l.b16 %v3956
    %v4245 = vunpack.c.l.b16 %v3957
    %v4246 = vunpack.c.l.b16 %v3958
    %v4247 = vunpack.c.l.b16 %v3959
    %v4248 = vunpack.c.l.b16 %v3960
    %v4249 = vunpack.c.l.b16 %v3961
    %v4250 = vunpack.c.l.b16 %v3962
    %v4251 = vunpack.c.l.b16 %v3963
    %v4252 = vunpack.c.l.b16 %v3964
    %v4253 = vunpack.c.l.b16 %v3965
    %v4254 = vunpack.c.l.b16 %v3966
    %v4255 = vunpack.c.l.b16 %v3967
    %v4256 = vunpack.c.l.b16 %v3968
    %v4257 = vunpack.c.l.b16 %v3969
    %v4258 = vunpack.c.l.b16 %v3970
    %v4259 = vunpack.c.l.b16 %v3971
    %v4260 = vunpack.c.l.b16 %v3972
    %v4261 = vunpack.c.l.b16 %v3973
    %v4262 = vunpack.c.l.b16 %v3974
    %v4263 = vunpack.c.l.b16 %v3975
    %v4264 = vunpack.c.l.b16 %v3976
    %v4265 = vunpack.c.l.b16 %v3977
    %v4266 = vunpack.c.l.b16 %v3978
    %v4267 = vunpack.c.l.b16 %v3979
    %v4268 = vunpack.c.l.b16 %v3980
    %v4269 = vunpack.c.l.b16 %v3981
    %v4270 = vunpack.c.l.b16 %v3982
    %v4271 = vunpack.c.l.b16 %v3983
    %v4272 = vunpack.c.l.b16 %v3984
    %v4273 = vunpack.c.l.b16 %v3985
    %v4274 = vunpack.c.l.b16 %v3986
    %v4275 = vunpack.c.l.b16 %v3987
    %v4276 = vunpack.c.l.b16 %v3988
    %v4277 = vunpack.c.l.b16 %v3989
    %v4278 = vunpack.c.l.b16 %v3990
    %v4279 = vunpack.c.l.b16 %v3991
    %v4280 = vunpack.c.l.b16 %v3992
    %v4281 = vunpack.c.l.b16 %v3993
    %v4282 = vunpack.c.l.b16 %v3994
    %v4283 = vunpack.c.l.b16 %v3995
    %v4284 = vunpack.c.l.b16 %v3996
    %v4285 = vunpack.c.l.b16 %v3997
    %v4286 = vunpack.c.l.b16 %v3998
    %v4287 = vunpack.c.l.b16 %v3999
    %v4288 = vunpack.c.l.b16 %v4000
    %v4289 = vunpack.c.l.b16 %v4001
    %v4290 = vunpack.c.l.b16 %v4002
    %v4291 = vunpack.c.l.b16 %v4003
    %v4292 = vunpack.c.l.b16 %v4004
    %v4293 = vunpack.c.l.b16 %v4005
    %v4294 = vunpack.c.l.b16 %v4006
    %v4295 = vunpack.c.l.b16 %v4007
    %v4296 = vunpack.c.l.b16 %v4008
    %v4297 = vunpack.c.l.b16 %v4009
    %v4298 = vunpack.c.l.b16 %v4010
    %v4299 = vunpack.c.l.b16 %v4011
    %v4300 = vunpack.c.l.b16 %v4012
    %v4301 = vunpack.c.l.b16 %v4013
    %v4302 = vunpack.c.l.b16 %v4014
    %v4303 = vunpack.c.l.b16 %v4015
    %v4304 = vunpack.c.l.b16 %v4016
    %v4305 = vunpack.c.l.b16 %v4017
    %v4306 = vunpack.c.l.b16 %v4018
    %v4307 = vunpack.c.l.b16 %v4019
    %v4308 = vunpack.c.l.b16 %v4020
    %v4309 = vunpack.c.l.b16 %v4021
    %v4310 = vunpack.c.l.b16 %v4022
    %v4311 = vunpack.c.l.b16 %v4023
    %v4312 = vunpack.c.l.b16 %v4024
    %v4313 = vunpack.c.l.b16 %v4025
    %v4314 = vunpack.c.l.b16 %v4026
    %v4315 = vunpack.c.l.b16 %v4027
    %v4316 = vunpack.c.l.b16 %v4028
    %v4317 = vunpack.c.l.b16 %v4029
    %v4318 = vunpack.c.l.b16 %v4030
    %v4319 = vunpack.c.l.b16 %v4031
    %v4320 = vunpack.c.l.b16 %v4032
    %v4321 = vunpack.c.l.b16 %v4033
    %v4322 = vunpack.c.l.b16 %v4034
    %v4323 = vunpack.c.l.b16 %v4035
    %v4324 = vunpack.c.l.b16 %v4036
    %v4325 = vunpack.c.l.b16 %v4037
    %v4326 = vunpack.c.l.b16 %v4038
    %v4327 = vunpack.c.l.b16 %v4039
    %v4328 = vunpack.c.l.b16 %v4040
    %v4329 = vunpack.c.l.b16 %v4041
    %v4330 = vunpack.c.l.b16 %v4042
    %v4331 = vunpack.c.l.b16 %v4043
    %v4332 = vunpack.c.l.b16 %v4044
    %v4333 = vunpack.c.l.b16 %v4045
    %v4334 = vunpack.c.l.b16 %v4046
    %v4335 = vunpack.c.l.b16 %v4047
    %v4336 = vunpack.c.l.b16 %v4048
    %v4337 = vunpack.c.l.b16 %v4049
    %v4338 = vpack.c.b16 %v4195, %v4194
    %v4339 = vpack.c.b16 %v4197, %v4196
    %v4340 = vpack.c.b16 %v4199, %v4198
    %v4341 = vpack.c.b16 %v4201, %v4200
    %v4342 = vpack.c.b16 %v4203, %v4202
    %v4343 = vpack.c.b16 %v4205, %v4204
    %v4344 = vpack.c.b16 %v4207, %v4206
    %v4345 = vpack.c.b16 %v4209, %v4208
    %v4346 = vpack.c.b16 %v4211, %v4210
    %v4347 = vpack.c.b16 %v4213, %v4212
    %v4348 = vpack.c.b16 %v4215, %v4214
    %v4349 = vpack.c.b16 %v4217, %v4216
    %v4350 = vpack.c.b16 %v4219, %v4218
    %v4351 = vpack.c.b16 %v4221, %v4220
    %v4352 = vpack.c.b16 %v4223, %v4222
    %v4353 = vpack.c.b16 %v4225, %v4224
    %v4354 = vpack.c.b16 %v4227, %v4226
    %v4355 = vpack.c.b16 %v4229, %v4228
    %v4356 = vpack.c.b16 %v4231, %v4230
    %v4357 = vpack.c.b16 %v4233, %v4232
    %v4358 = vpack.c.b16 %v4235, %v4234
    %v4359 = vpack.c.b16 %v4237, %v4236
    %v4360 = vpack.c.b16 %v4239, %v4238
    %v4361 = vpack.c.b16 %v4241, %v4240
    %v4362 = vpack.c.b16 %v4243, %v4242
    %v4363 = vpack.c.b16 %v4245, %v4244
    %v4364 = vpack.c.b16 %v4247, %v4246
    %v4365 = vpack.c.b16 %v4249, %v4248
    %v4366 = vpack.c.b16 %v4251, %v4250
    %v4367 = vpack.c.b16 %v4253, %v4252
    %v4368 = vpack.c.b16 %v4255, %v4254
    %v4369 = vpack.c.b16 %v4257, %v4256
    %v4370 = vpack.c.b16 %v4259, %v4258
    %v4371 = vpack.c.b16 %v4261, %v4260
    %v4372 = vpack.c.b16 %v4263, %v4262
    %v4373 = vpack.c.b16 %v4265, %v4264
    %v4374 = vpack.c.b16 %v4267, %v4266
    %v4375 = vpack.c.b16 %v4269, %v4268
    %v4376 = vpack.c.b16 %v4271, %v4270
    %v4377 = vpack.c.b16 %v4273, %v4272
    %v4378 = vpack.c.b16 %v4275, %v4274
    %v4379 = vpack.c.b16 %v4277, %v4276
    %v4380 = vpack.c.b16 %v4279, %v4278
    %v4381 = vpack.c.b16 %v4281, %v4280
    %v4382 = vpack.c.b16 %v4283, %v4282
    %v4383 = vpack.c.b16 %v4285, %v4284
    %v4384 = vpack.c.b16 %v4287, %v4286
    %v4385 = vpack.c.b16 %v4289, %v4288
    %v4386 = vpack.c.b16 %v4291, %v4290
    %v4387 = vpack.c.b16 %v4293, %v4292
    %v4388 = vpack.c.b16 %v4295, %v4294
    %v4389 = vpack.c.b16 %v4297, %v4296
    %v4390 = vpack.c.b16 %v4299, %v4298
    %v4391 = vpack.c.b16 %v4301, %v4300
    %v4392 = vpack.c.b16 %v4303, %v4302
    %v4393 = vpack.c.b16 %v4305, %v4304
    %v4394 = vpack.c.b16 %v4307, %v4306
    %v4395 = vpack.c.b16 %v4309, %v4308
    %v4396 = vpack.c.b16 %v4311, %v4310
    %v4397 = vpack.c.b16 %v4313, %v4312
    %v4398 = vpack.c.b16 %v4315, %v4314
    %v4399 = vpack.c.b16 %v4317, %v4316
    %v4400 = vpack.c.b16 %v4319, %v4318
    %v4401 = vpack.c.b16 %v4321, %v4320
    %v4402 = vpack.c.b16 %v4323, %v4322
    %v4403 = vpack.c.b16 %v4325, %v4324
    %v4404 = vpack.c.b16 %v4327, %v4326
    %v4405 = vpack.c.b16 %v4329, %v4328
    %v4406 = vpack.c.b16 %v4331, %v4330
    %v4407 = vpack.c.b16 %v4333, %v4332
    %v4408 = vpack.c.b16 %v4335, %v4334
    %v4409 = vpack.c.b16 %v4337, %v4336
    %4482 = vmatpush.bf16.msra.mxu0 %v4345
    %4483 = vmatpush.bf16.msra.mxu0 %v4344
    %4484 = vmatpush.bf16.msra.mxu0 %v4343
    %4485 = vmatpush.bf16.msra.mxu0 %v4342
    %4486 = vmatpush.bf16.msra.mxu0 %v4341
    %4487 = vmatpush.bf16.msra.mxu0 %v4340
    %4488 = vmatpush.bf16.msra.mxu0 %v4339
    %4489 = vmatpush.bf16.msra.mxu0 %v4338
    %4490 = vmatmul.bf16.gmra.mxu0 %v1216
    %v4491 = vpop.f32.mrf.mxu0
    %v4492 = vadd.f32 0.0, %v4491
    %v4493 = vpop.f32.mrf.mxu0
    %v4494 = vadd.f32 0.0, %v4493
    %4495 = vmatmul.bf16.gmra.mxu0 %v1217
    %v4496 = vpop.f32.mrf.mxu0
    %v4497 = vadd.f32 0.0, %v4496
    %v4498 = vpop.f32.mrf.mxu0
    %v4499 = vadd.f32 0.0, %v4498
    %4500 = vmatmul.bf16.gmra.mxu0 %v1218
    %v4501 = vpop.f32.mrf.mxu0
    %v4502 = vadd.f32 0.0, %v4501
    %v4503 = vpop.f32.mrf.mxu0
    %v4504 = vadd.f32 0.0, %v4503
    %4505 = vmatmul.bf16.gmra.mxu0 %v1219
    %v4506 = vpop.f32.mrf.mxu0
    %v4507 = vadd.f32 0.0, %v4506
    %v4508 = vpop.f32.mrf.mxu0
    %v4509 = vadd.f32 0.0, %v4508
    %4510 = vmatmul.bf16.gmra.mxu0 %v1220
    %v4511 = vpop.f32.mrf.mxu0
    %v4512 = vadd.f32 0.0, %v4511
    %v4513 = vpop.f32.mrf.mxu0
    %v4514 = vadd.f32 0.0, %v4513
    %4515 = vmatmul.bf16.gmra.mxu0 %v1221
    %v4516 = vpop.f32.mrf.mxu0
    %v4517 = vadd.f32 0.0, %v4516
    %v4518 = vpop.f32.mrf.mxu0
    %v4519 = vadd.f32 0.0, %v4518
    %4520 = vmatmul.bf16.gmra.mxu0 %v1222
    %v4521 = vpop.f32.mrf.mxu0
    %v4522 = vadd.f32 0.0, %v4521
    %v4523 = vpop.f32.mrf.mxu0
    %v4524 = vadd.f32 0.0, %v4523
    %4525 = vmatmul.bf16.gmra.mxu0 %v1223
    %v4526 = vpop.f32.mrf.mxu0
    %v4527 = vadd.f32 0.0, %v4526
    %v4528 = vpop.f32.mrf.mxu0
    %v4529 = vadd.f32 0.0, %v4528
    %4530 = vmatmul.bf16.gmra.mxu0 %v1224
    %v4531 = vpop.f32.mrf.mxu0
    %v4532 = vadd.f32 0.0, %v4531
    %v4533 = vpop.f32.mrf.mxu0
    %v4534 = vadd.f32 0.0, %v4533
    %4535 = vmatmul.bf16.gmra.mxu0 %v1225
    %v4536 = vpop.f32.mrf.mxu0
    %v4537 = vadd.f32 0.0, %v4536
    %v4538 = vpop.f32.mrf.mxu0
    %v4539 = vadd.f32 0.0, %v4538
    %4540 = vmatmul.bf16.gmra.mxu0 %v1226
    %v4541 = vpop.f32.mrf.mxu0
    %v4542 = vadd.f32 0.0, %v4541
    %v4543 = vpop.f32.mrf.mxu0
    %v4544 = vadd.f32 0.0, %v4543
    %4545 = vmatmul.bf16.gmra.mxu0 %v1227
    %v4546 = vpop.f32.mrf.mxu0
    %v4547 = vadd.f32 0.0, %v4546
    %v4548 = vpop.f32.mrf.mxu0
    %v4549 = vadd.f32 0.0, %v4548
    %4550 = vmatmul.bf16.gmra.mxu0 %v1228
    %v4551 = vpop.f32.mrf.mxu0
    %v4552 = vadd.f32 0.0, %v4551
    %v4553 = vpop.f32.mrf.mxu0
    %v4554 = vadd.f32 0.0, %v4553
    %4555 = vmatmul.bf16.gmra.mxu0 %v1229
    %v4556 = vpop.f32.mrf.mxu0
    %v4557 = vadd.f32 0.0, %v4556
    %v4558 = vpop.f32.mrf.mxu0
    %v4559 = vadd.f32 0.0, %v4558
    %4560 = vmatmul.bf16.gmra.mxu0 %v1230
    %v4561 = vpop.f32.mrf.mxu0
    %v4562 = vadd.f32 0.0, %v4561
    %v4563 = vpop.f32.mrf.mxu0
    %v4564 = vadd.f32 0.0, %v4563
    %4565 = vmatmul.bf16.gmra.mxu0 %v1231
    %v4566 = vpop.f32.mrf.mxu0
    %v4567 = vadd.f32 0.0, %v4566
    %v4568 = vpop.f32.mrf.mxu0
    %v4569 = vadd.f32 0.0, %v4568
    %4570 = vmatmul.bf16.gmra.mxu0 %v1312
    %v4571 = vpop.f32.mrf.mxu0
    %v4572 = vadd.f32 0.0, %v4571
    %v4573 = vpop.f32.mrf.mxu0
    %v4574 = vadd.f32 0.0, %v4573
    %4575 = vmatmul.bf16.gmra.mxu0 %v1313
    %v4576 = vpop.f32.mrf.mxu0
    %v4577 = vadd.f32 0.0, %v4576
    %v4578 = vpop.f32.mrf.mxu0
    %v4579 = vadd.f32 0.0, %v4578
    %4580 = vmatmul.bf16.gmra.mxu0 %v1314
    %v4581 = vpop.f32.mrf.mxu0
    %v4582 = vadd.f32 0.0, %v4581
    %v4583 = vpop.f32.mrf.mxu0
    %v4584 = vadd.f32 0.0, %v4583
    %4585 = vmatmul.bf16.gmra.mxu0 %v1315
    %v4586 = vpop.f32.mrf.mxu0
    %v4587 = vadd.f32 0.0, %v4586
    %v4588 = vpop.f32.mrf.mxu0
    %v4589 = vadd.f32 0.0, %v4588
    %4590 = vmatmul.bf16.gmra.mxu0 %v1316
    %v4591 = vpop.f32.mrf.mxu0
    %v4592 = vadd.f32 0.0, %v4591
    %v4593 = vpop.f32.mrf.mxu0
    %v4594 = vadd.f32 0.0, %v4593
    %4595 = vmatmul.bf16.gmra.mxu0 %v1317
    %v4596 = vpop.f32.mrf.mxu0
    %v4597 = vadd.f32 0.0, %v4596
    %v4598 = vpop.f32.mrf.mxu0
    %v4599 = vadd.f32 0.0, %v4598
    %4600 = vmatmul.bf16.gmra.mxu0 %v1318
    %v4601 = vpop.f32.mrf.mxu0
    %v4602 = vadd.f32 0.0, %v4601
    %v4603 = vpop.f32.mrf.mxu0
    %v4604 = vadd.f32 0.0, %v4603
    %4605 = vmatmul.bf16.gmra.mxu0 %v1319
    %v4606 = vpop.f32.mrf.mxu0
    %v4607 = vadd.f32 0.0, %v4606
    %v4608 = vpop.f32.mrf.mxu0
    %v4609 = vadd.f32 0.0, %v4608
    %4610 = vmatmul.bf16.gmra.mxu0 %v1320
    %v4611 = vpop.f32.mrf.mxu0
    %v4612 = vadd.f32 0.0, %v4611
    %v4613 = vpop.f32.mrf.mxu0
    %v4614 = vadd.f32 0.0, %v4613
    %4615 = vmatmul.bf16.gmra.mxu0 %v1321
    %v4616 = vpop.f32.mrf.mxu0
    %v4617 = vadd.f32 0.0, %v4616
    %v4618 = vpop.f32.mrf.mxu0
    %v4619 = vadd.f32 0.0, %v4618
    %4620 = vmatmul.bf16.gmra.mxu0 %v1322
    %v4621 = vpop.f32.mrf.mxu0
    %v4622 = vadd.f32 0.0, %v4621
    %v4623 = vpop.f32.mrf.mxu0
    %v4624 = vadd.f32 0.0, %v4623
    %4625 = vmatmul.bf16.gmra.mxu0 %v1323
    %v4626 = vpop.f32.mrf.mxu0
    %v4627 = vadd.f32 0.0, %v4626
    %v4628 = vpop.f32.mrf.mxu0
    %v4629 = vadd.f32 0.0, %v4628
    %4630 = vmatmul.bf16.gmra.mxu0 %v1324
    %v4631 = vpop.f32.mrf.mxu0
    %v4632 = vadd.f32 0.0, %v4631
    %v4633 = vpop.f32.mrf.mxu0
    %v4634 = vadd.f32 0.0, %v4633
    %4635 = vmatmul.bf16.gmra.mxu0 %v1325
    %v4636 = vpop.f32.mrf.mxu0
    %v4637 = vadd.f32 0.0, %v4636
    %v4638 = vpop.f32.mrf.mxu0
    %v4639 = vadd.f32 0.0, %v4638
    %4640 = vmatmul.bf16.gmra.mxu0 %v1326
    %v4641 = vpop.f32.mrf.mxu0
    %v4642 = vadd.f32 0.0, %v4641
    %v4643 = vpop.f32.mrf.mxu0
    %v4644 = vadd.f32 0.0, %v4643
    %4645 = vmatmul.bf16.gmra.mxu0 %v1327
    %v4646 = vpop.f32.mrf.mxu0
    %v4647 = vadd.f32 0.0, %v4646
    %v4648 = vpop.f32.mrf.mxu0
    %v4649 = vadd.f32 0.0, %v4648
    %4650 = vdwg.mxu0
    %4651 = vmatpush.bf16.msra.mxu0 %v4353
    %4652 = vmatpush.bf16.msra.mxu0 %v4352
    %4653 = vmatpush.bf16.msra.mxu0 %v4351
    %4654 = vmatpush.bf16.msra.mxu0 %v4350
    %4655 = vmatpush.bf16.msra.mxu0 %v4349
    %4656 = vmatpush.bf16.msra.mxu0 %v4348
    %4657 = vmatpush.bf16.msra.mxu0 %v4347
    %4658 = vmatpush.bf16.msra.mxu0 %v4346
    %4659 = vmatmul.bf16.gmra.mxu0 %v1536
    %v4660 = vpop.f32.mrf.mxu0
    %v4661 = vadd.f32 %v4492, %v4660
    %v4662 = vpop.f32.mrf.mxu0
    %v4663 = vadd.f32 %v4494, %v4662
    %4664 = vmatmul.bf16.gmra.mxu0 %v1537
    %v4665 = vpop.f32.mrf.mxu0
    %v4666 = vadd.f32 %v4497, %v4665
    %v4667 = vpop.f32.mrf.mxu0
    %v4668 = vadd.f32 %v4499, %v4667
    %4669 = vmatmul.bf16.gmra.mxu0 %v1538
    %v4670 = vpop.f32.mrf.mxu0
    %v4671 = vadd.f32 %v4502, %v4670
    %v4672 = vpop.f32.mrf.mxu0
    %v4673 = vadd.f32 %v4504, %v4672
    %4674 = vmatmul.bf16.gmra.mxu0 %v1539
    %v4675 = vpop.f32.mrf.mxu0
    %v4676 = vadd.f32 %v4507, %v4675
    %v4677 = vpop.f32.mrf.mxu0
    %v4678 = vadd.f32 %v4509, %v4677
    %4679 = vmatmul.bf16.gmra.mxu0 %v1540
    %v4680 = vpop.f32.mrf.mxu0
    %v4681 = vadd.f32 %v4512, %v4680
    %v4682 = vpop.f32.mrf.mxu0
    %v4683 = vadd.f32 %v4514, %v4682
    %4684 = vmatmul.bf16.gmra.mxu0 %v1541
    %v4685 = vpop.f32.mrf.mxu0
    %v4686 = vadd.f32 %v4517, %v4685
    %v4687 = vpop.f32.mrf.mxu0
    %v4688 = vadd.f32 %v4519, %v4687
    %4689 = vmatmul.bf16.gmra.mxu0 %v1542
    %v4690 = vpop.f32.mrf.mxu0
    %v4691 = vadd.f32 %v4522, %v4690
    %v4692 = vpop.f32.mrf.mxu0
    %v4693 = vadd.f32 %v4524, %v4692
    %4694 = vmatmul.bf16.gmra.mxu0 %v1543
    %v4695 = vpop.f32.mrf.mxu0
    %v4696 = vadd.f32 %v4527, %v4695
    %v4697 = vpop.f32.mrf.mxu0
    %v4698 = vadd.f32 %v4529, %v4697
    %4699 = vmatmul.bf16.gmra.mxu0 %v1544
    %v4700 = vpop.f32.mrf.mxu0
    %v4701 = vadd.f32 %v4532, %v4700
    %v4702 = vpop.f32.mrf.mxu0
    %v4703 = vadd.f32 %v4534, %v4702
    %4704 = vmatmul.bf16.gmra.mxu0 %v1545
    %v4705 = vpop.f32.mrf.mxu0
    %v4706 = vadd.f32 %v4537, %v4705
    %v4707 = vpop.f32.mrf.mxu0
    %v4708 = vadd.f32 %v4539, %v4707
    %4709 = vmatmul.bf16.gmra.mxu0 %v1546
    %v4710 = vpop.f32.mrf.mxu0
    %v4711 = vadd.f32 %v4542, %v4710
    %v4712 = vpop.f32.mrf.mxu0
    %v4713 = vadd.f32 %v4544, %v4712
    %4714 = vmatmul.bf16.gmra.mxu0 %v1547
    %v4715 = vpop.f32.mrf.mxu0
    %v4716 = vadd.f32 %v4547, %v4715
    %v4717 = vpop.f32.mrf.mxu0
    %v4718 = vadd.f32 %v4549, %v4717
    %4719 = vmatmul.bf16.gmra.mxu0 %v1548
    %v4720 = vpop.f32.mrf.mxu0
    %v4721 = vadd.f32 %v4552, %v4720
    %v4722 = vpop.f32.mrf.mxu0
    %v4723 = vadd.f32 %v4554, %v4722
    %4724 = vmatmul.bf16.gmra.mxu0 %v1549
    %v4725 = vpop.f32.mrf.mxu0
    %v4726 = vadd.f32 %v4557, %v4725
    %v4727 = vpop.f32.mrf.mxu0
    %v4728 = vadd.f32 %v4559, %v4727
    %4729 = vmatmul.bf16.gmra.mxu0 %v1550
    %v4730 = vpop.f32.mrf.mxu0
    %v4731 = vadd.f32 %v4562, %v4730
    %v4732 = vpop.f32.mrf.mxu0
    %v4733 = vadd.f32 %v4564, %v4732
    %4734 = vmatmul.bf16.gmra.mxu0 %v1551
    %v4735 = vpop.f32.mrf.mxu0
    %v4736 = vadd.f32 %v4567, %v4735
    %v4737 = vpop.f32.mrf.mxu0
    %v4738 = vadd.f32 %v4569, %v4737
    %4739 = vmatmul.bf16.gmra.mxu0 %v1632
    %v4740 = vpop.f32.mrf.mxu0
    %v4741 = vadd.f32 %v4572, %v4740
    %v4742 = vpop.f32.mrf.mxu0
    %v4743 = vadd.f32 %v4574, %v4742
    %4744 = vmatmul.bf16.gmra.mxu0 %v1633
    %v4745 = vpop.f32.mrf.mxu0
    %v4746 = vadd.f32 %v4577, %v4745
    %v4747 = vpop.f32.mrf.mxu0
    %v4748 = vadd.f32 %v4579, %v4747
    %4749 = vmatmul.bf16.gmra.mxu0 %v1634
    %v4750 = vpop.f32.mrf.mxu0
    %v4751 = vadd.f32 %v4582, %v4750
    %v4752 = vpop.f32.mrf.mxu0
    %v4753 = vadd.f32 %v4584, %v4752
    %4754 = vmatmul.bf16.gmra.mxu0 %v1635
    %v4755 = vpop.f32.mrf.mxu0
    %v4756 = vadd.f32 %v4587, %v4755
    %v4757 = vpop.f32.mrf.mxu0
    %v4758 = vadd.f32 %v4589, %v4757
    %4759 = vmatmul.bf16.gmra.mxu0 %v1636
    %v4760 = vpop.f32.mrf.mxu0
    %v4761 = vadd.f32 %v4592, %v4760
    %v4762 = vpop.f32.mrf.mxu0
    %v4763 = vadd.f32 %v4594, %v4762
    %4764 = vmatmul.bf16.gmra.mxu0 %v1637
    %v4765 = vpop.f32.mrf.mxu0
    %v4766 = vadd.f32 %v4597, %v4765
    %v4767 = vpop.f32.mrf.mxu0
    %v4768 = vadd.f32 %v4599, %v4767
    %4769 = vmatmul.bf16.gmra.mxu0 %v1638
    %v4770 = vpop.f32.mrf.mxu0
    %v4771 = vadd.f32 %v4602, %v4770
    %v4772 = vpop.f32.mrf.mxu0
    %v4773 = vadd.f32 %v4604, %v4772
    %4774 = vmatmul.bf16.gmra.mxu0 %v1639
    %v4775 = vpop.f32.mrf.mxu0
    %v4776 = vadd.f32 %v4607, %v4775
    %v4777 = vpop.f32.mrf.mxu0
    %v4778 = vadd.f32 %v4609, %v4777
    %4779 = vmatmul.bf16.gmra.mxu0 %v1640
    %v4780 = vpop.f32.mrf.mxu0
    %v4781 = vadd.f32 %v4612, %v4780
    %v4782 = vpop.f32.mrf.mxu0
    %v4783 = vadd.f32 %v4614, %v4782
    %4784 = vmatmul.bf16.gmra.mxu0 %v1641
    %v4785 = vpop.f32.mrf.mxu0
    %v4786 = vadd.f32 %v4617, %v4785
    %v4787 = vpop.f32.mrf.mxu0
    %v4788 = vadd.f32 %v4619, %v4787
    %4789 = vmatmul.bf16.gmra.mxu0 %v1642
    %v4790 = vpop.f32.mrf.mxu0
    %v4791 = vadd.f32 %v4622, %v4790
    %v4792 = vpop.f32.mrf.mxu0
    %v4793 = vadd.f32 %v4624, %v4792
    %4794 = vmatmul.bf16.gmra.mxu0 %v1643
    %v4795 = vpop.f32.mrf.mxu0
    %v4796 = vadd.f32 %v4627, %v4795
    %v4797 = vpop.f32.mrf.mxu0
    %v4798 = vadd.f32 %v4629, %v4797
    %4799 = vmatmul.bf16.gmra.mxu0 %v1644
    %v4800 = vpop.f32.mrf.mxu0
    %v4801 = vadd.f32 %v4632, %v4800
    %v4802 = vpop.f32.mrf.mxu0
    %v4803 = vadd.f32 %v4634, %v4802
    %4804 = vmatmul.bf16.gmra.mxu0 %v1645
    %v4805 = vpop.f32.mrf.mxu0
    %v4806 = vadd.f32 %v4637, %v4805
    %v4807 = vpop.f32.mrf.mxu0
    %v4808 = vadd.f32 %v4639, %v4807
    %4809 = vmatmul.bf16.gmra.mxu0 %v1646
    %v4810 = vpop.f32.mrf.mxu0
    %v4811 = vadd.f32 %v4642, %v4810
    %v4812 = vpop.f32.mrf.mxu0
    %v4813 = vadd.f32 %v4644, %v4812
    %4814 = vmatmul.bf16.gmra.mxu0 %v1647
    %v4815 = vpop.f32.mrf.mxu0
    %v4816 = vadd.f32 %v4647, %v4815
    %v4817 = vpop.f32.mrf.mxu0
    %v4818 = vadd.f32 %v4649, %v4817
    %4819 = vdwg.mxu0
    %4820 = vmatpush.bf16.msra.mxu0 %v4361
    %4821 = vmatpush.bf16.msra.mxu0 %v4360
    %4822 = vmatpush.bf16.msra.mxu0 %v4359
    %4823 = vmatpush.bf16.msra.mxu0 %v4358
    %4824 = vmatpush.bf16.msra.mxu0 %v4357
    %4825 = vmatpush.bf16.msra.mxu0 %v4356
    %4826 = vmatpush.bf16.msra.mxu0 %v4355
    %4827 = vmatpush.bf16.msra.mxu0 %v4354
    %4828 = vmatmul.bf16.gmra.mxu0 %v1856
    %v4829 = vpop.f32.mrf.mxu0
    %v4830 = vadd.f32 %v4661, %v4829
    %v4831 = vpop.f32.mrf.mxu0
    %v4832 = vadd.f32 %v4663, %v4831
    %4833 = vmatmul.bf16.gmra.mxu0 %v1857
    %v4834 = vpop.f32.mrf.mxu0
    %v4835 = vadd.f32 %v4666, %v4834
    %v4836 = vpop.f32.mrf.mxu0
    %v4837 = vadd.f32 %v4668, %v4836
    %4838 = vmatmul.bf16.gmra.mxu0 %v1858
    %v4839 = vpop.f32.mrf.mxu0
    %v4840 = vadd.f32 %v4671, %v4839
    %v4841 = vpop.f32.mrf.mxu0
    %v4842 = vadd.f32 %v4673, %v4841
    %4843 = vmatmul.bf16.gmra.mxu0 %v1859
    %v4844 = vpop.f32.mrf.mxu0
    %v4845 = vadd.f32 %v4676, %v4844
    %v4846 = vpop.f32.mrf.mxu0
    %v4847 = vadd.f32 %v4678, %v4846
    %4848 = vmatmul.bf16.gmra.mxu0 %v1860
    %v4849 = vpop.f32.mrf.mxu0
    %v4850 = vadd.f32 %v4681, %v4849
    %v4851 = vpop.f32.mrf.mxu0
    %v4852 = vadd.f32 %v4683, %v4851
    %4853 = vmatmul.bf16.gmra.mxu0 %v1861
    %v4854 = vpop.f32.mrf.mxu0
    %v4855 = vadd.f32 %v4686, %v4854
    %v4856 = vpop.f32.mrf.mxu0
    %v4857 = vadd.f32 %v4688, %v4856
    %4858 = vmatmul.bf16.gmra.mxu0 %v1862
    %v4859 = vpop.f32.mrf.mxu0
    %v4860 = vadd.f32 %v4691, %v4859
    %v4861 = vpop.f32.mrf.mxu0
    %v4862 = vadd.f32 %v4693, %v4861
    %4863 = vmatmul.bf16.gmra.mxu0 %v1863
    %v4864 = vpop.f32.mrf.mxu0
    %v4865 = vadd.f32 %v4696, %v4864
    %v4866 = vpop.f32.mrf.mxu0
    %v4867 = vadd.f32 %v4698, %v4866
    %4868 = vmatmul.bf16.gmra.mxu0 %v1864
    %v4869 = vpop.f32.mrf.mxu0
    %v4870 = vadd.f32 %v4701, %v4869
    %v4871 = vpop.f32.mrf.mxu0
    %v4872 = vadd.f32 %v4703, %v4871
    %4873 = vmatmul.bf16.gmra.mxu0 %v1865
    %v4874 = vpop.f32.mrf.mxu0
    %v4875 = vadd.f32 %v4706, %v4874
    %v4876 = vpop.f32.mrf.mxu0
    %v4877 = vadd.f32 %v4708, %v4876
    %4878 = vmatmul.bf16.gmra.mxu0 %v1866
    %v4879 = vpop.f32.mrf.mxu0
    %v4880 = vadd.f32 %v4711, %v4879
    %v4881 = vpop.f32.mrf.mxu0
    %v4882 = vadd.f32 %v4713, %v4881
    %4883 = vmatmul.bf16.gmra.mxu0 %v1867
    %v4884 = vpop.f32.mrf.mxu0
    %v4885 = vadd.f32 %v4716, %v4884
    %v4886 = vpop.f32.mrf.mxu0
    %v4887 = vadd.f32 %v4718, %v4886
    %4888 = vmatmul.bf16.gmra.mxu0 %v1868
    %v4889 = vpop.f32.mrf.mxu0
    %v4890 = vadd.f32 %v4721, %v4889
    %v4891 = vpop.f32.mrf.mxu0
    %v4892 = vadd.f32 %v4723, %v4891
    %4893 = vmatmul.bf16.gmra.mxu0 %v1869
    %v4894 = vpop.f32.mrf.mxu0
    %v4895 = vadd.f32 %v4726, %v4894
    %v4896 = vpop.f32.mrf.mxu0
    %v4897 = vadd.f32 %v4728, %v4896
    %4898 = vmatmul.bf16.gmra.mxu0 %v1870
    %v4899 = vpop.f32.mrf.mxu0
    %v4900 = vadd.f32 %v4731, %v4899
    %v4901 = vpop.f32.mrf.mxu0
    %v4902 = vadd.f32 %v4733, %v4901
    %4903 = vmatmul.bf16.gmra.mxu0 %v1871
    %v4904 = vpop.f32.mrf.mxu0
    %v4905 = vadd.f32 %v4736, %v4904
    %v4906 = vpop.f32.mrf.mxu0
    %v4907 = vadd.f32 %v4738, %v4906
    %4908 = vmatmul.bf16.gmra.mxu0 %v1952
    %v4909 = vpop.f32.mrf.mxu0
    %v4910 = vadd.f32 %v4741, %v4909
    %v4911 = vpop.f32.mrf.mxu0
    %v4912 = vadd.f32 %v4743, %v4911
    %4913 = vmatmul.bf16.gmra.mxu0 %v1953
    %v4914 = vpop.f32.mrf.mxu0
    %v4915 = vadd.f32 %v4746, %v4914
    %v4916 = vpop.f32.mrf.mxu0
    %v4917 = vadd.f32 %v4748, %v4916
    %4918 = vmatmul.bf16.gmra.mxu0 %v1954
    %v4919 = vpop.f32.mrf.mxu0
    %v4920 = vadd.f32 %v4751, %v4919
    %v4921 = vpop.f32.mrf.mxu0
    %v4922 = vadd.f32 %v4753, %v4921
    %4923 = vmatmul.bf16.gmra.mxu0 %v1955
    %v4924 = vpop.f32.mrf.mxu0
    %v4925 = vadd.f32 %v4756, %v4924
    %v4926 = vpop.f32.mrf.mxu0
    %v4927 = vadd.f32 %v4758, %v4926
    %4928 = vmatmul.bf16.gmra.mxu0 %v1956
    %v4929 = vpop.f32.mrf.mxu0
    %v4930 = vadd.f32 %v4761, %v4929
    %v4931 = vpop.f32.mrf.mxu0
    %v4932 = vadd.f32 %v4763, %v4931
    %4933 = vmatmul.bf16.gmra.mxu0 %v1957
    %v4934 = vpop.f32.mrf.mxu0
    %v4935 = vadd.f32 %v4766, %v4934
    %v4936 = vpop.f32.mrf.mxu0
    %v4937 = vadd.f32 %v4768, %v4936
    %4938 = vmatmul.bf16.gmra.mxu0 %v1958
    %v4939 = vpop.f32.mrf.mxu0
    %v4940 = vadd.f32 %v4771, %v4939
    %v4941 = vpop.f32.mrf.mxu0
    %v4942 = vadd.f32 %v4773, %v4941
    %4943 = vmatmul.bf16.gmra.mxu0 %v1959
    %v4944 = vpop.f32.mrf.mxu0
    %v4945 = vadd.f32 %v4776, %v4944
    %v4946 = vpop.f32.mrf.mxu0
    %v4947 = vadd.f32 %v4778, %v4946
    %4948 = vmatmul.bf16.gmra.mxu0 %v1960
    %v4949 = vpop.f32.mrf.mxu0
    %v4950 = vadd.f32 %v4781, %v4949
    %v4951 = vpop.f32.mrf.mxu0
    %v4952 = vadd.f32 %v4783, %v4951
    %4953 = vmatmul.bf16.gmra.mxu0 %v1961
    %v4954 = vpop.f32.mrf.mxu0
    %v4955 = vadd.f32 %v4786, %v4954
    %v4956 = vpop.f32.mrf.mxu0
    %v4957 = vadd.f32 %v4788, %v4956
    %4958 = vmatmul.bf16.gmra.mxu0 %v1962
    %v4959 = vpop.f32.mrf.mxu0
    %v4960 = vadd.f32 %v4791, %v4959
    %v4961 = vpop.f32.mrf.mxu0
    %v4962 = vadd.f32 %v4793, %v4961
    %4963 = vmatmul.bf16.gmra.mxu0 %v1963
    %v4964 = vpop.f32.mrf.mxu0
    %v4965 = vadd.f32 %v4796, %v4964
    %v4966 = vpop.f32.mrf.mxu0
    %v4967 = vadd.f32 %v4798, %v4966
    %4968 = vmatmul.bf16.gmra.mxu0 %v1964
    %v4969 = vpop.f32.mrf.mxu0
    %v4970 = vadd.f32 %v4801, %v4969
    %v4971 = vpop.f32.mrf.mxu0
    %v4972 = vadd.f32 %v4803, %v4971
    %4973 = vmatmul.bf16.gmra.mxu0 %v1965
    %v4974 = vpop.f32.mrf.mxu0
    %v4975 = vadd.f32 %v4806, %v4974
    %v4976 = vpop.f32.mrf.mxu0
    %v4977 = vadd.f32 %v4808, %v4976
    %4978 = vmatmul.bf16.gmra.mxu0 %v1966
    %v4979 = vpop.f32.mrf.mxu0
    %v4980 = vadd.f32 %v4811, %v4979
    %v4981 = vpop.f32.mrf.mxu0
    %v4982 = vadd.f32 %v4813, %v4981
    %4983 = vmatmul.bf16.gmra.mxu0 %v1967
    %v4984 = vpop.f32.mrf.mxu0
    %v4985 = vadd.f32 %v4816, %v4984
    %v4986 = vpop.f32.mrf.mxu0
    %v4987 = vadd.f32 %v4818, %v4986
    %4988 = vdwg.mxu0
    %4989 = vmatpush.bf16.msra.mxu0 %v4369
    %4990 = vmatpush.bf16.msra.mxu0 %v4368
    %4991 = vmatpush.bf16.msra.mxu0 %v4367
    %4992 = vmatpush.bf16.msra.mxu0 %v4366
    %4993 = vmatpush.bf16.msra.mxu0 %v4365
    %4994 = vmatpush.bf16.msra.mxu0 %v4364
    %4995 = vmatpush.bf16.msra.mxu0 %v4363
    %4996 = vmatpush.bf16.msra.mxu0 %v4362
    %4997 = vmatmul.bf16.gmra.mxu0 %v2176
    %v4998 = vpop.f32.mrf.mxu0
    %v4999 = vadd.f32 %v4830, %v4998
    %v5000 = vpop.f32.mrf.mxu0
    %v5001 = vadd.f32 %v4832, %v5000
    %5002 = vmatmul.bf16.gmra.mxu0 %v2177
    %v5003 = vpop.f32.mrf.mxu0
    %v5004 = vadd.f32 %v4835, %v5003
    %v5005 = vpop.f32.mrf.mxu0
    %v5006 = vadd.f32 %v4837, %v5005
    %5007 = vmatmul.bf16.gmra.mxu0 %v2178
    %v5008 = vpop.f32.mrf.mxu0
    %v5009 = vadd.f32 %v4840, %v5008
    %v5010 = vpop.f32.mrf.mxu0
    %v5011 = vadd.f32 %v4842, %v5010
    %5012 = vmatmul.bf16.gmra.mxu0 %v2179
    %v5013 = vpop.f32.mrf.mxu0
    %v5014 = vadd.f32 %v4845, %v5013
    %v5015 = vpop.f32.mrf.mxu0
    %v5016 = vadd.f32 %v4847, %v5015
    %5017 = vmatmul.bf16.gmra.mxu0 %v2180
    %v5018 = vpop.f32.mrf.mxu0
    %v5019 = vadd.f32 %v4850, %v5018
    %v5020 = vpop.f32.mrf.mxu0
    %v5021 = vadd.f32 %v4852, %v5020
    %5022 = vmatmul.bf16.gmra.mxu0 %v2181
    %v5023 = vpop.f32.mrf.mxu0
    %v5024 = vadd.f32 %v4855, %v5023
    %v5025 = vpop.f32.mrf.mxu0
    %v5026 = vadd.f32 %v4857, %v5025
    %5027 = vmatmul.bf16.gmra.mxu0 %v2182
    %v5028 = vpop.f32.mrf.mxu0
    %v5029 = vadd.f32 %v4860, %v5028
    %v5030 = vpop.f32.mrf.mxu0
    %v5031 = vadd.f32 %v4862, %v5030
    %5032 = vmatmul.bf16.gmra.mxu0 %v2183
    %v5033 = vpop.f32.mrf.mxu0
    %v5034 = vadd.f32 %v4865, %v5033
    %v5035 = vpop.f32.mrf.mxu0
    %v5036 = vadd.f32 %v4867, %v5035
    %5037 = vmatmul.bf16.gmra.mxu0 %v2184
    %v5038 = vpop.f32.mrf.mxu0
    %v5039 = vadd.f32 %v4870, %v5038
    %v5040 = vpop.f32.mrf.mxu0
    %v5041 = vadd.f32 %v4872, %v5040
    %5042 = vmatmul.bf16.gmra.mxu0 %v2185
    %v5043 = vpop.f32.mrf.mxu0
    %v5044 = vadd.f32 %v4875, %v5043
    %v5045 = vpop.f32.mrf.mxu0
    %v5046 = vadd.f32 %v4877, %v5045
    %5047 = vmatmul.bf16.gmra.mxu0 %v2186
    %v5048 = vpop.f32.mrf.mxu0
    %v5049 = vadd.f32 %v4880, %v5048
    %v5050 = vpop.f32.mrf.mxu0
    %v5051 = vadd.f32 %v4882, %v5050
    %5052 = vmatmul.bf16.gmra.mxu0 %v2187
    %v5053 = vpop.f32.mrf.mxu0
    %v5054 = vadd.f32 %v4885, %v5053
    %v5055 = vpop.f32.mrf.mxu0
    %v5056 = vadd.f32 %v4887, %v5055
    %5057 = vmatmul.bf16.gmra.mxu0 %v2188
    %v5058 = vpop.f32.mrf.mxu0
    %v5059 = vadd.f32 %v4890, %v5058
    %v5060 = vpop.f32.mrf.mxu0
    %v5061 = vadd.f32 %v4892, %v5060
    %5062 = vmatmul.bf16.gmra.mxu0 %v2189
    %v5063 = vpop.f32.mrf.mxu0
    %v5064 = vadd.f32 %v4895, %v5063
    %v5065 = vpop.f32.mrf.mxu0
    %v5066 = vadd.f32 %v4897, %v5065
    %5067 = vmatmul.bf16.gmra.mxu0 %v2190
    %v5068 = vpop.f32.mrf.mxu0
    %v5069 = vadd.f32 %v4900, %v5068
    %v5070 = vpop.f32.mrf.mxu0
    %v5071 = vadd.f32 %v4902, %v5070
    %5072 = vmatmul.bf16.gmra.mxu0 %v2191
    %v5073 = vpop.f32.mrf.mxu0
    %v5074 = vadd.f32 %v4905, %v5073
    %v5075 = vpop.f32.mrf.mxu0
    %v5076 = vadd.f32 %v4907, %v5075
    %5077 = vmatmul.bf16.gmra.mxu0 %v2272
    %v5078 = vpop.f32.mrf.mxu0
    %v5079 = vadd.f32 %v4910, %v5078
    %v5080 = vpop.f32.mrf.mxu0
    %v5081 = vadd.f32 %v4912, %v5080
    %5082 = vmatmul.bf16.gmra.mxu0 %v2273
    %v5083 = vpop.f32.mrf.mxu0
    %v5084 = vadd.f32 %v4915, %v5083
    %v5085 = vpop.f32.mrf.mxu0
    %v5086 = vadd.f32 %v4917, %v5085
    %5087 = vmatmul.bf16.gmra.mxu0 %v2274
    %v5088 = vpop.f32.mrf.mxu0
    %v5089 = vadd.f32 %v4920, %v5088
    %v5090 = vpop.f32.mrf.mxu0
    %v5091 = vadd.f32 %v4922, %v5090
    %5092 = vmatmul.bf16.gmra.mxu0 %v2275
    %v5093 = vpop.f32.mrf.mxu0
    %v5094 = vadd.f32 %v4925, %v5093
    %v5095 = vpop.f32.mrf.mxu0
    %v5096 = vadd.f32 %v4927, %v5095
    %5097 = vmatmul.bf16.gmra.mxu0 %v2276
    %v5098 = vpop.f32.mrf.mxu0
    %v5099 = vadd.f32 %v4930, %v5098
    %v5100 = vpop.f32.mrf.mxu0
    %v5101 = vadd.f32 %v4932, %v5100
    %5102 = vmatmul.bf16.gmra.mxu0 %v2277
    %v5103 = vpop.f32.mrf.mxu0
    %v5104 = vadd.f32 %v4935, %v5103
    %v5105 = vpop.f32.mrf.mxu0
    %v5106 = vadd.f32 %v4937, %v5105
    %5107 = vmatmul.bf16.gmra.mxu0 %v2278
    %v5108 = vpop.f32.mrf.mxu0
    %v5109 = vadd.f32 %v4940, %v5108
    %v5110 = vpop.f32.mrf.mxu0
    %v5111 = vadd.f32 %v4942, %v5110
    %5112 = vmatmul.bf16.gmra.mxu0 %v2279
    %v5113 = vpop.f32.mrf.mxu0
    %v5114 = vadd.f32 %v4945, %v5113
    %v5115 = vpop.f32.mrf.mxu0
    %v5116 = vadd.f32 %v4947, %v5115
    %5117 = vmatmul.bf16.gmra.mxu0 %v2280
    %v5118 = vpop.f32.mrf.mxu0
    %v5119 = vadd.f32 %v4950, %v5118
    %v5120 = vpop.f32.mrf.mxu0
    %v5121 = vadd.f32 %v4952, %v5120
    %5122 = vmatmul.bf16.gmra.mxu0 %v2281
    %v5123 = vpop.f32.mrf.mxu0
    %v5124 = vadd.f32 %v4955, %v5123
    %v5125 = vpop.f32.mrf.mxu0
    %v5126 = vadd.f32 %v4957, %v5125
    %5127 = vmatmul.bf16.gmra.mxu0 %v2282
    %v5128 = vpop.f32.mrf.mxu0
    %v5129 = vadd.f32 %v4960, %v5128
    %v5130 = vpop.f32.mrf.mxu0
    %v5131 = vadd.f32 %v4962, %v5130
    %5132 = vmatmul.bf16.gmra.mxu0 %v2283
    %v5133 = vpop.f32.mrf.mxu0
    %v5134 = vadd.f32 %v4965, %v5133
    %v5135 = vpop.f32.mrf.mxu0
    %v5136 = vadd.f32 %v4967, %v5135
    %5137 = vmatmul.bf16.gmra.mxu0 %v2284
    %v5138 = vpop.f32.mrf.mxu0
    %v5139 = vadd.f32 %v4970, %v5138
    %v5140 = vpop.f32.mrf.mxu0
    %v5141 = vadd.f32 %v4972, %v5140
    %5142 = vmatmul.bf16.gmra.mxu0 %v2285
    %v5143 = vpop.f32.mrf.mxu0
    %v5144 = vadd.f32 %v4975, %v5143
    %v5145 = vpop.f32.mrf.mxu0
    %v5146 = vadd.f32 %v4977, %v5145
    %5147 = vmatmul.bf16.gmra.mxu0 %v2286
    %v5148 = vpop.f32.mrf.mxu0
    %v5149 = vadd.f32 %v4980, %v5148
    %v5150 = vpop.f32.mrf.mxu0
    %v5151 = vadd.f32 %v4982, %v5150
    %5152 = vmatmul.bf16.gmra.mxu0 %v2287
    %v5153 = vpop.f32.mrf.mxu0
    %v5154 = vadd.f32 %v4985, %v5153
    %v5155 = vpop.f32.mrf.mxu0
    %v5156 = vadd.f32 %v4987, %v5155
    %5157 = vdwg.mxu0
    %5158 = vmatpush.bf16.msra.mxu0 %v4377
    %5159 = vmatpush.bf16.msra.mxu0 %v4376
    %5160 = vmatpush.bf16.msra.mxu0 %v4375
    %5161 = vmatpush.bf16.msra.mxu0 %v4374
    %5162 = vmatpush.bf16.msra.mxu0 %v4373
    %5163 = vmatpush.bf16.msra.mxu0 %v4372
    %5164 = vmatpush.bf16.msra.mxu0 %v4371
    %5165 = vmatpush.bf16.msra.mxu0 %v4370
    %5166 = vmatmul.bf16.gmra.mxu0 %v2496
    %v5167 = vpop.f32.mrf.mxu0
    %v5168 = vadd.f32 %v4999, %v5167
    %v5169 = vpop.f32.mrf.mxu0
    %v5170 = vadd.f32 %v5001, %v5169
    %5171 = vmatmul.bf16.gmra.mxu0 %v2497
    %v5172 = vpop.f32.mrf.mxu0
    %v5173 = vadd.f32 %v5004, %v5172
    %v5174 = vpop.f32.mrf.mxu0
    %v5175 = vadd.f32 %v5006, %v5174
    %5176 = vmatmul.bf16.gmra.mxu0 %v2498
    %v5177 = vpop.f32.mrf.mxu0
    %v5178 = vadd.f32 %v5009, %v5177
    %v5179 = vpop.f32.mrf.mxu0
    %v5180 = vadd.f32 %v5011, %v5179
    %5181 = vmatmul.bf16.gmra.mxu0 %v2499
    %v5182 = vpop.f32.mrf.mxu0
    %v5183 = vadd.f32 %v5014, %v5182
    %v5184 = vpop.f32.mrf.mxu0
    %v5185 = vadd.f32 %v5016, %v5184
    %5186 = vmatmul.bf16.gmra.mxu0 %v2500
    %v5187 = vpop.f32.mrf.mxu0
    %v5188 = vadd.f32 %v5019, %v5187
    %v5189 = vpop.f32.mrf.mxu0
    %v5190 = vadd.f32 %v5021, %v5189
    %5191 = vmatmul.bf16.gmra.mxu0 %v2501
    %v5192 = vpop.f32.mrf.mxu0
    %v5193 = vadd.f32 %v5024, %v5192
    %v5194 = vpop.f32.mrf.mxu0
    %v5195 = vadd.f32 %v5026, %v5194
    %5196 = vmatmul.bf16.gmra.mxu0 %v2502
    %v5197 = vpop.f32.mrf.mxu0
    %v5198 = vadd.f32 %v5029, %v5197
    %v5199 = vpop.f32.mrf.mxu0
    %v5200 = vadd.f32 %v5031, %v5199
    %5201 = vmatmul.bf16.gmra.mxu0 %v2503
    %v5202 = vpop.f32.mrf.mxu0
    %v5203 = vadd.f32 %v5034, %v5202
    %v5204 = vpop.f32.mrf.mxu0
    %v5205 = vadd.f32 %v5036, %v5204
    %5206 = vmatmul.bf16.gmra.mxu0 %v2504
    %v5207 = vpop.f32.mrf.mxu0
    %v5208 = vadd.f32 %v5039, %v5207
    %v5209 = vpop.f32.mrf.mxu0
    %v5210 = vadd.f32 %v5041, %v5209
    %5211 = vmatmul.bf16.gmra.mxu0 %v2505
    %v5212 = vpop.f32.mrf.mxu0
    %v5213 = vadd.f32 %v5044, %v5212
    %v5214 = vpop.f32.mrf.mxu0
    %v5215 = vadd.f32 %v5046, %v5214
    %5216 = vmatmul.bf16.gmra.mxu0 %v2506
    %v5217 = vpop.f32.mrf.mxu0
    %v5218 = vadd.f32 %v5049, %v5217
    %v5219 = vpop.f32.mrf.mxu0
    %v5220 = vadd.f32 %v5051, %v5219
    %5221 = vmatmul.bf16.gmra.mxu0 %v2507
    %v5222 = vpop.f32.mrf.mxu0
    %v5223 = vadd.f32 %v5054, %v5222
    %v5224 = vpop.f32.mrf.mxu0
    %v5225 = vadd.f32 %v5056, %v5224
    %5226 = vmatmul.bf16.gmra.mxu0 %v2508
    %v5227 = vpop.f32.mrf.mxu0
    %v5228 = vadd.f32 %v5059, %v5227
    %v5229 = vpop.f32.mrf.mxu0
    %v5230 = vadd.f32 %v5061, %v5229
    %5231 = vmatmul.bf16.gmra.mxu0 %v2509
    %v5232 = vpop.f32.mrf.mxu0
    %v5233 = vadd.f32 %v5064, %v5232
    %v5234 = vpop.f32.mrf.mxu0
    %v5235 = vadd.f32 %v5066, %v5234
    %5236 = vmatmul.bf16.gmra.mxu0 %v2510
    %v5237 = vpop.f32.mrf.mxu0
    %v5238 = vadd.f32 %v5069, %v5237
    %v5239 = vpop.f32.mrf.mxu0
    %v5240 = vadd.f32 %v5071, %v5239
    %5241 = vmatmul.bf16.gmra.mxu0 %v2511
    %v5242 = vpop.f32.mrf.mxu0
    %v5243 = vadd.f32 %v5074, %v5242
    %v5244 = vpop.f32.mrf.mxu0
    %v5245 = vadd.f32 %v5076, %v5244
    %5246 = vmatmul.bf16.gmra.mxu0 %v2592
    %v5247 = vpop.f32.mrf.mxu0
    %v5248 = vadd.f32 %v5079, %v5247
    %v5249 = vpop.f32.mrf.mxu0
    %v5250 = vadd.f32 %v5081, %v5249
    %5251 = vmatmul.bf16.gmra.mxu0 %v2593
    %v5252 = vpop.f32.mrf.mxu0
    %v5253 = vadd.f32 %v5084, %v5252
    %v5254 = vpop.f32.mrf.mxu0
    %v5255 = vadd.f32 %v5086, %v5254
    %5256 = vmatmul.bf16.gmra.mxu0 %v2594
    %v5257 = vpop.f32.mrf.mxu0
    %v5258 = vadd.f32 %v5089, %v5257
    %v5259 = vpop.f32.mrf.mxu0
    %v5260 = vadd.f32 %v5091, %v5259
    %5261 = vmatmul.bf16.gmra.mxu0 %v2595
    %v5262 = vpop.f32.mrf.mxu0
    %v5263 = vadd.f32 %v5094, %v5262
    %v5264 = vpop.f32.mrf.mxu0
    %v5265 = vadd.f32 %v5096, %v5264
    %5266 = vmatmul.bf16.gmra.mxu0 %v2596
    %v5267 = vpop.f32.mrf.mxu0
    %v5268 = vadd.f32 %v5099, %v5267
    %v5269 = vpop.f32.mrf.mxu0
    %v5270 = vadd.f32 %v5101, %v5269
    %5271 = vmatmul.bf16.gmra.mxu0 %v2597
    %v5272 = vpop.f32.mrf.mxu0
    %v5273 = vadd.f32 %v5104, %v5272
    %v5274 = vpop.f32.mrf.mxu0
    %v5275 = vadd.f32 %v5106, %v5274
    %5276 = vmatmul.bf16.gmra.mxu0 %v2598
    %v5277 = vpop.f32.mrf.mxu0
    %v5278 = vadd.f32 %v5109, %v5277
    %v5279 = vpop.f32.mrf.mxu0
    %v5280 = vadd.f32 %v5111, %v5279
    %5281 = vmatmul.bf16.gmra.mxu0 %v2599
    %v5282 = vpop.f32.mrf.mxu0
    %v5283 = vadd.f32 %v5114, %v5282
    %v5284 = vpop.f32.mrf.mxu0
    %v5285 = vadd.f32 %v5116, %v5284
    %5286 = vmatmul.bf16.gmra.mxu0 %v2600
    %v5287 = vpop.f32.mrf.mxu0
    %v5288 = vadd.f32 %v5119, %v5287
    %v5289 = vpop.f32.mrf.mxu0
    %v5290 = vadd.f32 %v5121, %v5289
    %5291 = vmatmul.bf16.gmra.mxu0 %v2601
    %v5292 = vpop.f32.mrf.mxu0
    %v5293 = vadd.f32 %v5124, %v5292
    %v5294 = vpop.f32.mrf.mxu0
    %v5295 = vadd.f32 %v5126, %v5294
    %5296 = vmatmul.bf16.gmra.mxu0 %v2602
    %v5297 = vpop.f32.mrf.mxu0
    %v5298 = vadd.f32 %v5129, %v5297
    %v5299 = vpop.f32.mrf.mxu0
    %v5300 = vadd.f32 %v5131, %v5299
    %5301 = vmatmul.bf16.gmra.mxu0 %v2603
    %v5302 = vpop.f32.mrf.mxu0
    %v5303 = vadd.f32 %v5134, %v5302
    %v5304 = vpop.f32.mrf.mxu0
    %v5305 = vadd.f32 %v5136, %v5304
    %5306 = vmatmul.bf16.gmra.mxu0 %v2604
    %v5307 = vpop.f32.mrf.mxu0
    %v5308 = vadd.f32 %v5139, %v5307
    %v5309 = vpop.f32.mrf.mxu0
    %v5310 = vadd.f32 %v5141, %v5309
    %5311 = vmatmul.bf16.gmra.mxu0 %v2605
    %v5312 = vpop.f32.mrf.mxu0
    %v5313 = vadd.f32 %v5144, %v5312
    %v5314 = vpop.f32.mrf.mxu0
    %v5315 = vadd.f32 %v5146, %v5314
    %5316 = vmatmul.bf16.gmra.mxu0 %v2606
    %v5317 = vpop.f32.mrf.mxu0
    %v5318 = vadd.f32 %v5149, %v5317
    %v5319 = vpop.f32.mrf.mxu0
    %v5320 = vadd.f32 %v5151, %v5319
    %5321 = vmatmul.bf16.gmra.mxu0 %v2607
    %v5322 = vpop.f32.mrf.mxu0
    %v5323 = vadd.f32 %v5154, %v5322
    %v5324 = vpop.f32.mrf.mxu0
    %v5325 = vadd.f32 %v5156, %v5324
    %5326 = vdwg.mxu0
    %5327 = vmatpush.bf16.msra.mxu0 %v4385
    %5328 = vmatpush.bf16.msra.mxu0 %v4384
    %5329 = vmatpush.bf16.msra.mxu0 %v4383
    %5330 = vmatpush.bf16.msra.mxu0 %v4382
    %5331 = vmatpush.bf16.msra.mxu0 %v4381
    %5332 = vmatpush.bf16.msra.mxu0 %v4380
    %5333 = vmatpush.bf16.msra.mxu0 %v4379
    %5334 = vmatpush.bf16.msra.mxu0 %v4378
    %5335 = vmatmul.bf16.gmra.mxu0 %v2816
    %v5336 = vpop.f32.mrf.mxu0
    %v5337 = vadd.f32 %v5168, %v5336
    %v5338 = vpop.f32.mrf.mxu0
    %v5339 = vadd.f32 %v5170, %v5338
    %5340 = vmatmul.bf16.gmra.mxu0 %v2817
    %v5341 = vpop.f32.mrf.mxu0
    %v5342 = vadd.f32 %v5173, %v5341
    %v5343 = vpop.f32.mrf.mxu0
    %v5344 = vadd.f32 %v5175, %v5343
    %5345 = vmatmul.bf16.gmra.mxu0 %v2818
    %v5346 = vpop.f32.mrf.mxu0
    %v5347 = vadd.f32 %v5178, %v5346
    %v5348 = vpop.f32.mrf.mxu0
    %v5349 = vadd.f32 %v5180, %v5348
    %5350 = vmatmul.bf16.gmra.mxu0 %v2819
    %v5351 = vpop.f32.mrf.mxu0
    %v5352 = vadd.f32 %v5183, %v5351
    %v5353 = vpop.f32.mrf.mxu0
    %v5354 = vadd.f32 %v5185, %v5353
    %5355 = vmatmul.bf16.gmra.mxu0 %v2820
    %v5356 = vpop.f32.mrf.mxu0
    %v5357 = vadd.f32 %v5188, %v5356
    %v5358 = vpop.f32.mrf.mxu0
    %v5359 = vadd.f32 %v5190, %v5358
    %5360 = vmatmul.bf16.gmra.mxu0 %v2821
    %v5361 = vpop.f32.mrf.mxu0
    %v5362 = vadd.f32 %v5193, %v5361
    %v5363 = vpop.f32.mrf.mxu0
    %v5364 = vadd.f32 %v5195, %v5363
    %5365 = vmatmul.bf16.gmra.mxu0 %v2822
    %v5366 = vpop.f32.mrf.mxu0
    %v5367 = vadd.f32 %v5198, %v5366
    %v5368 = vpop.f32.mrf.mxu0
    %v5369 = vadd.f32 %v5200, %v5368
    %5370 = vmatmul.bf16.gmra.mxu0 %v2823
    %v5371 = vpop.f32.mrf.mxu0
    %v5372 = vadd.f32 %v5203, %v5371
    %v5373 = vpop.f32.mrf.mxu0
    %v5374 = vadd.f32 %v5205, %v5373
    %5375 = vmatmul.bf16.gmra.mxu0 %v2824
    %v5376 = vpop.f32.mrf.mxu0
    %v5377 = vadd.f32 %v5208, %v5376
    %v5378 = vpop.f32.mrf.mxu0
    %v5379 = vadd.f32 %v5210, %v5378
    %5380 = vmatmul.bf16.gmra.mxu0 %v2825
    %v5381 = vpop.f32.mrf.mxu0
    %v5382 = vadd.f32 %v5213, %v5381
    %v5383 = vpop.f32.mrf.mxu0
    %v5384 = vadd.f32 %v5215, %v5383
    %5385 = vmatmul.bf16.gmra.mxu0 %v2826
    %v5386 = vpop.f32.mrf.mxu0
    %v5387 = vadd.f32 %v5218, %v5386
    %v5388 = vpop.f32.mrf.mxu0
    %v5389 = vadd.f32 %v5220, %v5388
    %5390 = vmatmul.bf16.gmra.mxu0 %v2827
    %v5391 = vpop.f32.mrf.mxu0
    %v5392 = vadd.f32 %v5223, %v5391
    %v5393 = vpop.f32.mrf.mxu0
    %v5394 = vadd.f32 %v5225, %v5393
    %5395 = vmatmul.bf16.gmra.mxu0 %v2828
    %v5396 = vpop.f32.mrf.mxu0
    %v5397 = vadd.f32 %v5228, %v5396
    %v5398 = vpop.f32.mrf.mxu0
    %v5399 = vadd.f32 %v5230, %v5398
    %5400 = vmatmul.bf16.gmra.mxu0 %v2829
    %v5401 = vpop.f32.mrf.mxu0
    %v5402 = vadd.f32 %v5233, %v5401
    %v5403 = vpop.f32.mrf.mxu0
    %v5404 = vadd.f32 %v5235, %v5403
    %5405 = vmatmul.bf16.gmra.mxu0 %v2830
    %v5406 = vpop.f32.mrf.mxu0
    %v5407 = vadd.f32 %v5238, %v5406
    %v5408 = vpop.f32.mrf.mxu0
    %v5409 = vadd.f32 %v5240, %v5408
    %5410 = vmatmul.bf16.gmra.mxu0 %v2831
    %v5411 = vpop.f32.mrf.mxu0
    %v5412 = vadd.f32 %v5243, %v5411
    %v5413 = vpop.f32.mrf.mxu0
    %v5414 = vadd.f32 %v5245, %v5413
    %5415 = vmatmul.bf16.gmra.mxu0 %v2912
    %v5416 = vpop.f32.mrf.mxu0
    %v5417 = vadd.f32 %v5248, %v5416
    %v5418 = vpop.f32.mrf.mxu0
    %v5419 = vadd.f32 %v5250, %v5418
    %5420 = vmatmul.bf16.gmra.mxu0 %v2913
    %v5421 = vpop.f32.mrf.mxu0
    %v5422 = vadd.f32 %v5253, %v5421
    %v5423 = vpop.f32.mrf.mxu0
    %v5424 = vadd.f32 %v5255, %v5423
    %5425 = vmatmul.bf16.gmra.mxu0 %v2914
    %v5426 = vpop.f32.mrf.mxu0
    %v5427 = vadd.f32 %v5258, %v5426
    %v5428 = vpop.f32.mrf.mxu0
    %v5429 = vadd.f32 %v5260, %v5428
    %5430 = vmatmul.bf16.gmra.mxu0 %v2915
    %v5431 = vpop.f32.mrf.mxu0
    %v5432 = vadd.f32 %v5263, %v5431
    %v5433 = vpop.f32.mrf.mxu0
    %v5434 = vadd.f32 %v5265, %v5433
    %5435 = vmatmul.bf16.gmra.mxu0 %v2916
    %v5436 = vpop.f32.mrf.mxu0
    %v5437 = vadd.f32 %v5268, %v5436
    %v5438 = vpop.f32.mrf.mxu0
    %v5439 = vadd.f32 %v5270, %v5438
    %5440 = vmatmul.bf16.gmra.mxu0 %v2917
    %v5441 = vpop.f32.mrf.mxu0
    %v5442 = vadd.f32 %v5273, %v5441
    %v5443 = vpop.f32.mrf.mxu0
    %v5444 = vadd.f32 %v5275, %v5443
    %5445 = vmatmul.bf16.gmra.mxu0 %v2918
    %v5446 = vpop.f32.mrf.mxu0
    %v5447 = vadd.f32 %v5278, %v5446
    %v5448 = vpop.f32.mrf.mxu0
    %v5449 = vadd.f32 %v5280, %v5448
    %5450 = vmatmul.bf16.gmra.mxu0 %v2919
    %v5451 = vpop.f32.mrf.mxu0
    %v5452 = vadd.f32 %v5283, %v5451
    %v5453 = vpop.f32.mrf.mxu0
    %v5454 = vadd.f32 %v5285, %v5453
    %5455 = vmatmul.bf16.gmra.mxu0 %v2920
    %v5456 = vpop.f32.mrf.mxu0
    %v5457 = vadd.f32 %v5288, %v5456
    %v5458 = vpop.f32.mrf.mxu0
    %v5459 = vadd.f32 %v5290, %v5458
    %5460 = vmatmul.bf16.gmra.mxu0 %v2921
    %v5461 = vpop.f32.mrf.mxu0
    %v5462 = vadd.f32 %v5293, %v5461
    %v5463 = vpop.f32.mrf.mxu0
    %v5464 = vadd.f32 %v5295, %v5463
    %5465 = vmatmul.bf16.gmra.mxu0 %v2922
    %v5466 = vpop.f32.mrf.mxu0
    %v5467 = vadd.f32 %v5298, %v5466
    %v5468 = vpop.f32.mrf.mxu0
    %v5469 = vadd.f32 %v5300, %v5468
    %5470 = vmatmul.bf16.gmra.mxu0 %v2923
    %v5471 = vpop.f32.mrf.mxu0
    %v5472 = vadd.f32 %v5303, %v5471
    %v5473 = vpop.f32.mrf.mxu0
    %v5474 = vadd.f32 %v5305, %v5473
    %5475 = vmatmul.bf16.gmra.mxu0 %v2924
    %v5476 = vpop.f32.mrf.mxu0
    %v5477 = vadd.f32 %v5308, %v5476
    %v5478 = vpop.f32.mrf.mxu0
    %v5479 = vadd.f32 %v5310, %v5478
    %5480 = vmatmul.bf16.gmra.mxu0 %v2925
    %v5481 = vpop.f32.mrf.mxu0
    %v5482 = vadd.f32 %v5313, %v5481
    %v5483 = vpop.f32.mrf.mxu0
    %v5484 = vadd.f32 %v5315, %v5483
    %5485 = vmatmul.bf16.gmra.mxu0 %v2926
    %v5486 = vpop.f32.mrf.mxu0
    %v5487 = vadd.f32 %v5318, %v5486
    %v5488 = vpop.f32.mrf.mxu0
    %v5489 = vadd.f32 %v5320, %v5488
    %5490 = vmatmul.bf16.gmra.mxu0 %v2927
    %v5491 = vpop.f32.mrf.mxu0
    %v5492 = vadd.f32 %v5323, %v5491
    %v5493 = vpop.f32.mrf.mxu0
    %v5494 = vadd.f32 %v5325, %v5493
    %5495 = vdwg.mxu0
    %5496 = vmatpush.bf16.msra.mxu0 %v4393
    %5497 = vmatpush.bf16.msra.mxu0 %v4392
    %5498 = vmatpush.bf16.msra.mxu0 %v4391
    %5499 = vmatpush.bf16.msra.mxu0 %v4390
    %5500 = vmatpush.bf16.msra.mxu0 %v4389
    %5501 = vmatpush.bf16.msra.mxu0 %v4388
    %5502 = vmatpush.bf16.msra.mxu0 %v4387
    %5503 = vmatpush.bf16.msra.mxu0 %v4386
    %5504 = vmatmul.bf16.gmra.mxu0 %v3138
    %v5505 = vpop.f32.mrf.mxu0
    %v5506 = vadd.f32 %v5337, %v5505
    %v5507 = vpop.f32.mrf.mxu0
    %v5508 = vadd.f32 %v5339, %v5507
    %5509 = vmatmul.bf16.gmra.mxu0 %v3139
    %v5510 = vpop.f32.mrf.mxu0
    %v5511 = vadd.f32 %v5342, %v5510
    %v5512 = vpop.f32.mrf.mxu0
    %v5513 = vadd.f32 %v5344, %v5512
    %5514 = vmatmul.bf16.gmra.mxu0 %v3140
    %v5515 = vpop.f32.mrf.mxu0
    %v5516 = vadd.f32 %v5347, %v5515
    %v5517 = vpop.f32.mrf.mxu0
    %v5518 = vadd.f32 %v5349, %v5517
    %5519 = vmatmul.bf16.gmra.mxu0 %v3141
    %v5520 = vpop.f32.mrf.mxu0
    %v5521 = vadd.f32 %v5352, %v5520
    %v5522 = vpop.f32.mrf.mxu0
    %v5523 = vadd.f32 %v5354, %v5522
    %5524 = vmatmul.bf16.gmra.mxu0 %v3142
    %v5525 = vpop.f32.mrf.mxu0
    %v5526 = vadd.f32 %v5357, %v5525
    %v5527 = vpop.f32.mrf.mxu0
    %v5528 = vadd.f32 %v5359, %v5527
    %5529 = vmatmul.bf16.gmra.mxu0 %v3143
    %v5530 = vpop.f32.mrf.mxu0
    %v5531 = vadd.f32 %v5362, %v5530
    %v5532 = vpop.f32.mrf.mxu0
    %v5533 = vadd.f32 %v5364, %v5532
    %5534 = vmatmul.bf16.gmra.mxu0 %v3144
    %v5535 = vpop.f32.mrf.mxu0
    %v5536 = vadd.f32 %v5367, %v5535
    %v5537 = vpop.f32.mrf.mxu0
    %v5538 = vadd.f32 %v5369, %v5537
    %5539 = vmatmul.bf16.gmra.mxu0 %v3145
    %v5540 = vpop.f32.mrf.mxu0
    %v5541 = vadd.f32 %v5372, %v5540
    %v5542 = vpop.f32.mrf.mxu0
    %v5543 = vadd.f32 %v5374, %v5542
    %5544 = vmatmul.bf16.gmra.mxu0 %v3146
    %v5545 = vpop.f32.mrf.mxu0
    %v5546 = vadd.f32 %v5377, %v5545
    %v5547 = vpop.f32.mrf.mxu0
    %v5548 = vadd.f32 %v5379, %v5547
    %5549 = vmatmul.bf16.gmra.mxu0 %v3147
    %v5550 = vpop.f32.mrf.mxu0
    %v5551 = vadd.f32 %v5382, %v5550
    %v5552 = vpop.f32.mrf.mxu0
    %v5553 = vadd.f32 %v5384, %v5552
    %5554 = vmatmul.bf16.gmra.mxu0 %v3148
    %v5555 = vpop.f32.mrf.mxu0
    %v5556 = vadd.f32 %v5387, %v5555
    %v5557 = vpop.f32.mrf.mxu0
    %v5558 = vadd.f32 %v5389, %v5557
    %5559 = vmatmul.bf16.gmra.mxu0 %v3149
    %v5560 = vpop.f32.mrf.mxu0
    %v5561 = vadd.f32 %v5392, %v5560
    %v5562 = vpop.f32.mrf.mxu0
    %v5563 = vadd.f32 %v5394, %v5562
    %5564 = vmatmul.bf16.gmra.mxu0 %v3150
    %v5565 = vpop.f32.mrf.mxu0
    %v5566 = vadd.f32 %v5397, %v5565
    %v5567 = vpop.f32.mrf.mxu0
    %v5568 = vadd.f32 %v5399, %v5567
    %5569 = vmatmul.bf16.gmra.mxu0 %v3151
    %v5570 = vpop.f32.mrf.mxu0
    %v5571 = vadd.f32 %v5402, %v5570
    %v5572 = vpop.f32.mrf.mxu0
    %v5573 = vadd.f32 %v5404, %v5572
    %5574 = vmatmul.bf16.gmra.mxu0 %v3152
    %v5575 = vpop.f32.mrf.mxu0
    %v5576 = vadd.f32 %v5407, %v5575
    %v5577 = vpop.f32.mrf.mxu0
    %v5578 = vadd.f32 %v5409, %v5577
    %5579 = vmatmul.bf16.gmra.mxu0 %v3153
    %v5580 = vpop.f32.mrf.mxu0
    %v5581 = vadd.f32 %v5412, %v5580
    %v5582 = vpop.f32.mrf.mxu0
    %v5583 = vadd.f32 %v5414, %v5582
    %5584 = vmatmul.bf16.gmra.mxu0 %v3234
    %v5585 = vpop.f32.mrf.mxu0
    %v5586 = vadd.f32 %v5417, %v5585
    %v5587 = vpop.f32.mrf.mxu0
    %v5588 = vadd.f32 %v5419, %v5587
    %5589 = vmatmul.bf16.gmra.mxu0 %v3235
    %v5590 = vpop.f32.mrf.mxu0
    %v5591 = vadd.f32 %v5422, %v5590
    %v5592 = vpop.f32.mrf.mxu0
    %v5593 = vadd.f32 %v5424, %v5592
    %5594 = vmatmul.bf16.gmra.mxu0 %v3236
    %v5595 = vpop.f32.mrf.mxu0
    %v5596 = vadd.f32 %v5427, %v5595
    %v5597 = vpop.f32.mrf.mxu0
    %v5598 = vadd.f32 %v5429, %v5597
    %5599 = vmatmul.bf16.gmra.mxu0 %v3237
    %v5600 = vpop.f32.mrf.mxu0
    %v5601 = vadd.f32 %v5432, %v5600
    %v5602 = vpop.f32.mrf.mxu0
    %v5603 = vadd.f32 %v5434, %v5602
    %5604 = vmatmul.bf16.gmra.mxu0 %v3238
    %v5605 = vpop.f32.mrf.mxu0
    %v5606 = vadd.f32 %v5437, %v5605
    %v5607 = vpop.f32.mrf.mxu0
    %v5608 = vadd.f32 %v5439, %v5607
    %5609 = vmatmul.bf16.gmra.mxu0 %v3239
    %v5610 = vpop.f32.mrf.mxu0
    %v5611 = vadd.f32 %v5442, %v5610
    %v5612 = vpop.f32.mrf.mxu0
    %v5613 = vadd.f32 %v5444, %v5612
    %5614 = vmatmul.bf16.gmra.mxu0 %v3240
    %v5615 = vpop.f32.mrf.mxu0
    %v5616 = vadd.f32 %v5447, %v5615
    %v5617 = vpop.f32.mrf.mxu0
    %v5618 = vadd.f32 %v5449, %v5617
    %5619 = vmatmul.bf16.gmra.mxu0 %v3241
    %v5620 = vpop.f32.mrf.mxu0
    %v5621 = vadd.f32 %v5452, %v5620
    %v5622 = vpop.f32.mrf.mxu0
    %v5623 = vadd.f32 %v5454, %v5622
    %5624 = vmatmul.bf16.gmra.mxu0 %v3242
    %v5625 = vpop.f32.mrf.mxu0
    %v5626 = vadd.f32 %v5457, %v5625
    %v5627 = vpop.f32.mrf.mxu0
    %v5628 = vadd.f32 %v5459, %v5627
    %5629 = vmatmul.bf16.gmra.mxu0 %v3243
    %v5630 = vpop.f32.mrf.mxu0
    %v5631 = vadd.f32 %v5462, %v5630
    %v5632 = vpop.f32.mrf.mxu0
    %v5633 = vadd.f32 %v5464, %v5632
    %5634 = vmatmul.bf16.gmra.mxu0 %v3244
    %v5635 = vpop.f32.mrf.mxu0
    %v5636 = vadd.f32 %v5467, %v5635
    %v5637 = vpop.f32.mrf.mxu0
    %v5638 = vadd.f32 %v5469, %v5637
    %5639 = vmatmul.bf16.gmra.mxu0 %v3245
    %v5640 = vpop.f32.mrf.mxu0
    %v5641 = vadd.f32 %v5472, %v5640
    %v5642 = vpop.f32.mrf.mxu0
    %v5643 = vadd.f32 %v5474, %v5642
    %5644 = vmatmul.bf16.gmra.mxu0 %v3246
    %v5645 = vpop.f32.mrf.mxu0
    %v5646 = vadd.f32 %v5477, %v5645
    %v5647 = vpop.f32.mrf.mxu0
    %v5648 = vadd.f32 %v5479, %v5647
    %5649 = vmatmul.bf16.gmra.mxu0 %v3247
    %v5650 = vpop.f32.mrf.mxu0
    %v5651 = vadd.f32 %v5482, %v5650
    %v5652 = vpop.f32.mrf.mxu0
    %v5653 = vadd.f32 %v5484, %v5652
    %5654 = vmatmul.bf16.gmra.mxu0 %v3248
    %v5655 = vpop.f32.mrf.mxu0
    %v5656 = vadd.f32 %v5487, %v5655
    %v5657 = vpop.f32.mrf.mxu0
    %v5658 = vadd.f32 %v5489, %v5657
    %5659 = vmatmul.bf16.gmra.mxu0 %v3249
    %v5660 = vpop.f32.mrf.mxu0
    %v5661 = vadd.f32 %v5492, %v5660
    %v5662 = vpop.f32.mrf.mxu0
    %v5663 = vadd.f32 %v5494, %v5662
    %5664 = vdwg.mxu0
    %5665 = vmatpush.bf16.msra.mxu0 %v4401
    %5666 = vmatpush.bf16.msra.mxu0 %v4400
    %5667 = vmatpush.bf16.msra.mxu0 %v4399
    %5668 = vmatpush.bf16.msra.mxu0 %v4398
    %5669 = vmatpush.bf16.msra.mxu0 %v4397
    %5670 = vmatpush.bf16.msra.mxu0 %v4396
    %5671 = vmatpush.bf16.msra.mxu0 %v4395
    %5672 = vmatpush.bf16.msra.mxu0 %v4394
    %5673 = vmatmul.bf16.gmra.mxu0 %v3458
    %v5674 = vpop.f32.mrf.mxu0
    %v5675 = vadd.f32 %v5506, %v5674
    %v5676 = vpop.f32.mrf.mxu0
    %v5677 = vadd.f32 %v5508, %v5676
    %5678 = vmatmul.bf16.gmra.mxu0 %v3459
    %v5679 = vpop.f32.mrf.mxu0
    %v5680 = vadd.f32 %v5511, %v5679
    %v5681 = vpop.f32.mrf.mxu0
    %v5682 = vadd.f32 %v5513, %v5681
    %5683 = vmatmul.bf16.gmra.mxu0 %v3460
    %v5684 = vpop.f32.mrf.mxu0
    %v5685 = vadd.f32 %v5516, %v5684
    %v5686 = vpop.f32.mrf.mxu0
    %v5687 = vadd.f32 %v5518, %v5686
    %5688 = vmatmul.bf16.gmra.mxu0 %v3461
    %v5689 = vpop.f32.mrf.mxu0
    %v5690 = vadd.f32 %v5521, %v5689
    %v5691 = vpop.f32.mrf.mxu0
    %v5692 = vadd.f32 %v5523, %v5691
    %5693 = vmatmul.bf16.gmra.mxu0 %v3462
    %v5694 = vpop.f32.mrf.mxu0
    %v5695 = vadd.f32 %v5526, %v5694
    %v5696 = vpop.f32.mrf.mxu0
    %v5697 = vadd.f32 %v5528, %v5696
    %5698 = vmatmul.bf16.gmra.mxu0 %v3463
    %v5699 = vpop.f32.mrf.mxu0
    %v5700 = vadd.f32 %v5531, %v5699
    %v5701 = vpop.f32.mrf.mxu0
    %v5702 = vadd.f32 %v5533, %v5701
    %5703 = vmatmul.bf16.gmra.mxu0 %v3464
    %v5704 = vpop.f32.mrf.mxu0
    %v5705 = vadd.f32 %v5536, %v5704
    %v5706 = vpop.f32.mrf.mxu0
    %v5707 = vadd.f32 %v5538, %v5706
    %5708 = vmatmul.bf16.gmra.mxu0 %v3465
    %v5709 = vpop.f32.mrf.mxu0
    %v5710 = vadd.f32 %v5541, %v5709
    %v5711 = vpop.f32.mrf.mxu0
    %v5712 = vadd.f32 %v5543, %v5711
    %5713 = vmatmul.bf16.gmra.mxu0 %v3466
    %v5714 = vpop.f32.mrf.mxu0
    %v5715 = vadd.f32 %v5546, %v5714
    %v5716 = vpop.f32.mrf.mxu0
    %v5717 = vadd.f32 %v5548, %v5716
    %5718 = vmatmul.bf16.gmra.mxu0 %v3467
    %v5719 = vpop.f32.mrf.mxu0
    %v5720 = vadd.f32 %v5551, %v5719
    %v5721 = vpop.f32.mrf.mxu0
    %v5722 = vadd.f32 %v5553, %v5721
    %5723 = vmatmul.bf16.gmra.mxu0 %v3468
    %v5724 = vpop.f32.mrf.mxu0
    %v5725 = vadd.f32 %v5556, %v5724
    %v5726 = vpop.f32.mrf.mxu0
    %v5727 = vadd.f32 %v5558, %v5726
    %5728 = vmatmul.bf16.gmra.mxu0 %v3469
    %v5729 = vpop.f32.mrf.mxu0
    %v5730 = vadd.f32 %v5561, %v5729
    %v5731 = vpop.f32.mrf.mxu0
    %v5732 = vadd.f32 %v5563, %v5731
    %5733 = vmatmul.bf16.gmra.mxu0 %v3470
    %v5734 = vpop.f32.mrf.mxu0
    %v5735 = vadd.f32 %v5566, %v5734
    %v5736 = vpop.f32.mrf.mxu0
    %v5737 = vadd.f32 %v5568, %v5736
    %5738 = vmatmul.bf16.gmra.mxu0 %v3471
    %v5739 = vpop.f32.mrf.mxu0
    %v5740 = vadd.f32 %v5571, %v5739
    %v5741 = vpop.f32.mrf.mxu0
    %v5742 = vadd.f32 %v5573, %v5741
    %5743 = vmatmul.bf16.gmra.mxu0 %v3472
    %v5744 = vpop.f32.mrf.mxu0
    %v5745 = vadd.f32 %v5576, %v5744
    %v5746 = vpop.f32.mrf.mxu0
    %v5747 = vadd.f32 %v5578, %v5746
    %5748 = vmatmul.bf16.gmra.mxu0 %v3473
    %v5749 = vpop.f32.mrf.mxu0
    %v5750 = vadd.f32 %v5581, %v5749
    %v5751 = vpop.f32.mrf.mxu0
    %v5752 = vadd.f32 %v5583, %v5751
    %5753 = vmatmul.bf16.gmra.mxu0 %v3554
    %v5754 = vpop.f32.mrf.mxu0
    %v5755 = vadd.f32 %v5586, %v5754
    %v5756 = vpop.f32.mrf.mxu0
    %v5757 = vadd.f32 %v5588, %v5756
    %5758 = vmatmul.bf16.gmra.mxu0 %v3555
    %v5759 = vpop.f32.mrf.mxu0
    %v5760 = vadd.f32 %v5591, %v5759
    %v5761 = vpop.f32.mrf.mxu0
    %v5762 = vadd.f32 %v5593, %v5761
    %5763 = vmatmul.bf16.gmra.mxu0 %v3556
    %v5764 = vpop.f32.mrf.mxu0
    %v5765 = vadd.f32 %v5596, %v5764
    %v5766 = vpop.f32.mrf.mxu0
    %v5767 = vadd.f32 %v5598, %v5766
    %5768 = vmatmul.bf16.gmra.mxu0 %v3557
    %v5769 = vpop.f32.mrf.mxu0
    %v5770 = vadd.f32 %v5601, %v5769
    %v5771 = vpop.f32.mrf.mxu0
    %v5772 = vadd.f32 %v5603, %v5771
    %5773 = vmatmul.bf16.gmra.mxu0 %v3558
    %v5774 = vpop.f32.mrf.mxu0
    %v5775 = vadd.f32 %v5606, %v5774
    %v5776 = vpop.f32.mrf.mxu0
    %v5777 = vadd.f32 %v5608, %v5776
    %5778 = vmatmul.bf16.gmra.mxu0 %v3559
    %v5779 = vpop.f32.mrf.mxu0
    %v5780 = vadd.f32 %v5611, %v5779
    %v5781 = vpop.f32.mrf.mxu0
    %v5782 = vadd.f32 %v5613, %v5781
    %5783 = vmatmul.bf16.gmra.mxu0 %v3560
    %v5784 = vpop.f32.mrf.mxu0
    %v5785 = vadd.f32 %v5616, %v5784
    %v5786 = vpop.f32.mrf.mxu0
    %v5787 = vadd.f32 %v5618, %v5786
    %5788 = vmatmul.bf16.gmra.mxu0 %v3561
    %v5789 = vpop.f32.mrf.mxu0
    %v5790 = vadd.f32 %v5621, %v5789
    %v5791 = vpop.f32.mrf.mxu0
    %v5792 = vadd.f32 %v5623, %v5791
    %5793 = vmatmul.bf16.gmra.mxu0 %v3562
    %v5794 = vpop.f32.mrf.mxu0
    %v5795 = vadd.f32 %v5626, %v5794
    %v5796 = vpop.f32.mrf.mxu0
    %v5797 = vadd.f32 %v5628, %v5796
    %5798 = vmatmul.bf16.gmra.mxu0 %v3563
    %v5799 = vpop.f32.mrf.mxu0
    %v5800 = vadd.f32 %v5631, %v5799
    %v5801 = vpop.f32.mrf.mxu0
    %v5802 = vadd.f32 %v5633, %v5801
    %5803 = vmatmul.bf16.gmra.mxu0 %v3564
    %v5804 = vpop.f32.mrf.mxu0
    %v5805 = vadd.f32 %v5636, %v5804
    %v5806 = vpop.f32.mrf.mxu0
    %v5807 = vadd.f32 %v5638, %v5806
    %5808 = vmatmul.bf16.gmra.mxu0 %v3565
    %v5809 = vpop.f32.mrf.mxu0
    %v5810 = vadd.f32 %v5641, %v5809
    %v5811 = vpop.f32.mrf.mxu0
    %v5812 = vadd.f32 %v5643, %v5811
    %5813 = vmatmul.bf16.gmra.mxu0 %v3566
    %v5814 = vpop.f32.mrf.mxu0
    %v5815 = vadd.f32 %v5646, %v5814
    %v5816 = vpop.f32.mrf.mxu0
    %v5817 = vadd.f32 %v5648, %v5816
    %5818 = vmatmul.bf16.gmra.mxu0 %v3567
    %v5819 = vpop.f32.mrf.mxu0
    %v5820 = vadd.f32 %v5651, %v5819
    %v5821 = vpop.f32.mrf.mxu0
    %v5822 = vadd.f32 %v5653, %v5821
    %5823 = vmatmul.bf16.gmra.mxu0 %v3568
    %v5824 = vpop.f32.mrf.mxu0
    %v5825 = vadd.f32 %v5656, %v5824
    %v5826 = vpop.f32.mrf.mxu0
    %v5827 = vadd.f32 %v5658, %v5826
    %5828 = vmatmul.bf16.gmra.mxu0 %v3569
    %v5829 = vpop.f32.mrf.mxu0
    %v5830 = vadd.f32 %v5661, %v5829
    %v5831 = vpop.f32.mrf.mxu0
    %v5832 = vadd.f32 %v5663, %v5831
    %5833 = vdwg.mxu0
    %5834 = vmatpush.bf16.msra.mxu0 %v4409
    %5835 = vmatpush.bf16.msra.mxu0 %v4408
    %5836 = vmatpush.bf16.msra.mxu0 %v4407
    %5837 = vmatpush.bf16.msra.mxu0 %v4406
    %5838 = vmatpush.bf16.msra.mxu0 %v4405
    %5839 = vmatpush.bf16.msra.mxu0 %v4404
    %5840 = vmatpush.bf16.msra.mxu0 %v4403
    %5841 = vmatpush.bf16.msra.mxu0 %v4402
    %5842 = vmatmul.bf16.gmra.mxu0 %v3778
    %v5843 = vpop.f32.mrf.mxu0
    %v5844 = vadd.f32 %v5675, %v5843
    %v5845 = vpop.f32.mrf.mxu0
    %v5846 = vadd.f32 %v5677, %v5845
    %5847 = vmatmul.bf16.gmra.mxu0 %v3779
    %v5848 = vpop.f32.mrf.mxu0
    %v5849 = vadd.f32 %v5680, %v5848
    %v5850 = vpop.f32.mrf.mxu0
    %v5851 = vadd.f32 %v5682, %v5850
    %5852 = vmatmul.bf16.gmra.mxu0 %v3780
    %v5853 = vpop.f32.mrf.mxu0
    %v5854 = vadd.f32 %v5685, %v5853
    %v5855 = vpop.f32.mrf.mxu0
    %v5856 = vadd.f32 %v5687, %v5855
    %5857 = vmatmul.bf16.gmra.mxu0 %v3781
    %v5858 = vpop.f32.mrf.mxu0
    %v5859 = vadd.f32 %v5690, %v5858
    %v5860 = vpop.f32.mrf.mxu0
    %v5861 = vadd.f32 %v5692, %v5860
    %5862 = vmatmul.bf16.gmra.mxu0 %v3782
    %v5863 = vpop.f32.mrf.mxu0
    %v5864 = vadd.f32 %v5695, %v5863
    %v5865 = vpop.f32.mrf.mxu0
    %v5866 = vadd.f32 %v5697, %v5865
    %5867 = vmatmul.bf16.gmra.mxu0 %v3783
    %v5868 = vpop.f32.mrf.mxu0
    %v5869 = vadd.f32 %v5700, %v5868
    %v5870 = vpop.f32.mrf.mxu0
    %v5871 = vadd.f32 %v5702, %v5870
    %5872 = vmatmul.bf16.gmra.mxu0 %v3784
    %v5873 = vpop.f32.mrf.mxu0
    %v5874 = vadd.f32 %v5705, %v5873
    %v5875 = vpop.f32.mrf.mxu0
    %v5876 = vadd.f32 %v5707, %v5875
    %5877 = vmatmul.bf16.gmra.mxu0 %v3785
    %v5878 = vpop.f32.mrf.mxu0
    %v5879 = vadd.f32 %v5710, %v5878
    %v5880 = vpop.f32.mrf.mxu0
    %v5881 = vadd.f32 %v5712, %v5880
    %5882 = vmatmul.bf16.gmra.mxu0 %v3786
    %v5883 = vpop.f32.mrf.mxu0
    %v5884 = vadd.f32 %v5715, %v5883
    %v5885 = vpop.f32.mrf.mxu0
    %v5886 = vadd.f32 %v5717, %v5885
    %5887 = vmatmul.bf16.gmra.mxu0 %v3787
    %v5888 = vpop.f32.mrf.mxu0
    %v5889 = vadd.f32 %v5720, %v5888
    %v5890 = vpop.f32.mrf.mxu0
    %v5891 = vadd.f32 %v5722, %v5890
    %5892 = vmatmul.bf16.gmra.mxu0 %v3788
    %v5893 = vpop.f32.mrf.mxu0
    %v5894 = vadd.f32 %v5725, %v5893
    %v5895 = vpop.f32.mrf.mxu0
    %v5896 = vadd.f32 %v5727, %v5895
    %5897 = vmatmul.bf16.gmra.mxu0 %v3789
    %v5898 = vpop.f32.mrf.mxu0
    %v5899 = vadd.f32 %v5730, %v5898
    %v5900 = vpop.f32.mrf.mxu0
    %v5901 = vadd.f32 %v5732, %v5900
    %5902 = vmatmul.bf16.gmra.mxu0 %v3790
    %v5903 = vpop.f32.mrf.mxu0
    %v5904 = vadd.f32 %v5735, %v5903
    %v5905 = vpop.f32.mrf.mxu0
    %v5906 = vadd.f32 %v5737, %v5905
    %5907 = vmatmul.bf16.gmra.mxu0 %v3791
    %v5908 = vpop.f32.mrf.mxu0
    %v5909 = vadd.f32 %v5740, %v5908
    %v5910 = vpop.f32.mrf.mxu0
    %v5911 = vadd.f32 %v5742, %v5910
    %5912 = vmatmul.bf16.gmra.mxu0 %v3792
    %v5913 = vpop.f32.mrf.mxu0
    %v5914 = vadd.f32 %v5745, %v5913
    %v5915 = vpop.f32.mrf.mxu0
    %v5916 = vadd.f32 %v5747, %v5915
    %5917 = vmatmul.bf16.gmra.mxu0 %v3793
    %v5918 = vpop.f32.mrf.mxu0
    %v5919 = vadd.f32 %v5750, %v5918
    %v5920 = vpop.f32.mrf.mxu0
    %v5921 = vadd.f32 %v5752, %v5920
    %5922 = vmatmul.bf16.gmra.mxu0 %v3874
    %v5923 = vpop.f32.mrf.mxu0
    %v5924 = vadd.f32 %v5755, %v5923
    %v5925 = vpop.f32.mrf.mxu0
    %v5926 = vadd.f32 %v5757, %v5925
    %5927 = vmatmul.bf16.gmra.mxu0 %v3875
    %v5928 = vpop.f32.mrf.mxu0
    %v5929 = vadd.f32 %v5760, %v5928
    %v5930 = vpop.f32.mrf.mxu0
    %v5931 = vadd.f32 %v5762, %v5930
    %5932 = vmatmul.bf16.gmra.mxu0 %v3876
    %v5933 = vpop.f32.mrf.mxu0
    %v5934 = vadd.f32 %v5765, %v5933
    %v5935 = vpop.f32.mrf.mxu0
    %v5936 = vadd.f32 %v5767, %v5935
    %5937 = vmatmul.bf16.gmra.mxu0 %v3877
    %v5938 = vpop.f32.mrf.mxu0
    %v5939 = vadd.f32 %v5770, %v5938
    %v5940 = vpop.f32.mrf.mxu0
    %v5941 = vadd.f32 %v5772, %v5940
    %5942 = vmatmul.bf16.gmra.mxu0 %v3878
    %v5943 = vpop.f32.mrf.mxu0
    %v5944 = vadd.f32 %v5775, %v5943
    %v5945 = vpop.f32.mrf.mxu0
    %v5946 = vadd.f32 %v5777, %v5945
    %5947 = vmatmul.bf16.gmra.mxu0 %v3879
    %v5948 = vpop.f32.mrf.mxu0
    %v5949 = vadd.f32 %v5780, %v5948
    %v5950 = vpop.f32.mrf.mxu0
    %v5951 = vadd.f32 %v5782, %v5950
    %5952 = vmatmul.bf16.gmra.mxu0 %v3880
    %v5953 = vpop.f32.mrf.mxu0
    %v5954 = vadd.f32 %v5785, %v5953
    %v5955 = vpop.f32.mrf.mxu0
    %v5956 = vadd.f32 %v5787, %v5955
    %5957 = vmatmul.bf16.gmra.mxu0 %v3881
    %v5958 = vpop.f32.mrf.mxu0
    %v5959 = vadd.f32 %v5790, %v5958
    %v5960 = vpop.f32.mrf.mxu0
    %v5961 = vadd.f32 %v5792, %v5960
    %5962 = vmatmul.bf16.gmra.mxu0 %v3882
    %v5963 = vpop.f32.mrf.mxu0
    %v5964 = vadd.f32 %v5795, %v5963
    %v5965 = vpop.f32.mrf.mxu0
    %v5966 = vadd.f32 %v5797, %v5965
    %5967 = vmatmul.bf16.gmra.mxu0 %v3883
    %v5968 = vpop.f32.mrf.mxu0
    %v5969 = vadd.f32 %v5800, %v5968
    %v5970 = vpop.f32.mrf.mxu0
    %v5971 = vadd.f32 %v5802, %v5970
    %5972 = vmatmul.bf16.gmra.mxu0 %v3884
    %v5973 = vpop.f32.mrf.mxu0
    %v5974 = vadd.f32 %v5805, %v5973
    %v5975 = vpop.f32.mrf.mxu0
    %v5976 = vadd.f32 %v5807, %v5975
    %5977 = vmatmul.bf16.gmra.mxu0 %v3885
    %v5978 = vpop.f32.mrf.mxu0
    %v5979 = vadd.f32 %v5810, %v5978
    %v5980 = vpop.f32.mrf.mxu0
    %v5981 = vadd.f32 %v5812, %v5980
    %5982 = vmatmul.bf16.gmra.mxu0 %v3886
    %v5983 = vpop.f32.mrf.mxu0
    %v5984 = vadd.f32 %v5815, %v5983
    %v5985 = vpop.f32.mrf.mxu0
    %v5986 = vadd.f32 %v5817, %v5985
    %5987 = vmatmul.bf16.gmra.mxu0 %v3887
    %v5988 = vpop.f32.mrf.mxu0
    %v5989 = vadd.f32 %v5820, %v5988
    %v5990 = vpop.f32.mrf.mxu0
    %v5991 = vadd.f32 %v5822, %v5990
    %5992 = vmatmul.bf16.gmra.mxu0 %v3888
    %v5993 = vpop.f32.mrf.mxu0
    %v5994 = vadd.f32 %v5825, %v5993
    %v5995 = vpop.f32.mrf.mxu0
    %v5996 = vadd.f32 %v5827, %v5995
    %5997 = vmatmul.bf16.gmra.mxu0 %v3889
    %v5998 = vpop.f32.mrf.mxu0
    %v5999 = vadd.f32 %v5830, %v5998
    %v6000 = vpop.f32.mrf.mxu0
    %v6001 = vadd.f32 %v5832, %v6000
    %6002 = vdwg.mxu0
    %v6003 = vld [vmem:[%s5] sm:$0x1]
    %v6004 = vld [vmem:[%s6] sm:$0x1]
    %v6005 = vadd.f32 %v5844, %v5846
    %v6006 = vadd.f32 %v6005, %v5849
    %v6007 = vadd.f32 %v6006, %v5851
    %v6008 = vadd.f32 %v6007, %v5854
    %v6009 = vadd.f32 %v6008, %v5856
    %v6010 = vadd.f32 %v6009, %v5859
    %v6011 = vadd.f32 %v6010, %v5861
    %v6012 = vadd.f32 %v6011, %v5864
    %v6013 = vadd.f32 %v6012, %v5866
    %v6014 = vadd.f32 %v6013, %v5869
    %v6015 = vadd.f32 %v6014, %v5871
    %v6016 = vadd.f32 %v6015, %v5874
    %v6017 = vadd.f32 %v6016, %v5876
    %v6018 = vadd.f32 %v6017, %v5879
    %v6019 = vadd.f32 %v6018, %v5881
    %v6020 = vadd.f32 %v6019, %v5884
    %v6021 = vadd.f32 %v6020, %v5886
    %v6022 = vadd.f32 %v6021, %v5889
    %v6023 = vadd.f32 %v6022, %v5891
    %v6024 = vadd.f32 %v6023, %v5894
    %v6025 = vadd.f32 %v6024, %v5896
    %v6026 = vadd.f32 %v6025, %v5899
    %v6027 = vadd.f32 %v6026, %v5901
    %v6028 = vadd.f32 %v6027, %v5904
    %v6029 = vadd.f32 %v6028, %v5906
    %v6030 = vadd.f32 %v6029, %v5909
    %v6031 = vadd.f32 %v6030, %v5911
    %v6032 = vadd.f32 %v6031, %v5914
    %v6033 = vadd.f32 %v6032, %v5916
    %v6034 = vadd.f32 %v6033, %v5919
    %v6035 = vadd.f32 %v6034, %v5921
    %v6036 = vadd.f32 %v6035, %v5924
    %v6037 = vadd.f32 %v6036, %v5926
    %v6038 = vadd.f32 %v6037, %v5929
    %v6039 = vadd.f32 %v6038, %v5931
    %v6040 = vadd.f32 %v6039, %v5934
    %v6041 = vadd.f32 %v6040, %v5936
    %v6042 = vadd.f32 %v6041, %v5939
    %v6043 = vadd.f32 %v6042, %v5941
    %v6044 = vadd.f32 %v6043, %v5944
    %v6045 = vadd.f32 %v6044, %v5946
    %v6046 = vadd.f32 %v6045, %v5949
    %v6047 = vadd.f32 %v6046, %v5951
    %v6048 = vadd.f32 %v6047, %v5954
    %v6049 = vadd.f32 %v6048, %v5956
    %v6050 = vadd.f32 %v6049, %v5959
    %v6051 = vadd.f32 %v6050, %v5961
    %v6052 = vadd.f32 %v6051, %v5964
    %v6053 = vadd.f32 %v6052, %v5966
    %v6054 = vadd.f32 %v6053, %v5969
    %v6055 = vadd.f32 %v6054, %v5971
    %v6056 = vadd.f32 %v6055, %v5974
    %v6057 = vadd.f32 %v6056, %v5976
    %v6058 = vadd.f32 %v6057, %v5979
    %v6059 = vadd.f32 %v6058, %v5981
    %v6060 = vadd.f32 %v6059, %v5984
    %v6061 = vadd.f32 %v6060, %v5986
    %v6062 = vadd.f32 %v6061, %v5989
    %v6063 = vadd.f32 %v6062, %v5991
    %v6064 = vadd.f32 %v6063, %v5994
    %v6065 = vadd.f32 %v6064, %v5996
    %v6066 = vadd.f32 %v6065, %v5999
    %v6067 = vadd.f32 %v6066, %v6001
    %v6068 = vrot.slane %v6067, 4
    %v6069 = vadd.f32 %v6067, %v6068
    %v6070 = vrot.slane %v6069, 2
    %v6071 = vadd.f32 %v6069, %v6070
    %v6072 = vrot.slane %v6071, 1
    %v6073 = vadd.f32 %v6071, %v6072
    %v6074 = vmul.f32 %v5844, %v5844
    %v6075 = vmul.f32 %v5846, %v5846
    %v6076 = vmul.f32 %v5849, %v5849
    %v6077 = vmul.f32 %v5851, %v5851
    %v6078 = vmul.f32 %v5854, %v5854
    %v6079 = vmul.f32 %v5856, %v5856
    %v6080 = vmul.f32 %v5859, %v5859
    %v6081 = vmul.f32 %v5861, %v5861
    %v6082 = vmul.f32 %v5864, %v5864
    %v6083 = vmul.f32 %v5866, %v5866
    %v6084 = vmul.f32 %v5869, %v5869
    %v6085 = vmul.f32 %v5871, %v5871
    %v6086 = vmul.f32 %v5874, %v5874
    %v6087 = vmul.f32 %v5876, %v5876
    %v6088 = vmul.f32 %v5879, %v5879
    %v6089 = vmul.f32 %v5881, %v5881
    %v6090 = vmul.f32 %v5884, %v5884
    %v6091 = vmul.f32 %v5886, %v5886
    %v6092 = vmul.f32 %v5889, %v5889
    %v6093 = vmul.f32 %v5891, %v5891
    %v6094 = vmul.f32 %v5894, %v5894
    %v6095 = vmul.f32 %v5896, %v5896
    %v6096 = vmul.f32 %v5899, %v5899
    %v6097 = vmul.f32 %v5901, %v5901
    %v6098 = vmul.f32 %v5904, %v5904
    %v6099 = vmul.f32 %v5906, %v5906
    %v6100 = vmul.f32 %v5909, %v5909
    %v6101 = vmul.f32 %v5911, %v5911
    %v6102 = vmul.f32 %v5914, %v5914
    %v6103 = vmul.f32 %v5916, %v5916
    %v6104 = vmul.f32 %v5919, %v5919
    %v6105 = vmul.f32 %v5921, %v5921
    %v6106 = vmul.f32 %v5924, %v5924
    %v6107 = vmul.f32 %v5926, %v5926
    %v6108 = vmul.f32 %v5929, %v5929
    %v6109 = vmul.f32 %v5931, %v5931
    %v6110 = vmul.f32 %v5934, %v5934
    %v6111 = vmul.f32 %v5936, %v5936
    %v6112 = vmul.f32 %v5939, %v5939
    %v6113 = vmul.f32 %v5941, %v5941
    %v6114 = vmul.f32 %v5944, %v5944
    %v6115 = vmul.f32 %v5946, %v5946
    %v6116 = vmul.f32 %v5949, %v5949
    %v6117 = vmul.f32 %v5951, %v5951
    %v6118 = vmul.f32 %v5954, %v5954
    %v6119 = vmul.f32 %v5956, %v5956
    %v6120 = vmul.f32 %v5959, %v5959
    %v6121 = vmul.f32 %v5961, %v5961
    %v6122 = vmul.f32 %v5964, %v5964
    %v6123 = vmul.f32 %v5966, %v5966
    %v6124 = vmul.f32 %v5969, %v5969
    %v6125 = vmul.f32 %v5971, %v5971
    %v6126 = vmul.f32 %v5974, %v5974
    %v6127 = vmul.f32 %v5976, %v5976
    %v6128 = vmul.f32 %v5979, %v5979
    %v6129 = vmul.f32 %v5981, %v5981
    %v6130 = vmul.f32 %v5984, %v5984
    %v6131 = vmul.f32 %v5986, %v5986
    %v6132 = vmul.f32 %v5989, %v5989
    %v6133 = vmul.f32 %v5991, %v5991
    %v6134 = vmul.f32 %v5994, %v5994
    %v6135 = vmul.f32 %v5996, %v5996
    %v6136 = vmul.f32 %v5999, %v5999
    %v6137 = vmul.f32 %v6001, %v6001
    %v6138 = vadd.f32 %v6074, %v6075
    %v6139 = vadd.f32 %v6138, %v6076
    %v6140 = vadd.f32 %v6139, %v6077
    %v6141 = vadd.f32 %v6140, %v6078
    %v6142 = vadd.f32 %v6141, %v6079
    %v6143 = vadd.f32 %v6142, %v6080
    %v6144 = vadd.f32 %v6143, %v6081
    %v6145 = vadd.f32 %v6144, %v6082
    %v6146 = vadd.f32 %v6145, %v6083
    %v6147 = vadd.f32 %v6146, %v6084
    %v6148 = vadd.f32 %v6147, %v6085
    %v6149 = vadd.f32 %v6148, %v6086
    %v6150 = vadd.f32 %v6149, %v6087
    %v6151 = vadd.f32 %v6150, %v6088
    %v6152 = vadd.f32 %v6151, %v6089
    %v6153 = vadd.f32 %v6152, %v6090
    %v6154 = vadd.f32 %v6153, %v6091
    %v6155 = vadd.f32 %v6154, %v6092
    %v6156 = vadd.f32 %v6155, %v6093
    %v6157 = vadd.f32 %v6156, %v6094
    %v6158 = vadd.f32 %v6157, %v6095
    %v6159 = vadd.f32 %v6158, %v6096
    %v6160 = vadd.f32 %v6159, %v6097
    %v6161 = vadd.f32 %v6160, %v6098
    %v6162 = vadd.f32 %v6161, %v6099
    %v6163 = vadd.f32 %v6162, %v6100
    %v6164 = vadd.f32 %v6163, %v6101
    %v6165 = vadd.f32 %v6164, %v6102
    %v6166 = vadd.f32 %v6165, %v6103
    %v6167 = vadd.f32 %v6166, %v6104
    %v6168 = vadd.f32 %v6167, %v6105
    %v6169 = vadd.f32 %v6168, %v6106
    %v6170 = vadd.f32 %v6169, %v6107
    %v6171 = vadd.f32 %v6170, %v6108
    %v6172 = vadd.f32 %v6171, %v6109
    %v6173 = vadd.f32 %v6172, %v6110
    %v6174 = vadd.f32 %v6173, %v6111
    %v6175 = vadd.f32 %v6174, %v6112
    %v6176 = vadd.f32 %v6175, %v6113
    %v6177 = vadd.f32 %v6176, %v6114
    %v6178 = vadd.f32 %v6177, %v6115
    %v6179 = vadd.f32 %v6178, %v6116
    %v6180 = vadd.f32 %v6179, %v6117
    %v6181 = vadd.f32 %v6180, %v6118
    %v6182 = vadd.f32 %v6181, %v6119
    %v6183 = vadd.f32 %v6182, %v6120
    %v6184 = vadd.f32 %v6183, %v6121
    %v6185 = vadd.f32 %v6184, %v6122
    %v6186 = vadd.f32 %v6185, %v6123
    %v6187 = vadd.f32 %v6186, %v6124
    %v6188 = vadd.f32 %v6187, %v6125
    %v6189 = vadd.f32 %v6188, %v6126
    %v6190 = vadd.f32 %v6189, %v6127
    %v6191 = vadd.f32 %v6190, %v6128
    %v6192 = vadd.f32 %v6191, %v6129
    %v6193 = vadd.f32 %v6192, %v6130
    %v6194 = vadd.f32 %v6193, %v6131
    %v6195 = vadd.f32 %v6194, %v6132
    %v6196 = vadd.f32 %v6195, %v6133
    %v6197 = vadd.f32 %v6196, %v6134
    %v6198 = vadd.f32 %v6197, %v6135
    %v6199 = vadd.f32 %v6198, %v6136
    %v6200 = vadd.f32 %v6199, %v6137
    %v6201 = vrot.slane %v6200, 4
    %v6202 = vadd.f32 %v6200, %v6201
    %v6203 = vrot.slane %v6202, 2
    %v6204 = vadd.f32 %v6202, %v6203
    %v6205 = vrot.slane %v6204, 1
    %v6206 = vadd.f32 %v6204, %v6205
    %v6207 = vmul.f32 %v6073, 0.001953125
    %v6208 = vmul.f32 %v6206, 0.001953125
    %v6209 = vmul.f32 %v6207, %v6207
    %v6210 = vsub.f32 %v6208, %v6209
    %v6211 = vmax.f32 %v6210, 0.0
    %v6212 = vadd.f32 %v6211, 1e-05
    %v6213 = vrsqrt.pop %v6212
    %v6214 = vmul.f32 %v6213, %v6212
    %v6215 = vmul.f32 %v6214, %v6213
    %v6216 = vmul.f32 0.5, %v6215
    %v6217 = vsub.f32 1.5, %v6216
    %v6218 = vmul.f32 %v6213, %v6217
    %vm6219 = vweird.f32 %v6212
    %vm6220 = vweird.f32 %v6213
    %vm6221 = vmor %vm6219, %vm6220
    %v6222 = vsel %vm6221, %v6213, %v6218
    %v6223 = vmul.f32 %v6003, %v6222
    %v6224 = vmul.f32 %v6207, %v6223
    %v6225 = vsub.f32 %v6004, %v6224
    %v6227 = vperm.slane %v6223, 0
    %v6229 = vmul.f32 %v5844, %v6227
    %v6230 = vmul.f32 %v5846, %v6227
    %v6231 = vmul.f32 %v5849, %v6227
    %v6232 = vmul.f32 %v5851, %v6227
    %v6233 = vmul.f32 %v5854, %v6227
    %v6234 = vmul.f32 %v5856, %v6227
    %v6235 = vmul.f32 %v5859, %v6227
    %v6236 = vmul.f32 %v5861, %v6227
    %v6237 = vmul.f32 %v5864, %v6227
    %v6238 = vmul.f32 %v5866, %v6227
    %v6239 = vmul.f32 %v5869, %v6227
    %v6240 = vmul.f32 %v5871, %v6227
    %v6241 = vmul.f32 %v5874, %v6227
    %v6242 = vmul.f32 %v5876, %v6227
    %v6243 = vmul.f32 %v5879, %v6227
    %v6244 = vmul.f32 %v5881, %v6227
    %v6245 = vmul.f32 %v5884, %v6227
    %v6246 = vmul.f32 %v5886, %v6227
    %v6247 = vmul.f32 %v5889, %v6227
    %v6248 = vmul.f32 %v5891, %v6227
    %v6249 = vmul.f32 %v5894, %v6227
    %v6250 = vmul.f32 %v5896, %v6227
    %v6251 = vmul.f32 %v5899, %v6227
    %v6252 = vmul.f32 %v5901, %v6227
    %v6253 = vmul.f32 %v5904, %v6227
    %v6254 = vmul.f32 %v5906, %v6227
    %v6255 = vmul.f32 %v5909, %v6227
    %v6256 = vmul.f32 %v5911, %v6227
    %v6257 = vmul.f32 %v5914, %v6227
    %v6258 = vmul.f32 %v5916, %v6227
    %v6259 = vmul.f32 %v5919, %v6227
    %v6260 = vmul.f32 %v5921, %v6227
    %v6261 = vmul.f32 %v5924, %v6227
    %v6262 = vmul.f32 %v5926, %v6227
    %v6263 = vmul.f32 %v5929, %v6227
    %v6264 = vmul.f32 %v5931, %v6227
    %v6265 = vmul.f32 %v5934, %v6227
    %v6266 = vmul.f32 %v5936, %v6227
    %v6267 = vmul.f32 %v5939, %v6227
    %v6268 = vmul.f32 %v5941, %v6227
    %v6269 = vmul.f32 %v5944, %v6227
    %v6270 = vmul.f32 %v5946, %v6227
    %v6271 = vmul.f32 %v5949, %v6227
    %v6272 = vmul.f32 %v5951, %v6227
    %v6273 = vmul.f32 %v5954, %v6227
    %v6274 = vmul.f32 %v5956, %v6227
    %v6275 = vmul.f32 %v5959, %v6227
    %v6276 = vmul.f32 %v5961, %v6227
    %v6277 = vmul.f32 %v5964, %v6227
    %v6278 = vmul.f32 %v5966, %v6227
    %v6279 = vmul.f32 %v5969, %v6227
    %v6280 = vmul.f32 %v5971, %v6227
    %v6281 = vmul.f32 %v5974, %v6227
    %v6282 = vmul.f32 %v5976, %v6227
    %v6283 = vmul.f32 %v5979, %v6227
    %v6284 = vmul.f32 %v5981, %v6227
    %v6285 = vmul.f32 %v5984, %v6227
    %v6286 = vmul.f32 %v5986, %v6227
    %v6287 = vmul.f32 %v5989, %v6227
    %v6288 = vmul.f32 %v5991, %v6227
    %v6289 = vmul.f32 %v5994, %v6227
    %v6290 = vmul.f32 %v5996, %v6227
    %v6291 = vmul.f32 %v5999, %v6227
    %v6292 = vmul.f32 %v6001, %v6227
    %v6294 = vperm.slane %v6225, 0
    %v6296 = vadd.f32 %v6229, %v6294
    %v6297 = vadd.f32 %v6230, %v6294
    %v6298 = vadd.f32 %v6231, %v6294
    %v6299 = vadd.f32 %v6232, %v6294
    %v6300 = vadd.f32 %v6233, %v6294
    %v6301 = vadd.f32 %v6234, %v6294
    %v6302 = vadd.f32 %v6235, %v6294
    %v6303 = vadd.f32 %v6236, %v6294
    %v6304 = vadd.f32 %v6237, %v6294
    %v6305 = vadd.f32 %v6238, %v6294
    %v6306 = vadd.f32 %v6239, %v6294
    %v6307 = vadd.f32 %v6240, %v6294
    %v6308 = vadd.f32 %v6241, %v6294
    %v6309 = vadd.f32 %v6242, %v6294
    %v6310 = vadd.f32 %v6243, %v6294
    %v6311 = vadd.f32 %v6244, %v6294
    %v6312 = vadd.f32 %v6245, %v6294
    %v6313 = vadd.f32 %v6246, %v6294
    %v6314 = vadd.f32 %v6247, %v6294
    %v6315 = vadd.f32 %v6248, %v6294
    %v6316 = vadd.f32 %v6249, %v6294
    %v6317 = vadd.f32 %v6250, %v6294
    %v6318 = vadd.f32 %v6251, %v6294
    %v6319 = vadd.f32 %v6252, %v6294
    %v6320 = vadd.f32 %v6253, %v6294
    %v6321 = vadd.f32 %v6254, %v6294
    %v6322 = vadd.f32 %v6255, %v6294
    %v6323 = vadd.f32 %v6256, %v6294
    %v6324 = vadd.f32 %v6257, %v6294
    %v6325 = vadd.f32 %v6258, %v6294
    %v6326 = vadd.f32 %v6259, %v6294
    %v6327 = vadd.f32 %v6260, %v6294
    %v6328 = vadd.f32 %v6261, %v6294
    %v6329 = vadd.f32 %v6262, %v6294
    %v6330 = vadd.f32 %v6263, %v6294
    %v6331 = vadd.f32 %v6264, %v6294
    %v6332 = vadd.f32 %v6265, %v6294
    %v6333 = vadd.f32 %v6266, %v6294
    %v6334 = vadd.f32 %v6267, %v6294
    %v6335 = vadd.f32 %v6268, %v6294
    %v6336 = vadd.f32 %v6269, %v6294
    %v6337 = vadd.f32 %v6270, %v6294
    %v6338 = vadd.f32 %v6271, %v6294
    %v6339 = vadd.f32 %v6272, %v6294
    %v6340 = vadd.f32 %v6273, %v6294
    %v6341 = vadd.f32 %v6274, %v6294
    %v6342 = vadd.f32 %v6275, %v6294
    %v6343 = vadd.f32 %v6276, %v6294
    %v6344 = vadd.f32 %v6277, %v6294
    %v6345 = vadd.f32 %v6278, %v6294
    %v6346 = vadd.f32 %v6279, %v6294
    %v6347 = vadd.f32 %v6280, %v6294
    %v6348 = vadd.f32 %v6281, %v6294
    %v6349 = vadd.f32 %v6282, %v6294
    %v6350 = vadd.f32 %v6283, %v6294
    %v6351 = vadd.f32 %v6284, %v6294
    %v6352 = vadd.f32 %v6285, %v6294
    %v6353 = vadd.f32 %v6286, %v6294
    %v6354 = vadd.f32 %v6287, %v6294
    %v6355 = vadd.f32 %v6288, %v6294
    %v6356 = vadd.f32 %v6289, %v6294
    %v6357 = vadd.f32 %v6290, %v6294
    %v6358 = vadd.f32 %v6291, %v6294
    %v6359 = vadd.f32 %v6292, %v6294
    %v6360 = vmax.f32 %v6296, 0.0
    %v6361 = vmax.f32 %v6297, 0.0
    %v6362 = vmax.f32 %v6298, 0.0
    %v6363 = vmax.f32 %v6299, 0.0
    %v6364 = vmax.f32 %v6300, 0.0
    %v6365 = vmax.f32 %v6301, 0.0
    %v6366 = vmax.f32 %v6302, 0.0
    %v6367 = vmax.f32 %v6303, 0.0
    %v6368 = vmax.f32 %v6304, 0.0
    %v6369 = vmax.f32 %v6305, 0.0
    %v6370 = vmax.f32 %v6306, 0.0
    %v6371 = vmax.f32 %v6307, 0.0
    %v6372 = vmax.f32 %v6308, 0.0
    %v6373 = vmax.f32 %v6309, 0.0
    %v6374 = vmax.f32 %v6310, 0.0
    %v6375 = vmax.f32 %v6311, 0.0
    %v6376 = vmax.f32 %v6312, 0.0
    %v6377 = vmax.f32 %v6313, 0.0
    %v6378 = vmax.f32 %v6314, 0.0
    %v6379 = vmax.f32 %v6315, 0.0
    %v6380 = vmax.f32 %v6316, 0.0
    %v6381 = vmax.f32 %v6317, 0.0
    %v6382 = vmax.f32 %v6318, 0.0
    %v6383 = vmax.f32 %v6319, 0.0
    %v6384 = vmax.f32 %v6320, 0.0
    %v6385 = vmax.f32 %v6321, 0.0
    %v6386 = vmax.f32 %v6322, 0.0
    %v6387 = vmax.f32 %v6323, 0.0
    %v6388 = vmax.f32 %v6324, 0.0
    %v6389 = vmax.f32 %v6325, 0.0
    %v6390 = vmax.f32 %v6326, 0.0
    %v6391 = vmax.f32 %v6327, 0.0
    %v6392 = vmax.f32 %v6328, 0.0
    %v6393 = vmax.f32 %v6329, 0.0
    %v6394 = vmax.f32 %v6330, 0.0
    %v6395 = vmax.f32 %v6331, 0.0
    %v6396 = vmax.f32 %v6332, 0.0
    %v6397 = vmax.f32 %v6333, 0.0
    %v6398 = vmax.f32 %v6334, 0.0
    %v6399 = vmax.f32 %v6335, 0.0
    %v6400 = vmax.f32 %v6336, 0.0
    %v6401 = vmax.f32 %v6337, 0.0
    %v6402 = vmax.f32 %v6338, 0.0
    %v6403 = vmax.f32 %v6339, 0.0
    %v6404 = vmax.f32 %v6340, 0.0
    %v6405 = vmax.f32 %v6341, 0.0
    %v6406 = vmax.f32 %v6342, 0.0
    %v6407 = vmax.f32 %v6343, 0.0
    %v6408 = vmax.f32 %v6344, 0.0
    %v6409 = vmax.f32 %v6345, 0.0
    %v6410 = vmax.f32 %v6346, 0.0
    %v6411 = vmax.f32 %v6347, 0.0
    %v6412 = vmax.f32 %v6348, 0.0
    %v6413 = vmax.f32 %v6349, 0.0
    %v6414 = vmax.f32 %v6350, 0.0
    %v6415 = vmax.f32 %v6351, 0.0
    %v6416 = vmax.f32 %v6352, 0.0
    %v6417 = vmax.f32 %v6353, 0.0
    %v6418 = vmax.f32 %v6354, 0.0
    %v6419 = vmax.f32 %v6355, 0.0
    %v6420 = vmax.f32 %v6356, 0.0
    %v6421 = vmax.f32 %v6357, 0.0
    %v6422 = vmax.f32 %v6358, 0.0
    %v6423 = vmax.f32 %v6359, 0.0
    %v6424 = vpack.c.bf16 %v6361, %v6360
    %v6425 = vpack.c.bf16 %v6363, %v6362
    %v6426 = vpack.c.bf16 %v6365, %v6364
    %v6427 = vpack.c.bf16 %v6367, %v6366
    %v6428 = vpack.c.bf16 %v6369, %v6368
    %v6429 = vpack.c.bf16 %v6371, %v6370
    %v6430 = vpack.c.bf16 %v6373, %v6372
    %v6431 = vpack.c.bf16 %v6375, %v6374
    %v6432 = vpack.c.bf16 %v6377, %v6376
    %v6433 = vpack.c.bf16 %v6379, %v6378
    %v6434 = vpack.c.bf16 %v6381, %v6380
    %v6435 = vpack.c.bf16 %v6383, %v6382
    %v6436 = vpack.c.bf16 %v6385, %v6384
    %v6437 = vpack.c.bf16 %v6387, %v6386
    %v6438 = vpack.c.bf16 %v6389, %v6388
    %v6439 = vpack.c.bf16 %v6391, %v6390
    %v6440 = vpack.c.bf16 %v6393, %v6392
    %v6441 = vpack.c.bf16 %v6395, %v6394
    %v6442 = vpack.c.bf16 %v6397, %v6396
    %v6443 = vpack.c.bf16 %v6399, %v6398
    %v6444 = vpack.c.bf16 %v6401, %v6400
    %v6445 = vpack.c.bf16 %v6403, %v6402
    %v6446 = vpack.c.bf16 %v6405, %v6404
    %v6447 = vpack.c.bf16 %v6407, %v6406
    %v6448 = vpack.c.bf16 %v6409, %v6408
    %v6449 = vpack.c.bf16 %v6411, %v6410
    %v6450 = vpack.c.bf16 %v6413, %v6412
    %v6451 = vpack.c.bf16 %v6415, %v6414
    %v6452 = vpack.c.bf16 %v6417, %v6416
    %v6453 = vpack.c.bf16 %v6419, %v6418
    %v6454 = vpack.c.bf16 %v6421, %v6420
    %v6455 = vpack.c.bf16 %v6423, %v6422
    %v6456 = vld [vmem:[#allocation9] sm:$0xf]
    %v6457 = vld [vmem:[#allocation9 + $0x4] sm:$0xf]
    %v6458 = vld [vmem:[#allocation9 + $0x8] sm:$0xf]
    %v6459 = vld [vmem:[#allocation9 + $0xc] sm:$0xf]
    %v6460 = vld [vmem:[#allocation9 + $0x10] sm:$0xf]
    %v6461 = vld [vmem:[#allocation9 + $0x14] sm:$0xf]
    %v6462 = vld [vmem:[#allocation9 + $0x18] sm:$0xf]
    %v6463 = vld [vmem:[#allocation9 + $0x1c] sm:$0xf]
    %v6464 = vld [vmem:[#allocation9 + $0x20] sm:$0xf]
    %v6465 = vld [vmem:[#allocation9 + $0x24] sm:$0xf]
    %v6466 = vld [vmem:[#allocation9 + $0x28] sm:$0xf]
    %v6467 = vld [vmem:[#allocation9 + $0x2c] sm:$0xf]
    %v6468 = vld [vmem:[#allocation9 + $0x30] sm:$0xf]
    %v6469 = vld [vmem:[#allocation9 + $0x34] sm:$0xf]
    %v6470 = vld [vmem:[#allocation9 + $0x38] sm:$0xf]
    %v6471 = vld [vmem:[#allocation9 + $0x3c] sm:$0xf]
    %v6488 = vunpack.c.l.b16 %v6456
    %v6489 = vunpack.c.l.b16 %v6457
    %v6490 = vunpack.c.l.b16 %v6458
    %v6491 = vunpack.c.l.b16 %v6459
    %v6492 = vunpack.c.l.b16 %v6460
    %v6493 = vunpack.c.l.b16 %v6461
    %v6494 = vunpack.c.l.b16 %v6462
    %v6495 = vunpack.c.l.b16 %v6463
    %v6496 = vunpack.c.l.b16 %v6464
    %v6497 = vunpack.c.l.b16 %v6465
    %v6498 = vunpack.c.l.b16 %v6466
    %v6499 = vunpack.c.l.b16 %v6467
    %v6500 = vunpack.c.l.b16 %v6468
    %v6501 = vunpack.c.l.b16 %v6469
    %v6502 = vunpack.c.l.b16 %v6470
    %v6503 = vunpack.c.l.b16 %v6471
    %v6504 = vpack.c.b16 %v6489, %v6488
    %v6505 = vpack.c.b16 %v6491, %v6490
    %v6506 = vpack.c.b16 %v6493, %v6492
    %v6507 = vpack.c.b16 %v6495, %v6494
    %v6508 = vpack.c.b16 %v6497, %v6496
    %v6509 = vpack.c.b16 %v6499, %v6498
    %v6510 = vpack.c.b16 %v6501, %v6500
    %v6511 = vpack.c.b16 %v6503, %v6502
    %6520 = vmatpush.bf16.msra.mxu0 %v6511
    %6521 = vmatpush.bf16.msra.mxu0 %v6510
    %6522 = vmatpush.bf16.msra.mxu0 %v6509
    %6523 = vmatpush.bf16.msra.mxu0 %v6508
    %6524 = vmatpush.bf16.msra.mxu0 %v6507
    %6525 = vmatpush.bf16.msra.mxu0 %v6506
    %6526 = vmatpush.bf16.msra.mxu0 %v6505
    %6527 = vmatpush.bf16.msra.mxu0 %v6504
    %6528 = vmatmul.bf16.gmra.mxu0 %v6424
    %v6529 = vpop.f32.mrf.mxu0
    %v6530 = vadd.f32 0.0, %v6529
    %v6531 = vpop.f32.mrf.mxu0
    %v6532 = vadd.f32 0.0, %v6531
    %6533 = vmatmul.bf16.gmra.mxu0 %v6425
    %v6534 = vpop.f32.mrf.mxu0
    %v6535 = vadd.f32 0.0, %v6534
    %v6536 = vpop.f32.mrf.mxu0
    %v6537 = vadd.f32 0.0, %v6536
    %6538 = vmatmul.bf16.gmra.mxu0 %v6426
    %v6539 = vpop.f32.mrf.mxu0
    %v6540 = vadd.f32 0.0, %v6539
    %v6541 = vpop.f32.mrf.mxu0
    %v6542 = vadd.f32 0.0, %v6541
    %6543 = vmatmul.bf16.gmra.mxu0 %v6427
    %v6544 = vpop.f32.mrf.mxu0
    %v6545 = vadd.f32 0.0, %v6544
    %v6546 = vpop.f32.mrf.mxu0
    %v6547 = vadd.f32 0.0, %v6546
    %6548 = vmatmul.bf16.gmra.mxu0 %v6428
    %v6549 = vpop.f32.mrf.mxu0
    %v6550 = vadd.f32 0.0, %v6549
    %v6551 = vpop.f32.mrf.mxu0
    %v6552 = vadd.f32 0.0, %v6551
    %6553 = vmatmul.bf16.gmra.mxu0 %v6429
    %v6554 = vpop.f32.mrf.mxu0
    %v6555 = vadd.f32 0.0, %v6554
    %v6556 = vpop.f32.mrf.mxu0
    %v6557 = vadd.f32 0.0, %v6556
    %6558 = vmatmul.bf16.gmra.mxu0 %v6430
    %v6559 = vpop.f32.mrf.mxu0
    %v6560 = vadd.f32 0.0, %v6559
    %v6561 = vpop.f32.mrf.mxu0
    %v6562 = vadd.f32 0.0, %v6561
    %6563 = vmatmul.bf16.gmra.mxu0 %v6431
    %v6564 = vpop.f32.mrf.mxu0
    %v6565 = vadd.f32 0.0, %v6564
    %v6566 = vpop.f32.mrf.mxu0
    %v6567 = vadd.f32 0.0, %v6566
    %6568 = vmatmul.bf16.gmra.mxu0 %v6432
    %v6569 = vpop.f32.mrf.mxu0
    %v6570 = vadd.f32 0.0, %v6569
    %v6571 = vpop.f32.mrf.mxu0
    %v6572 = vadd.f32 0.0, %v6571
    %6573 = vmatmul.bf16.gmra.mxu0 %v6433
    %v6574 = vpop.f32.mrf.mxu0
    %v6575 = vadd.f32 0.0, %v6574
    %v6576 = vpop.f32.mrf.mxu0
    %v6577 = vadd.f32 0.0, %v6576
    %6578 = vmatmul.bf16.gmra.mxu0 %v6434
    %v6579 = vpop.f32.mrf.mxu0
    %v6580 = vadd.f32 0.0, %v6579
    %v6581 = vpop.f32.mrf.mxu0
    %v6582 = vadd.f32 0.0, %v6581
    %6583 = vmatmul.bf16.gmra.mxu0 %v6435
    %v6584 = vpop.f32.mrf.mxu0
    %v6585 = vadd.f32 0.0, %v6584
    %v6586 = vpop.f32.mrf.mxu0
    %v6587 = vadd.f32 0.0, %v6586
    %6588 = vmatmul.bf16.gmra.mxu0 %v6436
    %v6589 = vpop.f32.mrf.mxu0
    %v6590 = vadd.f32 0.0, %v6589
    %v6591 = vpop.f32.mrf.mxu0
    %v6592 = vadd.f32 0.0, %v6591
    %6593 = vmatmul.bf16.gmra.mxu0 %v6437
    %v6594 = vpop.f32.mrf.mxu0
    %v6595 = vadd.f32 0.0, %v6594
    %v6596 = vpop.f32.mrf.mxu0
    %v6597 = vadd.f32 0.0, %v6596
    %6598 = vmatmul.bf16.gmra.mxu0 %v6438
    %v6599 = vpop.f32.mrf.mxu0
    %v6600 = vadd.f32 0.0, %v6599
    %v6601 = vpop.f32.mrf.mxu0
    %v6602 = vadd.f32 0.0, %v6601
    %6603 = vmatmul.bf16.gmra.mxu0 %v6439
    %v6604 = vpop.f32.mrf.mxu0
    %v6605 = vadd.f32 0.0, %v6604
    %v6606 = vpop.f32.mrf.mxu0
    %v6607 = vadd.f32 0.0, %v6606
    %6608 = vmatmul.bf16.gmra.mxu0 %v6440
    %v6609 = vpop.f32.mrf.mxu0
    %v6610 = vadd.f32 0.0, %v6609
    %v6611 = vpop.f32.mrf.mxu0
    %v6612 = vadd.f32 0.0, %v6611
    %6613 = vmatmul.bf16.gmra.mxu0 %v6441
    %v6614 = vpop.f32.mrf.mxu0
    %v6615 = vadd.f32 0.0, %v6614
    %v6616 = vpop.f32.mrf.mxu0
    %v6617 = vadd.f32 0.0, %v6616
    %6618 = vmatmul.bf16.gmra.mxu0 %v6442
    %v6619 = vpop.f32.mrf.mxu0
    %v6620 = vadd.f32 0.0, %v6619
    %v6621 = vpop.f32.mrf.mxu0
    %v6622 = vadd.f32 0.0, %v6621
    %6623 = vmatmul.bf16.gmra.mxu0 %v6443
    %v6624 = vpop.f32.mrf.mxu0
    %v6625 = vadd.f32 0.0, %v6624
    %v6626 = vpop.f32.mrf.mxu0
    %v6627 = vadd.f32 0.0, %v6626
    %6628 = vmatmul.bf16.gmra.mxu0 %v6444
    %v6629 = vpop.f32.mrf.mxu0
    %v6630 = vadd.f32 0.0, %v6629
    %v6631 = vpop.f32.mrf.mxu0
    %v6632 = vadd.f32 0.0, %v6631
    %6633 = vmatmul.bf16.gmra.mxu0 %v6445
    %v6634 = vpop.f32.mrf.mxu0
    %v6635 = vadd.f32 0.0, %v6634
    %v6636 = vpop.f32.mrf.mxu0
    %v6637 = vadd.f32 0.0, %v6636
    %6638 = vmatmul.bf16.gmra.mxu0 %v6446
    %v6639 = vpop.f32.mrf.mxu0
    %v6640 = vadd.f32 0.0, %v6639
    %v6641 = vpop.f32.mrf.mxu0
    %v6642 = vadd.f32 0.0, %v6641
    %6643 = vmatmul.bf16.gmra.mxu0 %v6447
    %v6644 = vpop.f32.mrf.mxu0
    %v6645 = vadd.f32 0.0, %v6644
    %v6646 = vpop.f32.mrf.mxu0
    %v6647 = vadd.f32 0.0, %v6646
    %6648 = vmatmul.bf16.gmra.mxu0 %v6448
    %v6649 = vpop.f32.mrf.mxu0
    %v6650 = vadd.f32 0.0, %v6649
    %v6651 = vpop.f32.mrf.mxu0
    %v6652 = vadd.f32 0.0, %v6651
    %6653 = vmatmul.bf16.gmra.mxu0 %v6449
    %v6654 = vpop.f32.mrf.mxu0
    %v6655 = vadd.f32 0.0, %v6654
    %v6656 = vpop.f32.mrf.mxu0
    %v6657 = vadd.f32 0.0, %v6656
    %6658 = vmatmul.bf16.gmra.mxu0 %v6450
    %v6659 = vpop.f32.mrf.mxu0
    %v6660 = vadd.f32 0.0, %v6659
    %v6661 = vpop.f32.mrf.mxu0
    %v6662 = vadd.f32 0.0, %v6661
    %6663 = vmatmul.bf16.gmra.mxu0 %v6451
    %v6664 = vpop.f32.mrf.mxu0
    %v6665 = vadd.f32 0.0, %v6664
    %v6666 = vpop.f32.mrf.mxu0
    %v6667 = vadd.f32 0.0, %v6666
    %6668 = vmatmul.bf16.gmra.mxu0 %v6452
    %v6669 = vpop.f32.mrf.mxu0
    %v6670 = vadd.f32 0.0, %v6669
    %v6671 = vpop.f32.mrf.mxu0
    %v6672 = vadd.f32 0.0, %v6671
    %6673 = vmatmul.bf16.gmra.mxu0 %v6453
    %v6674 = vpop.f32.mrf.mxu0
    %v6675 = vadd.f32 0.0, %v6674
    %v6676 = vpop.f32.mrf.mxu0
    %v6677 = vadd.f32 0.0, %v6676
    %6678 = vmatmul.bf16.gmra.mxu0 %v6454
    %v6679 = vpop.f32.mrf.mxu0
    %v6680 = vadd.f32 0.0, %v6679
    %v6681 = vpop.f32.mrf.mxu0
    %v6682 = vadd.f32 0.0, %v6681
    %6683 = vmatmul.bf16.gmra.mxu0 %v6455
    %v6684 = vpop.f32.mrf.mxu0
    %v6685 = vadd.f32 0.0, %v6684
    %v6686 = vpop.f32.mrf.mxu0
    %v6687 = vadd.f32 0.0, %v6686
    %6688 = vdwg.mxu0
    %v6689 = vld [vmem:[%s8] sm:$0x1]
    %v6690 = vld [vmem:[%s9] sm:$0x1]
    %v6691 = vadd.f32 %v6530, %v6532
    %v6692 = vadd.f32 %v6691, %v6535
    %v6693 = vadd.f32 %v6692, %v6537
    %v6694 = vadd.f32 %v6693, %v6540
    %v6695 = vadd.f32 %v6694, %v6542
    %v6696 = vadd.f32 %v6695, %v6545
    %v6697 = vadd.f32 %v6696, %v6547
    %v6698 = vadd.f32 %v6697, %v6550
    %v6699 = vadd.f32 %v6698, %v6552
    %v6700 = vadd.f32 %v6699, %v6555
    %v6701 = vadd.f32 %v6700, %v6557
    %v6702 = vadd.f32 %v6701, %v6560
    %v6703 = vadd.f32 %v6702, %v6562
    %v6704 = vadd.f32 %v6703, %v6565
    %v6705 = vadd.f32 %v6704, %v6567
    %v6706 = vadd.f32 %v6705, %v6570
    %v6707 = vadd.f32 %v6706, %v6572
    %v6708 = vadd.f32 %v6707, %v6575
    %v6709 = vadd.f32 %v6708, %v6577
    %v6710 = vadd.f32 %v6709, %v6580
    %v6711 = vadd.f32 %v6710, %v6582
    %v6712 = vadd.f32 %v6711, %v6585
    %v6713 = vadd.f32 %v6712, %v6587
    %v6714 = vadd.f32 %v6713, %v6590
    %v6715 = vadd.f32 %v6714, %v6592
    %v6716 = vadd.f32 %v6715, %v6595
    %v6717 = vadd.f32 %v6716, %v6597
    %v6718 = vadd.f32 %v6717, %v6600
    %v6719 = vadd.f32 %v6718, %v6602
    %v6720 = vadd.f32 %v6719, %v6605
    %v6721 = vadd.f32 %v6720, %v6607
    %v6722 = vadd.f32 %v6721, %v6610
    %v6723 = vadd.f32 %v6722, %v6612
    %v6724 = vadd.f32 %v6723, %v6615
    %v6725 = vadd.f32 %v6724, %v6617
    %v6726 = vadd.f32 %v6725, %v6620
    %v6727 = vadd.f32 %v6726, %v6622
    %v6728 = vadd.f32 %v6727, %v6625
    %v6729 = vadd.f32 %v6728, %v6627
    %v6730 = vadd.f32 %v6729, %v6630
    %v6731 = vadd.f32 %v6730, %v6632
    %v6732 = vadd.f32 %v6731, %v6635
    %v6733 = vadd.f32 %v6732, %v6637
    %v6734 = vadd.f32 %v6733, %v6640
    %v6735 = vadd.f32 %v6734, %v6642
    %v6736 = vadd.f32 %v6735, %v6645
    %v6737 = vadd.f32 %v6736, %v6647
    %v6738 = vadd.f32 %v6737, %v6650
    %v6739 = vadd.f32 %v6738, %v6652
    %v6740 = vadd.f32 %v6739, %v6655
    %v6741 = vadd.f32 %v6740, %v6657
    %v6742 = vadd.f32 %v6741, %v6660
    %v6743 = vadd.f32 %v6742, %v6662
    %v6744 = vadd.f32 %v6743, %v6665
    %v6745 = vadd.f32 %v6744, %v6667
    %v6746 = vadd.f32 %v6745, %v6670
    %v6747 = vadd.f32 %v6746, %v6672
    %v6748 = vadd.f32 %v6747, %v6675
    %v6749 = vadd.f32 %v6748, %v6677
    %v6750 = vadd.f32 %v6749, %v6680
    %v6751 = vadd.f32 %v6750, %v6682
    %v6752 = vadd.f32 %v6751, %v6685
    %v6753 = vadd.f32 %v6752, %v6687
    %v6754 = vrot.slane %v6753, 4
    %v6755 = vadd.f32 %v6753, %v6754
    %v6756 = vrot.slane %v6755, 2
    %v6757 = vadd.f32 %v6755, %v6756
    %v6758 = vrot.slane %v6757, 1
    %v6759 = vadd.f32 %v6757, %v6758
    %v6760 = vmul.f32 %v6530, %v6530
    %v6761 = vmul.f32 %v6532, %v6532
    %v6762 = vmul.f32 %v6535, %v6535
    %v6763 = vmul.f32 %v6537, %v6537
    %v6764 = vmul.f32 %v6540, %v6540
    %v6765 = vmul.f32 %v6542, %v6542
    %v6766 = vmul.f32 %v6545, %v6545
    %v6767 = vmul.f32 %v6547, %v6547
    %v6768 = vmul.f32 %v6550, %v6550
    %v6769 = vmul.f32 %v6552, %v6552
    %v6770 = vmul.f32 %v6555, %v6555
    %v6771 = vmul.f32 %v6557, %v6557
    %v6772 = vmul.f32 %v6560, %v6560
    %v6773 = vmul.f32 %v6562, %v6562
    %v6774 = vmul.f32 %v6565, %v6565
    %v6775 = vmul.f32 %v6567, %v6567
    %v6776 = vmul.f32 %v6570, %v6570
    %v6777 = vmul.f32 %v6572, %v6572
    %v6778 = vmul.f32 %v6575, %v6575
    %v6779 = vmul.f32 %v6577, %v6577
    %v6780 = vmul.f32 %v6580, %v6580
    %v6781 = vmul.f32 %v6582, %v6582
    %v6782 = vmul.f32 %v6585, %v6585
    %v6783 = vmul.f32 %v6587, %v6587
    %v6784 = vmul.f32 %v6590, %v6590
    %v6785 = vmul.f32 %v6592, %v6592
    %v6786 = vmul.f32 %v6595, %v6595
    %v6787 = vmul.f32 %v6597, %v6597
    %v6788 = vmul.f32 %v6600, %v6600
    %v6789 = vmul.f32 %v6602, %v6602
    %v6790 = vmul.f32 %v6605, %v6605
    %v6791 = vmul.f32 %v6607, %v6607
    %v6792 = vmul.f32 %v6610, %v6610
    %v6793 = vmul.f32 %v6612, %v6612
    %v6794 = vmul.f32 %v6615, %v6615
    %v6795 = vmul.f32 %v6617, %v6617
    %v6796 = vmul.f32 %v6620, %v6620
    %v6797 = vmul.f32 %v6622, %v6622
    %v6798 = vmul.f32 %v6625, %v6625
    %v6799 = vmul.f32 %v6627, %v6627
    %v6800 = vmul.f32 %v6630, %v6630
    %v6801 = vmul.f32 %v6632, %v6632
    %v6802 = vmul.f32 %v6635, %v6635
    %v6803 = vmul.f32 %v6637, %v6637
    %v6804 = vmul.f32 %v6640, %v6640
    %v6805 = vmul.f32 %v6642, %v6642
    %v6806 = vmul.f32 %v6645, %v6645
    %v6807 = vmul.f32 %v6647, %v6647
    %v6808 = vmul.f32 %v6650, %v6650
    %v6809 = vmul.f32 %v6652, %v6652
    %v6810 = vmul.f32 %v6655, %v6655
    %v6811 = vmul.f32 %v6657, %v6657
    %v6812 = vmul.f32 %v6660, %v6660
    %v6813 = vmul.f32 %v6662, %v6662
    %v6814 = vmul.f32 %v6665, %v6665
    %v6815 = vmul.f32 %v6667, %v6667
    %v6816 = vmul.f32 %v6670, %v6670
    %v6817 = vmul.f32 %v6672, %v6672
    %v6818 = vmul.f32 %v6675, %v6675
    %v6819 = vmul.f32 %v6677, %v6677
    %v6820 = vmul.f32 %v6680, %v6680
    %v6821 = vmul.f32 %v6682, %v6682
    %v6822 = vmul.f32 %v6685, %v6685
    %v6823 = vmul.f32 %v6687, %v6687
    %v6824 = vadd.f32 %v6760, %v6761
    %v6825 = vadd.f32 %v6824, %v6762
    %v6826 = vadd.f32 %v6825, %v6763
    %v6827 = vadd.f32 %v6826, %v6764
    %v6828 = vadd.f32 %v6827, %v6765
    %v6829 = vadd.f32 %v6828, %v6766
    %v6830 = vadd.f32 %v6829, %v6767
    %v6831 = vadd.f32 %v6830, %v6768
    %v6832 = vadd.f32 %v6831, %v6769
    %v6833 = vadd.f32 %v6832, %v6770
    %v6834 = vadd.f32 %v6833, %v6771
    %v6835 = vadd.f32 %v6834, %v6772
    %v6836 = vadd.f32 %v6835, %v6773
    %v6837 = vadd.f32 %v6836, %v6774
    %v6838 = vadd.f32 %v6837, %v6775
    %v6839 = vadd.f32 %v6838, %v6776
    %v6840 = vadd.f32 %v6839, %v6777
    %v6841 = vadd.f32 %v6840, %v6778
    %v6842 = vadd.f32 %v6841, %v6779
    %v6843 = vadd.f32 %v6842, %v6780
    %v6844 = vadd.f32 %v6843, %v6781
    %v6845 = vadd.f32 %v6844, %v6782
    %v6846 = vadd.f32 %v6845, %v6783
    %v6847 = vadd.f32 %v6846, %v6784
    %v6848 = vadd.f32 %v6847, %v6785
    %v6849 = vadd.f32 %v6848, %v6786
    %v6850 = vadd.f32 %v6849, %v6787
    %v6851 = vadd.f32 %v6850, %v6788
    %v6852 = vadd.f32 %v6851, %v6789
    %v6853 = vadd.f32 %v6852, %v6790
    %v6854 = vadd.f32 %v6853, %v6791
    %v6855 = vadd.f32 %v6854, %v6792
    %v6856 = vadd.f32 %v6855, %v6793
    %v6857 = vadd.f32 %v6856, %v6794
    %v6858 = vadd.f32 %v6857, %v6795
    %v6859 = vadd.f32 %v6858, %v6796
    %v6860 = vadd.f32 %v6859, %v6797
    %v6861 = vadd.f32 %v6860, %v6798
    %v6862 = vadd.f32 %v6861, %v6799
    %v6863 = vadd.f32 %v6862, %v6800
    %v6864 = vadd.f32 %v6863, %v6801
    %v6865 = vadd.f32 %v6864, %v6802
    %v6866 = vadd.f32 %v6865, %v6803
    %v6867 = vadd.f32 %v6866, %v6804
    %v6868 = vadd.f32 %v6867, %v6805
    %v6869 = vadd.f32 %v6868, %v6806
    %v6870 = vadd.f32 %v6869, %v6807
    %v6871 = vadd.f32 %v6870, %v6808
    %v6872 = vadd.f32 %v6871, %v6809
    %v6873 = vadd.f32 %v6872, %v6810
    %v6874 = vadd.f32 %v6873, %v6811
    %v6875 = vadd.f32 %v6874, %v6812
    %v6876 = vadd.f32 %v6875, %v6813
    %v6877 = vadd.f32 %v6876, %v6814
    %v6878 = vadd.f32 %v6877, %v6815
    %v6879 = vadd.f32 %v6878, %v6816
    %v6880 = vadd.f32 %v6879, %v6817
    %v6881 = vadd.f32 %v6880, %v6818
    %v6882 = vadd.f32 %v6881, %v6819
    %v6883 = vadd.f32 %v6882, %v6820
    %v6884 = vadd.f32 %v6883, %v6821
    %v6885 = vadd.f32 %v6884, %v6822
    %v6886 = vadd.f32 %v6885, %v6823
    %v6887 = vrot.slane %v6886, 4
    %v6888 = vadd.f32 %v6886, %v6887
    %v6889 = vrot.slane %v6888, 2
    %v6890 = vadd.f32 %v6888, %v6889
    %v6891 = vrot.slane %v6890, 1
    %v6892 = vadd.f32 %v6890, %v6891
    %v6893 = vmul.f32 %v6759, 0.001953125
    %v6894 = vmul.f32 %v6892, 0.001953125
    %v6895 = vmul.f32 %v6893, %v6893
    %v6896 = vsub.f32 %v6894, %v6895
    %v6897 = vmax.f32 %v6896, 0.0
    %v6898 = vadd.f32 %v6897, 1e-05
    %v6899 = vrsqrt.pop %v6898
    %v6900 = vmul.f32 %v6899, %v6898
    %v6901 = vmul.f32 %v6900, %v6899
    %v6902 = vmul.f32 0.5, %v6901
    %v6903 = vsub.f32 1.5, %v6902
    %v6904 = vmul.f32 %v6899, %v6903
    %vm6905 = vweird.f32 %v6898
    %vm6906 = vweird.f32 %v6899
    %vm6907 = vmor %vm6905, %vm6906
    %v6908 = vsel %vm6907, %v6899, %v6904
    %v6909 = vmul.f32 %v6689, %v6908
    %v6910 = vmul.f32 %v6893, %v6909
    %v6911 = vsub.f32 %v6690, %v6910
    %v6913 = vperm.slane %v6909, 0
    %v6915 = vmul.f32 %v6530, %v6913
    %v6916 = vmul.f32 %v6532, %v6913
    %v6917 = vmul.f32 %v6535, %v6913
    %v6918 = vmul.f32 %v6537, %v6913
    %v6919 = vmul.f32 %v6540, %v6913
    %v6920 = vmul.f32 %v6542, %v6913
    %v6921 = vmul.f32 %v6545, %v6913
    %v6922 = vmul.f32 %v6547, %v6913
    %v6923 = vmul.f32 %v6550, %v6913
    %v6924 = vmul.f32 %v6552, %v6913
    %v6925 = vmul.f32 %v6555, %v6913
    %v6926 = vmul.f32 %v6557, %v6913
    %v6927 = vmul.f32 %v6560, %v6913
    %v6928 = vmul.f32 %v6562, %v6913
    %v6929 = vmul.f32 %v6565, %v6913
    %v6930 = vmul.f32 %v6567, %v6913
    %v6931 = vmul.f32 %v6570, %v6913
    %v6932 = vmul.f32 %v6572, %v6913
    %v6933 = vmul.f32 %v6575, %v6913
    %v6934 = vmul.f32 %v6577, %v6913
    %v6935 = vmul.f32 %v6580, %v6913
    %v6936 = vmul.f32 %v6582, %v6913
    %v6937 = vmul.f32 %v6585, %v6913
    %v6938 = vmul.f32 %v6587, %v6913
    %v6939 = vmul.f32 %v6590, %v6913
    %v6940 = vmul.f32 %v6592, %v6913
    %v6941 = vmul.f32 %v6595, %v6913
    %v6942 = vmul.f32 %v6597, %v6913
    %v6943 = vmul.f32 %v6600, %v6913
    %v6944 = vmul.f32 %v6602, %v6913
    %v6945 = vmul.f32 %v6605, %v6913
    %v6946 = vmul.f32 %v6607, %v6913
    %v6947 = vmul.f32 %v6610, %v6913
    %v6948 = vmul.f32 %v6612, %v6913
    %v6949 = vmul.f32 %v6615, %v6913
    %v6950 = vmul.f32 %v6617, %v6913
    %v6951 = vmul.f32 %v6620, %v6913
    %v6952 = vmul.f32 %v6622, %v6913
    %v6953 = vmul.f32 %v6625, %v6913
    %v6954 = vmul.f32 %v6627, %v6913
    %v6955 = vmul.f32 %v6630, %v6913
    %v6956 = vmul.f32 %v6632, %v6913
    %v6957 = vmul.f32 %v6635, %v6913
    %v6958 = vmul.f32 %v6637, %v6913
    %v6959 = vmul.f32 %v6640, %v6913
    %v6960 = vmul.f32 %v6642, %v6913
    %v6961 = vmul.f32 %v6645, %v6913
    %v6962 = vmul.f32 %v6647, %v6913
    %v6963 = vmul.f32 %v6650, %v6913
    %v6964 = vmul.f32 %v6652, %v6913
    %v6965 = vmul.f32 %v6655, %v6913
    %v6966 = vmul.f32 %v6657, %v6913
    %v6967 = vmul.f32 %v6660, %v6913
    %v6968 = vmul.f32 %v6662, %v6913
    %v6969 = vmul.f32 %v6665, %v6913
    %v6970 = vmul.f32 %v6667, %v6913
    %v6971 = vmul.f32 %v6670, %v6913
    %v6972 = vmul.f32 %v6672, %v6913
    %v6973 = vmul.f32 %v6675, %v6913
    %v6974 = vmul.f32 %v6677, %v6913
    %v6975 = vmul.f32 %v6680, %v6913
    %v6976 = vmul.f32 %v6682, %v6913
    %v6977 = vmul.f32 %v6685, %v6913
    %v6978 = vmul.f32 %v6687, %v6913
    %v6980 = vperm.slane %v6911, 0
    %v6982 = vadd.f32 %v6915, %v6980
    %v6983 = vadd.f32 %v6916, %v6980
    %v6984 = vadd.f32 %v6917, %v6980
    %v6985 = vadd.f32 %v6918, %v6980
    %v6986 = vadd.f32 %v6919, %v6980
    %v6987 = vadd.f32 %v6920, %v6980
    %v6988 = vadd.f32 %v6921, %v6980
    %v6989 = vadd.f32 %v6922, %v6980
    %v6990 = vadd.f32 %v6923, %v6980
    %v6991 = vadd.f32 %v6924, %v6980
    %v6992 = vadd.f32 %v6925, %v6980
    %v6993 = vadd.f32 %v6926, %v6980
    %v6994 = vadd.f32 %v6927, %v6980
    %v6995 = vadd.f32 %v6928, %v6980
    %v6996 = vadd.f32 %v6929, %v6980
    %v6997 = vadd.f32 %v6930, %v6980
    %v6998 = vadd.f32 %v6931, %v6980
    %v6999 = vadd.f32 %v6932, %v6980
    %v7000 = vadd.f32 %v6933, %v6980
    %v7001 = vadd.f32 %v6934, %v6980
    %v7002 = vadd.f32 %v6935, %v6980
    %v7003 = vadd.f32 %v6936, %v6980
    %v7004 = vadd.f32 %v6937, %v6980
    %v7005 = vadd.f32 %v6938, %v6980
    %v7006 = vadd.f32 %v6939, %v6980
    %v7007 = vadd.f32 %v6940, %v6980
    %v7008 = vadd.f32 %v6941, %v6980
    %v7009 = vadd.f32 %v6942, %v6980
    %v7010 = vadd.f32 %v6943, %v6980
    %v7011 = vadd.f32 %v6944, %v6980
    %v7012 = vadd.f32 %v6945, %v6980
    %v7013 = vadd.f32 %v6946, %v6980
    %v7014 = vadd.f32 %v6947, %v6980
    %v7015 = vadd.f32 %v6948, %v6980
    %v7016 = vadd.f32 %v6949, %v6980
    %v7017 = vadd.f32 %v6950, %v6980
    %v7018 = vadd.f32 %v6951, %v6980
    %v7019 = vadd.f32 %v6952, %v6980
    %v7020 = vadd.f32 %v6953, %v6980
    %v7021 = vadd.f32 %v6954, %v6980
    %v7022 = vadd.f32 %v6955, %v6980
    %v7023 = vadd.f32 %v6956, %v6980
    %v7024 = vadd.f32 %v6957, %v6980
    %v7025 = vadd.f32 %v6958, %v6980
    %v7026 = vadd.f32 %v6959, %v6980
    %v7027 = vadd.f32 %v6960, %v6980
    %v7028 = vadd.f32 %v6961, %v6980
    %v7029 = vadd.f32 %v6962, %v6980
    %v7030 = vadd.f32 %v6963, %v6980
    %v7031 = vadd.f32 %v6964, %v6980
    %v7032 = vadd.f32 %v6965, %v6980
    %v7033 = vadd.f32 %v6966, %v6980
    %v7034 = vadd.f32 %v6967, %v6980
    %v7035 = vadd.f32 %v6968, %v6980
    %v7036 = vadd.f32 %v6969, %v6980
    %v7037 = vadd.f32 %v6970, %v6980
    %v7038 = vadd.f32 %v6971, %v6980
    %v7039 = vadd.f32 %v6972, %v6980
    %v7040 = vadd.f32 %v6973, %v6980
    %v7041 = vadd.f32 %v6974, %v6980
    %v7042 = vadd.f32 %v6975, %v6980
    %v7043 = vadd.f32 %v6976, %v6980
    %v7044 = vadd.f32 %v6977, %v6980
    %v7045 = vadd.f32 %v6978, %v6980
    %v7046 = vld [vmem:[#allocation3] sm:$0xff]
    %v7047 = vld [vmem:[#allocation3 + $0x8] sm:$0xff]
    %v7048 = vld [vmem:[#allocation3 + $0x10] sm:$0xff]
    %v7049 = vld [vmem:[#allocation3 + $0x18] sm:$0xff]
    %v7050 = vld [vmem:[#allocation3 + $0x20] sm:$0xff]
    %v7051 = vld [vmem:[#allocation3 + $0x28] sm:$0xff]
    %v7052 = vld [vmem:[#allocation3 + $0x30] sm:$0xff]
    %v7053 = vld [vmem:[#allocation3 + $0x38] sm:$0xff]
    %v7054 = vld [vmem:[#allocation3 + $0x40] sm:$0xff]
    %v7055 = vld [vmem:[#allocation3 + $0x48] sm:$0xff]
    %v7056 = vld [vmem:[#allocation3 + $0x50] sm:$0xff]
    %v7057 = vld [vmem:[#allocation3 + $0x58] sm:$0xff]
    %v7058 = vld [vmem:[#allocation3 + $0x60] sm:$0xff]
    %v7059 = vld [vmem:[#allocation3 + $0x68] sm:$0xff]
    %v7060 = vld [vmem:[#allocation3 + $0x70] sm:$0xff]
    %v7061 = vld [vmem:[#allocation3 + $0x78] sm:$0xff]
    %v7062 = vld [vmem:[#allocation3 + $0x80] sm:$0xff]
    %v7063 = vld [vmem:[#allocation3 + $0x88] sm:$0xff]
    %v7064 = vld [vmem:[#allocation3 + $0x90] sm:$0xff]
    %v7065 = vld [vmem:[#allocation3 + $0x98] sm:$0xff]
    %v7066 = vld [vmem:[#allocation3 + $0xa0] sm:$0xff]
    %v7067 = vld [vmem:[#allocation3 + $0xa8] sm:$0xff]
    %v7068 = vld [vmem:[#allocation3 + $0xb0] sm:$0xff]
    %v7069 = vld [vmem:[#allocation3 + $0xb8] sm:$0xff]
    %v7070 = vld [vmem:[#allocation3 + $0xc0] sm:$0xff]
    %v7071 = vld [vmem:[#allocation3 + $0xc8] sm:$0xff]
    %v7072 = vld [vmem:[#allocation3 + $0xd0] sm:$0xff]
    %v7073 = vld [vmem:[#allocation3 + $0xd8] sm:$0xff]
    %v7074 = vld [vmem:[#allocation3 + $0xe0] sm:$0xff]
    %v7075 = vld [vmem:[#allocation3 + $0xe8] sm:$0xff]
    %v7076 = vld [vmem:[#allocation3 + $0xf0] sm:$0xff]
    %v7077 = vld [vmem:[#allocation3 + $0xf8] sm:$0xff]
    %v7078 = vld [vmem:[#allocation3 + $0x100] sm:$0xff]
    %v7079 = vld [vmem:[#allocation3 + $0x108] sm:$0xff]
    %v7080 = vld [vmem:[#allocation3 + $0x110] sm:$0xff]
    %v7081 = vld [vmem:[#allocation3 + $0x118] sm:$0xff]
    %v7082 = vld [vmem:[#allocation3 + $0x120] sm:$0xff]
    %v7083 = vld [vmem:[#allocation3 + $0x128] sm:$0xff]
    %v7084 = vld [vmem:[#allocation3 + $0x130] sm:$0xff]
    %v7085 = vld [vmem:[#allocation3 + $0x138] sm:$0xff]
    %v7086 = vld [vmem:[#allocation3 + $0x140] sm:$0xff]
    %v7087 = vld [vmem:[#allocation3 + $0x148] sm:$0xff]
    %v7088 = vld [vmem:[#allocation3 + $0x150] sm:$0xff]
    %v7089 = vld [vmem:[#allocation3 + $0x158] sm:$0xff]
    %v7090 = vld [vmem:[#allocation3 + $0x160] sm:$0xff]
    %v7091 = vld [vmem:[#allocation3 + $0x168] sm:$0xff]
    %v7092 = vld [vmem:[#allocation3 + $0x170] sm:$0xff]
    %v7093 = vld [vmem:[#allocation3 + $0x178] sm:$0xff]
    %v7094 = vld [vmem:[#allocation3 + $0x180] sm:$0xff]
    %v7095 = vld [vmem:[#allocation3 + $0x188] sm:$0xff]
    %v7096 = vld [vmem:[#allocation3 + $0x190] sm:$0xff]
    %v7097 = vld [vmem:[#allocation3 + $0x198] sm:$0xff]
    %v7098 = vld [vmem:[#allocation3 + $0x1a0] sm:$0xff]
    %v7099 = vld [vmem:[#allocation3 + $0x1a8] sm:$0xff]
    %v7100 = vld [vmem:[#allocation3 + $0x1b0] sm:$0xff]
    %v7101 = vld [vmem:[#allocation3 + $0x1b8] sm:$0xff]
    %v7102 = vld [vmem:[#allocation3 + $0x1c0] sm:$0xff]
    %v7103 = vld [vmem:[#allocation3 + $0x1c8] sm:$0xff]
    %v7104 = vld [vmem:[#allocation3 + $0x1d0] sm:$0xff]
    %v7105 = vld [vmem:[#allocation3 + $0x1d8] sm:$0xff]
    %v7106 = vld [vmem:[#allocation3 + $0x1e0] sm:$0xff]
    %v7107 = vld [vmem:[#allocation3 + $0x1e8] sm:$0xff]
    %v7108 = vld [vmem:[#allocation3 + $0x1f0] sm:$0xff]
    %v7109 = vld [vmem:[#allocation3 + $0x1f8] sm:$0xff]
    %v7110 = vadd.f32 %v6982, %v7046
    %v7111 = vadd.f32 %v6983, %v7047
    %v7112 = vadd.f32 %v6984, %v7048
    %v7113 = vadd.f32 %v6985, %v7049
    %v7114 = vadd.f32 %v6986, %v7050
    %v7115 = vadd.f32 %v6987, %v7051
    %v7116 = vadd.f32 %v6988, %v7052
    %v7117 = vadd.f32 %v6989, %v7053
    %v7118 = vadd.f32 %v6990, %v7054
    %v7119 = vadd.f32 %v6991, %v7055
    %v7120 = vadd.f32 %v6992, %v7056
    %v7121 = vadd.f32 %v6993, %v7057
    %v7122 = vadd.f32 %v6994, %v7058
    %v7123 = vadd.f32 %v6995, %v7059
    %v7124 = vadd.f32 %v6996, %v7060
    %v7125 = vadd.f32 %v6997, %v7061
    %v7126 = vadd.f32 %v6998, %v7062
    %v7127 = vadd.f32 %v6999, %v7063
    %v7128 = vadd.f32 %v7000, %v7064
    %v7129 = vadd.f32 %v7001, %v7065
    %v7130 = vadd.f32 %v7002, %v7066
    %v7131 = vadd.f32 %v7003, %v7067
    %v7132 = vadd.f32 %v7004, %v7068
    %v7133 = vadd.f32 %v7005, %v7069
    %v7134 = vadd.f32 %v7006, %v7070
    %v7135 = vadd.f32 %v7007, %v7071
    %v7136 = vadd.f32 %v7008, %v7072
    %v7137 = vadd.f32 %v7009, %v7073
    %v7138 = vadd.f32 %v7010, %v7074
    %v7139 = vadd.f32 %v7011, %v7075
    %v7140 = vadd.f32 %v7012, %v7076
    %v7141 = vadd.f32 %v7013, %v7077
    %v7142 = vadd.f32 %v7014, %v7078
    %v7143 = vadd.f32 %v7015, %v7079
    %v7144 = vadd.f32 %v7016, %v7080
    %v7145 = vadd.f32 %v7017, %v7081
    %v7146 = vadd.f32 %v7018, %v7082
    %v7147 = vadd.f32 %v7019, %v7083
    %v7148 = vadd.f32 %v7020, %v7084
    %v7149 = vadd.f32 %v7021, %v7085
    %v7150 = vadd.f32 %v7022, %v7086
    %v7151 = vadd.f32 %v7023, %v7087
    %v7152 = vadd.f32 %v7024, %v7088
    %v7153 = vadd.f32 %v7025, %v7089
    %v7154 = vadd.f32 %v7026, %v7090
    %v7155 = vadd.f32 %v7027, %v7091
    %v7156 = vadd.f32 %v7028, %v7092
    %v7157 = vadd.f32 %v7029, %v7093
    %v7158 = vadd.f32 %v7030, %v7094
    %v7159 = vadd.f32 %v7031, %v7095
    %v7160 = vadd.f32 %v7032, %v7096
    %v7161 = vadd.f32 %v7033, %v7097
    %v7162 = vadd.f32 %v7034, %v7098
    %v7163 = vadd.f32 %v7035, %v7099
    %v7164 = vadd.f32 %v7036, %v7100
    %v7165 = vadd.f32 %v7037, %v7101
    %v7166 = vadd.f32 %v7038, %v7102
    %v7167 = vadd.f32 %v7039, %v7103
    %v7168 = vadd.f32 %v7040, %v7104
    %v7169 = vadd.f32 %v7041, %v7105
    %v7170 = vadd.f32 %v7042, %v7106
    %v7171 = vadd.f32 %v7043, %v7107
    %v7172 = vadd.f32 %v7044, %v7108
    %v7173 = vadd.f32 %v7045, %v7109
    %v7174 = vmax.f32 %v7110, 0.0
    %v7175 = vmax.f32 %v7111, 0.0
    %v7176 = vmax.f32 %v7112, 0.0
    %v7177 = vmax.f32 %v7113, 0.0
    %v7178 = vmax.f32 %v7114, 0.0
    %v7179 = vmax.f32 %v7115, 0.0
    %v7180 = vmax.f32 %v7116, 0.0
    %v7181 = vmax.f32 %v7117, 0.0
    %v7182 = vmax.f32 %v7118, 0.0
    %v7183 = vmax.f32 %v7119, 0.0
    %v7184 = vmax.f32 %v7120, 0.0
    %v7185 = vmax.f32 %v7121, 0.0
    %v7186 = vmax.f32 %v7122, 0.0
    %v7187 = vmax.f32 %v7123, 0.0
    %v7188 = vmax.f32 %v7124, 0.0
    %v7189 = vmax.f32 %v7125, 0.0
    %v7190 = vmax.f32 %v7126, 0.0
    %v7191 = vmax.f32 %v7127, 0.0
    %v7192 = vmax.f32 %v7128, 0.0
    %v7193 = vmax.f32 %v7129, 0.0
    %v7194 = vmax.f32 %v7130, 0.0
    %v7195 = vmax.f32 %v7131, 0.0
    %v7196 = vmax.f32 %v7132, 0.0
    %v7197 = vmax.f32 %v7133, 0.0
    %v7198 = vmax.f32 %v7134, 0.0
    %v7199 = vmax.f32 %v7135, 0.0
    %v7200 = vmax.f32 %v7136, 0.0
    %v7201 = vmax.f32 %v7137, 0.0
    %v7202 = vmax.f32 %v7138, 0.0
    %v7203 = vmax.f32 %v7139, 0.0
    %v7204 = vmax.f32 %v7140, 0.0
    %v7205 = vmax.f32 %v7141, 0.0
    %v7206 = vmax.f32 %v7142, 0.0
    %v7207 = vmax.f32 %v7143, 0.0
    %v7208 = vmax.f32 %v7144, 0.0
    %v7209 = vmax.f32 %v7145, 0.0
    %v7210 = vmax.f32 %v7146, 0.0
    %v7211 = vmax.f32 %v7147, 0.0
    %v7212 = vmax.f32 %v7148, 0.0
    %v7213 = vmax.f32 %v7149, 0.0
    %v7214 = vmax.f32 %v7150, 0.0
    %v7215 = vmax.f32 %v7151, 0.0
    %v7216 = vmax.f32 %v7152, 0.0
    %v7217 = vmax.f32 %v7153, 0.0
    %v7218 = vmax.f32 %v7154, 0.0
    %v7219 = vmax.f32 %v7155, 0.0
    %v7220 = vmax.f32 %v7156, 0.0
    %v7221 = vmax.f32 %v7157, 0.0
    %v7222 = vmax.f32 %v7158, 0.0
    %v7223 = vmax.f32 %v7159, 0.0
    %v7224 = vmax.f32 %v7160, 0.0
    %v7225 = vmax.f32 %v7161, 0.0
    %v7226 = vmax.f32 %v7162, 0.0
    %v7227 = vmax.f32 %v7163, 0.0
    %v7228 = vmax.f32 %v7164, 0.0
    %v7229 = vmax.f32 %v7165, 0.0
    %v7230 = vmax.f32 %v7166, 0.0
    %v7231 = vmax.f32 %v7167, 0.0
    %v7232 = vmax.f32 %v7168, 0.0
    %v7233 = vmax.f32 %v7169, 0.0
    %v7234 = vmax.f32 %v7170, 0.0
    %v7235 = vmax.f32 %v7171, 0.0
    %v7236 = vmax.f32 %v7172, 0.0
    %v7237 = vmax.f32 %v7173, 0.0
    %7238 = vst [vmem:[#allocation11] sm:$0xff] %v7174
    %7239 = vst [vmem:[#allocation11 + $0x8] sm:$0xff] %v7175
    %7240 = vst [vmem:[#allocation11 + $0x10] sm:$0xff] %v7176
    %7241 = vst [vmem:[#allocation11 + $0x18] sm:$0xff] %v7177
    %7242 = vst [vmem:[#allocation11 + $0x20] sm:$0xff] %v7178
    %7243 = vst [vmem:[#allocation11 + $0x28] sm:$0xff] %v7179
    %7244 = vst [vmem:[#allocation11 + $0x30] sm:$0xff] %v7180
    %7245 = vst [vmem:[#allocation11 + $0x38] sm:$0xff] %v7181
    %7246 = vst [vmem:[#allocation11 + $0x40] sm:$0xff] %v7182
    %7247 = vst [vmem:[#allocation11 + $0x48] sm:$0xff] %v7183
    %7248 = vst [vmem:[#allocation11 + $0x50] sm:$0xff] %v7184
    %7249 = vst [vmem:[#allocation11 + $0x58] sm:$0xff] %v7185
    %7250 = vst [vmem:[#allocation11 + $0x60] sm:$0xff] %v7186
    %7251 = vst [vmem:[#allocation11 + $0x68] sm:$0xff] %v7187
    %7252 = vst [vmem:[#allocation11 + $0x70] sm:$0xff] %v7188
    %7253 = vst [vmem:[#allocation11 + $0x78] sm:$0xff] %v7189
    %7254 = vst [vmem:[#allocation11 + $0x80] sm:$0xff] %v7190
    %7255 = vst [vmem:[#allocation11 + $0x88] sm:$0xff] %v7191
    %7256 = vst [vmem:[#allocation11 + $0x90] sm:$0xff] %v7192
    %7257 = vst [vmem:[#allocation11 + $0x98] sm:$0xff] %v7193
    %7258 = vst [vmem:[#allocation11 + $0xa0] sm:$0xff] %v7194
    %7259 = vst [vmem:[#allocation11 + $0xa8] sm:$0xff] %v7195
    %7260 = vst [vmem:[#allocation11 + $0xb0] sm:$0xff] %v7196
    %7261 = vst [vmem:[#allocation11 + $0xb8] sm:$0xff] %v7197
    %7262 = vst [vmem:[#allocation11 + $0xc0] sm:$0xff] %v7198
    %7263 = vst [vmem:[#allocation11 + $0xc8] sm:$0xff] %v7199
    %7264 = vst [vmem:[#allocation11 + $0xd0] sm:$0xff] %v7200
    %7265 = vst [vmem:[#allocation11 + $0xd8] sm:$0xff] %v7201
    %7266 = vst [vmem:[#allocation11 + $0xe0] sm:$0xff] %v7202
    %7267 = vst [vmem:[#allocation11 + $0xe8] sm:$0xff] %v7203
    %7268 = vst [vmem:[#allocation11 + $0xf0] sm:$0xff] %v7204
    %7269 = vst [vmem:[#allocation11 + $0xf8] sm:$0xff] %v7205
    %7270 = vst [vmem:[#allocation11 + $0x100] sm:$0xff] %v7206
    %7271 = vst [vmem:[#allocation11 + $0x108] sm:$0xff] %v7207
    %7272 = vst [vmem:[#allocation11 + $0x110] sm:$0xff] %v7208
    %7273 = vst [vmem:[#allocation11 + $0x118] sm:$0xff] %v7209
    %7274 = vst [vmem:[#allocation11 + $0x120] sm:$0xff] %v7210
    %7275 = vst [vmem:[#allocation11 + $0x128] sm:$0xff] %v7211
    %7276 = vst [vmem:[#allocation11 + $0x130] sm:$0xff] %v7212
    %7277 = vst [vmem:[#allocation11 + $0x138] sm:$0xff] %v7213
    %7278 = vst [vmem:[#allocation11 + $0x140] sm:$0xff] %v7214
    %7279 = vst [vmem:[#allocation11 + $0x148] sm:$0xff] %v7215
    %7280 = vst [vmem:[#allocation11 + $0x150] sm:$0xff] %v7216
    %7281 = vst [vmem:[#allocation11 + $0x158] sm:$0xff] %v7217
    %7282 = vst [vmem:[#allocation11 + $0x160] sm:$0xff] %v7218
    %7283 = vst [vmem:[#allocation11 + $0x168] sm:$0xff] %v7219
    %7284 = vst [vmem:[#allocation11 + $0x170] sm:$0xff] %v7220
    %7285 = vst [vmem:[#allocation11 + $0x178] sm:$0xff] %v7221
    %7286 = vst [vmem:[#allocation11 + $0x180] sm:$0xff] %v7222
    %7287 = vst [vmem:[#allocation11 + $0x188] sm:$0xff] %v7223
    %7288 = vst [vmem:[#allocation11 + $0x190] sm:$0xff] %v7224
    %7289 = vst [vmem:[#allocation11 + $0x198] sm:$0xff] %v7225
    %7290 = vst [vmem:[#allocation11 + $0x1a0] sm:$0xff] %v7226
    %7291 = vst [vmem:[#allocation11 + $0x1a8] sm:$0xff] %v7227
    %7292 = vst [vmem:[#allocation11 + $0x1b0] sm:$0xff] %v7228
    %7293 = vst [vmem:[#allocation11 + $0x1b8] sm:$0xff] %v7229
    %7294 = vst [vmem:[#allocation11 + $0x1c0] sm:$0xff] %v7230
    %7295 = vst [vmem:[#allocation11 + $0x1c8] sm:$0xff] %v7231
    %7296 = vst [vmem:[#allocation11 + $0x1d0] sm:$0xff] %v7232
    %7297 = vst [vmem:[#allocation11 + $0x1d8] sm:$0xff] %v7233
    %7298 = vst [vmem:[#allocation11 + $0x1e0] sm:$0xff] %v7234
    %7299 = vst [vmem:[#allocation11 + $0x1e8] sm:$0xff] %v7235
    %7300 = vst [vmem:[#allocation11 + $0x1f0] sm:$0xff] %v7236
    %7301 = vst [vmem:[#allocation11 + $0x1f8] sm:$0xff] %v7237
    // Predicated region
    $region58: #{tpu_custom_call.1} parent=1 // pred_check
      _
    $region59: #{tpu_custom_call.1} parent=1 // pred_check_branch
      %7303 = sbr.rel (0) target = $region61
    $region60: #{tpu_custom_call.1} parent=1 // pred_region
      %7305 = vsyncadd [#allocation5], 0
      %s7306 = sshll.u32 [#allocation11], 4
      %s7307 = int_to_ptr.vmem [resolvable:$true] %s7306
      %s7308 = sshll.u32 %s10, 4
      %s7309 = int_to_ptr.hbm [resolvable:$true] %s7308
      %7314 = dma.vmem_to_hbm [thread:$0]  %s7307, 8192, %s7309, [#allocation5], 128, 128, 8
    $region61: #{tpu_custom_call.1} parent=1 // pred_fallthru
      _
    // Predicated region
    $region62: #{tpu_custom_call.1} parent=1 // pred_check
      _
    $region63: #{tpu_custom_call.1} parent=1 // pred_check_branch
      %7316 = sbr.rel (0) target = $region65
    $region64: #{tpu_custom_call.1} parent=1 // pred_region
      %7318 = dma.done [#allocation5], 8192
    $region65: #{tpu_custom_call.1} parent=1 // pred_fallthru
      _
    %7319 = vsyncpa [#allocation4], 1
    %7320 = vsyncpa [#allocation7], 1
    %7321 = vsyncpa [#allocation10], 1
    %7322 = vsyncpa [#allocation5], 1

</llo_original>
